<compile_context>
chip_gen: v5e
topology: v5e:2x2
jax: 0.10.0
libtpu: 0.0.40
codegen_flags: <defaults>
</compile_context>

<pallas_src>
import functools

import jax
import jax.numpy as jnp
from jax.experimental import pallas as pl
from jax.experimental.pallas import tpu as pltpu

GROWTH_RATE = 8
BLOCK_CONFIG = (2, 2, 2, 2)
NUM_INIT_FEATURES = 16
BN_SIZE = 4
NUM_CLASSES = 10
BN_EPS = 1e-5


def _round_up(x, m):
    return (x + m - 1) // m * m


def _tile_for(dim_padded, cap, mult):
    """Largest tile that divides dim_padded, is a multiple of mult, and <= cap."""
    if dim_padded <= cap:
        return dim_padded
    t = (cap // mult) * mult
    while t >= mult:
        if dim_padded % t == 0:
            return t
        t -= mult
    return mult


def _pad2d(x, rp, cp):
    r, c = x.shape
    if r == rp and c == cp:
        return x
    return jnp.pad(x, ((0, rp - r), (0, cp - c)))


def _pad_vec(v, n):
    v = v.astype(jnp.float32)
    if v.shape[0] != n:
        v = jnp.pad(v, (0, n - v.shape[0]))
    return v.reshape(1, n)


def _bn_scale_shift(bn):
    gamma, beta, mean, var = bn
    scale = gamma * jax.lax.rsqrt(var + BN_EPS)
    shift = beta - mean * scale
    return scale, shift


# ---------------------------------------------------------------------------
# Pallas kernels
# ---------------------------------------------------------------------------
def _mm_kernel(a_ref, b_ref, isc_ref, ish_ref, osc_ref, osh_ref, o_ref, acc_ref,
               *, prologue, pro_relu, epi_relu):
    """Tiled MXU matmul with fused per-K-column prologue BN(+ReLU) and
    per-N-column epilogue scale/shift(+ReLU)/bias."""
    k = pl.program_id(2)

    @pl.when(k == 0)
    def _init():
        acc_ref[...] = jnp.zeros_like(acc_ref)

    a = a_ref[...]
    if prologue:
        af = a.astype(jnp.float32) * isc_ref[...] + ish_ref[...]
        if pro_relu:
            af = jnp.maximum(af, 0.0)
        a = af.astype(jnp.bfloat16)
    acc_ref[...] += jnp.dot(a, b_ref[...], preferred_element_type=jnp.float32)

    @pl.when(k == pl.num_programs(2) - 1)
    def _fin():
        y = acc_ref[...] * osc_ref[...] + osh_ref[...]
        if epi_relu:
            y = jnp.maximum(y, 0.0)
        o_ref[...] = y.astype(o_ref.dtype)


def pallas_matmul(a, b, *, bias=None,
                  in_scale=None, in_shift=None, in_relu=False,
                  out_scale=None, out_shift=None, out_relu=False,
                  out_dtype=jnp.bfloat16,
                  tm_max=512, tk_max=512, tn_max=256):
    """(M,K)@(K,N): bf16 MXU matmul with f32 accumulation.

    Optional fused prologue : A <- relu?(A * in_scale + in_shift)      (per K column)
    Always-on epilogue      : O <- relu?(acc * out_scale + out_shift)  (per N column)
    (bias, if given, is folded into out_shift.)
    """
    M, K = a.shape
    K2, N = b.shape
    assert K == K2
    prologue = in_scale is not None

    # Tile selection: feed the 256x256 MXU (v6e/v7x) with few, fat grid steps,
    # while keeping double-buffered VMEM well under the scoped default.
    Mp = _round_up(M, 8)
    if Mp <= tm_max:
        tm = Mp
    else:
        tm = tm_max
        Mp = _round_up(M, tm_max)
    Kp = _round_up(K, 128)
    tk = _tile_for(Kp, tk_max, 128)
    Np = _round_up(N, 128)
    tn = _tile_for(Np, tn_max, 128)

    a_p = _pad2d(a.astype(jnp.bfloat16), Mp, Kp)   # no-op when already aligned
    b_p = _pad2d(b.astype(jnp.bfloat16), Kp, Np)

    if in_scale is None:
        in_scale = jnp.ones((K,), jnp.float32)
        in_shift = jnp.zeros((K,), jnp.float32)
    if out_scale is None:
        out_scale = jnp.ones((N,), jnp.float32)
    if out_shift is None:
        out_shift = jnp.zeros((N,), jnp.float32)
    if bias is not None:
        out_shift = out_shift + bias.astype(jnp.float32)

    isc_p = _pad_vec(in_scale, Kp)
    ish_p = _pad_vec(in_shift, Kp)
    osc_p = _pad_vec(out_scale, Np)
    osh_p = _pad_vec(out_shift, Np)

    grid = (Mp // tm, Np // tn, Kp // tk)
    out = pl.pallas_call(
        functools.partial(_mm_kernel, prologue=prologue,
                          pro_relu=in_relu, epi_relu=out_relu),
        out_shape=jax.ShapeDtypeStruct((Mp, Np), out_dtype),
        grid_spec=pltpu.PrefetchScalarGridSpec(
            num_scalar_prefetch=0,
            grid=grid,
            in_specs=[
                pl.BlockSpec((tm, tk), lambda i, j, k: (i, k)),
                pl.BlockSpec((tk, tn), lambda i, j, k: (k, j)),
                pl.BlockSpec((1, tk), lambda i, j, k: (0, k)),
                pl.BlockSpec((1, tk), lambda i, j, k: (0, k)),
                pl.BlockSpec((1, tn), lambda i, j, k: (0, j)),
                pl.BlockSpec((1, tn), lambda i, j, k: (0, j)),
            ],
            out_specs=pl.BlockSpec((tm, tn), lambda i, j, k: (i, j)),
            scratch_shapes=[pltpu.VMEM((tm, tn), jnp.float32)],
        ),
        compiler_params=pltpu.CompilerParams(
            dimension_semantics=("parallel", "parallel", "arbitrary")),
    )(a_p, b_p, isc_p, ish_p, osc_p, osh_p)
    if Mp != M or Np != N:
        out = out[:M, :N]
    return out


def _window_reduce_kernel(x_ref, o_ref, *, op, kk):
    if op == "max":
        acc = x_ref[0]
        for t in range(1, kk):
            acc = jnp.maximum(acc, x_ref[t])
        o_ref[...] = acc
    else:  # avg
        acc = x_ref[0].astype(jnp.float32)
        for t in range(1, kk):
            acc = acc + x_ref[t].astype(jnp.float32)
        o_ref[...] = (acc * (1.0 / kk)).astype(o_ref.dtype)


def _pool_row_tile(R, kk, C, itemsize, budget=2 * 1024 * 1024):
    """Row tile: whole array if small; else the largest sublane-aligned divisor
    of R that keeps the (kk, TR, C) block under the VMEM budget."""
    cap = max(8, budget // max(1, kk * C * itemsize))
    if R <= cap:
        return R
    mult = 16 if itemsize == 2 else 8          # bf16 packs 2 rows per sublane
    t = (cap // mult) * mult
    while t >= mult:
        if R % t == 0:
            return t
        t -= mult
    return R                                   # fallback: single whole-array block


def pallas_window_reduce(stacked, op):
    """Reduce (KK, R, C) over the leading window axis; row-tiled & parallel over R."""
    KK, R, C = stacked.shape
    TR = _pool_row_tile(R, KK, C, stacked.dtype.itemsize)
    return pl.pallas_call(
        functools.partial(_window_reduce_kernel, op=op, kk=KK),
        out_shape=jax.ShapeDtypeStruct((R, C), stacked.dtype),
        grid_spec=pltpu.PrefetchScalarGridSpec(
            num_scalar_prefetch=0,
            grid=(R // TR,),
            in_specs=[pl.BlockSpec((KK, TR, C), lambda i: (0, i, 0))],
            out_specs=pl.BlockSpec((TR, C), lambda i: (i, 0)),
        ),
        compiler_params=pltpu.CompilerParams(dimension_semantics=("parallel",)),
    )(stacked)


# ---------------------------------------------------------------------------
# Layer wrappers (NHWC, bf16 activations)
# ---------------------------------------------------------------------------
def conv2d_im2col(x, w, stride, pad, out_scale=None, out_shift=None,
                  out_relu=False, out_dtype=jnp.bfloat16):
    """Spatial conv via im2col + fused-epilogue matmul. x:(N,H,W,Cin), w:(Cout,Cin,kh,kw)."""
    Cout, Cin, kh, kw = w.shape
    N, H, W, C = x.shape
    assert C == Cin
    Ho = (H + 2 * pad - kh) // stride + 1
    Wo = (W + 2 * pad - kw) // stride + 1
    xb = x.astype(jnp.bfloat16)
    if pad:
        xb = jnp.pad(xb, ((0, 0), (pad, pad), (pad, pad), (0, 0)))
    cols = [xb[:, i:i + stride * (Ho - 1) + 1:stride,
               j:j + stride * (Wo - 1) + 1:stride, :]
            for i in range(kh) for j in range(kw)]
    patches = jnp.concatenate(cols, axis=-1).reshape(N * Ho * Wo, kh * kw * Cin)
    w2 = jnp.transpose(w, (2, 3, 1, 0)).reshape(kh * kw * Cin, Cout)
    out = pallas_matmul(patches, w2, out_scale=out_scale, out_shift=out_shift,
                        out_relu=out_relu, out_dtype=out_dtype)
    return out.reshape(N, Ho, Wo, Cout)


def maxpool_3x3_s2_p1(x):
    N, H, W, C = x.shape
    Ho = (H + 2 - 3) // 2 + 1
    Wo = (W + 2 - 3) // 2 + 1
    pad_val = float(jnp.finfo(x.dtype).min)
    xp = jnp.pad(x, ((0, 0), (1, 1), (1, 1), (0, 0)), constant_values=pad_val)
    views = [xp[:, i:i + 2 * (Ho - 1) + 1:2, j:j + 2 * (Wo - 1) + 1:2, :]
             for i in range(3) for j in range(3)]
    stacked = jnp.stack(views, 0).reshape(9, N * Ho * Wo, C)
    return pallas_window_reduce(stacked, "max").reshape(N, Ho, Wo, C)


def avgpool_2x2_s2(x):
    N, H, W, C = x.shape
    Ho, Wo = H // 2, W // 2
    views = [x[:, i:i + 2 * (Ho - 1) + 1:2, j:j + 2 * (Wo - 1) + 1:2, :]
             for i in range(2) for j in range(2)]
    stacked = jnp.stack(views, 0).reshape(4, N * Ho * Wo, C)
    return pallas_window_reduce(stacked, "avg").reshape(N, Ho, Wo, C)


# ---------------------------------------------------------------------------
# DenseNet pieces (all BN+ReLU fused into the matmuls)
# ---------------------------------------------------------------------------
def _dense_block(x, params, b, n_layers, c_in):
    """Dense block: preallocated lane-padded channel buffer, in-place growth writes."""
    N, H, W, Cx = x.shape
    g = GROWTH_RATE
    c_final = c_in + n_layers * g
    c_buf = _round_up(c_final, 128)            # channels stay lane-padded once
    buf = jnp.pad(x.astype(jnp.bfloat16),
                  ((0, 0), (0, 0), (0, 0), (0, c_buf - Cx)))
    M = N * H * W
    for l in range(n_layers):
        c_cur = c_in + l * g
        p = params[f"block{b}_layer{l}"]
        # BN1+ReLU (prologue) -> Conv1x1 -> BN2+ReLU (epilogue), single matmul.
        isc, ish = _bn_scale_shift(p["norm1"])             # (c_cur,)
        isc = jnp.pad(isc, (0, c_buf - c_cur))             # zero => unwritten channels ignored
        ish = jnp.pad(ish, (0, c_buf - c_cur))
        w1 = jnp.pad(p["conv1"][:, :, 0, 0], ((0, 0), (0, c_buf - c_cur)))
        osc, osh = _bn_scale_shift(p["norm2"])
        a = buf.reshape(M, c_buf)                          # free reshape, already aligned
        y = pallas_matmul(a, w1.T, in_scale=isc, in_shift=ish, in_relu=True,
                          out_scale=osc, out_shift=osh, out_relu=True,
                          out_dtype=jnp.bfloat16)
        y = y.reshape(N, H, W, -1)
        new = conv2d_im2col(y, p["conv2"], stride=1, pad=1, out_dtype=jnp.bfloat16)
        buf = buf.at[..., c_cur:c_cur + g].set(new)        # in-place growth slice write
    return buf, c_final


def _transition(x, p, c_valid):
    """BN+ReLU fused into the 1x1 conv prologue, then 2x2 avg pool."""
    N, H, W, Cb = x.shape
    isc, ish = _bn_scale_shift(p["norm"])
    isc = jnp.pad(isc, (0, Cb - c_valid))
    ish = jnp.pad(ish, (0, Cb - c_valid))
    w = jnp.pad(p["conv"][:, :, 0, 0], ((0, 0), (0, Cb - c_valid)))
    a = x.reshape(N * H * W, Cb)
    y = pallas_matmul(a, w.T, in_scale=isc, in_shift=ish, in_relu=True,
                      out_dtype=jnp.bfloat16)
    y = y.reshape(N, H, W, -1)
    return avgpool_2x2_s2(y)


def densenet_features(x, params):
    # conv0 (7x7 s2 p3) with norm0+relu0 fused into the matmul epilogue, then pool0.
    osc, osh = _bn_scale_shift(params["norm0"])
    y = conv2d_im2col(x, params["conv0"], stride=2, pad=3,
                      out_scale=osc, out_shift=osh, out_relu=True,
                      out_dtype=jnp.bfloat16)
    y = maxpool_3x3_s2_p1(y)
    c = NUM_INIT_FEATURES
    for b, n_layers in enumerate(BLOCK_CONFIG):
        y, c = _dense_block(y, params, b, n_layers, c)
        if b != len(BLOCK_CONFIG) - 1:
            y = _transition(y, params[f"trans{b}"], c)
            c = c // 2
    return y, c   # lane-padded NHWC features + valid channel count (norm5 folded into FC)


def _classifier(x, params, c_valid):
    """norm5 + NCHW Flatten + Linear, with norm5 and the layout permutation folded
    into the (tiny) FC weight so the big feature map is consumed as-is."""
    N, H, W, Cb = x.shape
    scale, shift = _bn_scale_shift(params["norm5"])        # (c_valid,)
    fc_w = params["fc_w"]                                  # (classes, c_valid*H*W), NCHW order
    fc_b = params["fc_b"]
    w_nchw = fc_w.reshape(NUM_CLASSES, c_valid, H, W)
    w_nhwc = jnp.transpose(w_nchw, (0, 2, 3, 1)) * scale[None, None, None, :]
    w_nhwc = jnp.pad(w_nhwc, ((0, 0), (0, 0), (0, 0), (0, Cb - c_valid)))
    w2 = w_nhwc.reshape(NUM_CLASSES, H * W * Cb).T
    b_eff = fc_b + jnp.einsum("ochw,c->o", w_nchw, shift)  # fold norm5 shift into bias
    a = x.reshape(N, H * W * Cb)                           # free reshape, K already 128-aligned
    return pallas_matmul(a, w2, bias=b_eff, out_dtype=jnp.float32, tk_max=2048)


@jax.jit
def densenet121_combine_forward(x_nchw, params):
    x = jnp.transpose(x_nchw, (0, 2, 3, 1)).astype(jnp.bfloat16)   # NCHW -> NHWC
    feats, c_valid = densenet_features(x, params)
    return _classifier(feats, params, c_valid)


# ---------------------------------------------------------------------------
# Deterministic parameter init (pretrained weights are not loadable here)
# ---------------------------------------------------------------------------
def init_params(key, in_h, in_w):
    keys = iter(jax.random.split(key, 512))

    def nk():
        return next(keys)

    def conv_w(cout, cin, kh, kw):
        return 0.1 * jax.random.normal(nk(), (cout, cin, kh, kw), jnp.float32)

    def bn(c):
        gamma = 1.0 + 0.1 * jax.random.normal(nk(), (c,), jnp.float32)
        beta = 0.1 * jax.random.normal(nk(), (c,), jnp.float32)
        mean = 0.1 * jax.random.normal(nk(), (c,), jnp.float32)
        var = 1.0 + 0.1 * jnp.abs(jax.random.normal(nk(), (c,), jnp.float32))
        return (gamma, beta, mean, var)

    params = {}
    params["conv0"] = conv_w(NUM_INIT_FEATURES, 3, 7, 7)
    params["norm0"] = bn(NUM_INIT_FEATURES)

    c = NUM_INIT_FEATURES
    h = (in_h + 6 - 7) // 2 + 1
    w = (in_w + 6 - 7) // 2 + 1
    h = (h + 2 - 3) // 2 + 1
    w = (w + 2 - 3) // 2 + 1

    for b, n_layers in enumerate(BLOCK_CONFIG):
        for l in range(n_layers):
            cin = c + l * GROWTH_RATE
            params[f"block{b}_layer{l}"] = {
                "norm1": bn(cin),
                "conv1": conv_w(BN_SIZE * GROWTH_RATE, cin, 1, 1),
                "norm2": bn(BN_SIZE * GROWTH_RATE),
                "conv2": conv_w(GROWTH_RATE, BN_SIZE * GROWTH_RATE, 3, 3),
            }
        c = c + n_layers * GROWTH_RATE
        if b != len(BLOCK_CONFIG) - 1:
            params[f"trans{b}"] = {"norm": bn(c), "conv": conv_w(c // 2, c, 1, 1)}
            c = c // 2
            h, w = h // 2, w // 2

    params["norm5"] = bn(c)
    last_node = c * h * w
    params["fc_w"] = 0.05 * jax.random.normal(nk(), (NUM_CLASSES, last_node),
                                              jnp.float32)
    params["fc_b"] = 0.05 * jax.random.normal(nk(), (NUM_CLASSES,), jnp.float32)
    return params, last_node


if __name__ == "__main__":
    key = jax.random.PRNGKey(0)
    k_param, k_x = jax.random.split(key)

    B, C_IN, H_IN, W_IN = 2, 3, 32, 32
    x = jax.random.normal(k_x, (B, C_IN, H_IN, W_IN), jnp.float32)

    params, last_node = init_params(k_param, H_IN, W_IN)

    out = densenet121_combine_forward(x, params)
    out = jax.block_until_ready(out)

    assert out.shape == (B, NUM_CLASSES), out.shape
    assert bool(jnp.all(jnp.isfinite(out)))
    print("KERNEL_OK")
</pallas_src>

<mosaic_0001>
module attributes {stable_mosaic.version = 11 : i64} {
  func.func @_mm_kernel(%arg0: i32, %arg1: i32, %arg2: i32, %arg3: memref<512x256xbf16, #tpu.memory_space<vmem>>, %arg4: memref<256x128xbf16, #tpu.memory_space<vmem>>, %arg5: memref<1x256xf32, #tpu.memory_space<vmem>>, %arg6: memref<1x256xf32, #tpu.memory_space<vmem>>, %arg7: memref<1x128xf32, #tpu.memory_space<vmem>>, %arg8: memref<1x128xf32, #tpu.memory_space<vmem>>, %arg9: memref<512x128xbf16, #tpu.memory_space<vmem>>, %arg10: memref<512x128xf32, #tpu.memory_space<vmem>>) attributes {dimension_semantics = [#tpu.dimension_semantics<parallel>, #tpu.dimension_semantics<parallel>, #tpu.dimension_semantics<arbitrary>], iteration_bounds = array<i64: 1, 1, 1>, scalar_prefetch = 0 : i64, scratch_operands = 1 : i64, tpu.core_type = #tpu.core_type<tc>, window_params = [{transform_indices = @transform_0, window_bounds = array<i64: 512, 256>}, {transform_indices = @transform_1, window_bounds = array<i64: 256, 128>}, {transform_indices = @transform_2, window_bounds = array<i64: 1, 256>}, {transform_indices = @transform_3, window_bounds = array<i64: 1, 256>}, {transform_indices = @transform_4, window_bounds = array<i64: 1, 128>}, {transform_indices = @transform_5, window_bounds = array<i64: 1, 128>}, {transform_indices = @transform_6, window_bounds = array<i64: 512, 128>}]} {
    %c0_i32 = arith.constant 0 : i32
    %0 = arith.cmpi eq, %arg2, %c0_i32 : i32
    %1 = arith.extui %0 : i1 to i32
    %c0_i32_0 = arith.constant 0 : i32
    %2 = arith.cmpi ne, %1, %c0_i32_0 : i32
    scf.if %2 {
      %cst_10 = arith.constant 0.000000e+00 : f32
      %12 = vector.broadcast %cst_10 : f32 to vector<512x128xf32>
      %c0_11 = arith.constant 0 : index
      %c0_12 = arith.constant 0 : index
      %13 = vector.load %arg10[%c0_11, %c0_12] : memref<512x128xf32, #tpu.memory_space<vmem>>, vector<512x128xf32>
      tpu.vector_store %arg10[%c0_11, %c0_12], %12 {strides = array<i32>} : memref<512x128xf32, #tpu.memory_space<vmem>>, vector<512x128xf32>,
    } else {
    }
    %c0 = arith.constant 0 : index
    %c0_1 = arith.constant 0 : index
    %3 = vector.load %arg3[%c0, %c0_1] : memref<512x256xbf16, #tpu.memory_space<vmem>>, vector<512x256xbf16>
    %c0_2 = arith.constant 0 : index
    %c0_3 = arith.constant 0 : index
    %4 = vector.load %arg10[%c0_2, %c0_3] : memref<512x128xf32, #tpu.memory_space<vmem>>, vector<512x128xf32>
    %c0_4 = arith.constant 0 : index
    %c0_5 = arith.constant 0 : index
    %5 = vector.load %arg4[%c0_4, %c0_5] : memref<256x128xbf16, #tpu.memory_space<vmem>>, vector<256x128xbf16>
    %cst = arith.constant dense<0.000000e+00> : vector<512x128xf32>
    %6 = tpu.matmul %3, %5, %cst {dimension_numbers = #tpu.dot_dimension_numbers<[1], [0], [0], [1], [0, 0, 1, 1], [], []>} : vector<512x256xbf16>, vector<256x128xbf16>, vector<512x128xf32> -> vector<512x128xf32>
    %7 = arith.addf %4, %6 : vector<512x128xf32>
    %c0_6 = arith.constant 0 : index
    %c0_7 = arith.constant 0 : index
    %8 = vector.load %arg10[%c0_6, %c0_7] : memref<512x128xf32, #tpu.memory_space<vmem>>, vector<512x128xf32>
    tpu.vector_store %arg10[%c0_6, %c0_7], %7 {strides = array<i32>} : memref<512x128xf32, #tpu.memory_space<vmem>>, vector<512x128xf32>,
    %c0_i32_8 = arith.constant 0 : i32
    %9 = arith.cmpi eq, %arg2, %c0_i32_8 : i32
    %10 = arith.extui %9 : i1 to i32
    %c0_i32_9 = arith.constant 0 : i32
    %11 = arith.cmpi ne, %10, %c0_i32_9 : i32
    scf.if %11 {
      %c0_10 = arith.constant 0 : index
      %c0_11 = arith.constant 0 : index
      %12 = vector.load %arg10[%c0_10, %c0_11] : memref<512x128xf32, #tpu.memory_space<vmem>>, vector<512x128xf32>
      %c0_12 = arith.constant 0 : index
      %c0_13 = arith.constant 0 : index
      %13 = vector.load %arg7[%c0_12, %c0_13] : memref<1x128xf32, #tpu.memory_space<vmem>>, vector<1x128xf32>
      %14 = vector.broadcast %13 : vector<1x128xf32> to vector<512x128xf32>
      %15 = arith.mulf %12, %14 : vector<512x128xf32>
      %c0_14 = arith.constant 0 : index
      %c0_15 = arith.constant 0 : index
      %16 = vector.load %arg8[%c0_14, %c0_15] : memref<1x128xf32, #tpu.memory_space<vmem>>, vector<1x128xf32>
      %17 = vector.broadcast %16 : vector<1x128xf32> to vector<512x128xf32>
      %18 = arith.addf %15, %17 : vector<512x128xf32>
      %cst_16 = arith.constant 0.000000e+00 : f32
      %19 = vector.broadcast %cst_16 : f32 to vector<512x128xf32>
      %20 = arith.maximumf %18, %19 : vector<512x128xf32>
      %21 = arith.truncf %20 : vector<512x128xf32> to vector<512x128xbf16>
      %c0_17 = arith.constant 0 : index
      %c0_18 = arith.constant 0 : index
      %22 = vector.load %arg9[%c0_17, %c0_18] : memref<512x128xbf16, #tpu.memory_space<vmem>>, vector<512x128xbf16>
      tpu.vector_store %arg9[%c0_17, %c0_18], %21 {strides = array<i32>} : memref<512x128xbf16, #tpu.memory_space<vmem>>, vector<512x128xbf16>,
    } else {
    }
    return
  }
  func.func @transform_0(%arg0: i32, %arg1: i32, %arg2: i32) -> (i32, i32) {
    %c0_i32 = arith.constant 0 : i32
    return %arg0, %arg2 : i32, i32
  }
  func.func @transform_1(%arg0: i32, %arg1: i32, %arg2: i32) -> (i32, i32) {
    %c0_i32 = arith.constant 0 : i32
    return %arg2, %arg1 : i32, i32
  }
  func.func @transform_2(%arg0: i32, %arg1: i32, %arg2: i32) -> (i32, i32) {
    %c0_i32 = arith.constant 0 : i32
    %c0_i32_0 = arith.constant 0 : i32
    return %c0_i32, %arg2 : i32, i32
  }
  func.func @transform_3(%arg0: i32, %arg1: i32, %arg2: i32) -> (i32, i32) {
    %c0_i32 = arith.constant 0 : i32
    %c0_i32_0 = arith.constant 0 : i32
    return %c0_i32, %arg2 : i32, i32
  }
  func.func @transform_4(%arg0: i32, %arg1: i32, %arg2: i32) -> (i32, i32) {
    %c0_i32 = arith.constant 0 : i32
    %c0_i32_0 = arith.constant 0 : i32
    return %c0_i32, %arg1 : i32, i32
  }
  func.func @transform_5(%arg0: i32, %arg1: i32, %arg2: i32) -> (i32, i32) {
    %c0_i32 = arith.constant 0 : i32
    %c0_i32_0 = arith.constant 0 : i32
    return %c0_i32, %arg1 : i32, i32
  }
  func.func @transform_6(%arg0: i32, %arg1: i32, %arg2: i32) -> (i32, i32) {
    %c0_i32 = arith.constant 0 : i32
    return %arg0, %arg1 : i32, i32
  }
}

module attributes {stable_mosaic.version = 11 : i64} {
  func.func @_window_reduce_kernel(%arg0: i32, %arg1: memref<9x128x16xbf16, #tpu.memory_space<vmem>>, %arg2: memref<128x16xbf16, #tpu.memory_space<vmem>>) attributes {dimension_semantics = [#tpu.dimension_semantics<parallel>], iteration_bounds = array<i64: 1>, scalar_prefetch = 0 : i64, scratch_operands = 0 : i64, tpu.core_type = #tpu.core_type<tc>, window_params = [{transform_indices = @transform_0, window_bounds = array<i64: 9, 128, 16>}, {transform_indices = @transform_1, window_bounds = array<i64: 128, 16>}]} {
    %c0 = arith.constant 0 : index
    %c0_0 = arith.constant 0 : index
    %c0_1 = arith.constant 0 : index
    %0 = vector.load %arg1[%c0, %c0_0, %c0_1] : memref<9x128x16xbf16, #tpu.memory_space<vmem>>, vector<1x128x16xbf16>
    %1 = vector.shape_cast %0 : vector<1x128x16xbf16> to vector<128x16xbf16>
    %c1 = arith.constant 1 : index
    %c0_2 = arith.constant 0 : index
    %c0_3 = arith.constant 0 : index
    %2 = vector.load %arg1[%c1, %c0_2, %c0_3] : memref<9x128x16xbf16, #tpu.memory_space<vmem>>, vector<1x128x16xbf16>
    %3 = vector.shape_cast %2 : vector<1x128x16xbf16> to vector<128x16xbf16>
    %4 = arith.maximumf %1, %3 : vector<128x16xbf16>
    %c2 = arith.constant 2 : index
    %c0_4 = arith.constant 0 : index
    %c0_5 = arith.constant 0 : index
    %5 = vector.load %arg1[%c2, %c0_4, %c0_5] : memref<9x128x16xbf16, #tpu.memory_space<vmem>>, vector<1x128x16xbf16>
    %6 = vector.shape_cast %5 : vector<1x128x16xbf16> to vector<128x16xbf16>
    %7 = arith.maximumf %4, %6 : vector<128x16xbf16>
    %c3 = arith.constant 3 : index
    %c0_6 = arith.constant 0 : index
    %c0_7 = arith.constant 0 : index
    %8 = vector.load %arg1[%c3, %c0_6, %c0_7] : memref<9x128x16xbf16, #tpu.memory_space<vmem>>, vector<1x128x16xbf16>
    %9 = vector.shape_cast %8 : vector<1x128x16xbf16> to vector<128x16xbf16>
    %10 = arith.maximumf %7, %9 : vector<128x16xbf16>
    %c4 = arith.constant 4 : index
    %c0_8 = arith.constant 0 : index
    %c0_9 = arith.constant 0 : index
    %11 = vector.load %arg1[%c4, %c0_8, %c0_9] : memref<9x128x16xbf16, #tpu.memory_space<vmem>>, vector<1x128x16xbf16>
    %12 = vector.shape_cast %11 : vector<1x128x16xbf16> to vector<128x16xbf16>
    %13 = arith.maximumf %10, %12 : vector<128x16xbf16>
    %c5 = arith.constant 5 : index
    %c0_10 = arith.constant 0 : index
    %c0_11 = arith.constant 0 : index
    %14 = vector.load %arg1[%c5, %c0_10, %c0_11] : memref<9x128x16xbf16, #tpu.memory_space<vmem>>, vector<1x128x16xbf16>
    %15 = vector.shape_cast %14 : vector<1x128x16xbf16> to vector<128x16xbf16>
    %16 = arith.maximumf %13, %15 : vector<128x16xbf16>
    %c6 = arith.constant 6 : index
    %c0_12 = arith.constant 0 : index
    %c0_13 = arith.constant 0 : index
    %17 = vector.load %arg1[%c6, %c0_12, %c0_13] : memref<9x128x16xbf16, #tpu.memory_space<vmem>>, vector<1x128x16xbf16>
    %18 = vector.shape_cast %17 : vector<1x128x16xbf16> to vector<128x16xbf16>
    %19 = arith.maximumf %16, %18 : vector<128x16xbf16>
    %c7 = arith.constant 7 : index
    %c0_14 = arith.constant 0 : index
    %c0_15 = arith.constant 0 : index
    %20 = vector.load %arg1[%c7, %c0_14, %c0_15] : memref<9x128x16xbf16, #tpu.memory_space<vmem>>, vector<1x128x16xbf16>
    %21 = vector.shape_cast %20 : vector<1x128x16xbf16> to vector<128x16xbf16>
    %22 = arith.maximumf %19, %21 : vector<128x16xbf16>
    %c8 = arith.constant 8 : index
    %c0_16 = arith.constant 0 : index
    %c0_17 = arith.constant 0 : index
    %23 = vector.load %arg1[%c8, %c0_16, %c0_17] : memref<9x128x16xbf16, #tpu.memory_space<vmem>>, vector<1x128x16xbf16>
    %24 = vector.shape_cast %23 : vector<1x128x16xbf16> to vector<128x16xbf16>
    %25 = arith.maximumf %22, %24 : vector<128x16xbf16>
    %c0_18 = arith.constant 0 : index
    %c0_19 = arith.constant 0 : index
    %26 = vector.load %arg2[%c0_18, %c0_19] : memref<128x16xbf16, #tpu.memory_space<vmem>>, vector<128x16xbf16>
    tpu.vector_store %arg2[%c0_18, %c0_19], %25 {strides = array<i32>} : memref<128x16xbf16, #tpu.memory_space<vmem>>, vector<128x16xbf16>,
    return
  }
  func.func @transform_0(%arg0: i32) -> (i32, i32, i32) {
    %c0_i32 = arith.constant 0 : i32
    %c0_i32_0 = arith.constant 0 : i32
    %c0_i32_1 = arith.constant 0 : i32
    return %c0_i32, %arg0, %c0_i32_0 : i32, i32, i32
  }
  func.func @transform_1(%arg0: i32) -> (i32, i32) {
    %c0_i32 = arith.constant 0 : i32
    %c0_i32_0 = arith.constant 0 : i32
    return %arg0, %c0_i32 : i32, i32
  }
}

module attributes {stable_mosaic.version = 11 : i64} {
  func.func @_mm_kernel(%arg0: i32, %arg1: i32, %arg2: i32, %arg3: memref<128x128xbf16, #tpu.memory_space<vmem>>, %arg4: memref<128x128xbf16, #tpu.memory_space<vmem>>, %arg5: memref<1x128xf32, #tpu.memory_space<vmem>>, %arg6: memref<1x128xf32, #tpu.memory_space<vmem>>, %arg7: memref<1x128xf32, #tpu.memory_space<vmem>>, %arg8: memref<1x128xf32, #tpu.memory_space<vmem>>, %arg9: memref<128x128xbf16, #tpu.memory_space<vmem>>, %arg10: memref<128x128xf32, #tpu.memory_space<vmem>>) attributes {dimension_semantics = [#tpu.dimension_semantics<parallel>, #tpu.dimension_semantics<parallel>, #tpu.dimension_semantics<arbitrary>], iteration_bounds = array<i64: 1, 1, 1>, scalar_prefetch = 0 : i64, scratch_operands = 1 : i64, tpu.core_type = #tpu.core_type<tc>, window_params = [{transform_indices = @transform_0, window_bounds = array<i64: 128, 128>}, {transform_indices = @transform_1, window_bounds = array<i64: 128, 128>}, {transform_indices = @transform_2, window_bounds = array<i64: 1, 128>}, {transform_indices = @transform_3, window_bounds = array<i64: 1, 128>}, {transform_indices = @transform_4, window_bounds = array<i64: 1, 128>}, {transform_indices = @transform_5, window_bounds = array<i64: 1, 128>}, {transform_indices = @transform_6, window_bounds = array<i64: 128, 128>}]} {
    %c0_i32 = arith.constant 0 : i32
    %0 = arith.cmpi eq, %arg2, %c0_i32 : i32
    %1 = arith.extui %0 : i1 to i32
    %c0_i32_0 = arith.constant 0 : i32
    %2 = arith.cmpi ne, %1, %c0_i32_0 : i32
    scf.if %2 {
      %cst_15 = arith.constant 0.000000e+00 : f32
      %22 = vector.broadcast %cst_15 : f32 to vector<128x128xf32>
      %c0_16 = arith.constant 0 : index
      %c0_17 = arith.constant 0 : index
      %23 = vector.load %arg10[%c0_16, %c0_17] : memref<128x128xf32, #tpu.memory_space<vmem>>, vector<128x128xf32>
      tpu.vector_store %arg10[%c0_16, %c0_17], %22 {strides = array<i32>} : memref<128x128xf32, #tpu.memory_space<vmem>>, vector<128x128xf32>,
    } else {
    }
    %c0 = arith.constant 0 : index
    %c0_1 = arith.constant 0 : index
    %3 = vector.load %arg3[%c0, %c0_1] : memref<128x128xbf16, #tpu.memory_space<vmem>>, vector<128x128xbf16>
    %4 = arith.extf %3 : vector<128x128xbf16> to vector<128x128xf32>
    %c0_2 = arith.constant 0 : index
    %c0_3 = arith.constant 0 : index
    %5 = vector.load %arg5[%c0_2, %c0_3] : memref<1x128xf32, #tpu.memory_space<vmem>>, vector<1x128xf32>
    %6 = vector.broadcast %5 : vector<1x128xf32> to vector<128x128xf32>
    %7 = arith.mulf %4, %6 : vector<128x128xf32>
    %c0_4 = arith.constant 0 : index
    %c0_5 = arith.constant 0 : index
    %8 = vector.load %arg6[%c0_4, %c0_5] : memref<1x128xf32, #tpu.memory_space<vmem>>, vector<1x128xf32>
    %9 = vector.broadcast %8 : vector<1x128xf32> to vector<128x128xf32>
    %10 = arith.addf %7, %9 : vector<128x128xf32>
    %cst = arith.constant 0.000000e+00 : f32
    %11 = vector.broadcast %cst : f32 to vector<128x128xf32>
    %12 = arith.maximumf %10, %11 : vector<128x128xf32>
    %13 = arith.truncf %12 : vector<128x128xf32> to vector<128x128xbf16>
    %c0_6 = arith.constant 0 : index
    %c0_7 = arith.constant 0 : index
    %14 = vector.load %arg10[%c0_6, %c0_7] : memref<128x128xf32, #tpu.memory_space<vmem>>, vector<128x128xf32>
    %c0_8 = arith.constant 0 : index
    %c0_9 = arith.constant 0 : index
    %15 = vector.load %arg4[%c0_8, %c0_9] : memref<128x128xbf16, #tpu.memory_space<vmem>>, vector<128x128xbf16>
    %cst_10 = arith.constant dense<0.000000e+00> : vector<128x128xf32>
    %16 = tpu.matmul %13, %15, %cst_10 {dimension_numbers = #tpu.dot_dimension_numbers<[1], [0], [0], [1], [0, 0, 1, 1], [], []>} : vector<128x128xbf16>, vector<128x128xbf16>, vector<128x128xf32> -> vector<128x128xf32>
    %17 = arith.addf %14, %16 : vector<128x128xf32>
    %c0_11 = arith.constant 0 : index
    %c0_12 = arith.constant 0 : index
    %18 = vector.load %arg10[%c0_11, %c0_12] : memref<128x128xf32, #tpu.memory_space<vmem>>, vector<128x128xf32>
    tpu.vector_store %arg10[%c0_11, %c0_12], %17 {strides = array<i32>} : memref<128x128xf32, #tpu.memory_space<vmem>>, vector<128x128xf32>,
    %c0_i32_13 = arith.constant 0 : i32
    %19 = arith.cmpi eq, %arg2, %c0_i32_13 : i32
    %20 = arith.extui %19 : i1 to i32
    %c0_i32_14 = arith.constant 0 : i32
    %21 = arith.cmpi ne, %20, %c0_i32_14 : i32
    scf.if %21 {
      %c0_15 = arith.constant 0 : index
      %c0_16 = arith.constant 0 : index
      %22 = vector.load %arg10[%c0_15, %c0_16] : memref<128x128xf32, #tpu.memory_space<vmem>>, vector<128x128xf32>
      %c0_17 = arith.constant 0 : index
      %c0_18 = arith.constant 0 : index
      %23 = vector.load %arg7[%c0_17, %c0_18] : memref<1x128xf32, #tpu.memory_space<vmem>>, vector<1x128xf32>
      %24 = vector.broadcast %23 : vector<1x128xf32> to vector<128x128xf32>
      %25 = arith.mulf %22, %24 : vector<128x128xf32>
      %c0_19 = arith.constant 0 : index
      %c0_20 = arith.constant 0 : index
      %26 = vector.load %arg8[%c0_19, %c0_20] : memref<1x128xf32, #tpu.memory_space<vmem>>, vector<1x128xf32>
      %27 = vector.broadcast %26 : vector<1x128xf32> to vector<128x128xf32>
      %28 = arith.addf %25, %27 : vector<128x128xf32>
      %cst_21 = arith.constant 0.000000e+00 : f32
      %29 = vector.broadcast %cst_21 : f32 to vector<128x128xf32>
      %30 = arith.maximumf %28, %29 : vector<128x128xf32>
      %31 = arith.truncf %30 : vector<128x128xf32> to vector<128x128xbf16>
      %c0_22 = arith.constant 0 : index
      %c0_23 = arith.constant 0 : index
      %32 = vector.load %arg9[%c0_22, %c0_23] : memref<128x128xbf16, #tpu.memory_space<vmem>>, vector<128x128xbf16>
      tpu.vector_store %arg9[%c0_22, %c0_23], %31 {strides = array<i32>} : memref<128x128xbf16, #tpu.memory_space<vmem>>, vector<128x128xbf16>,
    } else {
    }
    return
  }
  func.func @transform_0(%arg0: i32, %arg1: i32, %arg2: i32) -> (i32, i32) {
    %c0_i32 = arith.constant 0 : i32
    return %arg0, %arg2 : i32, i32
  }
  func.func @transform_1(%arg0: i32, %arg1: i32, %arg2: i32) -> (i32, i32) {
    %c0_i32 = arith.constant 0 : i32
    return %arg2, %arg1 : i32, i32
  }
  func.func @transform_2(%arg0: i32, %arg1: i32, %arg2: i32) -> (i32, i32) {
    %c0_i32 = arith.constant 0 : i32
    %c0_i32_0 = arith.constant 0 : i32
    return %c0_i32, %arg2 : i32, i32
  }
  func.func @transform_3(%arg0: i32, %arg1: i32, %arg2: i32) -> (i32, i32) {
    %c0_i32 = arith.constant 0 : i32
    %c0_i32_0 = arith.constant 0 : i32
    return %c0_i32, %arg2 : i32, i32
  }
  func.func @transform_4(%arg0: i32, %arg1: i32, %arg2: i32) -> (i32, i32) {
    %c0_i32 = arith.constant 0 : i32
    %c0_i32_0 = arith.constant 0 : i32
    return %c0_i32, %arg1 : i32, i32
  }
  func.func @transform_5(%arg0: i32, %arg1: i32, %arg2: i32) -> (i32, i32) {
    %c0_i32 = arith.constant 0 : i32
    %c0_i32_0 = arith.constant 0 : i32
    return %c0_i32, %arg1 : i32, i32
  }
  func.func @transform_6(%arg0: i32, %arg1: i32, %arg2: i32) -> (i32, i32) {
    %c0_i32 = arith.constant 0 : i32
    return %arg0, %arg1 : i32, i32
  }
}

module attributes {stable_mosaic.version = 11 : i64} {
  func.func @_mm_kernel(%arg0: i32, %arg1: i32, %arg2: i32, %arg3: memref<128x384xbf16, #tpu.memory_space<vmem>>, %arg4: memref<384x128xbf16, #tpu.memory_space<vmem>>, %arg5: memref<1x384xf32, #tpu.memory_space<vmem>>, %arg6: memref<1x384xf32, #tpu.memory_space<vmem>>, %arg7: memref<1x128xf32, #tpu.memory_space<vmem>>, %arg8: memref<1x128xf32, #tpu.memory_space<vmem>>, %arg9: memref<128x128xbf16, #tpu.memory_space<vmem>>, %arg10: memref<128x128xf32, #tpu.memory_space<vmem>>) attributes {dimension_semantics = [#tpu.dimension_semantics<parallel>, #tpu.dimension_semantics<parallel>, #tpu.dimension_semantics<arbitrary>], iteration_bounds = array<i64: 1, 1, 1>, scalar_prefetch = 0 : i64, scratch_operands = 1 : i64, tpu.core_type = #tpu.core_type<tc>, window_params = [{transform_indices = @transform_0, window_bounds = array<i64: 128, 384>}, {transform_indices = @transform_1, window_bounds = array<i64: 384, 128>}, {transform_indices = @transform_2, window_bounds = array<i64: 1, 384>}, {transform_indices = @transform_3, window_bounds = array<i64: 1, 384>}, {transform_indices = @transform_4, window_bounds = array<i64: 1, 128>}, {transform_indices = @transform_5, window_bounds = array<i64: 1, 128>}, {transform_indices = @transform_6, window_bounds = array<i64: 128, 128>}]} {
    %c0_i32 = arith.constant 0 : i32
    %0 = arith.cmpi eq, %arg2, %c0_i32 : i32
    %1 = arith.extui %0 : i1 to i32
    %c0_i32_0 = arith.constant 0 : i32
    %2 = arith.cmpi ne, %1, %c0_i32_0 : i32
    scf.if %2 {
      %cst_10 = arith.constant 0.000000e+00 : f32
      %12 = vector.broadcast %cst_10 : f32 to vector<128x128xf32>
      %c0_11 = arith.constant 0 : index
      %c0_12 = arith.constant 0 : index
      %13 = vector.load %arg10[%c0_11, %c0_12] : memref<128x128xf32, #tpu.memory_space<vmem>>, vector<128x128xf32>
      tpu.vector_store %arg10[%c0_11, %c0_12], %12 {strides = array<i32>} : memref<128x128xf32, #tpu.memory_space<vmem>>, vector<128x128xf32>,
    } else {
    }
    %c0 = arith.constant 0 : index
    %c0_1 = arith.constant 0 : index
    %3 = vector.load %arg3[%c0, %c0_1] : memref<128x384xbf16, #tpu.memory_space<vmem>>, vector<128x384xbf16>
    %c0_2 = arith.constant 0 : index
    %c0_3 = arith.constant 0 : index
    %4 = vector.load %arg10[%c0_2, %c0_3] : memref<128x128xf32, #tpu.memory_space<vmem>>, vector<128x128xf32>
    %c0_4 = arith.constant 0 : index
    %c0_5 = arith.constant 0 : index
    %5 = vector.load %arg4[%c0_4, %c0_5] : memref<384x128xbf16, #tpu.memory_space<vmem>>, vector<384x128xbf16>
    %cst = arith.constant dense<0.000000e+00> : vector<128x128xf32>
    %6 = tpu.matmul %3, %5, %cst {dimension_numbers = #tpu.dot_dimension_numbers<[1], [0], [0], [1], [0, 0, 1, 1], [], []>} : vector<128x384xbf16>, vector<384x128xbf16>, vector<128x128xf32> -> vector<128x128xf32>
    %7 = arith.addf %4, %6 : vector<128x128xf32>
    %c0_6 = arith.constant 0 : index
    %c0_7 = arith.constant 0 : index
    %8 = vector.load %arg10[%c0_6, %c0_7] : memref<128x128xf32, #tpu.memory_space<vmem>>, vector<128x128xf32>
    tpu.vector_store %arg10[%c0_6, %c0_7], %7 {strides = array<i32>} : memref<128x128xf32, #tpu.memory_space<vmem>>, vector<128x128xf32>,
    %c0_i32_8 = arith.constant 0 : i32
    %9 = arith.cmpi eq, %arg2, %c0_i32_8 : i32
    %10 = arith.extui %9 : i1 to i32
    %c0_i32_9 = arith.constant 0 : i32
    %11 = arith.cmpi ne, %10, %c0_i32_9 : i32
    scf.if %11 {
      %c0_10 = arith.constant 0 : index
      %c0_11 = arith.constant 0 : index
      %12 = vector.load %arg10[%c0_10, %c0_11] : memref<128x128xf32, #tpu.memory_space<vmem>>, vector<128x128xf32>
      %c0_12 = arith.constant 0 : index
      %c0_13 = arith.constant 0 : index
      %13 = vector.load %arg7[%c0_12, %c0_13] : memref<1x128xf32, #tpu.memory_space<vmem>>, vector<1x128xf32>
      %14 = vector.broadcast %13 : vector<1x128xf32> to vector<128x128xf32>
      %15 = arith.mulf %12, %14 : vector<128x128xf32>
      %c0_14 = arith.constant 0 : index
      %c0_15 = arith.constant 0 : index
      %16 = vector.load %arg8[%c0_14, %c0_15] : memref<1x128xf32, #tpu.memory_space<vmem>>, vector<1x128xf32>
      %17 = vector.broadcast %16 : vector<1x128xf32> to vector<128x128xf32>
      %18 = arith.addf %15, %17 : vector<128x128xf32>
      %19 = arith.truncf %18 : vector<128x128xf32> to vector<128x128xbf16>
      %c0_16 = arith.constant 0 : index
      %c0_17 = arith.constant 0 : index
      %20 = vector.load %arg9[%c0_16, %c0_17] : memref<128x128xbf16, #tpu.memory_space<vmem>>, vector<128x128xbf16>
      tpu.vector_store %arg9[%c0_16, %c0_17], %19 {strides = array<i32>} : memref<128x128xbf16, #tpu.memory_space<vmem>>, vector<128x128xbf16>,
    } else {
    }
    return
  }
  func.func @transform_0(%arg0: i32, %arg1: i32, %arg2: i32) -> (i32, i32) {
    %c0_i32 = arith.constant 0 : i32
    return %arg0, %arg2 : i32, i32
  }
  func.func @transform_1(%arg0: i32, %arg1: i32, %arg2: i32) -> (i32, i32) {
    %c0_i32 = arith.constant 0 : i32
    return %arg2, %arg1 : i32, i32
  }
  func.func @transform_2(%arg0: i32, %arg1: i32, %arg2: i32) -> (i32, i32) {
    %c0_i32 = arith.constant 0 : i32
    %c0_i32_0 = arith.constant 0 : i32
    return %c0_i32, %arg2 : i32, i32
  }
  func.func @transform_3(%arg0: i32, %arg1: i32, %arg2: i32) -> (i32, i32) {
    %c0_i32 = arith.constant 0 : i32
    %c0_i32_0 = arith.constant 0 : i32
    return %c0_i32, %arg2 : i32, i32
  }
  func.func @transform_4(%arg0: i32, %arg1: i32, %arg2: i32) -> (i32, i32) {
    %c0_i32 = arith.constant 0 : i32
    %c0_i32_0 = arith.constant 0 : i32
    return %c0_i32, %arg1 : i32, i32
  }
  func.func @transform_5(%arg0: i32, %arg1: i32, %arg2: i32) -> (i32, i32) {
    %c0_i32 = arith.constant 0 : i32
    %c0_i32_0 = arith.constant 0 : i32
    return %c0_i32, %arg1 : i32, i32
  }
  func.func @transform_6(%arg0: i32, %arg1: i32, %arg2: i32) -> (i32, i32) {
    %c0_i32 = arith.constant 0 : i32
    return %arg0, %arg1 : i32, i32
  }
}

module attributes {stable_mosaic.version = 11 : i64} {
  func.func @_mm_kernel(%arg0: i32, %arg1: i32, %arg2: i32, %arg3: memref<128x128xbf16, #tpu.memory_space<vmem>>, %arg4: memref<128x128xbf16, #tpu.memory_space<vmem>>, %arg5: memref<1x128xf32, #tpu.memory_space<vmem>>, %arg6: memref<1x128xf32, #tpu.memory_space<vmem>>, %arg7: memref<1x128xf32, #tpu.memory_space<vmem>>, %arg8: memref<1x128xf32, #tpu.memory_space<vmem>>, %arg9: memref<128x128xbf16, #tpu.memory_space<vmem>>, %arg10: memref<128x128xf32, #tpu.memory_space<vmem>>) attributes {dimension_semantics = [#tpu.dimension_semantics<parallel>, #tpu.dimension_semantics<parallel>, #tpu.dimension_semantics<arbitrary>], iteration_bounds = array<i64: 1, 1, 1>, scalar_prefetch = 0 : i64, scratch_operands = 1 : i64, tpu.core_type = #tpu.core_type<tc>, window_params = [{transform_indices = @transform_0, window_bounds = array<i64: 128, 128>}, {transform_indices = @transform_1, window_bounds = array<i64: 128, 128>}, {transform_indices = @transform_2, window_bounds = array<i64: 1, 128>}, {transform_indices = @transform_3, window_bounds = array<i64: 1, 128>}, {transform_indices = @transform_4, window_bounds = array<i64: 1, 128>}, {transform_indices = @transform_5, window_bounds = array<i64: 1, 128>}, {transform_indices = @transform_6, window_bounds = array<i64: 128, 128>}]} {
    %c0_i32 = arith.constant 0 : i32
    %0 = arith.cmpi eq, %arg2, %c0_i32 : i32
    %1 = arith.extui %0 : i1 to i32
    %c0_i32_0 = arith.constant 0 : i32
    %2 = arith.cmpi ne, %1, %c0_i32_0 : i32
    scf.if %2 {
      %cst_15 = arith.constant 0.000000e+00 : f32
      %22 = vector.broadcast %cst_15 : f32 to vector<128x128xf32>
      %c0_16 = arith.constant 0 : index
      %c0_17 = arith.constant 0 : index
      %23 = vector.load %arg10[%c0_16, %c0_17] : memref<128x128xf32, #tpu.memory_space<vmem>>, vector<128x128xf32>
      tpu.vector_store %arg10[%c0_16, %c0_17], %22 {strides = array<i32>} : memref<128x128xf32, #tpu.memory_space<vmem>>, vector<128x128xf32>,
    } else {
    }
    %c0 = arith.constant 0 : index
    %c0_1 = arith.constant 0 : index
    %3 = vector.load %arg3[%c0, %c0_1] : memref<128x128xbf16, #tpu.memory_space<vmem>>, vector<128x128xbf16>
    %4 = arith.extf %3 : vector<128x128xbf16> to vector<128x128xf32>
    %c0_2 = arith.constant 0 : index
    %c0_3 = arith.constant 0 : index
    %5 = vector.load %arg5[%c0_2, %c0_3] : memref<1x128xf32, #tpu.memory_space<vmem>>, vector<1x128xf32>
    %6 = vector.broadcast %5 : vector<1x128xf32> to vector<128x128xf32>
    %7 = arith.mulf %4, %6 : vector<128x128xf32>
    %c0_4 = arith.constant 0 : index
    %c0_5 = arith.constant 0 : index
    %8 = vector.load %arg6[%c0_4, %c0_5] : memref<1x128xf32, #tpu.memory_space<vmem>>, vector<1x128xf32>
    %9 = vector.broadcast %8 : vector<1x128xf32> to vector<128x128xf32>
    %10 = arith.addf %7, %9 : vector<128x128xf32>
    %cst = arith.constant 0.000000e+00 : f32
    %11 = vector.broadcast %cst : f32 to vector<128x128xf32>
    %12 = arith.maximumf %10, %11 : vector<128x128xf32>
    %13 = arith.truncf %12 : vector<128x128xf32> to vector<128x128xbf16>
    %c0_6 = arith.constant 0 : index
    %c0_7 = arith.constant 0 : index
    %14 = vector.load %arg10[%c0_6, %c0_7] : memref<128x128xf32, #tpu.memory_space<vmem>>, vector<128x128xf32>
    %c0_8 = arith.constant 0 : index
    %c0_9 = arith.constant 0 : index
    %15 = vector.load %arg4[%c0_8, %c0_9] : memref<128x128xbf16, #tpu.memory_space<vmem>>, vector<128x128xbf16>
    %cst_10 = arith.constant dense<0.000000e+00> : vector<128x128xf32>
    %16 = tpu.matmul %13, %15, %cst_10 {dimension_numbers = #tpu.dot_dimension_numbers<[1], [0], [0], [1], [0, 0, 1, 1], [], []>} : vector<128x128xbf16>, vector<128x128xbf16>, vector<128x128xf32> -> vector<128x128xf32>
    %17 = arith.addf %14, %16 : vector<128x128xf32>
    %c0_11 = arith.constant 0 : index
    %c0_12 = arith.constant 0 : index
    %18 = vector.load %arg10[%c0_11, %c0_12] : memref<128x128xf32, #tpu.memory_space<vmem>>, vector<128x128xf32>
    tpu.vector_store %arg10[%c0_11, %c0_12], %17 {strides = array<i32>} : memref<128x128xf32, #tpu.memory_space<vmem>>, vector<128x128xf32>,
    %c0_i32_13 = arith.constant 0 : i32
    %19 = arith.cmpi eq, %arg2, %c0_i32_13 : i32
    %20 = arith.extui %19 : i1 to i32
    %c0_i32_14 = arith.constant 0 : i32
    %21 = arith.cmpi ne, %20, %c0_i32_14 : i32
    scf.if %21 {
      %c0_15 = arith.constant 0 : index
      %c0_16 = arith.constant 0 : index
      %22 = vector.load %arg10[%c0_15, %c0_16] : memref<128x128xf32, #tpu.memory_space<vmem>>, vector<128x128xf32>
      %c0_17 = arith.constant 0 : index
      %c0_18 = arith.constant 0 : index
      %23 = vector.load %arg7[%c0_17, %c0_18] : memref<1x128xf32, #tpu.memory_space<vmem>>, vector<1x128xf32>
      %24 = vector.broadcast %23 : vector<1x128xf32> to vector<128x128xf32>
      %25 = arith.mulf %22, %24 : vector<128x128xf32>
      %c0_19 = arith.constant 0 : index
      %c0_20 = arith.constant 0 : index
      %26 = vector.load %arg8[%c0_19, %c0_20] : memref<1x128xf32, #tpu.memory_space<vmem>>, vector<1x128xf32>
      %27 = vector.broadcast %26 : vector<1x128xf32> to vector<128x128xf32>
      %28 = arith.addf %25, %27 : vector<128x128xf32>
      %29 = arith.truncf %28 : vector<128x128xf32> to vector<128x128xbf16>
      %c0_21 = arith.constant 0 : index
      %c0_22 = arith.constant 0 : index
      %30 = vector.load %arg9[%c0_21, %c0_22] : memref<128x128xbf16, #tpu.memory_space<vmem>>, vector<128x128xbf16>
      tpu.vector_store %arg9[%c0_21, %c0_22], %29 {strides = array<i32>} : memref<128x128xbf16, #tpu.memory_space<vmem>>, vector<128x128xbf16>,
    } else {
    }
    return
  }
  func.func @transform_0(%arg0: i32, %arg1: i32, %arg2: i32) -> (i32, i32) {
    %c0_i32 = arith.constant 0 : i32
    return %arg0, %arg2 : i32, i32
  }
  func.func @transform_1(%arg0: i32, %arg1: i32, %arg2: i32) -> (i32, i32) {
    %c0_i32 = arith.constant 0 : i32
    return %arg2, %arg1 : i32, i32
  }
  func.func @transform_2(%arg0: i32, %arg1: i32, %arg2: i32) -> (i32, i32) {
    %c0_i32 = arith.constant 0 : i32
    %c0_i32_0 = arith.constant 0 : i32
    return %c0_i32, %arg2 : i32, i32
  }
  func.func @transform_3(%arg0: i32, %arg1: i32, %arg2: i32) -> (i32, i32) {
    %c0_i32 = arith.constant 0 : i32
    %c0_i32_0 = arith.constant 0 : i32
    return %c0_i32, %arg2 : i32, i32
  }
  func.func @transform_4(%arg0: i32, %arg1: i32, %arg2: i32) -> (i32, i32) {
    %c0_i32 = arith.constant 0 : i32
    %c0_i32_0 = arith.constant 0 : i32
    return %c0_i32, %arg1 : i32, i32
  }
  func.func @transform_5(%arg0: i32, %arg1: i32, %arg2: i32) -> (i32, i32) {
    %c0_i32 = arith.constant 0 : i32
    %c0_i32_0 = arith.constant 0 : i32
    return %c0_i32, %arg1 : i32, i32
  }
  func.func @transform_6(%arg0: i32, %arg1: i32, %arg2: i32) -> (i32, i32) {
    %c0_i32 = arith.constant 0 : i32
    return %arg0, %arg1 : i32, i32
  }
}

module attributes {stable_mosaic.version = 11 : i64} {
  func.func @_window_reduce_kernel(%arg0: i32, %arg1: memref<4x32x16xbf16, #tpu.memory_space<vmem>>, %arg2: memref<32x16xbf16, #tpu.memory_space<vmem>>) attributes {dimension_semantics = [#tpu.dimension_semantics<parallel>], iteration_bounds = array<i64: 1>, scalar_prefetch = 0 : i64, scratch_operands = 0 : i64, tpu.core_type = #tpu.core_type<tc>, window_params = [{transform_indices = @transform_0, window_bounds = array<i64: 4, 32, 16>}, {transform_indices = @transform_1, window_bounds = array<i64: 32, 16>}]} {
    %c0 = arith.constant 0 : index
    %c0_0 = arith.constant 0 : index
    %c0_1 = arith.constant 0 : index
    %0 = vector.load %arg1[%c0, %c0_0, %c0_1] : memref<4x32x16xbf16, #tpu.memory_space<vmem>>, vector<1x32x16xbf16>
    %1 = vector.shape_cast %0 : vector<1x32x16xbf16> to vector<32x16xbf16>
    %2 = arith.extf %1 : vector<32x16xbf16> to vector<32x16xf32>
    %c1 = arith.constant 1 : index
    %c0_2 = arith.constant 0 : index
    %c0_3 = arith.constant 0 : index
    %3 = vector.load %arg1[%c1, %c0_2, %c0_3] : memref<4x32x16xbf16, #tpu.memory_space<vmem>>, vector<1x32x16xbf16>
    %4 = vector.shape_cast %3 : vector<1x32x16xbf16> to vector<32x16xbf16>
    %5 = arith.extf %4 : vector<32x16xbf16> to vector<32x16xf32>
    %6 = arith.addf %2, %5 : vector<32x16xf32>
    %c2 = arith.constant 2 : index
    %c0_4 = arith.constant 0 : index
    %c0_5 = arith.constant 0 : index
    %7 = vector.load %arg1[%c2, %c0_4, %c0_5] : memref<4x32x16xbf16, #tpu.memory_space<vmem>>, vector<1x32x16xbf16>
    %8 = vector.shape_cast %7 : vector<1x32x16xbf16> to vector<32x16xbf16>
    %9 = arith.extf %8 : vector<32x16xbf16> to vector<32x16xf32>
    %10 = arith.addf %6, %9 : vector<32x16xf32>
    %c3 = arith.constant 3 : index
    %c0_6 = arith.constant 0 : index
    %c0_7 = arith.constant 0 : index
    %11 = vector.load %arg1[%c3, %c0_6, %c0_7] : memref<4x32x16xbf16, #tpu.memory_space<vmem>>, vector<1x32x16xbf16>
    %12 = vector.shape_cast %11 : vector<1x32x16xbf16> to vector<32x16xbf16>
    %13 = arith.extf %12 : vector<32x16xbf16> to vector<32x16xf32>
    %14 = arith.addf %10, %13 : vector<32x16xf32>
    %cst = arith.constant 2.500000e-01 : f32
    %15 = vector.broadcast %cst : f32 to vector<32x16xf32>
    %16 = arith.mulf %14, %15 : vector<32x16xf32>
    %17 = arith.truncf %16 : vector<32x16xf32> to vector<32x16xbf16>
    %c0_8 = arith.constant 0 : index
    %c0_9 = arith.constant 0 : index
    %18 = vector.load %arg2[%c0_8, %c0_9] : memref<32x16xbf16, #tpu.memory_space<vmem>>, vector<32x16xbf16>
    tpu.vector_store %arg2[%c0_8, %c0_9], %17 {strides = array<i32>} : memref<32x16xbf16, #tpu.memory_space<vmem>>, vector<32x16xbf16>,
    return
  }
  func.func @transform_0(%arg0: i32) -> (i32, i32, i32) {
    %c0_i32 = arith.constant 0 : i32
    %c0_i32_0 = arith.constant 0 : i32
    %c0_i32_1 = arith.constant 0 : i32
    return %c0_i32, %arg0, %c0_i32_0 : i32, i32, i32
  }
  func.func @transform_1(%arg0: i32) -> (i32, i32) {
    %c0_i32 = arith.constant 0 : i32
    %c0_i32_0 = arith.constant 0 : i32
    return %arg0, %c0_i32 : i32, i32
  }
}

module attributes {stable_mosaic.version = 11 : i64} {
  func.func @_mm_kernel(%arg0: i32, %arg1: i32, %arg2: i32, %arg3: memref<32x128xbf16, #tpu.memory_space<vmem>>, %arg4: memref<128x128xbf16, #tpu.memory_space<vmem>>, %arg5: memref<1x128xf32, #tpu.memory_space<vmem>>, %arg6: memref<1x128xf32, #tpu.memory_space<vmem>>, %arg7: memref<1x128xf32, #tpu.memory_space<vmem>>, %arg8: memref<1x128xf32, #tpu.memory_space<vmem>>, %arg9: memref<32x128xbf16, #tpu.memory_space<vmem>>, %arg10: memref<32x128xf32, #tpu.memory_space<vmem>>) attributes {dimension_semantics = [#tpu.dimension_semantics<parallel>, #tpu.dimension_semantics<parallel>, #tpu.dimension_semantics<arbitrary>], iteration_bounds = array<i64: 1, 1, 1>, scalar_prefetch = 0 : i64, scratch_operands = 1 : i64, tpu.core_type = #tpu.core_type<tc>, window_params = [{transform_indices = @transform_0, window_bounds = array<i64: 32, 128>}, {transform_indices = @transform_1, window_bounds = array<i64: 128, 128>}, {transform_indices = @transform_2, window_bounds = array<i64: 1, 128>}, {transform_indices = @transform_3, window_bounds = array<i64: 1, 128>}, {transform_indices = @transform_4, window_bounds = array<i64: 1, 128>}, {transform_indices = @transform_5, window_bounds = array<i64: 1, 128>}, {transform_indices = @transform_6, window_bounds = array<i64: 32, 128>}]} {
    %c0_i32 = arith.constant 0 : i32
    %0 = arith.cmpi eq, %arg2, %c0_i32 : i32
    %1 = arith.extui %0 : i1 to i32
    %c0_i32_0 = arith.constant 0 : i32
    %2 = arith.cmpi ne, %1, %c0_i32_0 : i32
    scf.if %2 {
      %cst_15 = arith.constant 0.000000e+00 : f32
      %22 = vector.broadcast %cst_15 : f32 to vector<32x128xf32>
      %c0_16 = arith.constant 0 : index
      %c0_17 = arith.constant 0 : index
      %23 = vector.load %arg10[%c0_16, %c0_17] : memref<32x128xf32, #tpu.memory_space<vmem>>, vector<32x128xf32>
      tpu.vector_store %arg10[%c0_16, %c0_17], %22 {strides = array<i32>} : memref<32x128xf32, #tpu.memory_space<vmem>>, vector<32x128xf32>,
    } else {
    }
    %c0 = arith.constant 0 : index
    %c0_1 = arith.constant 0 : index
    %3 = vector.load %arg3[%c0, %c0_1] : memref<32x128xbf16, #tpu.memory_space<vmem>>, vector<32x128xbf16>
    %4 = arith.extf %3 : vector<32x128xbf16> to vector<32x128xf32>
    %c0_2 = arith.constant 0 : index
    %c0_3 = arith.constant 0 : index
    %5 = vector.load %arg5[%c0_2, %c0_3] : memref<1x128xf32, #tpu.memory_space<vmem>>, vector<1x128xf32>
    %6 = vector.broadcast %5 : vector<1x128xf32> to vector<32x128xf32>
    %7 = arith.mulf %4, %6 : vector<32x128xf32>
    %c0_4 = arith.constant 0 : index
    %c0_5 = arith.constant 0 : index
    %8 = vector.load %arg6[%c0_4, %c0_5] : memref<1x128xf32, #tpu.memory_space<vmem>>, vector<1x128xf32>
    %9 = vector.broadcast %8 : vector<1x128xf32> to vector<32x128xf32>
    %10 = arith.addf %7, %9 : vector<32x128xf32>
    %cst = arith.constant 0.000000e+00 : f32
    %11 = vector.broadcast %cst : f32 to vector<32x128xf32>
    %12 = arith.maximumf %10, %11 : vector<32x128xf32>
    %13 = arith.truncf %12 : vector<32x128xf32> to vector<32x128xbf16>
    %c0_6 = arith.constant 0 : index
    %c0_7 = arith.constant 0 : index
    %14 = vector.load %arg10[%c0_6, %c0_7] : memref<32x128xf32, #tpu.memory_space<vmem>>, vector<32x128xf32>
    %c0_8 = arith.constant 0 : index
    %c0_9 = arith.constant 0 : index
    %15 = vector.load %arg4[%c0_8, %c0_9] : memref<128x128xbf16, #tpu.memory_space<vmem>>, vector<128x128xbf16>
    %cst_10 = arith.constant dense<0.000000e+00> : vector<32x128xf32>
    %16 = tpu.matmul %13, %15, %cst_10 {dimension_numbers = #tpu.dot_dimension_numbers<[1], [0], [0], [1], [0, 0, 1, 1], [], []>} : vector<32x128xbf16>, vector<128x128xbf16>, vector<32x128xf32> -> vector<32x128xf32>
    %17 = arith.addf %14, %16 : vector<32x128xf32>
    %c0_11 = arith.constant 0 : index
    %c0_12 = arith.constant 0 : index
    %18 = vector.load %arg10[%c0_11, %c0_12] : memref<32x128xf32, #tpu.memory_space<vmem>>, vector<32x128xf32>
    tpu.vector_store %arg10[%c0_11, %c0_12], %17 {strides = array<i32>} : memref<32x128xf32, #tpu.memory_space<vmem>>, vector<32x128xf32>,
    %c0_i32_13 = arith.constant 0 : i32
    %19 = arith.cmpi eq, %arg2, %c0_i32_13 : i32
    %20 = arith.extui %19 : i1 to i32
    %c0_i32_14 = arith.constant 0 : i32
    %21 = arith.cmpi ne, %20, %c0_i32_14 : i32
    scf.if %21 {
      %c0_15 = arith.constant 0 : index
      %c0_16 = arith.constant 0 : index
      %22 = vector.load %arg10[%c0_15, %c0_16] : memref<32x128xf32, #tpu.memory_space<vmem>>, vector<32x128xf32>
      %c0_17 = arith.constant 0 : index
      %c0_18 = arith.constant 0 : index
      %23 = vector.load %arg7[%c0_17, %c0_18] : memref<1x128xf32, #tpu.memory_space<vmem>>, vector<1x128xf32>
      %24 = vector.broadcast %23 : vector<1x128xf32> to vector<32x128xf32>
      %25 = arith.mulf %22, %24 : vector<32x128xf32>
      %c0_19 = arith.constant 0 : index
      %c0_20 = arith.constant 0 : index
      %26 = vector.load %arg8[%c0_19, %c0_20] : memref<1x128xf32, #tpu.memory_space<vmem>>, vector<1x128xf32>
      %27 = vector.broadcast %26 : vector<1x128xf32> to vector<32x128xf32>
      %28 = arith.addf %25, %27 : vector<32x128xf32>
      %cst_21 = arith.constant 0.000000e+00 : f32
      %29 = vector.broadcast %cst_21 : f32 to vector<32x128xf32>
      %30 = arith.maximumf %28, %29 : vector<32x128xf32>
      %31 = arith.truncf %30 : vector<32x128xf32> to vector<32x128xbf16>
      %c0_22 = arith.constant 0 : index
      %c0_23 = arith.constant 0 : index
      %32 = vector.load %arg9[%c0_22, %c0_23] : memref<32x128xbf16, #tpu.memory_space<vmem>>, vector<32x128xbf16>
      tpu.vector_store %arg9[%c0_22, %c0_23], %31 {strides = array<i32>} : memref<32x128xbf16, #tpu.memory_space<vmem>>, vector<32x128xbf16>,
    } else {
    }
    return
  }
  func.func @transform_0(%arg0: i32, %arg1: i32, %arg2: i32) -> (i32, i32) {
    %c0_i32 = arith.constant 0 : i32
    return %arg0, %arg2 : i32, i32
  }
  func.func @transform_1(%arg0: i32, %arg1: i32, %arg2: i32) -> (i32, i32) {
    %c0_i32 = arith.constant 0 : i32
    return %arg2, %arg1 : i32, i32
  }
  func.func @transform_2(%arg0: i32, %arg1: i32, %arg2: i32) -> (i32, i32) {
    %c0_i32 = arith.constant 0 : i32
    %c0_i32_0 = arith.constant 0 : i32
    return %c0_i32, %arg2 : i32, i32
  }
  func.func @transform_3(%arg0: i32, %arg1: i32, %arg2: i32) -> (i32, i32) {
    %c0_i32 = arith.constant 0 : i32
    %c0_i32_0 = arith.constant 0 : i32
    return %c0_i32, %arg2 : i32, i32
  }
  func.func @transform_4(%arg0: i32, %arg1: i32, %arg2: i32) -> (i32, i32) {
    %c0_i32 = arith.constant 0 : i32
    %c0_i32_0 = arith.constant 0 : i32
    return %c0_i32, %arg1 : i32, i32
  }
  func.func @transform_5(%arg0: i32, %arg1: i32, %arg2: i32) -> (i32, i32) {
    %c0_i32 = arith.constant 0 : i32
    %c0_i32_0 = arith.constant 0 : i32
    return %c0_i32, %arg1 : i32, i32
  }
  func.func @transform_6(%arg0: i32, %arg1: i32, %arg2: i32) -> (i32, i32) {
    %c0_i32 = arith.constant 0 : i32
    return %arg0, %arg1 : i32, i32
  }
}

module attributes {stable_mosaic.version = 11 : i64} {
  func.func @_mm_kernel(%arg0: i32, %arg1: i32, %arg2: i32, %arg3: memref<32x384xbf16, #tpu.memory_space<vmem>>, %arg4: memref<384x128xbf16, #tpu.memory_space<vmem>>, %arg5: memref<1x384xf32, #tpu.memory_space<vmem>>, %arg6: memref<1x384xf32, #tpu.memory_space<vmem>>, %arg7: memref<1x128xf32, #tpu.memory_space<vmem>>, %arg8: memref<1x128xf32, #tpu.memory_space<vmem>>, %arg9: memref<32x128xbf16, #tpu.memory_space<vmem>>, %arg10: memref<32x128xf32, #tpu.memory_space<vmem>>) attributes {dimension_semantics = [#tpu.dimension_semantics<parallel>, #tpu.dimension_semantics<parallel>, #tpu.dimension_semantics<arbitrary>], iteration_bounds = array<i64: 1, 1, 1>, scalar_prefetch = 0 : i64, scratch_operands = 1 : i64, tpu.core_type = #tpu.core_type<tc>, window_params = [{transform_indices = @transform_0, window_bounds = array<i64: 32, 384>}, {transform_indices = @transform_1, window_bounds = array<i64: 384, 128>}, {transform_indices = @transform_2, window_bounds = array<i64: 1, 384>}, {transform_indices = @transform_3, window_bounds = array<i64: 1, 384>}, {transform_indices = @transform_4, window_bounds = array<i64: 1, 128>}, {transform_indices = @transform_5, window_bounds = array<i64: 1, 128>}, {transform_indices = @transform_6, window_bounds = array<i64: 32, 128>}]} {
    %c0_i32 = arith.constant 0 : i32
    %0 = arith.cmpi eq, %arg2, %c0_i32 : i32
    %1 = arith.extui %0 : i1 to i32
    %c0_i32_0 = arith.constant 0 : i32
    %2 = arith.cmpi ne, %1, %c0_i32_0 : i32
    scf.if %2 {
      %cst_10 = arith.constant 0.000000e+00 : f32
      %12 = vector.broadcast %cst_10 : f32 to vector<32x128xf32>
      %c0_11 = arith.constant 0 : index
      %c0_12 = arith.constant 0 : index
      %13 = vector.load %arg10[%c0_11, %c0_12] : memref<32x128xf32, #tpu.memory_space<vmem>>, vector<32x128xf32>
      tpu.vector_store %arg10[%c0_11, %c0_12], %12 {strides = array<i32>} : memref<32x128xf32, #tpu.memory_space<vmem>>, vector<32x128xf32>,
    } else {
    }
    %c0 = arith.constant 0 : index
    %c0_1 = arith.constant 0 : index
    %3 = vector.load %arg3[%c0, %c0_1] : memref<32x384xbf16, #tpu.memory_space<vmem>>, vector<32x384xbf16>
    %c0_2 = arith.constant 0 : index
    %c0_3 = arith.constant 0 : index
    %4 = vector.load %arg10[%c0_2, %c0_3] : memref<32x128xf32, #tpu.memory_space<vmem>>, vector<32x128xf32>
    %c0_4 = arith.constant 0 : index
    %c0_5 = arith.constant 0 : index
    %5 = vector.load %arg4[%c0_4, %c0_5] : memref<384x128xbf16, #tpu.memory_space<vmem>>, vector<384x128xbf16>
    %cst = arith.constant dense<0.000000e+00> : vector<32x128xf32>
    %6 = tpu.matmul %3, %5, %cst {dimension_numbers = #tpu.dot_dimension_numbers<[1], [0], [0], [1], [0, 0, 1, 1], [], []>} : vector<32x384xbf16>, vector<384x128xbf16>, vector<32x128xf32> -> vector<32x128xf32>
    %7 = arith.addf %4, %6 : vector<32x128xf32>
    %c0_6 = arith.constant 0 : index
    %c0_7 = arith.constant 0 : index
    %8 = vector.load %arg10[%c0_6, %c0_7] : memref<32x128xf32, #tpu.memory_space<vmem>>, vector<32x128xf32>
    tpu.vector_store %arg10[%c0_6, %c0_7], %7 {strides = array<i32>} : memref<32x128xf32, #tpu.memory_space<vmem>>, vector<32x128xf32>,
    %c0_i32_8 = arith.constant 0 : i32
    %9 = arith.cmpi eq, %arg2, %c0_i32_8 : i32
    %10 = arith.extui %9 : i1 to i32
    %c0_i32_9 = arith.constant 0 : i32
    %11 = arith.cmpi ne, %10, %c0_i32_9 : i32
    scf.if %11 {
      %c0_10 = arith.constant 0 : index
      %c0_11 = arith.constant 0 : index
      %12 = vector.load %arg10[%c0_10, %c0_11] : memref<32x128xf32, #tpu.memory_space<vmem>>, vector<32x128xf32>
      %c0_12 = arith.constant 0 : index
      %c0_13 = arith.constant 0 : index
      %13 = vector.load %arg7[%c0_12, %c0_13] : memref<1x128xf32, #tpu.memory_space<vmem>>, vector<1x128xf32>
      %14 = vector.broadcast %13 : vector<1x128xf32> to vector<32x128xf32>
      %15 = arith.mulf %12, %14 : vector<32x128xf32>
      %c0_14 = arith.constant 0 : index
      %c0_15 = arith.constant 0 : index
      %16 = vector.load %arg8[%c0_14, %c0_15] : memref<1x128xf32, #tpu.memory_space<vmem>>, vector<1x128xf32>
      %17 = vector.broadcast %16 : vector<1x128xf32> to vector<32x128xf32>
      %18 = arith.addf %15, %17 : vector<32x128xf32>
      %19 = arith.truncf %18 : vector<32x128xf32> to vector<32x128xbf16>
      %c0_16 = arith.constant 0 : index
      %c0_17 = arith.constant 0 : index
      %20 = vector.load %arg9[%c0_16, %c0_17] : memref<32x128xbf16, #tpu.memory_space<vmem>>, vector<32x128xbf16>
      tpu.vector_store %arg9[%c0_16, %c0_17], %19 {strides = array<i32>} : memref<32x128xbf16, #tpu.memory_space<vmem>>, vector<32x128xbf16>,
    } else {
    }
    return
  }
  func.func @transform_0(%arg0: i32, %arg1: i32, %arg2: i32) -> (i32, i32) {
    %c0_i32 = arith.constant 0 : i32
    return %arg0, %arg2 : i32, i32
  }
  func.func @transform_1(%arg0: i32, %arg1: i32, %arg2: i32) -> (i32, i32) {
    %c0_i32 = arith.constant 0 : i32
    return %arg2, %arg1 : i32, i32
  }
  func.func @transform_2(%arg0: i32, %arg1: i32, %arg2: i32) -> (i32, i32) {
    %c0_i32 = arith.constant 0 : i32
    %c0_i32_0 = arith.constant 0 : i32
    return %c0_i32, %arg2 : i32, i32
  }
  func.func @transform_3(%arg0: i32, %arg1: i32, %arg2: i32) -> (i32, i32) {
    %c0_i32 = arith.constant 0 : i32
    %c0_i32_0 = arith.constant 0 : i32
    return %c0_i32, %arg2 : i32, i32
  }
  func.func @transform_4(%arg0: i32, %arg1: i32, %arg2: i32) -> (i32, i32) {
    %c0_i32 = arith.constant 0 : i32
    %c0_i32_0 = arith.constant 0 : i32
    return %c0_i32, %arg1 : i32, i32
  }
  func.func @transform_5(%arg0: i32, %arg1: i32, %arg2: i32) -> (i32, i32) {
    %c0_i32 = arith.constant 0 : i32
    %c0_i32_0 = arith.constant 0 : i32
    return %c0_i32, %arg1 : i32, i32
  }
  func.func @transform_6(%arg0: i32, %arg1: i32, %arg2: i32) -> (i32, i32) {
    %c0_i32 = arith.constant 0 : i32
    return %arg0, %arg1 : i32, i32
  }
}

module attributes {stable_mosaic.version = 11 : i64} {
  func.func @_mm_kernel(%arg0: i32, %arg1: i32, %arg2: i32, %arg3: memref<32x128xbf16, #tpu.memory_space<vmem>>, %arg4: memref<128x128xbf16, #tpu.memory_space<vmem>>, %arg5: memref<1x128xf32, #tpu.memory_space<vmem>>, %arg6: memref<1x128xf32, #tpu.memory_space<vmem>>, %arg7: memref<1x128xf32, #tpu.memory_space<vmem>>, %arg8: memref<1x128xf32, #tpu.memory_space<vmem>>, %arg9: memref<32x128xbf16, #tpu.memory_space<vmem>>, %arg10: memref<32x128xf32, #tpu.memory_space<vmem>>) attributes {dimension_semantics = [#tpu.dimension_semantics<parallel>, #tpu.dimension_semantics<parallel>, #tpu.dimension_semantics<arbitrary>], iteration_bounds = array<i64: 1, 1, 1>, scalar_prefetch = 0 : i64, scratch_operands = 1 : i64, tpu.core_type = #tpu.core_type<tc>, window_params = [{transform_indices = @transform_0, window_bounds = array<i64: 32, 128>}, {transform_indices = @transform_1, window_bounds = array<i64: 128, 128>}, {transform_indices = @transform_2, window_bounds = array<i64: 1, 128>}, {transform_indices = @transform_3, window_bounds = array<i64: 1, 128>}, {transform_indices = @transform_4, window_bounds = array<i64: 1, 128>}, {transform_indices = @transform_5, window_bounds = array<i64: 1, 128>}, {transform_indices = @transform_6, window_bounds = array<i64: 32, 128>}]} {
    %c0_i32 = arith.constant 0 : i32
    %0 = arith.cmpi eq, %arg2, %c0_i32 : i32
    %1 = arith.extui %0 : i1 to i32
    %c0_i32_0 = arith.constant 0 : i32
    %2 = arith.cmpi ne, %1, %c0_i32_0 : i32
    scf.if %2 {
      %cst_15 = arith.constant 0.000000e+00 : f32
      %22 = vector.broadcast %cst_15 : f32 to vector<32x128xf32>
      %c0_16 = arith.constant 0 : index
      %c0_17 = arith.constant 0 : index
      %23 = vector.load %arg10[%c0_16, %c0_17] : memref<32x128xf32, #tpu.memory_space<vmem>>, vector<32x128xf32>
      tpu.vector_store %arg10[%c0_16, %c0_17], %22 {strides = array<i32>} : memref<32x128xf32, #tpu.memory_space<vmem>>, vector<32x128xf32>,
    } else {
    }
    %c0 = arith.constant 0 : index
    %c0_1 = arith.constant 0 : index
    %3 = vector.load %arg3[%c0, %c0_1] : memref<32x128xbf16, #tpu.memory_space<vmem>>, vector<32x128xbf16>
    %4 = arith.extf %3 : vector<32x128xbf16> to vector<32x128xf32>
    %c0_2 = arith.constant 0 : index
    %c0_3 = arith.constant 0 : index
    %5 = vector.load %arg5[%c0_2, %c0_3] : memref<1x128xf32, #tpu.memory_space<vmem>>, vector<1x128xf32>
    %6 = vector.broadcast %5 : vector<1x128xf32> to vector<32x128xf32>
    %7 = arith.mulf %4, %6 : vector<32x128xf32>
    %c0_4 = arith.constant 0 : index
    %c0_5 = arith.constant 0 : index
    %8 = vector.load %arg6[%c0_4, %c0_5] : memref<1x128xf32, #tpu.memory_space<vmem>>, vector<1x128xf32>
    %9 = vector.broadcast %8 : vector<1x128xf32> to vector<32x128xf32>
    %10 = arith.addf %7, %9 : vector<32x128xf32>
    %cst = arith.constant 0.000000e+00 : f32
    %11 = vector.broadcast %cst : f32 to vector<32x128xf32>
    %12 = arith.maximumf %10, %11 : vector<32x128xf32>
    %13 = arith.truncf %12 : vector<32x128xf32> to vector<32x128xbf16>
    %c0_6 = arith.constant 0 : index
    %c0_7 = arith.constant 0 : index
    %14 = vector.load %arg10[%c0_6, %c0_7] : memref<32x128xf32, #tpu.memory_space<vmem>>, vector<32x128xf32>
    %c0_8 = arith.constant 0 : index
    %c0_9 = arith.constant 0 : index
    %15 = vector.load %arg4[%c0_8, %c0_9] : memref<128x128xbf16, #tpu.memory_space<vmem>>, vector<128x128xbf16>
    %cst_10 = arith.constant dense<0.000000e+00> : vector<32x128xf32>
    %16 = tpu.matmul %13, %15, %cst_10 {dimension_numbers = #tpu.dot_dimension_numbers<[1], [0], [0], [1], [0, 0, 1, 1], [], []>} : vector<32x128xbf16>, vector<128x128xbf16>, vector<32x128xf32> -> vector<32x128xf32>
    %17 = arith.addf %14, %16 : vector<32x128xf32>
    %c0_11 = arith.constant 0 : index
    %c0_12 = arith.constant 0 : index
    %18 = vector.load %arg10[%c0_11, %c0_12] : memref<32x128xf32, #tpu.memory_space<vmem>>, vector<32x128xf32>
    tpu.vector_store %arg10[%c0_11, %c0_12], %17 {strides = array<i32>} : memref<32x128xf32, #tpu.memory_space<vmem>>, vector<32x128xf32>,
    %c0_i32_13 = arith.constant 0 : i32
    %19 = arith.cmpi eq, %arg2, %c0_i32_13 : i32
    %20 = arith.extui %19 : i1 to i32
    %c0_i32_14 = arith.constant 0 : i32
    %21 = arith.cmpi ne, %20, %c0_i32_14 : i32
    scf.if %21 {
      %c0_15 = arith.constant 0 : index
      %c0_16 = arith.constant 0 : index
      %22 = vector.load %arg10[%c0_15, %c0_16] : memref<32x128xf32, #tpu.memory_space<vmem>>, vector<32x128xf32>
      %c0_17 = arith.constant 0 : index
      %c0_18 = arith.constant 0 : index
      %23 = vector.load %arg7[%c0_17, %c0_18] : memref<1x128xf32, #tpu.memory_space<vmem>>, vector<1x128xf32>
      %24 = vector.broadcast %23 : vector<1x128xf32> to vector<32x128xf32>
      %25 = arith.mulf %22, %24 : vector<32x128xf32>
      %c0_19 = arith.constant 0 : index
      %c0_20 = arith.constant 0 : index
      %26 = vector.load %arg8[%c0_19, %c0_20] : memref<1x128xf32, #tpu.memory_space<vmem>>, vector<1x128xf32>
      %27 = vector.broadcast %26 : vector<1x128xf32> to vector<32x128xf32>
      %28 = arith.addf %25, %27 : vector<32x128xf32>
      %29 = arith.truncf %28 : vector<32x128xf32> to vector<32x128xbf16>
      %c0_21 = arith.constant 0 : index
      %c0_22 = arith.constant 0 : index
      %30 = vector.load %arg9[%c0_21, %c0_22] : memref<32x128xbf16, #tpu.memory_space<vmem>>, vector<32x128xbf16>
      tpu.vector_store %arg9[%c0_21, %c0_22], %29 {strides = array<i32>} : memref<32x128xbf16, #tpu.memory_space<vmem>>, vector<32x128xbf16>,
    } else {
    }
    return
  }
  func.func @transform_0(%arg0: i32, %arg1: i32, %arg2: i32) -> (i32, i32) {
    %c0_i32 = arith.constant 0 : i32
    return %arg0, %arg2 : i32, i32
  }
  func.func @transform_1(%arg0: i32, %arg1: i32, %arg2: i32) -> (i32, i32) {
    %c0_i32 = arith.constant 0 : i32
    return %arg2, %arg1 : i32, i32
  }
  func.func @transform_2(%arg0: i32, %arg1: i32, %arg2: i32) -> (i32, i32) {
    %c0_i32 = arith.constant 0 : i32
    %c0_i32_0 = arith.constant 0 : i32
    return %c0_i32, %arg2 : i32, i32
  }
  func.func @transform_3(%arg0: i32, %arg1: i32, %arg2: i32) -> (i32, i32) {
    %c0_i32 = arith.constant 0 : i32
    %c0_i32_0 = arith.constant 0 : i32
    return %c0_i32, %arg2 : i32, i32
  }
  func.func @transform_4(%arg0: i32, %arg1: i32, %arg2: i32) -> (i32, i32) {
    %c0_i32 = arith.constant 0 : i32
    %c0_i32_0 = arith.constant 0 : i32
    return %c0_i32, %arg1 : i32, i32
  }
  func.func @transform_5(%arg0: i32, %arg1: i32, %arg2: i32) -> (i32, i32) {
    %c0_i32 = arith.constant 0 : i32
    %c0_i32_0 = arith.constant 0 : i32
    return %c0_i32, %arg1 : i32, i32
  }
  func.func @transform_6(%arg0: i32, %arg1: i32, %arg2: i32) -> (i32, i32) {
    %c0_i32 = arith.constant 0 : i32
    return %arg0, %arg1 : i32, i32
  }
}

module attributes {stable_mosaic.version = 11 : i64} {
  func.func @_window_reduce_kernel(%arg0: i32, %arg1: memref<4x8x16xbf16, #tpu.memory_space<vmem>>, %arg2: memref<8x16xbf16, #tpu.memory_space<vmem>>) attributes {dimension_semantics = [#tpu.dimension_semantics<parallel>], iteration_bounds = array<i64: 1>, scalar_prefetch = 0 : i64, scratch_operands = 0 : i64, tpu.core_type = #tpu.core_type<tc>, window_params = [{transform_indices = @transform_0, window_bounds = array<i64: 4, 8, 16>}, {transform_indices = @transform_1, window_bounds = array<i64: 8, 16>}]} {
    %c0 = arith.constant 0 : index
    %c0_0 = arith.constant 0 : index
    %c0_1 = arith.constant 0 : index
    %0 = vector.load %arg1[%c0, %c0_0, %c0_1] : memref<4x8x16xbf16, #tpu.memory_space<vmem>>, vector<1x8x16xbf16>
    %1 = vector.shape_cast %0 : vector<1x8x16xbf16> to vector<8x16xbf16>
    %2 = arith.extf %1 : vector<8x16xbf16> to vector<8x16xf32>
    %c1 = arith.constant 1 : index
    %c0_2 = arith.constant 0 : index
    %c0_3 = arith.constant 0 : index
    %3 = vector.load %arg1[%c1, %c0_2, %c0_3] : memref<4x8x16xbf16, #tpu.memory_space<vmem>>, vector<1x8x16xbf16>
    %4 = vector.shape_cast %3 : vector<1x8x16xbf16> to vector<8x16xbf16>
    %5 = arith.extf %4 : vector<8x16xbf16> to vector<8x16xf32>
    %6 = arith.addf %2, %5 : vector<8x16xf32>
    %c2 = arith.constant 2 : index
    %c0_4 = arith.constant 0 : index
    %c0_5 = arith.constant 0 : index
    %7 = vector.load %arg1[%c2, %c0_4, %c0_5] : memref<4x8x16xbf16, #tpu.memory_space<vmem>>, vector<1x8x16xbf16>
    %8 = vector.shape_cast %7 : vector<1x8x16xbf16> to vector<8x16xbf16>
    %9 = arith.extf %8 : vector<8x16xbf16> to vector<8x16xf32>
    %10 = arith.addf %6, %9 : vector<8x16xf32>
    %c3 = arith.constant 3 : index
    %c0_6 = arith.constant 0 : index
    %c0_7 = arith.constant 0 : index
    %11 = vector.load %arg1[%c3, %c0_6, %c0_7] : memref<4x8x16xbf16, #tpu.memory_space<vmem>>, vector<1x8x16xbf16>
    %12 = vector.shape_cast %11 : vector<1x8x16xbf16> to vector<8x16xbf16>
    %13 = arith.extf %12 : vector<8x16xbf16> to vector<8x16xf32>
    %14 = arith.addf %10, %13 : vector<8x16xf32>
    %cst = arith.constant 2.500000e-01 : f32
    %15 = vector.broadcast %cst : f32 to vector<8x16xf32>
    %16 = arith.mulf %14, %15 : vector<8x16xf32>
    %17 = arith.truncf %16 : vector<8x16xf32> to vector<8x16xbf16>
    %c0_8 = arith.constant 0 : index
    %c0_9 = arith.constant 0 : index
    %18 = vector.load %arg2[%c0_8, %c0_9] : memref<8x16xbf16, #tpu.memory_space<vmem>>, vector<8x16xbf16>
    tpu.vector_store %arg2[%c0_8, %c0_9], %17 {strides = array<i32>} : memref<8x16xbf16, #tpu.memory_space<vmem>>, vector<8x16xbf16>,
    return
  }
  func.func @transform_0(%arg0: i32) -> (i32, i32, i32) {
    %c0_i32 = arith.constant 0 : i32
    %c0_i32_0 = arith.constant 0 : i32
    %c0_i32_1 = arith.constant 0 : i32
    return %c0_i32, %arg0, %c0_i32_0 : i32, i32, i32
  }
  func.func @transform_1(%arg0: i32) -> (i32, i32) {
    %c0_i32 = arith.constant 0 : i32
    %c0_i32_0 = arith.constant 0 : i32
    return %arg0, %c0_i32 : i32, i32
  }
}

module attributes {stable_mosaic.version = 11 : i64} {
  func.func @_mm_kernel(%arg0: i32, %arg1: i32, %arg2: i32, %arg3: memref<8x128xbf16, #tpu.memory_space<vmem>>, %arg4: memref<128x128xbf16, #tpu.memory_space<vmem>>, %arg5: memref<1x128xf32, #tpu.memory_space<vmem>>, %arg6: memref<1x128xf32, #tpu.memory_space<vmem>>, %arg7: memref<1x128xf32, #tpu.memory_space<vmem>>, %arg8: memref<1x128xf32, #tpu.memory_space<vmem>>, %arg9: memref<8x128xbf16, #tpu.memory_space<vmem>>, %arg10: memref<8x128xf32, #tpu.memory_space<vmem>>) attributes {dimension_semantics = [#tpu.dimension_semantics<parallel>, #tpu.dimension_semantics<parallel>, #tpu.dimension_semantics<arbitrary>], iteration_bounds = array<i64: 1, 1, 1>, scalar_prefetch = 0 : i64, scratch_operands = 1 : i64, tpu.core_type = #tpu.core_type<tc>, window_params = [{transform_indices = @transform_0, window_bounds = array<i64: 8, 128>}, {transform_indices = @transform_1, window_bounds = array<i64: 128, 128>}, {transform_indices = @transform_2, window_bounds = array<i64: 1, 128>}, {transform_indices = @transform_3, window_bounds = array<i64: 1, 128>}, {transform_indices = @transform_4, window_bounds = array<i64: 1, 128>}, {transform_indices = @transform_5, window_bounds = array<i64: 1, 128>}, {transform_indices = @transform_6, window_bounds = array<i64: 8, 128>}]} {
    %c0_i32 = arith.constant 0 : i32
    %0 = arith.cmpi eq, %arg2, %c0_i32 : i32
    %1 = arith.extui %0 : i1 to i32
    %c0_i32_0 = arith.constant 0 : i32
    %2 = arith.cmpi ne, %1, %c0_i32_0 : i32
    scf.if %2 {
      %cst_15 = arith.constant 0.000000e+00 : f32
      %22 = vector.broadcast %cst_15 : f32 to vector<8x128xf32>
      %c0_16 = arith.constant 0 : index
      %c0_17 = arith.constant 0 : index
      %23 = vector.load %arg10[%c0_16, %c0_17] : memref<8x128xf32, #tpu.memory_space<vmem>>, vector<8x128xf32>
      tpu.vector_store %arg10[%c0_16, %c0_17], %22 {strides = array<i32>} : memref<8x128xf32, #tpu.memory_space<vmem>>, vector<8x128xf32>,
    } else {
    }
    %c0 = arith.constant 0 : index
    %c0_1 = arith.constant 0 : index
    %3 = vector.load %arg3[%c0, %c0_1] : memref<8x128xbf16, #tpu.memory_space<vmem>>, vector<8x128xbf16>
    %4 = arith.extf %3 : vector<8x128xbf16> to vector<8x128xf32>
    %c0_2 = arith.constant 0 : index
    %c0_3 = arith.constant 0 : index
    %5 = vector.load %arg5[%c0_2, %c0_3] : memref<1x128xf32, #tpu.memory_space<vmem>>, vector<1x128xf32>
    %6 = vector.broadcast %5 : vector<1x128xf32> to vector<8x128xf32>
    %7 = arith.mulf %4, %6 : vector<8x128xf32>
    %c0_4 = arith.constant 0 : index
    %c0_5 = arith.constant 0 : index
    %8 = vector.load %arg6[%c0_4, %c0_5] : memref<1x128xf32, #tpu.memory_space<vmem>>, vector<1x128xf32>
    %9 = vector.broadcast %8 : vector<1x128xf32> to vector<8x128xf32>
    %10 = arith.addf %7, %9 : vector<8x128xf32>
    %cst = arith.constant 0.000000e+00 : f32
    %11 = vector.broadcast %cst : f32 to vector<8x128xf32>
    %12 = arith.maximumf %10, %11 : vector<8x128xf32>
    %13 = arith.truncf %12 : vector<8x128xf32> to vector<8x128xbf16>
    %c0_6 = arith.constant 0 : index
    %c0_7 = arith.constant 0 : index
    %14 = vector.load %arg10[%c0_6, %c0_7] : memref<8x128xf32, #tpu.memory_space<vmem>>, vector<8x128xf32>
    %c0_8 = arith.constant 0 : index
    %c0_9 = arith.constant 0 : index
    %15 = vector.load %arg4[%c0_8, %c0_9] : memref<128x128xbf16, #tpu.memory_space<vmem>>, vector<128x128xbf16>
    %cst_10 = arith.constant dense<0.000000e+00> : vector<8x128xf32>
    %16 = tpu.matmul %13, %15, %cst_10 {dimension_numbers = #tpu.dot_dimension_numbers<[1], [0], [0], [1], [0, 0, 1, 1], [], []>} : vector<8x128xbf16>, vector<128x128xbf16>, vector<8x128xf32> -> vector<8x128xf32>
    %17 = arith.addf %14, %16 : vector<8x128xf32>
    %c0_11 = arith.constant 0 : index
    %c0_12 = arith.constant 0 : index
    %18 = vector.load %arg10[%c0_11, %c0_12] : memref<8x128xf32, #tpu.memory_space<vmem>>, vector<8x128xf32>
    tpu.vector_store %arg10[%c0_11, %c0_12], %17 {strides = array<i32>} : memref<8x128xf32, #tpu.memory_space<vmem>>, vector<8x128xf32>,
    %c0_i32_13 = arith.constant 0 : i32
    %19 = arith.cmpi eq, %arg2, %c0_i32_13 : i32
    %20 = arith.extui %19 : i1 to i32
    %c0_i32_14 = arith.constant 0 : i32
    %21 = arith.cmpi ne, %20, %c0_i32_14 : i32
    scf.if %21 {
      %c0_15 = arith.constant 0 : index
      %c0_16 = arith.constant 0 : index
      %22 = vector.load %arg10[%c0_15, %c0_16] : memref<8x128xf32, #tpu.memory_space<vmem>>, vector<8x128xf32>
      %c0_17 = arith.constant 0 : index
      %c0_18 = arith.constant 0 : index
      %23 = vector.load %arg7[%c0_17, %c0_18] : memref<1x128xf32, #tpu.memory_space<vmem>>, vector<1x128xf32>
      %24 = vector.broadcast %23 : vector<1x128xf32> to vector<8x128xf32>
      %25 = arith.mulf %22, %24 : vector<8x128xf32>
      %c0_19 = arith.constant 0 : index
      %c0_20 = arith.constant 0 : index
      %26 = vector.load %arg8[%c0_19, %c0_20] : memref<1x128xf32, #tpu.memory_space<vmem>>, vector<1x128xf32>
      %27 = vector.broadcast %26 : vector<1x128xf32> to vector<8x128xf32>
      %28 = arith.addf %25, %27 : vector<8x128xf32>
      %cst_21 = arith.constant 0.000000e+00 : f32
      %29 = vector.broadcast %cst_21 : f32 to vector<8x128xf32>
      %30 = arith.maximumf %28, %29 : vector<8x128xf32>
      %31 = arith.truncf %30 : vector<8x128xf32> to vector<8x128xbf16>
      %c0_22 = arith.constant 0 : index
      %c0_23 = arith.constant 0 : index
      %32 = vector.load %arg9[%c0_22, %c0_23] : memref<8x128xbf16, #tpu.memory_space<vmem>>, vector<8x128xbf16>
      tpu.vector_store %arg9[%c0_22, %c0_23], %31 {strides = array<i32>} : memref<8x128xbf16, #tpu.memory_space<vmem>>, vector<8x128xbf16>,
    } else {
    }
    return
  }
  func.func @transform_0(%arg0: i32, %arg1: i32, %arg2: i32) -> (i32, i32) {
    %c0_i32 = arith.constant 0 : i32
    return %arg0, %arg2 : i32, i32
  }
  func.func @transform_1(%arg0: i32, %arg1: i32, %arg2: i32) -> (i32, i32) {
    %c0_i32 = arith.constant 0 : i32
    return %arg2, %arg1 : i32, i32
  }
  func.func @transform_2(%arg0: i32, %arg1: i32, %arg2: i32) -> (i32, i32) {
    %c0_i32 = arith.constant 0 : i32
    %c0_i32_0 = arith.constant 0 : i32
    return %c0_i32, %arg2 : i32, i32
  }
  func.func @transform_3(%arg0: i32, %arg1: i32, %arg2: i32) -> (i32, i32) {
    %c0_i32 = arith.constant 0 : i32
    %c0_i32_0 = arith.constant 0 : i32
    return %c0_i32, %arg2 : i32, i32
  }
  func.func @transform_4(%arg0: i32, %arg1: i32, %arg2: i32) -> (i32, i32) {
    %c0_i32 = arith.constant 0 : i32
    %c0_i32_0 = arith.constant 0 : i32
    return %c0_i32, %arg1 : i32, i32
  }
  func.func @transform_5(%arg0: i32, %arg1: i32, %arg2: i32) -> (i32, i32) {
    %c0_i32 = arith.constant 0 : i32
    %c0_i32_0 = arith.constant 0 : i32
    return %c0_i32, %arg1 : i32, i32
  }
  func.func @transform_6(%arg0: i32, %arg1: i32, %arg2: i32) -> (i32, i32) {
    %c0_i32 = arith.constant 0 : i32
    return %arg0, %arg1 : i32, i32
  }
}

module attributes {stable_mosaic.version = 11 : i64} {
  func.func @_mm_kernel(%arg0: i32, %arg1: i32, %arg2: i32, %arg3: memref<8x384xbf16, #tpu.memory_space<vmem>>, %arg4: memref<384x128xbf16, #tpu.memory_space<vmem>>, %arg5: memref<1x384xf32, #tpu.memory_space<vmem>>, %arg6: memref<1x384xf32, #tpu.memory_space<vmem>>, %arg7: memref<1x128xf32, #tpu.memory_space<vmem>>, %arg8: memref<1x128xf32, #tpu.memory_space<vmem>>, %arg9: memref<8x128xbf16, #tpu.memory_space<vmem>>, %arg10: memref<8x128xf32, #tpu.memory_space<vmem>>) attributes {dimension_semantics = [#tpu.dimension_semantics<parallel>, #tpu.dimension_semantics<parallel>, #tpu.dimension_semantics<arbitrary>], iteration_bounds = array<i64: 1, 1, 1>, scalar_prefetch = 0 : i64, scratch_operands = 1 : i64, tpu.core_type = #tpu.core_type<tc>, window_params = [{transform_indices = @transform_0, window_bounds = array<i64: 8, 384>}, {transform_indices = @transform_1, window_bounds = array<i64: 384, 128>}, {transform_indices = @transform_2, window_bounds = array<i64: 1, 384>}, {transform_indices = @transform_3, window_bounds = array<i64: 1, 384>}, {transform_indices = @transform_4, window_bounds = array<i64: 1, 128>}, {transform_indices = @transform_5, window_bounds = array<i64: 1, 128>}, {transform_indices = @transform_6, window_bounds = array<i64: 8, 128>}]} {
    %c0_i32 = arith.constant 0 : i32
    %0 = arith.cmpi eq, %arg2, %c0_i32 : i32
    %1 = arith.extui %0 : i1 to i32
    %c0_i32_0 = arith.constant 0 : i32
    %2 = arith.cmpi ne, %1, %c0_i32_0 : i32
    scf.if %2 {
      %cst_10 = arith.constant 0.000000e+00 : f32
      %12 = vector.broadcast %cst_10 : f32 to vector<8x128xf32>
      %c0_11 = arith.constant 0 : index
      %c0_12 = arith.constant 0 : index
      %13 = vector.load %arg10[%c0_11, %c0_12] : memref<8x128xf32, #tpu.memory_space<vmem>>, vector<8x128xf32>
      tpu.vector_store %arg10[%c0_11, %c0_12], %12 {strides = array<i32>} : memref<8x128xf32, #tpu.memory_space<vmem>>, vector<8x128xf32>,
    } else {
    }
    %c0 = arith.constant 0 : index
    %c0_1 = arith.constant 0 : index
    %3 = vector.load %arg3[%c0, %c0_1] : memref<8x384xbf16, #tpu.memory_space<vmem>>, vector<8x384xbf16>
    %c0_2 = arith.constant 0 : index
    %c0_3 = arith.constant 0 : index
    %4 = vector.load %arg10[%c0_2, %c0_3] : memref<8x128xf32, #tpu.memory_space<vmem>>, vector<8x128xf32>
    %c0_4 = arith.constant 0 : index
    %c0_5 = arith.constant 0 : index
    %5 = vector.load %arg4[%c0_4, %c0_5] : memref<384x128xbf16, #tpu.memory_space<vmem>>, vector<384x128xbf16>
    %cst = arith.constant dense<0.000000e+00> : vector<8x128xf32>
    %6 = tpu.matmul %3, %5, %cst {dimension_numbers = #tpu.dot_dimension_numbers<[1], [0], [0], [1], [0, 0, 1, 1], [], []>} : vector<8x384xbf16>, vector<384x128xbf16>, vector<8x128xf32> -> vector<8x128xf32>
    %7 = arith.addf %4, %6 : vector<8x128xf32>
    %c0_6 = arith.constant 0 : index
    %c0_7 = arith.constant 0 : index
    %8 = vector.load %arg10[%c0_6, %c0_7] : memref<8x128xf32, #tpu.memory_space<vmem>>, vector<8x128xf32>
    tpu.vector_store %arg10[%c0_6, %c0_7], %7 {strides = array<i32>} : memref<8x128xf32, #tpu.memory_space<vmem>>, vector<8x128xf32>,
    %c0_i32_8 = arith.constant 0 : i32
    %9 = arith.cmpi eq, %arg2, %c0_i32_8 : i32
    %10 = arith.extui %9 : i1 to i32
    %c0_i32_9 = arith.constant 0 : i32
    %11 = arith.cmpi ne, %10, %c0_i32_9 : i32
    scf.if %11 {
      %c0_10 = arith.constant 0 : index
      %c0_11 = arith.constant 0 : index
      %12 = vector.load %arg10[%c0_10, %c0_11] : memref<8x128xf32, #tpu.memory_space<vmem>>, vector<8x128xf32>
      %c0_12 = arith.constant 0 : index
      %c0_13 = arith.constant 0 : index
      %13 = vector.load %arg7[%c0_12, %c0_13] : memref<1x128xf32, #tpu.memory_space<vmem>>, vector<1x128xf32>
      %14 = vector.broadcast %13 : vector<1x128xf32> to vector<8x128xf32>
      %15 = arith.mulf %12, %14 : vector<8x128xf32>
      %c0_14 = arith.constant 0 : index
      %c0_15 = arith.constant 0 : index
      %16 = vector.load %arg8[%c0_14, %c0_15] : memref<1x128xf32, #tpu.memory_space<vmem>>, vector<1x128xf32>
      %17 = vector.broadcast %16 : vector<1x128xf32> to vector<8x128xf32>
      %18 = arith.addf %15, %17 : vector<8x128xf32>
      %19 = arith.truncf %18 : vector<8x128xf32> to vector<8x128xbf16>
      %c0_16 = arith.constant 0 : index
      %c0_17 = arith.constant 0 : index
      %20 = vector.load %arg9[%c0_16, %c0_17] : memref<8x128xbf16, #tpu.memory_space<vmem>>, vector<8x128xbf16>
      tpu.vector_store %arg9[%c0_16, %c0_17], %19 {strides = array<i32>} : memref<8x128xbf16, #tpu.memory_space<vmem>>, vector<8x128xbf16>,
    } else {
    }
    return
  }
  func.func @transform_0(%arg0: i32, %arg1: i32, %arg2: i32) -> (i32, i32) {
    %c0_i32 = arith.constant 0 : i32
    return %arg0, %arg2 : i32, i32
  }
  func.func @transform_1(%arg0: i32, %arg1: i32, %arg2: i32) -> (i32, i32) {
    %c0_i32 = arith.constant 0 : i32
    return %arg2, %arg1 : i32, i32
  }
  func.func @transform_2(%arg0: i32, %arg1: i32, %arg2: i32) -> (i32, i32) {
    %c0_i32 = arith.constant 0 : i32
    %c0_i32_0 = arith.constant 0 : i32
    return %c0_i32, %arg2 : i32, i32
  }
  func.func @transform_3(%arg0: i32, %arg1: i32, %arg2: i32) -> (i32, i32) {
    %c0_i32 = arith.constant 0 : i32
    %c0_i32_0 = arith.constant 0 : i32
    return %c0_i32, %arg2 : i32, i32
  }
  func.func @transform_4(%arg0: i32, %arg1: i32, %arg2: i32) -> (i32, i32) {
    %c0_i32 = arith.constant 0 : i32
    %c0_i32_0 = arith.constant 0 : i32
    return %c0_i32, %arg1 : i32, i32
  }
  func.func @transform_5(%arg0: i32, %arg1: i32, %arg2: i32) -> (i32, i32) {
    %c0_i32 = arith.constant 0 : i32
    %c0_i32_0 = arith.constant 0 : i32
    return %c0_i32, %arg1 : i32, i32
  }
  func.func @transform_6(%arg0: i32, %arg1: i32, %arg2: i32) -> (i32, i32) {
    %c0_i32 = arith.constant 0 : i32
    return %arg0, %arg1 : i32, i32
  }
}

module attributes {stable_mosaic.version = 11 : i64} {
  func.func @_mm_kernel(%arg0: i32, %arg1: i32, %arg2: i32, %arg3: memref<8x128xbf16, #tpu.memory_space<vmem>>, %arg4: memref<128x128xbf16, #tpu.memory_space<vmem>>, %arg5: memref<1x128xf32, #tpu.memory_space<vmem>>, %arg6: memref<1x128xf32, #tpu.memory_space<vmem>>, %arg7: memref<1x128xf32, #tpu.memory_space<vmem>>, %arg8: memref<1x128xf32, #tpu.memory_space<vmem>>, %arg9: memref<8x128xbf16, #tpu.memory_space<vmem>>, %arg10: memref<8x128xf32, #tpu.memory_space<vmem>>) attributes {dimension_semantics = [#tpu.dimension_semantics<parallel>, #tpu.dimension_semantics<parallel>, #tpu.dimension_semantics<arbitrary>], iteration_bounds = array<i64: 1, 1, 1>, scalar_prefetch = 0 : i64, scratch_operands = 1 : i64, tpu.core_type = #tpu.core_type<tc>, window_params = [{transform_indices = @transform_0, window_bounds = array<i64: 8, 128>}, {transform_indices = @transform_1, window_bounds = array<i64: 128, 128>}, {transform_indices = @transform_2, window_bounds = array<i64: 1, 128>}, {transform_indices = @transform_3, window_bounds = array<i64: 1, 128>}, {transform_indices = @transform_4, window_bounds = array<i64: 1, 128>}, {transform_indices = @transform_5, window_bounds = array<i64: 1, 128>}, {transform_indices = @transform_6, window_bounds = array<i64: 8, 128>}]} {
    %c0_i32 = arith.constant 0 : i32
    %0 = arith.cmpi eq, %arg2, %c0_i32 : i32
    %1 = arith.extui %0 : i1 to i32
    %c0_i32_0 = arith.constant 0 : i32
    %2 = arith.cmpi ne, %1, %c0_i32_0 : i32
    scf.if %2 {
      %cst_15 = arith.constant 0.000000e+00 : f32
      %22 = vector.broadcast %cst_15 : f32 to vector<8x128xf32>
      %c0_16 = arith.constant 0 : index
      %c0_17 = arith.constant 0 : index
      %23 = vector.load %arg10[%c0_16, %c0_17] : memref<8x128xf32, #tpu.memory_space<vmem>>, vector<8x128xf32>
      tpu.vector_store %arg10[%c0_16, %c0_17], %22 {strides = array<i32>} : memref<8x128xf32, #tpu.memory_space<vmem>>, vector<8x128xf32>,
    } else {
    }
    %c0 = arith.constant 0 : index
    %c0_1 = arith.constant 0 : index
    %3 = vector.load %arg3[%c0, %c0_1] : memref<8x128xbf16, #tpu.memory_space<vmem>>, vector<8x128xbf16>
    %4 = arith.extf %3 : vector<8x128xbf16> to vector<8x128xf32>
    %c0_2 = arith.constant 0 : index
    %c0_3 = arith.constant 0 : index
    %5 = vector.load %arg5[%c0_2, %c0_3] : memref<1x128xf32, #tpu.memory_space<vmem>>, vector<1x128xf32>
    %6 = vector.broadcast %5 : vector<1x128xf32> to vector<8x128xf32>
    %7 = arith.mulf %4, %6 : vector<8x128xf32>
    %c0_4 = arith.constant 0 : index
    %c0_5 = arith.constant 0 : index
    %8 = vector.load %arg6[%c0_4, %c0_5] : memref<1x128xf32, #tpu.memory_space<vmem>>, vector<1x128xf32>
    %9 = vector.broadcast %8 : vector<1x128xf32> to vector<8x128xf32>
    %10 = arith.addf %7, %9 : vector<8x128xf32>
    %cst = arith.constant 0.000000e+00 : f32
    %11 = vector.broadcast %cst : f32 to vector<8x128xf32>
    %12 = arith.maximumf %10, %11 : vector<8x128xf32>
    %13 = arith.truncf %12 : vector<8x128xf32> to vector<8x128xbf16>
    %c0_6 = arith.constant 0 : index
    %c0_7 = arith.constant 0 : index
    %14 = vector.load %arg10[%c0_6, %c0_7] : memref<8x128xf32, #tpu.memory_space<vmem>>, vector<8x128xf32>
    %c0_8 = arith.constant 0 : index
    %c0_9 = arith.constant 0 : index
    %15 = vector.load %arg4[%c0_8, %c0_9] : memref<128x128xbf16, #tpu.memory_space<vmem>>, vector<128x128xbf16>
    %cst_10 = arith.constant dense<0.000000e+00> : vector<8x128xf32>
    %16 = tpu.matmul %13, %15, %cst_10 {dimension_numbers = #tpu.dot_dimension_numbers<[1], [0], [0], [1], [0, 0, 1, 1], [], []>} : vector<8x128xbf16>, vector<128x128xbf16>, vector<8x128xf32> -> vector<8x128xf32>
    %17 = arith.addf %14, %16 : vector<8x128xf32>
    %c0_11 = arith.constant 0 : index
    %c0_12 = arith.constant 0 : index
    %18 = vector.load %arg10[%c0_11, %c0_12] : memref<8x128xf32, #tpu.memory_space<vmem>>, vector<8x128xf32>
    tpu.vector_store %arg10[%c0_11, %c0_12], %17 {strides = array<i32>} : memref<8x128xf32, #tpu.memory_space<vmem>>, vector<8x128xf32>,
    %c0_i32_13 = arith.constant 0 : i32
    %19 = arith.cmpi eq, %arg2, %c0_i32_13 : i32
    %20 = arith.extui %19 : i1 to i32
    %c0_i32_14 = arith.constant 0 : i32
    %21 = arith.cmpi ne, %20, %c0_i32_14 : i32
    scf.if %21 {
      %c0_15 = arith.constant 0 : index
      %c0_16 = arith.constant 0 : index
      %22 = vector.load %arg10[%c0_15, %c0_16] : memref<8x128xf32, #tpu.memory_space<vmem>>, vector<8x128xf32>
      %c0_17 = arith.constant 0 : index
      %c0_18 = arith.constant 0 : index
      %23 = vector.load %arg7[%c0_17, %c0_18] : memref<1x128xf32, #tpu.memory_space<vmem>>, vector<1x128xf32>
      %24 = vector.broadcast %23 : vector<1x128xf32> to vector<8x128xf32>
      %25 = arith.mulf %22, %24 : vector<8x128xf32>
      %c0_19 = arith.constant 0 : index
      %c0_20 = arith.constant 0 : index
      %26 = vector.load %arg8[%c0_19, %c0_20] : memref<1x128xf32, #tpu.memory_space<vmem>>, vector<1x128xf32>
      %27 = vector.broadcast %26 : vector<1x128xf32> to vector<8x128xf32>
      %28 = arith.addf %25, %27 : vector<8x128xf32>
      %29 = arith.truncf %28 : vector<8x128xf32> to vector<8x128xbf16>
      %c0_21 = arith.constant 0 : index
      %c0_22 = arith.constant 0 : index
      %30 = vector.load %arg9[%c0_21, %c0_22] : memref<8x128xbf16, #tpu.memory_space<vmem>>, vector<8x128xbf16>
      tpu.vector_store %arg9[%c0_21, %c0_22], %29 {strides = array<i32>} : memref<8x128xbf16, #tpu.memory_space<vmem>>, vector<8x128xbf16>,
    } else {
    }
    return
  }
  func.func @transform_0(%arg0: i32, %arg1: i32, %arg2: i32) -> (i32, i32) {
    %c0_i32 = arith.constant 0 : i32
    return %arg0, %arg2 : i32, i32
  }
  func.func @transform_1(%arg0: i32, %arg1: i32, %arg2: i32) -> (i32, i32) {
    %c0_i32 = arith.constant 0 : i32
    return %arg2, %arg1 : i32, i32
  }
  func.func @transform_2(%arg0: i32, %arg1: i32, %arg2: i32) -> (i32, i32) {
    %c0_i32 = arith.constant 0 : i32
    %c0_i32_0 = arith.constant 0 : i32
    return %c0_i32, %arg2 : i32, i32
  }
  func.func @transform_3(%arg0: i32, %arg1: i32, %arg2: i32) -> (i32, i32) {
    %c0_i32 = arith.constant 0 : i32
    %c0_i32_0 = arith.constant 0 : i32
    return %c0_i32, %arg2 : i32, i32
  }
  func.func @transform_4(%arg0: i32, %arg1: i32, %arg2: i32) -> (i32, i32) {
    %c0_i32 = arith.constant 0 : i32
    %c0_i32_0 = arith.constant 0 : i32
    return %c0_i32, %arg1 : i32, i32
  }
  func.func @transform_5(%arg0: i32, %arg1: i32, %arg2: i32) -> (i32, i32) {
    %c0_i32 = arith.constant 0 : i32
    %c0_i32_0 = arith.constant 0 : i32
    return %c0_i32, %arg1 : i32, i32
  }
  func.func @transform_6(%arg0: i32, %arg1: i32, %arg2: i32) -> (i32, i32) {
    %c0_i32 = arith.constant 0 : i32
    return %arg0, %arg1 : i32, i32
  }
}

module attributes {stable_mosaic.version = 11 : i64} {
  func.func @_window_reduce_kernel(%arg0: i32, %arg1: memref<4x2x16xbf16, #tpu.memory_space<vmem>>, %arg2: memref<2x16xbf16, #tpu.memory_space<vmem>>) attributes {dimension_semantics = [#tpu.dimension_semantics<parallel>], iteration_bounds = array<i64: 1>, scalar_prefetch = 0 : i64, scratch_operands = 0 : i64, tpu.core_type = #tpu.core_type<tc>, window_params = [{transform_indices = @transform_0, window_bounds = array<i64: 4, 2, 16>}, {transform_indices = @transform_1, window_bounds = array<i64: 2, 16>}]} {
    %c0 = arith.constant 0 : index
    %c0_0 = arith.constant 0 : index
    %c0_1 = arith.constant 0 : index
    %0 = vector.load %arg1[%c0, %c0_0, %c0_1] : memref<4x2x16xbf16, #tpu.memory_space<vmem>>, vector<1x2x16xbf16>
    %1 = vector.shape_cast %0 : vector<1x2x16xbf16> to vector<2x16xbf16>
    %2 = arith.extf %1 : vector<2x16xbf16> to vector<2x16xf32>
    %c1 = arith.constant 1 : index
    %c0_2 = arith.constant 0 : index
    %c0_3 = arith.constant 0 : index
    %3 = vector.load %arg1[%c1, %c0_2, %c0_3] : memref<4x2x16xbf16, #tpu.memory_space<vmem>>, vector<1x2x16xbf16>
    %4 = vector.shape_cast %3 : vector<1x2x16xbf16> to vector<2x16xbf16>
    %5 = arith.extf %4 : vector<2x16xbf16> to vector<2x16xf32>
    %6 = arith.addf %2, %5 : vector<2x16xf32>
    %c2 = arith.constant 2 : index
    %c0_4 = arith.constant 0 : index
    %c0_5 = arith.constant 0 : index
    %7 = vector.load %arg1[%c2, %c0_4, %c0_5] : memref<4x2x16xbf16, #tpu.memory_space<vmem>>, vector<1x2x16xbf16>
    %8 = vector.shape_cast %7 : vector<1x2x16xbf16> to vector<2x16xbf16>
    %9 = arith.extf %8 : vector<2x16xbf16> to vector<2x16xf32>
    %10 = arith.addf %6, %9 : vector<2x16xf32>
    %c3 = arith.constant 3 : index
    %c0_6 = arith.constant 0 : index
    %c0_7 = arith.constant 0 : index
    %11 = vector.load %arg1[%c3, %c0_6, %c0_7] : memref<4x2x16xbf16, #tpu.memory_space<vmem>>, vector<1x2x16xbf16>
    %12 = vector.shape_cast %11 : vector<1x2x16xbf16> to vector<2x16xbf16>
    %13 = arith.extf %12 : vector<2x16xbf16> to vector<2x16xf32>
    %14 = arith.addf %10, %13 : vector<2x16xf32>
    %cst = arith.constant 2.500000e-01 : f32
    %15 = vector.broadcast %cst : f32 to vector<2x16xf32>
    %16 = arith.mulf %14, %15 : vector<2x16xf32>
    %17 = arith.truncf %16 : vector<2x16xf32> to vector<2x16xbf16>
    %c0_8 = arith.constant 0 : index
    %c0_9 = arith.constant 0 : index
    %18 = vector.load %arg2[%c0_8, %c0_9] : memref<2x16xbf16, #tpu.memory_space<vmem>>, vector<2x16xbf16>
    tpu.vector_store %arg2[%c0_8, %c0_9], %17 {strides = array<i32>} : memref<2x16xbf16, #tpu.memory_space<vmem>>, vector<2x16xbf16>,
    return
  }
  func.func @transform_0(%arg0: i32) -> (i32, i32, i32) {
    %c0_i32 = arith.constant 0 : i32
    %c0_i32_0 = arith.constant 0 : i32
    %c0_i32_1 = arith.constant 0 : i32
    return %c0_i32, %arg0, %c0_i32_0 : i32, i32, i32
  }
  func.func @transform_1(%arg0: i32) -> (i32, i32) {
    %c0_i32 = arith.constant 0 : i32
    %c0_i32_0 = arith.constant 0 : i32
    return %arg0, %c0_i32 : i32, i32
  }
}

module attributes {stable_mosaic.version = 11 : i64} {
  func.func @_mm_kernel(%arg0: i32, %arg1: i32, %arg2: i32, %arg3: memref<8x128xbf16, #tpu.memory_space<vmem>>, %arg4: memref<128x128xbf16, #tpu.memory_space<vmem>>, %arg5: memref<1x128xf32, #tpu.memory_space<vmem>>, %arg6: memref<1x128xf32, #tpu.memory_space<vmem>>, %arg7: memref<1x128xf32, #tpu.memory_space<vmem>>, %arg8: memref<1x128xf32, #tpu.memory_space<vmem>>, %arg9: memref<8x128xf32, #tpu.memory_space<vmem>>, %arg10: memref<8x128xf32, #tpu.memory_space<vmem>>) attributes {dimension_semantics = [#tpu.dimension_semantics<parallel>, #tpu.dimension_semantics<parallel>, #tpu.dimension_semantics<arbitrary>], iteration_bounds = array<i64: 1, 1, 1>, scalar_prefetch = 0 : i64, scratch_operands = 1 : i64, tpu.core_type = #tpu.core_type<tc>, window_params = [{transform_indices = @transform_0, window_bounds = array<i64: 8, 128>}, {transform_indices = @transform_1, window_bounds = array<i64: 128, 128>}, {transform_indices = @transform_2, window_bounds = array<i64: 1, 128>}, {transform_indices = @transform_3, window_bounds = array<i64: 1, 128>}, {transform_indices = @transform_4, window_bounds = array<i64: 1, 128>}, {transform_indices = @transform_5, window_bounds = array<i64: 1, 128>}, {transform_indices = @transform_6, window_bounds = array<i64: 8, 128>}]} {
    %c0_i32 = arith.constant 0 : i32
    %0 = arith.cmpi eq, %arg2, %c0_i32 : i32
    %1 = arith.extui %0 : i1 to i32
    %c0_i32_0 = arith.constant 0 : i32
    %2 = arith.cmpi ne, %1, %c0_i32_0 : i32
    scf.if %2 {
      %cst_10 = arith.constant 0.000000e+00 : f32
      %12 = vector.broadcast %cst_10 : f32 to vector<8x128xf32>
      %c0_11 = arith.constant 0 : index
      %c0_12 = arith.constant 0 : index
      %13 = vector.load %arg10[%c0_11, %c0_12] : memref<8x128xf32, #tpu.memory_space<vmem>>, vector<8x128xf32>
      tpu.vector_store %arg10[%c0_11, %c0_12], %12 {strides = array<i32>} : memref<8x128xf32, #tpu.memory_space<vmem>>, vector<8x128xf32>,
    } else {
    }
    %c0 = arith.constant 0 : index
    %c0_1 = arith.constant 0 : index
    %3 = vector.load %arg3[%c0, %c0_1] : memref<8x128xbf16, #tpu.memory_space<vmem>>, vector<8x128xbf16>
    %c0_2 = arith.constant 0 : index
    %c0_3 = arith.constant 0 : index
    %4 = vector.load %arg10[%c0_2, %c0_3] : memref<8x128xf32, #tpu.memory_space<vmem>>, vector<8x128xf32>
    %c0_4 = arith.constant 0 : index
    %c0_5 = arith.constant 0 : index
    %5 = vector.load %arg4[%c0_4, %c0_5] : memref<128x128xbf16, #tpu.memory_space<vmem>>, vector<128x128xbf16>
    %cst = arith.constant dense<0.000000e+00> : vector<8x128xf32>
    %6 = tpu.matmul %3, %5, %cst {dimension_numbers = #tpu.dot_dimension_numbers<[1], [0], [0], [1], [0, 0, 1, 1], [], []>} : vector<8x128xbf16>, vector<128x128xbf16>, vector<8x128xf32> -> vector<8x128xf32>
    %7 = arith.addf %4, %6 : vector<8x128xf32>
    %c0_6 = arith.constant 0 : index
    %c0_7 = arith.constant 0 : index
    %8 = vector.load %arg10[%c0_6, %c0_7] : memref<8x128xf32, #tpu.memory_space<vmem>>, vector<8x128xf32>
    tpu.vector_store %arg10[%c0_6, %c0_7], %7 {strides = array<i32>} : memref<8x128xf32, #tpu.memory_space<vmem>>, vector<8x128xf32>,
    %c0_i32_8 = arith.constant 0 : i32
    %9 = arith.cmpi eq, %arg2, %c0_i32_8 : i32
    %10 = arith.extui %9 : i1 to i32
    %c0_i32_9 = arith.constant 0 : i32
    %11 = arith.cmpi ne, %10, %c0_i32_9 : i32
    scf.if %11 {
      %c0_10 = arith.constant 0 : index
      %c0_11 = arith.constant 0 : index
      %12 = vector.load %arg10[%c0_10, %c0_11] : memref<8x128xf32, #tpu.memory_space<vmem>>, vector<8x128xf32>
      %c0_12 = arith.constant 0 : index
      %c0_13 = arith.constant 0 : index
      %13 = vector.load %arg7[%c0_12, %c0_13] : memref<1x128xf32, #tpu.memory_space<vmem>>, vector<1x128xf32>
      %14 = vector.broadcast %13 : vector<1x128xf32> to vector<8x128xf32>
      %15 = arith.mulf %12, %14 : vector<8x128xf32>
      %c0_14 = arith.constant 0 : index
      %c0_15 = arith.constant 0 : index
      %16 = vector.load %arg8[%c0_14, %c0_15] : memref<1x128xf32, #tpu.memory_space<vmem>>, vector<1x128xf32>
      %17 = vector.broadcast %16 : vector<1x128xf32> to vector<8x128xf32>
      %18 = arith.addf %15, %17 : vector<8x128xf32>
      %c0_16 = arith.constant 0 : index
      %c0_17 = arith.constant 0 : index
      %19 = vector.load %arg9[%c0_16, %c0_17] : memref<8x128xf32, #tpu.memory_space<vmem>>, vector<8x128xf32>
      tpu.vector_store %arg9[%c0_16, %c0_17], %18 {strides = array<i32>} : memref<8x128xf32, #tpu.memory_space<vmem>>, vector<8x128xf32>,
    } else {
    }
    return
  }
  func.func @transform_0(%arg0: i32, %arg1: i32, %arg2: i32) -> (i32, i32) {
    %c0_i32 = arith.constant 0 : i32
    return %arg0, %arg2 : i32, i32
  }
  func.func @transform_1(%arg0: i32, %arg1: i32, %arg2: i32) -> (i32, i32) {
    %c0_i32 = arith.constant 0 : i32
    return %arg2, %arg1 : i32, i32
  }
  func.func @transform_2(%arg0: i32, %arg1: i32, %arg2: i32) -> (i32, i32) {
    %c0_i32 = arith.constant 0 : i32
    %c0_i32_0 = arith.constant 0 : i32
    return %c0_i32, %arg2 : i32, i32
  }
  func.func @transform_3(%arg0: i32, %arg1: i32, %arg2: i32) -> (i32, i32) {
    %c0_i32 = arith.constant 0 : i32
    %c0_i32_0 = arith.constant 0 : i32
    return %c0_i32, %arg2 : i32, i32
  }
  func.func @transform_4(%arg0: i32, %arg1: i32, %arg2: i32) -> (i32, i32) {
    %c0_i32 = arith.constant 0 : i32
    %c0_i32_0 = arith.constant 0 : i32
    return %c0_i32, %arg1 : i32, i32
  }
  func.func @transform_5(%arg0: i32, %arg1: i32, %arg2: i32) -> (i32, i32) {
    %c0_i32 = arith.constant 0 : i32
    %c0_i32_0 = arith.constant 0 : i32
    return %c0_i32, %arg1 : i32, i32
  }
  func.func @transform_6(%arg0: i32, %arg1: i32, %arg2: i32) -> (i32, i32) {
    %c0_i32 = arith.constant 0 : i32
    return %arg0, %arg1 : i32, i32
  }
}

</mosaic_0001>

<llo_original>
// kernel: densenet121_combine_forward.26
$region0: #{densenet121_combine_forward.26}
  #allocation0 [shape = 'u32[]', space=smem, size = 0x4, offset = 0x4, fixed_abs, tag = 'smem constant byte address 0x4 - core index']
  #allocation1 [shape = 'u32[72,128]{1,0:T(1,128)}', space=vmem, size = 0x9000, scoped, tag = 'internal scratch']
  %s0 = inlined_call_operand.vmem [shape: bf16[9,128,16], index: 0, kind: input, shape index: {}]
  %s1 = inlined_call_operand.vmem [shape: bf16[128,16], index: 1, kind: output, shape index: {}]
  %s2 = sld [smem:[#allocation0]]
  $region14: #{densenet121_combine_forward.26} parent=0
    _
  %s4 = ssub.s32 1, %s2
  %s5 = scalar_select 0, %s4, %s2
  // Predicated region
  $region2: #{densenet121_combine_forward.26} parent=0 // pred_check
    _
  $region3: #{densenet121_combine_forward.26} parent=0 // pred_check_branch
    %7 = sbr.rel (0) target = $region5
  $region4: #{densenet121_combine_forward.26} parent=0 // pred_region
    _
  $region5: #{densenet121_combine_forward.26} parent=0 // pred_fallthru
    _
  %v8 = vld [vmem:[%s0] sm:$0xf]
  %v9 = vld [vmem:[%s0 + $0x4] sm:$0xf]
  %v10 = vld [vmem:[%s0 + $0x8] sm:$0xf]
  %v11 = vld [vmem:[%s0 + $0xc] sm:$0xf]
  %v12 = vld [vmem:[%s0 + $0x10] sm:$0xf]
  %v13 = vld [vmem:[%s0 + $0x14] sm:$0xf]
  %v14 = vld [vmem:[%s0 + $0x18] sm:$0xf]
  %v15 = vld [vmem:[%s0 + $0x1c] sm:$0xf]
  %v16 = vld [vmem:[%s0 + $0x20] sm:$0xf]
  %v17 = vld [vmem:[%s0 + $0x24] sm:$0xf]
  %v18 = vld [vmem:[%s0 + $0x28] sm:$0xf]
  %v19 = vld [vmem:[%s0 + $0x2c] sm:$0xf]
  %v20 = vld [vmem:[%s0 + $0x30] sm:$0xf]
  %v21 = vld [vmem:[%s0 + $0x34] sm:$0xf]
  %v22 = vld [vmem:[%s0 + $0x38] sm:$0xf]
  %v23 = vld [vmem:[%s0 + $0x3c] sm:$0xf]
  %s24 = scalar_lea.vmem %s0, 64
  %v25 = vld [vmem:[%s24] sm:$0xf]
  %v26 = vld [vmem:[%s24 + $0x4] sm:$0xf]
  %v27 = vld [vmem:[%s24 + $0x8] sm:$0xf]
  %v28 = vld [vmem:[%s24 + $0xc] sm:$0xf]
  %v29 = vld [vmem:[%s24 + $0x10] sm:$0xf]
  %v30 = vld [vmem:[%s24 + $0x14] sm:$0xf]
  %v31 = vld [vmem:[%s24 + $0x18] sm:$0xf]
  %v32 = vld [vmem:[%s24 + $0x1c] sm:$0xf]
  %v33 = vld [vmem:[%s24 + $0x20] sm:$0xf]
  %v34 = vld [vmem:[%s24 + $0x24] sm:$0xf]
  %v35 = vld [vmem:[%s24 + $0x28] sm:$0xf]
  %v36 = vld [vmem:[%s24 + $0x2c] sm:$0xf]
  %v37 = vld [vmem:[%s24 + $0x30] sm:$0xf]
  %v38 = vld [vmem:[%s24 + $0x34] sm:$0xf]
  %v39 = vld [vmem:[%s24 + $0x38] sm:$0xf]
  %v40 = vld [vmem:[%s24 + $0x3c] sm:$0xf]
  %v41 = vunpack.c.l.bf16 %v8
  %v42 = vunpack.c.l.bf16 %v9
  %v43 = vunpack.c.l.bf16 %v10
  %v44 = vunpack.c.l.bf16 %v11
  %v45 = vunpack.c.l.bf16 %v12
  %v46 = vunpack.c.l.bf16 %v13
  %v47 = vunpack.c.l.bf16 %v14
  %v48 = vunpack.c.l.bf16 %v15
  %v49 = vunpack.c.l.bf16 %v16
  %v50 = vunpack.c.l.bf16 %v17
  %v51 = vunpack.c.l.bf16 %v18
  %v52 = vunpack.c.l.bf16 %v19
  %v53 = vunpack.c.l.bf16 %v20
  %v54 = vunpack.c.l.bf16 %v21
  %v55 = vunpack.c.l.bf16 %v22
  %v56 = vunpack.c.l.bf16 %v23
  %v57 = vunpack.c.l.bf16 %v25
  %v58 = vunpack.c.l.bf16 %v26
  %v59 = vunpack.c.l.bf16 %v27
  %v60 = vunpack.c.l.bf16 %v28
  %v61 = vunpack.c.l.bf16 %v29
  %v62 = vunpack.c.l.bf16 %v30
  %v63 = vunpack.c.l.bf16 %v31
  %v64 = vunpack.c.l.bf16 %v32
  %v65 = vunpack.c.l.bf16 %v33
  %v66 = vunpack.c.l.bf16 %v34
  %v67 = vunpack.c.l.bf16 %v35
  %v68 = vunpack.c.l.bf16 %v36
  %v69 = vunpack.c.l.bf16 %v37
  %v70 = vunpack.c.l.bf16 %v38
  %v71 = vunpack.c.l.bf16 %v39
  %v72 = vunpack.c.l.bf16 %v40
  %v73 = vmax.f32 %v41, %v57
  %v74 = vmax.f32 %v42, %v58
  %v75 = vmax.f32 %v43, %v59
  %v76 = vmax.f32 %v44, %v60
  %v77 = vmax.f32 %v45, %v61
  %v78 = vmax.f32 %v46, %v62
  %v79 = vmax.f32 %v47, %v63
  %v80 = vmax.f32 %v48, %v64
  %v81 = vmax.f32 %v49, %v65
  %v82 = vmax.f32 %v50, %v66
  %v83 = vmax.f32 %v51, %v67
  %v84 = vmax.f32 %v52, %v68
  %v85 = vmax.f32 %v53, %v69
  %v86 = vmax.f32 %v54, %v70
  %v87 = vmax.f32 %v55, %v71
  %v88 = vmax.f32 %v56, %v72
  %v89 = vpack.c.bf16 %v73, %v73
  %v90 = vpack.c.bf16 %v74, %v74
  %v91 = vpack.c.bf16 %v75, %v75
  %v92 = vpack.c.bf16 %v76, %v76
  %v93 = vpack.c.bf16 %v77, %v77
  %v94 = vpack.c.bf16 %v78, %v78
  %v95 = vpack.c.bf16 %v79, %v79
  %v96 = vpack.c.bf16 %v80, %v80
  %v97 = vpack.c.bf16 %v81, %v81
  %v98 = vpack.c.bf16 %v82, %v82
  %v99 = vpack.c.bf16 %v83, %v83
  %v100 = vpack.c.bf16 %v84, %v84
  %v101 = vpack.c.bf16 %v85, %v85
  %v102 = vpack.c.bf16 %v86, %v86
  %v103 = vpack.c.bf16 %v87, %v87
  %v104 = vpack.c.bf16 %v88, %v88
  %s105 = scalar_lea.vmem %s0, 128
  %v106 = vld [vmem:[%s105] sm:$0xf]
  %v107 = vld [vmem:[%s105 + $0x4] sm:$0xf]
  %v108 = vld [vmem:[%s105 + $0x8] sm:$0xf]
  %v109 = vld [vmem:[%s105 + $0xc] sm:$0xf]
  %v110 = vld [vmem:[%s105 + $0x10] sm:$0xf]
  %v111 = vld [vmem:[%s105 + $0x14] sm:$0xf]
  %v112 = vld [vmem:[%s105 + $0x18] sm:$0xf]
  %v113 = vld [vmem:[%s105 + $0x1c] sm:$0xf]
  %v114 = vld [vmem:[%s105 + $0x20] sm:$0xf]
  %v115 = vld [vmem:[%s105 + $0x24] sm:$0xf]
  %v116 = vld [vmem:[%s105 + $0x28] sm:$0xf]
  %v117 = vld [vmem:[%s105 + $0x2c] sm:$0xf]
  %v118 = vld [vmem:[%s105 + $0x30] sm:$0xf]
  %v119 = vld [vmem:[%s105 + $0x34] sm:$0xf]
  %v120 = vld [vmem:[%s105 + $0x38] sm:$0xf]
  %v121 = vld [vmem:[%s105 + $0x3c] sm:$0xf]
  %v122 = vunpack.c.l.bf16 %v89
  %v123 = vunpack.c.l.bf16 %v90
  %v124 = vunpack.c.l.bf16 %v91
  %v125 = vunpack.c.l.bf16 %v92
  %v126 = vunpack.c.l.bf16 %v93
  %v127 = vunpack.c.l.bf16 %v94
  %v128 = vunpack.c.l.bf16 %v95
  %v129 = vunpack.c.l.bf16 %v96
  %v130 = vunpack.c.l.bf16 %v97
  %v131 = vunpack.c.l.bf16 %v98
  %v132 = vunpack.c.l.bf16 %v99
  %v133 = vunpack.c.l.bf16 %v100
  %v134 = vunpack.c.l.bf16 %v101
  %v135 = vunpack.c.l.bf16 %v102
  %v136 = vunpack.c.l.bf16 %v103
  %v137 = vunpack.c.l.bf16 %v104
  %v138 = vunpack.c.l.bf16 %v106
  %v139 = vunpack.c.l.bf16 %v107
  %v140 = vunpack.c.l.bf16 %v108
  %v141 = vunpack.c.l.bf16 %v109
  %v142 = vunpack.c.l.bf16 %v110
  %v143 = vunpack.c.l.bf16 %v111
  %v144 = vunpack.c.l.bf16 %v112
  %v145 = vunpack.c.l.bf16 %v113
  %v146 = vunpack.c.l.bf16 %v114
  %v147 = vunpack.c.l.bf16 %v115
  %v148 = vunpack.c.l.bf16 %v116
  %v149 = vunpack.c.l.bf16 %v117
  %v150 = vunpack.c.l.bf16 %v118
  %v151 = vunpack.c.l.bf16 %v119
  %v152 = vunpack.c.l.bf16 %v120
  %v153 = vunpack.c.l.bf16 %v121
  %v154 = vmax.f32 %v122, %v138
  %v155 = vmax.f32 %v123, %v139
  %v156 = vmax.f32 %v124, %v140
  %v157 = vmax.f32 %v125, %v141
  %v158 = vmax.f32 %v126, %v142
  %v159 = vmax.f32 %v127, %v143
  %v160 = vmax.f32 %v128, %v144
  %v161 = vmax.f32 %v129, %v145
  %v162 = vmax.f32 %v130, %v146
  %v163 = vmax.f32 %v131, %v147
  %v164 = vmax.f32 %v132, %v148
  %v165 = vmax.f32 %v133, %v149
  %v166 = vmax.f32 %v134, %v150
  %v167 = vmax.f32 %v135, %v151
  %v168 = vmax.f32 %v136, %v152
  %v169 = vmax.f32 %v137, %v153
  %v170 = vpack.c.bf16 %v154, %v154
  %v171 = vpack.c.bf16 %v155, %v155
  %v172 = vpack.c.bf16 %v156, %v156
  %v173 = vpack.c.bf16 %v157, %v157
  %v174 = vpack.c.bf16 %v158, %v158
  %v175 = vpack.c.bf16 %v159, %v159
  %v176 = vpack.c.bf16 %v160, %v160
  %v177 = vpack.c.bf16 %v161, %v161
  %v178 = vpack.c.bf16 %v162, %v162
  %v179 = vpack.c.bf16 %v163, %v163
  %v180 = vpack.c.bf16 %v164, %v164
  %v181 = vpack.c.bf16 %v165, %v165
  %v182 = vpack.c.bf16 %v166, %v166
  %v183 = vpack.c.bf16 %v167, %v167
  %v184 = vpack.c.bf16 %v168, %v168
  %v185 = vpack.c.bf16 %v169, %v169
  %s186 = scalar_lea.vmem %s0, 192
  %v187 = vld [vmem:[%s186] sm:$0xf]
  %v188 = vld [vmem:[%s186 + $0x4] sm:$0xf]
  %v189 = vld [vmem:[%s186 + $0x8] sm:$0xf]
  %v190 = vld [vmem:[%s186 + $0xc] sm:$0xf]
  %v191 = vld [vmem:[%s186 + $0x10] sm:$0xf]
  %v192 = vld [vmem:[%s186 + $0x14] sm:$0xf]
  %v193 = vld [vmem:[%s186 + $0x18] sm:$0xf]
  %v194 = vld [vmem:[%s186 + $0x1c] sm:$0xf]
  %v195 = vld [vmem:[%s186 + $0x20] sm:$0xf]
  %v196 = vld [vmem:[%s186 + $0x24] sm:$0xf]
  %v197 = vld [vmem:[%s186 + $0x28] sm:$0xf]
  %v198 = vld [vmem:[%s186 + $0x2c] sm:$0xf]
  %v199 = vld [vmem:[%s186 + $0x30] sm:$0xf]
  %v200 = vld [vmem:[%s186 + $0x34] sm:$0xf]
  %v201 = vld [vmem:[%s186 + $0x38] sm:$0xf]
  %v202 = vld [vmem:[%s186 + $0x3c] sm:$0xf]
  %v203 = vunpack.c.l.bf16 %v170
  %v204 = vunpack.c.l.bf16 %v171
  %v205 = vunpack.c.l.bf16 %v172
  %v206 = vunpack.c.l.bf16 %v173
  %v207 = vunpack.c.l.bf16 %v174
  %v208 = vunpack.c.l.bf16 %v175
  %v209 = vunpack.c.l.bf16 %v176
  %v210 = vunpack.c.l.bf16 %v177
  %v211 = vunpack.c.l.bf16 %v178
  %v212 = vunpack.c.l.bf16 %v179
  %v213 = vunpack.c.l.bf16 %v180
  %v214 = vunpack.c.l.bf16 %v181
  %v215 = vunpack.c.l.bf16 %v182
  %v216 = vunpack.c.l.bf16 %v183
  %v217 = vunpack.c.l.bf16 %v184
  %v218 = vunpack.c.l.bf16 %v185
  %v219 = vunpack.c.l.bf16 %v187
  %v220 = vunpack.c.l.bf16 %v188
  %v221 = vunpack.c.l.bf16 %v189
  %v222 = vunpack.c.l.bf16 %v190
  %v223 = vunpack.c.l.bf16 %v191
  %v224 = vunpack.c.l.bf16 %v192
  %v225 = vunpack.c.l.bf16 %v193
  %v226 = vunpack.c.l.bf16 %v194
  %v227 = vunpack.c.l.bf16 %v195
  %v228 = vunpack.c.l.bf16 %v196
  %v229 = vunpack.c.l.bf16 %v197
  %v230 = vunpack.c.l.bf16 %v198
  %v231 = vunpack.c.l.bf16 %v199
  %v232 = vunpack.c.l.bf16 %v200
  %v233 = vunpack.c.l.bf16 %v201
  %v234 = vunpack.c.l.bf16 %v202
  %v235 = vmax.f32 %v203, %v219
  %v236 = vmax.f32 %v204, %v220
  %v237 = vmax.f32 %v205, %v221
  %v238 = vmax.f32 %v206, %v222
  %v239 = vmax.f32 %v207, %v223
  %v240 = vmax.f32 %v208, %v224
  %v241 = vmax.f32 %v209, %v225
  %v242 = vmax.f32 %v210, %v226
  %v243 = vmax.f32 %v211, %v227
  %v244 = vmax.f32 %v212, %v228
  %v245 = vmax.f32 %v213, %v229
  %v246 = vmax.f32 %v214, %v230
  %v247 = vmax.f32 %v215, %v231
  %v248 = vmax.f32 %v216, %v232
  %v249 = vmax.f32 %v217, %v233
  %v250 = vmax.f32 %v218, %v234
  %v251 = vpack.c.bf16 %v235, %v235
  %v252 = vpack.c.bf16 %v236, %v236
  %v253 = vpack.c.bf16 %v237, %v237
  %v254 = vpack.c.bf16 %v238, %v238
  %v255 = vpack.c.bf16 %v239, %v239
  %v256 = vpack.c.bf16 %v240, %v240
  %v257 = vpack.c.bf16 %v241, %v241
  %v258 = vpack.c.bf16 %v242, %v242
  %v259 = vpack.c.bf16 %v243, %v243
  %v260 = vpack.c.bf16 %v244, %v244
  %v261 = vpack.c.bf16 %v245, %v245
  %v262 = vpack.c.bf16 %v246, %v246
  %v263 = vpack.c.bf16 %v247, %v247
  %v264 = vpack.c.bf16 %v248, %v248
  %v265 = vpack.c.bf16 %v249, %v249
  %v266 = vpack.c.bf16 %v250, %v250
  %s267 = scalar_lea.vmem %s0, 256
  %v268 = vld [vmem:[%s267] sm:$0xf]
  %v269 = vld [vmem:[%s267 + $0x4] sm:$0xf]
  %v270 = vld [vmem:[%s267 + $0x8] sm:$0xf]
  %v271 = vld [vmem:[%s267 + $0xc] sm:$0xf]
  %v272 = vld [vmem:[%s267 + $0x10] sm:$0xf]
  %v273 = vld [vmem:[%s267 + $0x14] sm:$0xf]
  %v274 = vld [vmem:[%s267 + $0x18] sm:$0xf]
  %v275 = vld [vmem:[%s267 + $0x1c] sm:$0xf]
  %v276 = vld [vmem:[%s267 + $0x20] sm:$0xf]
  %v277 = vld [vmem:[%s267 + $0x24] sm:$0xf]
  %v278 = vld [vmem:[%s267 + $0x28] sm:$0xf]
  %v279 = vld [vmem:[%s267 + $0x2c] sm:$0xf]
  %v280 = vld [vmem:[%s267 + $0x30] sm:$0xf]
  %v281 = vld [vmem:[%s267 + $0x34] sm:$0xf]
  %v282 = vld [vmem:[%s267 + $0x38] sm:$0xf]
  %v283 = vld [vmem:[%s267 + $0x3c] sm:$0xf]
  %v284 = vunpack.c.l.bf16 %v251
  %v285 = vunpack.c.l.bf16 %v252
  %v286 = vunpack.c.l.bf16 %v253
  %v287 = vunpack.c.l.bf16 %v254
  %v288 = vunpack.c.l.bf16 %v255
  %v289 = vunpack.c.l.bf16 %v256
  %v290 = vunpack.c.l.bf16 %v257
  %v291 = vunpack.c.l.bf16 %v258
  %v292 = vunpack.c.l.bf16 %v259
  %v293 = vunpack.c.l.bf16 %v260
  %v294 = vunpack.c.l.bf16 %v261
  %v295 = vunpack.c.l.bf16 %v262
  %v296 = vunpack.c.l.bf16 %v263
  %v297 = vunpack.c.l.bf16 %v264
  %v298 = vunpack.c.l.bf16 %v265
  %v299 = vunpack.c.l.bf16 %v266
  %v300 = vunpack.c.l.bf16 %v268
  %v301 = vunpack.c.l.bf16 %v269
  %v302 = vunpack.c.l.bf16 %v270
  %v303 = vunpack.c.l.bf16 %v271
  %v304 = vunpack.c.l.bf16 %v272
  %v305 = vunpack.c.l.bf16 %v273
  %v306 = vunpack.c.l.bf16 %v274
  %v307 = vunpack.c.l.bf16 %v275
  %v308 = vunpack.c.l.bf16 %v276
  %v309 = vunpack.c.l.bf16 %v277
  %v310 = vunpack.c.l.bf16 %v278
  %v311 = vunpack.c.l.bf16 %v279
  %v312 = vunpack.c.l.bf16 %v280
  %v313 = vunpack.c.l.bf16 %v281
  %v314 = vunpack.c.l.bf16 %v282
  %v315 = vunpack.c.l.bf16 %v283
  %v316 = vmax.f32 %v284, %v300
  %v317 = vmax.f32 %v285, %v301
  %v318 = vmax.f32 %v286, %v302
  %v319 = vmax.f32 %v287, %v303
  %v320 = vmax.f32 %v288, %v304
  %v321 = vmax.f32 %v289, %v305
  %v322 = vmax.f32 %v290, %v306
  %v323 = vmax.f32 %v291, %v307
  %v324 = vmax.f32 %v292, %v308
  %v325 = vmax.f32 %v293, %v309
  %v326 = vmax.f32 %v294, %v310
  %v327 = vmax.f32 %v295, %v311
  %v328 = vmax.f32 %v296, %v312
  %v329 = vmax.f32 %v297, %v313
  %v330 = vmax.f32 %v298, %v314
  %v331 = vmax.f32 %v299, %v315
  %v332 = vpack.c.bf16 %v316, %v316
  %v333 = vpack.c.bf16 %v317, %v317
  %v334 = vpack.c.bf16 %v318, %v318
  %v335 = vpack.c.bf16 %v319, %v319
  %v336 = vpack.c.bf16 %v320, %v320
  %v337 = vpack.c.bf16 %v321, %v321
  %v338 = vpack.c.bf16 %v322, %v322
  %v339 = vpack.c.bf16 %v323, %v323
  %v340 = vpack.c.bf16 %v324, %v324
  %v341 = vpack.c.bf16 %v325, %v325
  %v342 = vpack.c.bf16 %v326, %v326
  %v343 = vpack.c.bf16 %v327, %v327
  %v344 = vpack.c.bf16 %v328, %v328
  %v345 = vpack.c.bf16 %v329, %v329
  %v346 = vpack.c.bf16 %v330, %v330
  %v347 = vpack.c.bf16 %v331, %v331
  %s348 = scalar_lea.vmem %s0, 320
  %v349 = vld [vmem:[%s348] sm:$0xf]
  %v350 = vld [vmem:[%s348 + $0x4] sm:$0xf]
  %v351 = vld [vmem:[%s348 + $0x8] sm:$0xf]
  %v352 = vld [vmem:[%s348 + $0xc] sm:$0xf]
  %v353 = vld [vmem:[%s348 + $0x10] sm:$0xf]
  %v354 = vld [vmem:[%s348 + $0x14] sm:$0xf]
  %v355 = vld [vmem:[%s348 + $0x18] sm:$0xf]
  %v356 = vld [vmem:[%s348 + $0x1c] sm:$0xf]
  %v357 = vld [vmem:[%s348 + $0x20] sm:$0xf]
  %v358 = vld [vmem:[%s348 + $0x24] sm:$0xf]
  %v359 = vld [vmem:[%s348 + $0x28] sm:$0xf]
  %v360 = vld [vmem:[%s348 + $0x2c] sm:$0xf]
  %v361 = vld [vmem:[%s348 + $0x30] sm:$0xf]
  %v362 = vld [vmem:[%s348 + $0x34] sm:$0xf]
  %v363 = vld [vmem:[%s348 + $0x38] sm:$0xf]
  %v364 = vld [vmem:[%s348 + $0x3c] sm:$0xf]
  %v365 = vunpack.c.l.bf16 %v332
  %v366 = vunpack.c.l.bf16 %v333
  %v367 = vunpack.c.l.bf16 %v334
  %v368 = vunpack.c.l.bf16 %v335
  %v369 = vunpack.c.l.bf16 %v336
  %v370 = vunpack.c.l.bf16 %v337
  %v371 = vunpack.c.l.bf16 %v338
  %v372 = vunpack.c.l.bf16 %v339
  %v373 = vunpack.c.l.bf16 %v340
  %v374 = vunpack.c.l.bf16 %v341
  %v375 = vunpack.c.l.bf16 %v342
  %v376 = vunpack.c.l.bf16 %v343
  %v377 = vunpack.c.l.bf16 %v344
  %v378 = vunpack.c.l.bf16 %v345
  %v379 = vunpack.c.l.bf16 %v346
  %v380 = vunpack.c.l.bf16 %v347
  %v381 = vunpack.c.l.bf16 %v349
  %v382 = vunpack.c.l.bf16 %v350
  %v383 = vunpack.c.l.bf16 %v351
  %v384 = vunpack.c.l.bf16 %v352
  %v385 = vunpack.c.l.bf16 %v353
  %v386 = vunpack.c.l.bf16 %v354
  %v387 = vunpack.c.l.bf16 %v355
  %v388 = vunpack.c.l.bf16 %v356
  %v389 = vunpack.c.l.bf16 %v357
  %v390 = vunpack.c.l.bf16 %v358
  %v391 = vunpack.c.l.bf16 %v359
  %v392 = vunpack.c.l.bf16 %v360
  %v393 = vunpack.c.l.bf16 %v361
  %v394 = vunpack.c.l.bf16 %v362
  %v395 = vunpack.c.l.bf16 %v363
  %v396 = vunpack.c.l.bf16 %v364
  %v397 = vmax.f32 %v365, %v381
  %v398 = vmax.f32 %v366, %v382
  %v399 = vmax.f32 %v367, %v383
  %v400 = vmax.f32 %v368, %v384
  %v401 = vmax.f32 %v369, %v385
  %v402 = vmax.f32 %v370, %v386
  %v403 = vmax.f32 %v371, %v387
  %v404 = vmax.f32 %v372, %v388
  %v405 = vmax.f32 %v373, %v389
  %v406 = vmax.f32 %v374, %v390
  %v407 = vmax.f32 %v375, %v391
  %v408 = vmax.f32 %v376, %v392
  %v409 = vmax.f32 %v377, %v393
  %v410 = vmax.f32 %v378, %v394
  %v411 = vmax.f32 %v379, %v395
  %v412 = vmax.f32 %v380, %v396
  %v413 = vpack.c.bf16 %v397, %v397
  %v414 = vpack.c.bf16 %v398, %v398
  %v415 = vpack.c.bf16 %v399, %v399
  %v416 = vpack.c.bf16 %v400, %v400
  %v417 = vpack.c.bf16 %v401, %v401
  %v418 = vpack.c.bf16 %v402, %v402
  %v419 = vpack.c.bf16 %v403, %v403
  %v420 = vpack.c.bf16 %v404, %v404
  %v421 = vpack.c.bf16 %v405, %v405
  %v422 = vpack.c.bf16 %v406, %v406
  %v423 = vpack.c.bf16 %v407, %v407
  %v424 = vpack.c.bf16 %v408, %v408
  %v425 = vpack.c.bf16 %v409, %v409
  %v426 = vpack.c.bf16 %v410, %v410
  %v427 = vpack.c.bf16 %v411, %v411
  %v428 = vpack.c.bf16 %v412, %v412
  %s429 = scalar_lea.vmem %s0, 384
  %v430 = vld [vmem:[%s429] sm:$0xf]
  %v431 = vld [vmem:[%s429 + $0x4] sm:$0xf]
  %v432 = vld [vmem:[%s429 + $0x8] sm:$0xf]
  %v433 = vld [vmem:[%s429 + $0xc] sm:$0xf]
  %v434 = vld [vmem:[%s429 + $0x10] sm:$0xf]
  %v435 = vld [vmem:[%s429 + $0x14] sm:$0xf]
  %v436 = vld [vmem:[%s429 + $0x18] sm:$0xf]
  %v437 = vld [vmem:[%s429 + $0x1c] sm:$0xf]
  %v438 = vld [vmem:[%s429 + $0x20] sm:$0xf]
  %v439 = vld [vmem:[%s429 + $0x24] sm:$0xf]
  %v440 = vld [vmem:[%s429 + $0x28] sm:$0xf]
  %v441 = vld [vmem:[%s429 + $0x2c] sm:$0xf]
  %v442 = vld [vmem:[%s429 + $0x30] sm:$0xf]
  %v443 = vld [vmem:[%s429 + $0x34] sm:$0xf]
  %v444 = vld [vmem:[%s429 + $0x38] sm:$0xf]
  %v445 = vld [vmem:[%s429 + $0x3c] sm:$0xf]
  %v446 = vunpack.c.l.bf16 %v413
  %v447 = vunpack.c.l.bf16 %v414
  %v448 = vunpack.c.l.bf16 %v415
  %v449 = vunpack.c.l.bf16 %v416
  %v450 = vunpack.c.l.bf16 %v417
  %v451 = vunpack.c.l.bf16 %v418
  %v452 = vunpack.c.l.bf16 %v419
  %v453 = vunpack.c.l.bf16 %v420
  %v454 = vunpack.c.l.bf16 %v421
  %v455 = vunpack.c.l.bf16 %v422
  %v456 = vunpack.c.l.bf16 %v423
  %v457 = vunpack.c.l.bf16 %v424
  %v458 = vunpack.c.l.bf16 %v425
  %v459 = vunpack.c.l.bf16 %v426
  %v460 = vunpack.c.l.bf16 %v427
  %v461 = vunpack.c.l.bf16 %v428
  %v462 = vunpack.c.l.bf16 %v430
  %v463 = vunpack.c.l.bf16 %v431
  %v464 = vunpack.c.l.bf16 %v432
  %v465 = vunpack.c.l.bf16 %v433
  %v466 = vunpack.c.l.bf16 %v434
  %v467 = vunpack.c.l.bf16 %v435
  %v468 = vunpack.c.l.bf16 %v436
  %v469 = vunpack.c.l.bf16 %v437
  %v470 = vunpack.c.l.bf16 %v438
  %v471 = vunpack.c.l.bf16 %v439
  %v472 = vunpack.c.l.bf16 %v440
  %v473 = vunpack.c.l.bf16 %v441
  %v474 = vunpack.c.l.bf16 %v442
  %v475 = vunpack.c.l.bf16 %v443
  %v476 = vunpack.c.l.bf16 %v444
  %v477 = vunpack.c.l.bf16 %v445
  %v478 = vmax.f32 %v446, %v462
  %v479 = vmax.f32 %v447, %v463
  %v480 = vmax.f32 %v448, %v464
  %v481 = vmax.f32 %v449, %v465
  %v482 = vmax.f32 %v450, %v466
  %v483 = vmax.f32 %v451, %v467
  %v484 = vmax.f32 %v452, %v468
  %v485 = vmax.f32 %v453, %v469
  %v486 = vmax.f32 %v454, %v470
  %v487 = vmax.f32 %v455, %v471
  %v488 = vmax.f32 %v456, %v472
  %v489 = vmax.f32 %v457, %v473
  %v490 = vmax.f32 %v458, %v474
  %v491 = vmax.f32 %v459, %v475
  %v492 = vmax.f32 %v460, %v476
  %v493 = vmax.f32 %v461, %v477
  %v494 = vpack.c.bf16 %v478, %v478
  %v495 = vpack.c.bf16 %v479, %v479
  %v496 = vpack.c.bf16 %v480, %v480
  %v497 = vpack.c.bf16 %v481, %v481
  %v498 = vpack.c.bf16 %v482, %v482
  %v499 = vpack.c.bf16 %v483, %v483
  %v500 = vpack.c.bf16 %v484, %v484
  %v501 = vpack.c.bf16 %v485, %v485
  %v502 = vpack.c.bf16 %v486, %v486
  %v503 = vpack.c.bf16 %v487, %v487
  %v504 = vpack.c.bf16 %v488, %v488
  %v505 = vpack.c.bf16 %v489, %v489
  %v506 = vpack.c.bf16 %v490, %v490
  %v507 = vpack.c.bf16 %v491, %v491
  %v508 = vpack.c.bf16 %v492, %v492
  %v509 = vpack.c.bf16 %v493, %v493
  %s510 = scalar_lea.vmem %s0, 448
  %v511 = vld [vmem:[%s510] sm:$0xf]
  %v512 = vld [vmem:[%s510 + $0x4] sm:$0xf]
  %v513 = vld [vmem:[%s510 + $0x8] sm:$0xf]
  %v514 = vld [vmem:[%s510 + $0xc] sm:$0xf]
  %v515 = vld [vmem:[%s510 + $0x10] sm:$0xf]
  %v516 = vld [vmem:[%s510 + $0x14] sm:$0xf]
  %v517 = vld [vmem:[%s510 + $0x18] sm:$0xf]
  %v518 = vld [vmem:[%s510 + $0x1c] sm:$0xf]
  %v519 = vld [vmem:[%s510 + $0x20] sm:$0xf]
  %v520 = vld [vmem:[%s510 + $0x24] sm:$0xf]
  %v521 = vld [vmem:[%s510 + $0x28] sm:$0xf]
  %v522 = vld [vmem:[%s510 + $0x2c] sm:$0xf]
  %v523 = vld [vmem:[%s510 + $0x30] sm:$0xf]
  %v524 = vld [vmem:[%s510 + $0x34] sm:$0xf]
  %v525 = vld [vmem:[%s510 + $0x38] sm:$0xf]
  %v526 = vld [vmem:[%s510 + $0x3c] sm:$0xf]
  %v527 = vunpack.c.l.bf16 %v494
  %v528 = vunpack.c.l.bf16 %v495
  %v529 = vunpack.c.l.bf16 %v496
  %v530 = vunpack.c.l.bf16 %v497
  %v531 = vunpack.c.l.bf16 %v498
  %v532 = vunpack.c.l.bf16 %v499
  %v533 = vunpack.c.l.bf16 %v500
  %v534 = vunpack.c.l.bf16 %v501
  %v535 = vunpack.c.l.bf16 %v502
  %v536 = vunpack.c.l.bf16 %v503
  %v537 = vunpack.c.l.bf16 %v504
  %v538 = vunpack.c.l.bf16 %v505
  %v539 = vunpack.c.l.bf16 %v506
  %v540 = vunpack.c.l.bf16 %v507
  %v541 = vunpack.c.l.bf16 %v508
  %v542 = vunpack.c.l.bf16 %v509
  %v543 = vunpack.c.l.bf16 %v511
  %v544 = vunpack.c.l.bf16 %v512
  %v545 = vunpack.c.l.bf16 %v513
  %v546 = vunpack.c.l.bf16 %v514
  %v547 = vunpack.c.l.bf16 %v515
  %v548 = vunpack.c.l.bf16 %v516
  %v549 = vunpack.c.l.bf16 %v517
  %v550 = vunpack.c.l.bf16 %v518
  %v551 = vunpack.c.l.bf16 %v519
  %v552 = vunpack.c.l.bf16 %v520
  %v553 = vunpack.c.l.bf16 %v521
  %v554 = vunpack.c.l.bf16 %v522
  %v555 = vunpack.c.l.bf16 %v523
  %v556 = vunpack.c.l.bf16 %v524
  %v557 = vunpack.c.l.bf16 %v525
  %v558 = vunpack.c.l.bf16 %v526
  %v559 = vmax.f32 %v527, %v543
  %v560 = vmax.f32 %v528, %v544
  %v561 = vmax.f32 %v529, %v545
  %v562 = vmax.f32 %v530, %v546
  %v563 = vmax.f32 %v531, %v547
  %v564 = vmax.f32 %v532, %v548
  %v565 = vmax.f32 %v533, %v549
  %v566 = vmax.f32 %v534, %v550
  %v567 = vmax.f32 %v535, %v551
  %v568 = vmax.f32 %v536, %v552
  %v569 = vmax.f32 %v537, %v553
  %v570 = vmax.f32 %v538, %v554
  %v571 = vmax.f32 %v539, %v555
  %v572 = vmax.f32 %v540, %v556
  %v573 = vmax.f32 %v541, %v557
  %v574 = vmax.f32 %v542, %v558
  %v575 = vpack.c.bf16 %v559, %v559
  %v576 = vpack.c.bf16 %v560, %v560
  %v577 = vpack.c.bf16 %v561, %v561
  %v578 = vpack.c.bf16 %v562, %v562
  %v579 = vpack.c.bf16 %v563, %v563
  %v580 = vpack.c.bf16 %v564, %v564
  %v581 = vpack.c.bf16 %v565, %v565
  %v582 = vpack.c.bf16 %v566, %v566
  %v583 = vpack.c.bf16 %v567, %v567
  %v584 = vpack.c.bf16 %v568, %v568
  %v585 = vpack.c.bf16 %v569, %v569
  %v586 = vpack.c.bf16 %v570, %v570
  %v587 = vpack.c.bf16 %v571, %v571
  %v588 = vpack.c.bf16 %v572, %v572
  %v589 = vpack.c.bf16 %v573, %v573
  %v590 = vpack.c.bf16 %v574, %v574
  %s591 = scalar_lea.vmem %s0, 512
  %v592 = vld [vmem:[%s591] sm:$0xf]
  %v593 = vld [vmem:[%s591 + $0x4] sm:$0xf]
  %v594 = vld [vmem:[%s591 + $0x8] sm:$0xf]
  %v595 = vld [vmem:[%s591 + $0xc] sm:$0xf]
  %v596 = vld [vmem:[%s591 + $0x10] sm:$0xf]
  %v597 = vld [vmem:[%s591 + $0x14] sm:$0xf]
  %v598 = vld [vmem:[%s591 + $0x18] sm:$0xf]
  %v599 = vld [vmem:[%s591 + $0x1c] sm:$0xf]
  %v600 = vld [vmem:[%s591 + $0x20] sm:$0xf]
  %v601 = vld [vmem:[%s591 + $0x24] sm:$0xf]
  %v602 = vld [vmem:[%s591 + $0x28] sm:$0xf]
  %v603 = vld [vmem:[%s591 + $0x2c] sm:$0xf]
  %v604 = vld [vmem:[%s591 + $0x30] sm:$0xf]
  %v605 = vld [vmem:[%s591 + $0x34] sm:$0xf]
  %v606 = vld [vmem:[%s591 + $0x38] sm:$0xf]
  %v607 = vld [vmem:[%s591 + $0x3c] sm:$0xf]
  %v608 = vunpack.c.l.bf16 %v575
  %v609 = vunpack.c.l.bf16 %v576
  %v610 = vunpack.c.l.bf16 %v577
  %v611 = vunpack.c.l.bf16 %v578
  %v612 = vunpack.c.l.bf16 %v579
  %v613 = vunpack.c.l.bf16 %v580
  %v614 = vunpack.c.l.bf16 %v581
  %v615 = vunpack.c.l.bf16 %v582
  %v616 = vunpack.c.l.bf16 %v583
  %v617 = vunpack.c.l.bf16 %v584
  %v618 = vunpack.c.l.bf16 %v585
  %v619 = vunpack.c.l.bf16 %v586
  %v620 = vunpack.c.l.bf16 %v587
  %v621 = vunpack.c.l.bf16 %v588
  %v622 = vunpack.c.l.bf16 %v589
  %v623 = vunpack.c.l.bf16 %v590
  %v624 = vunpack.c.l.bf16 %v592
  %v625 = vunpack.c.l.bf16 %v593
  %v626 = vunpack.c.l.bf16 %v594
  %v627 = vunpack.c.l.bf16 %v595
  %v628 = vunpack.c.l.bf16 %v596
  %v629 = vunpack.c.l.bf16 %v597
  %v630 = vunpack.c.l.bf16 %v598
  %v631 = vunpack.c.l.bf16 %v599
  %v632 = vunpack.c.l.bf16 %v600
  %v633 = vunpack.c.l.bf16 %v601
  %v634 = vunpack.c.l.bf16 %v602
  %v635 = vunpack.c.l.bf16 %v603
  %v636 = vunpack.c.l.bf16 %v604
  %v637 = vunpack.c.l.bf16 %v605
  %v638 = vunpack.c.l.bf16 %v606
  %v639 = vunpack.c.l.bf16 %v607
  %v640 = vmax.f32 %v608, %v624
  %v641 = vmax.f32 %v609, %v625
  %v642 = vmax.f32 %v610, %v626
  %v643 = vmax.f32 %v611, %v627
  %v644 = vmax.f32 %v612, %v628
  %v645 = vmax.f32 %v613, %v629
  %v646 = vmax.f32 %v614, %v630
  %v647 = vmax.f32 %v615, %v631
  %v648 = vmax.f32 %v616, %v632
  %v649 = vmax.f32 %v617, %v633
  %v650 = vmax.f32 %v618, %v634
  %v651 = vmax.f32 %v619, %v635
  %v652 = vmax.f32 %v620, %v636
  %v653 = vmax.f32 %v621, %v637
  %v654 = vmax.f32 %v622, %v638
  %v655 = vmax.f32 %v623, %v639
  %v656 = vpack.c.bf16 %v640, %v640
  %v657 = vpack.c.bf16 %v641, %v641
  %v658 = vpack.c.bf16 %v642, %v642
  %v659 = vpack.c.bf16 %v643, %v643
  %v660 = vpack.c.bf16 %v644, %v644
  %v661 = vpack.c.bf16 %v645, %v645
  %v662 = vpack.c.bf16 %v646, %v646
  %v663 = vpack.c.bf16 %v647, %v647
  %v664 = vpack.c.bf16 %v648, %v648
  %v665 = vpack.c.bf16 %v649, %v649
  %v666 = vpack.c.bf16 %v650, %v650
  %v667 = vpack.c.bf16 %v651, %v651
  %v668 = vpack.c.bf16 %v652, %v652
  %v669 = vpack.c.bf16 %v653, %v653
  %v670 = vpack.c.bf16 %v654, %v654
  %v671 = vpack.c.bf16 %v655, %v655
  %vm672 = vcmask 125952
  %673 = vst.msk [vmem:[%s1] sm:$0xf] %vm672, %v656
  %674 = vst.msk [vmem:[%s1 + $0x4] sm:$0xf] %vm672, %v657
  %675 = vst.msk [vmem:[%s1 + $0x8] sm:$0xf] %vm672, %v658
  %676 = vst.msk [vmem:[%s1 + $0xc] sm:$0xf] %vm672, %v659
  %677 = vst.msk [vmem:[%s1 + $0x10] sm:$0xf] %vm672, %v660
  %678 = vst.msk [vmem:[%s1 + $0x14] sm:$0xf] %vm672, %v661
  %679 = vst.msk [vmem:[%s1 + $0x18] sm:$0xf] %vm672, %v662
  %680 = vst.msk [vmem:[%s1 + $0x1c] sm:$0xf] %vm672, %v663
  %681 = vst.msk [vmem:[%s1 + $0x20] sm:$0xf] %vm672, %v664
  %682 = vst.msk [vmem:[%s1 + $0x24] sm:$0xf] %vm672, %v665
  %683 = vst.msk [vmem:[%s1 + $0x28] sm:$0xf] %vm672, %v666
  %684 = vst.msk [vmem:[%s1 + $0x2c] sm:$0xf] %vm672, %v667
  %685 = vst.msk [vmem:[%s1 + $0x30] sm:$0xf] %vm672, %v668
  %686 = vst.msk [vmem:[%s1 + $0x34] sm:$0xf] %vm672, %v669
  %687 = vst.msk [vmem:[%s1 + $0x38] sm:$0xf] %vm672, %v670
  %688 = vst.msk [vmem:[%s1 + $0x3c] sm:$0xf] %vm672, %v671
  // Predicated region
  $region6: #{densenet121_combine_forward.26} parent=0 // pred_check
    _
  $region7: #{densenet121_combine_forward.26} parent=0 // pred_check_branch
    %690 = sbr.rel (0) target = $region9
  $region8: #{densenet121_combine_forward.26} parent=0 // pred_region
    _
  $region9: #{densenet121_combine_forward.26} parent=0 // pred_fallthru
    _
  // Predicated region
  $region10: #{densenet121_combine_forward.26} parent=0 // pred_check
    _
  $region11: #{densenet121_combine_forward.26} parent=0 // pred_check_branch
    %692 = sbr.rel (0) target = $region13
  $region12: #{densenet121_combine_forward.26} parent=0 // pred_region
    _
  $region13: #{densenet121_combine_forward.26} parent=0 // pred_fallthru
    _

// kernel: densenet121_combine_forward.27
$region0: #{densenet121_combine_forward.27}
  #allocation0 [shape = 'u32[]', space=smem, size = 0x4, offset = 0x4, fixed_abs, tag = 'smem constant byte address 0x4 - core index']
  #allocation1 [shape = 'u32[72,128]{1,0:T(1,128)}', space=vmem, size = 0x9000, scoped, tag = 'internal scratch']
  #allocation2 [shape = 'f32[128,128]{1,0:T(8,128)}', space=vmem, size = 0x10000, scoped, tag = 'scratch operand']
  %s0 = inlined_call_operand.vmem [shape: bf16[128,128], index: 0, kind: input, shape index: {}]
  %s1 = inlined_call_operand.vmem [shape: bf16[128,128], index: 1, kind: input, shape index: {}]
  %s2 = inlined_call_operand.vmem [shape: f32[1,128], index: 2, kind: input, shape index: {}]
  %s3 = inlined_call_operand.vmem [shape: f32[1,128], index: 3, kind: input, shape index: {}]
  %s4 = inlined_call_operand.vmem [shape: f32[1,128], index: 4, kind: input, shape index: {}]
  %s5 = inlined_call_operand.vmem [shape: f32[1,128], index: 5, kind: input, shape index: {}]
  %s6 = inlined_call_operand.vmem [shape: bf16[128,128], index: 6, kind: output, shape index: {}]
  %s7 = sld [smem:[#allocation0]]
  $region42: #{densenet121_combine_forward.27} parent=0
    _
  %s9 = ssub.s32 1, %s7
  %s10 = scalar_select 0, %s9, %s7
  // Predicated region
  $region2: #{densenet121_combine_forward.27} parent=0 // pred_check
    _
  $region3: #{densenet121_combine_forward.27} parent=0 // pred_check_branch
    %12 = sbr.rel (0) target = $region5
  $region4: #{densenet121_combine_forward.27} parent=0 // pred_region
    _
  $region5: #{densenet121_combine_forward.27} parent=0 // pred_fallthru
    _
  // Predicated region
  $region6: #{densenet121_combine_forward.27} parent=0 // pred_check
    _
  $region7: #{densenet121_combine_forward.27} parent=0 // pred_check_branch
    %14 = sbr.rel (0) target = $region9
  $region8: #{densenet121_combine_forward.27} parent=0 // pred_region
    _
  $region9: #{densenet121_combine_forward.27} parent=0 // pred_fallthru
    _
  // Predicated region
  $region10: #{densenet121_combine_forward.27} parent=0 // pred_check
    _
  $region11: #{densenet121_combine_forward.27} parent=0 // pred_check_branch
    %16 = sbr.rel (0) target = $region13
  $region12: #{densenet121_combine_forward.27} parent=0 // pred_region
    _
  $region13: #{densenet121_combine_forward.27} parent=0 // pred_fallthru
    _
  // Predicated region
  $region14: #{densenet121_combine_forward.27} parent=0 // pred_check
    _
  $region15: #{densenet121_combine_forward.27} parent=0 // pred_check_branch
    %18 = sbr.rel (0) target = $region17
  $region16: #{densenet121_combine_forward.27} parent=0 // pred_region
    _
  $region17: #{densenet121_combine_forward.27} parent=0 // pred_fallthru
    _
  // Predicated region
  $region18: #{densenet121_combine_forward.27} parent=0 // pred_check
    _
  $region19: #{densenet121_combine_forward.27} parent=0 // pred_check_branch
    %20 = sbr.rel (0) target = $region21
  $region20: #{densenet121_combine_forward.27} parent=0 // pred_region
    _
  $region21: #{densenet121_combine_forward.27} parent=0 // pred_fallthru
    _
  // Predicated region
  $region22: #{densenet121_combine_forward.27} parent=0 // pred_check
    _
  $region23: #{densenet121_combine_forward.27} parent=0 // pred_check_branch
    %22 = sbr.rel (0) target = $region25
  $region24: #{densenet121_combine_forward.27} parent=0 // pred_region
    _
  $region25: #{densenet121_combine_forward.27} parent=0 // pred_fallthru
    _
  %p23 = scmp.eq.s32.totalorder 0, 0
  // Predicated region
  $region26: #{densenet121_combine_forward.27} parent=0 // pred_check
    %p24 = pneg %p23
  $region27: #{densenet121_combine_forward.27} parent=0 // pred_check_branch
    %26 = sbr.rel (%p24) target = $region29
  $region28: #{densenet121_combine_forward.27} parent=0 // pred_region
    %27 = vst [vmem:[#allocation2] sm:$0xff] 0.0
    %28 = vst [vmem:[#allocation2 + $0x8] sm:$0xff] 0.0
    %29 = vst [vmem:[#allocation2 + $0x10] sm:$0xff] 0.0
    %30 = vst [vmem:[#allocation2 + $0x18] sm:$0xff] 0.0
    %31 = vst [vmem:[#allocation2 + $0x20] sm:$0xff] 0.0
    %32 = vst [vmem:[#allocation2 + $0x28] sm:$0xff] 0.0
    %33 = vst [vmem:[#allocation2 + $0x30] sm:$0xff] 0.0
    %34 = vst [vmem:[#allocation2 + $0x38] sm:$0xff] 0.0
    %35 = vst [vmem:[#allocation2 + $0x40] sm:$0xff] 0.0
    %36 = vst [vmem:[#allocation2 + $0x48] sm:$0xff] 0.0
    %37 = vst [vmem:[#allocation2 + $0x50] sm:$0xff] 0.0
    %38 = vst [vmem:[#allocation2 + $0x58] sm:$0xff] 0.0
    %39 = vst [vmem:[#allocation2 + $0x60] sm:$0xff] 0.0
    %40 = vst [vmem:[#allocation2 + $0x68] sm:$0xff] 0.0
    %41 = vst [vmem:[#allocation2 + $0x70] sm:$0xff] 0.0
    %42 = vst [vmem:[#allocation2 + $0x78] sm:$0xff] 0.0
  $region29: #{densenet121_combine_forward.27} parent=0 // pred_fallthru
    _
  %v43 = vld [vmem:[%s0] sm:$0xf]
  %v44 = vld [vmem:[%s0 + $0x4] sm:$0xf]
  %v45 = vld [vmem:[%s0 + $0x8] sm:$0xf]
  %v46 = vld [vmem:[%s0 + $0xc] sm:$0xf]
  %v47 = vld [vmem:[%s0 + $0x10] sm:$0xf]
  %v48 = vld [vmem:[%s0 + $0x14] sm:$0xf]
  %v49 = vld [vmem:[%s0 + $0x18] sm:$0xf]
  %v50 = vld [vmem:[%s0 + $0x1c] sm:$0xf]
  %v51 = vld [vmem:[%s0 + $0x20] sm:$0xf]
  %v52 = vld [vmem:[%s0 + $0x24] sm:$0xf]
  %v53 = vld [vmem:[%s0 + $0x28] sm:$0xf]
  %v54 = vld [vmem:[%s0 + $0x2c] sm:$0xf]
  %v55 = vld [vmem:[%s0 + $0x30] sm:$0xf]
  %v56 = vld [vmem:[%s0 + $0x34] sm:$0xf]
  %v57 = vld [vmem:[%s0 + $0x38] sm:$0xf]
  %v58 = vld [vmem:[%s0 + $0x3c] sm:$0xf]
  %v59 = vunpack.c.l.bf16 %v43
  %v60 = vunpack.c.l.bf16 %v44
  %v61 = vunpack.c.l.bf16 %v45
  %v62 = vunpack.c.l.bf16 %v46
  %v63 = vunpack.c.l.bf16 %v47
  %v64 = vunpack.c.l.bf16 %v48
  %v65 = vunpack.c.l.bf16 %v49
  %v66 = vunpack.c.l.bf16 %v50
  %v67 = vunpack.c.l.bf16 %v51
  %v68 = vunpack.c.l.bf16 %v52
  %v69 = vunpack.c.l.bf16 %v53
  %v70 = vunpack.c.l.bf16 %v54
  %v71 = vunpack.c.l.bf16 %v55
  %v72 = vunpack.c.l.bf16 %v56
  %v73 = vunpack.c.l.bf16 %v57
  %v74 = vunpack.c.l.bf16 %v58
  %v75 = vld [vmem:[%s2] sm:$0x1]
  %v77 = vperm.slane %v75, 0
  %v79 = vmul.f32 %v59, %v77
  %v80 = vmul.f32 %v60, %v77
  %v81 = vmul.f32 %v61, %v77
  %v82 = vmul.f32 %v62, %v77
  %v83 = vmul.f32 %v63, %v77
  %v84 = vmul.f32 %v64, %v77
  %v85 = vmul.f32 %v65, %v77
  %v86 = vmul.f32 %v66, %v77
  %v87 = vmul.f32 %v67, %v77
  %v88 = vmul.f32 %v68, %v77
  %v89 = vmul.f32 %v69, %v77
  %v90 = vmul.f32 %v70, %v77
  %v91 = vmul.f32 %v71, %v77
  %v92 = vmul.f32 %v72, %v77
  %v93 = vmul.f32 %v73, %v77
  %v94 = vmul.f32 %v74, %v77
  %v95 = vld [vmem:[%s3] sm:$0x1]
  %v97 = vperm.slane %v95, 0
  %v99 = vadd.f32 %v79, %v97
  %v100 = vadd.f32 %v80, %v97
  %v101 = vadd.f32 %v81, %v97
  %v102 = vadd.f32 %v82, %v97
  %v103 = vadd.f32 %v83, %v97
  %v104 = vadd.f32 %v84, %v97
  %v105 = vadd.f32 %v85, %v97
  %v106 = vadd.f32 %v86, %v97
  %v107 = vadd.f32 %v87, %v97
  %v108 = vadd.f32 %v88, %v97
  %v109 = vadd.f32 %v89, %v97
  %v110 = vadd.f32 %v90, %v97
  %v111 = vadd.f32 %v91, %v97
  %v112 = vadd.f32 %v92, %v97
  %v113 = vadd.f32 %v93, %v97
  %v114 = vadd.f32 %v94, %v97
  %v115 = vmax.f32 %v99, 0.0
  %v116 = vmax.f32 %v100, 0.0
  %v117 = vmax.f32 %v101, 0.0
  %v118 = vmax.f32 %v102, 0.0
  %v119 = vmax.f32 %v103, 0.0
  %v120 = vmax.f32 %v104, 0.0
  %v121 = vmax.f32 %v105, 0.0
  %v122 = vmax.f32 %v106, 0.0
  %v123 = vmax.f32 %v107, 0.0
  %v124 = vmax.f32 %v108, 0.0
  %v125 = vmax.f32 %v109, 0.0
  %v126 = vmax.f32 %v110, 0.0
  %v127 = vmax.f32 %v111, 0.0
  %v128 = vmax.f32 %v112, 0.0
  %v129 = vmax.f32 %v113, 0.0
  %v130 = vmax.f32 %v114, 0.0
  %v131 = vpack.c.bf16 %v116, %v115
  %v132 = vpack.c.bf16 %v118, %v117
  %v133 = vpack.c.bf16 %v120, %v119
  %v134 = vpack.c.bf16 %v122, %v121
  %v135 = vpack.c.bf16 %v124, %v123
  %v136 = vpack.c.bf16 %v126, %v125
  %v137 = vpack.c.bf16 %v128, %v127
  %v138 = vpack.c.bf16 %v130, %v129
  %v139 = vld [vmem:[#allocation2] sm:$0xff]
  %v140 = vld [vmem:[#allocation2 + $0x8] sm:$0xff]
  %v141 = vld [vmem:[#allocation2 + $0x10] sm:$0xff]
  %v142 = vld [vmem:[#allocation2 + $0x18] sm:$0xff]
  %v143 = vld [vmem:[#allocation2 + $0x20] sm:$0xff]
  %v144 = vld [vmem:[#allocation2 + $0x28] sm:$0xff]
  %v145 = vld [vmem:[#allocation2 + $0x30] sm:$0xff]
  %v146 = vld [vmem:[#allocation2 + $0x38] sm:$0xff]
  %v147 = vld [vmem:[#allocation2 + $0x40] sm:$0xff]
  %v148 = vld [vmem:[#allocation2 + $0x48] sm:$0xff]
  %v149 = vld [vmem:[#allocation2 + $0x50] sm:$0xff]
  %v150 = vld [vmem:[#allocation2 + $0x58] sm:$0xff]
  %v151 = vld [vmem:[#allocation2 + $0x60] sm:$0xff]
  %v152 = vld [vmem:[#allocation2 + $0x68] sm:$0xff]
  %v153 = vld [vmem:[#allocation2 + $0x70] sm:$0xff]
  %v154 = vld [vmem:[#allocation2 + $0x78] sm:$0xff]
  %v155 = vld [vmem:[%s1] sm:$0xf]
  %v156 = vld [vmem:[%s1 + $0x4] sm:$0xf]
  %v157 = vld [vmem:[%s1 + $0x8] sm:$0xf]
  %v158 = vld [vmem:[%s1 + $0xc] sm:$0xf]
  %v159 = vld [vmem:[%s1 + $0x10] sm:$0xf]
  %v160 = vld [vmem:[%s1 + $0x14] sm:$0xf]
  %v161 = vld [vmem:[%s1 + $0x18] sm:$0xf]
  %v162 = vld [vmem:[%s1 + $0x1c] sm:$0xf]
  %v163 = vld [vmem:[%s1 + $0x20] sm:$0xf]
  %v164 = vld [vmem:[%s1 + $0x24] sm:$0xf]
  %v165 = vld [vmem:[%s1 + $0x28] sm:$0xf]
  %v166 = vld [vmem:[%s1 + $0x2c] sm:$0xf]
  %v167 = vld [vmem:[%s1 + $0x30] sm:$0xf]
  %v168 = vld [vmem:[%s1 + $0x34] sm:$0xf]
  %v169 = vld [vmem:[%s1 + $0x38] sm:$0xf]
  %v170 = vld [vmem:[%s1 + $0x3c] sm:$0xf]
  %v187 = vunpack.c.l.b16 %v155
  %v188 = vunpack.c.l.b16 %v156
  %v189 = vunpack.c.l.b16 %v157
  %v190 = vunpack.c.l.b16 %v158
  %v191 = vunpack.c.l.b16 %v159
  %v192 = vunpack.c.l.b16 %v160
  %v193 = vunpack.c.l.b16 %v161
  %v194 = vunpack.c.l.b16 %v162
  %v195 = vunpack.c.l.b16 %v163
  %v196 = vunpack.c.l.b16 %v164
  %v197 = vunpack.c.l.b16 %v165
  %v198 = vunpack.c.l.b16 %v166
  %v199 = vunpack.c.l.b16 %v167
  %v200 = vunpack.c.l.b16 %v168
  %v201 = vunpack.c.l.b16 %v169
  %v202 = vunpack.c.l.b16 %v170
  %v203 = vpack.c.b16 %v188, %v187
  %v204 = vpack.c.b16 %v190, %v189
  %v205 = vpack.c.b16 %v192, %v191
  %v206 = vpack.c.b16 %v194, %v193
  %v207 = vpack.c.b16 %v196, %v195
  %v208 = vpack.c.b16 %v198, %v197
  %v209 = vpack.c.b16 %v200, %v199
  %v210 = vpack.c.b16 %v202, %v201
  %219 = vmatpush.bf16.msra.mxu0 %v210
  %220 = vmatpush.bf16.msra.mxu0 %v209
  %221 = vmatpush.bf16.msra.mxu0 %v208
  %222 = vmatpush.bf16.msra.mxu0 %v207
  %223 = vmatpush.bf16.msra.mxu0 %v206
  %224 = vmatpush.bf16.msra.mxu0 %v205
  %225 = vmatpush.bf16.msra.mxu0 %v204
  %226 = vmatpush.bf16.msra.mxu0 %v203
  %227 = vmatmul.bf16.gmra.mxu0 %v131
  %v228 = vpop.f32.mrf.mxu0
  %v229 = vadd.f32 0.0, %v228
  %v230 = vpop.f32.mrf.mxu0
  %v231 = vadd.f32 0.0, %v230
  %232 = vmatmul.bf16.gmra.mxu0 %v132
  %v233 = vpop.f32.mrf.mxu0
  %v234 = vadd.f32 0.0, %v233
  %v235 = vpop.f32.mrf.mxu0
  %v236 = vadd.f32 0.0, %v235
  %237 = vmatmul.bf16.gmra.mxu0 %v133
  %v238 = vpop.f32.mrf.mxu0
  %v239 = vadd.f32 0.0, %v238
  %v240 = vpop.f32.mrf.mxu0
  %v241 = vadd.f32 0.0, %v240
  %242 = vmatmul.bf16.gmra.mxu0 %v134
  %v243 = vpop.f32.mrf.mxu0
  %v244 = vadd.f32 0.0, %v243
  %v245 = vpop.f32.mrf.mxu0
  %v246 = vadd.f32 0.0, %v245
  %247 = vmatmul.bf16.gmra.mxu0 %v135
  %v248 = vpop.f32.mrf.mxu0
  %v249 = vadd.f32 0.0, %v248
  %v250 = vpop.f32.mrf.mxu0
  %v251 = vadd.f32 0.0, %v250
  %252 = vmatmul.bf16.gmra.mxu0 %v136
  %v253 = vpop.f32.mrf.mxu0
  %v254 = vadd.f32 0.0, %v253
  %v255 = vpop.f32.mrf.mxu0
  %v256 = vadd.f32 0.0, %v255
  %257 = vmatmul.bf16.gmra.mxu0 %v137
  %v258 = vpop.f32.mrf.mxu0
  %v259 = vadd.f32 0.0, %v258
  %v260 = vpop.f32.mrf.mxu0
  %v261 = vadd.f32 0.0, %v260
  %262 = vmatmul.bf16.gmra.mxu0 %v138
  %v263 = vpop.f32.mrf.mxu0
  %v264 = vadd.f32 0.0, %v263
  %v265 = vpop.f32.mrf.mxu0
  %v266 = vadd.f32 0.0, %v265
  %267 = vdwg.mxu0
  %v268 = vadd.f32 %v139, %v229
  %v269 = vadd.f32 %v140, %v231
  %v270 = vadd.f32 %v141, %v234
  %v271 = vadd.f32 %v142, %v236
  %v272 = vadd.f32 %v143, %v239
  %v273 = vadd.f32 %v144, %v241
  %v274 = vadd.f32 %v145, %v244
  %v275 = vadd.f32 %v146, %v246
  %v276 = vadd.f32 %v147, %v249
  %v277 = vadd.f32 %v148, %v251
  %v278 = vadd.f32 %v149, %v254
  %v279 = vadd.f32 %v150, %v256
  %v280 = vadd.f32 %v151, %v259
  %v281 = vadd.f32 %v152, %v261
  %v282 = vadd.f32 %v153, %v264
  %v283 = vadd.f32 %v154, %v266
  %284 = vst [vmem:[#allocation2] sm:$0xff] %v268
  %285 = vst [vmem:[#allocation2 + $0x8] sm:$0xff] %v269
  %286 = vst [vmem:[#allocation2 + $0x10] sm:$0xff] %v270
  %287 = vst [vmem:[#allocation2 + $0x18] sm:$0xff] %v271
  %288 = vst [vmem:[#allocation2 + $0x20] sm:$0xff] %v272
  %289 = vst [vmem:[#allocation2 + $0x28] sm:$0xff] %v273
  %290 = vst [vmem:[#allocation2 + $0x30] sm:$0xff] %v274
  %291 = vst [vmem:[#allocation2 + $0x38] sm:$0xff] %v275
  %292 = vst [vmem:[#allocation2 + $0x40] sm:$0xff] %v276
  %293 = vst [vmem:[#allocation2 + $0x48] sm:$0xff] %v277
  %294 = vst [vmem:[#allocation2 + $0x50] sm:$0xff] %v278
  %295 = vst [vmem:[#allocation2 + $0x58] sm:$0xff] %v279
  %296 = vst [vmem:[#allocation2 + $0x60] sm:$0xff] %v280
  %297 = vst [vmem:[#allocation2 + $0x68] sm:$0xff] %v281
  %298 = vst [vmem:[#allocation2 + $0x70] sm:$0xff] %v282
  %299 = vst [vmem:[#allocation2 + $0x78] sm:$0xff] %v283
  // Predicated region
  $region30: #{densenet121_combine_forward.27} parent=0 // pred_check
    %p300 = pneg %p23
  $region31: #{densenet121_combine_forward.27} parent=0 // pred_check_branch
    %302 = sbr.rel (%p300) target = $region33
  $region32: #{densenet121_combine_forward.27} parent=0 // pred_region
    %v303 = vld [vmem:[#allocation2] sm:$0xff]
    %v304 = vld [vmem:[#allocation2 + $0x8] sm:$0xff]
    %v305 = vld [vmem:[#allocation2 + $0x10] sm:$0xff]
    %v306 = vld [vmem:[#allocation2 + $0x18] sm:$0xff]
    %v307 = vld [vmem:[#allocation2 + $0x20] sm:$0xff]
    %v308 = vld [vmem:[#allocation2 + $0x28] sm:$0xff]
    %v309 = vld [vmem:[#allocation2 + $0x30] sm:$0xff]
    %v310 = vld [vmem:[#allocation2 + $0x38] sm:$0xff]
    %v311 = vld [vmem:[#allocation2 + $0x40] sm:$0xff]
    %v312 = vld [vmem:[#allocation2 + $0x48] sm:$0xff]
    %v313 = vld [vmem:[#allocation2 + $0x50] sm:$0xff]
    %v314 = vld [vmem:[#allocation2 + $0x58] sm:$0xff]
    %v315 = vld [vmem:[#allocation2 + $0x60] sm:$0xff]
    %v316 = vld [vmem:[#allocation2 + $0x68] sm:$0xff]
    %v317 = vld [vmem:[#allocation2 + $0x70] sm:$0xff]
    %v318 = vld [vmem:[#allocation2 + $0x78] sm:$0xff]
    %v319 = vld [vmem:[%s4] sm:$0x1]
    %v321 = vperm.slane %v319, 0
    %v323 = vmul.f32 %v303, %v321
    %v324 = vmul.f32 %v304, %v321
    %v325 = vmul.f32 %v305, %v321
    %v326 = vmul.f32 %v306, %v321
    %v327 = vmul.f32 %v307, %v321
    %v328 = vmul.f32 %v308, %v321
    %v329 = vmul.f32 %v309, %v321
    %v330 = vmul.f32 %v310, %v321
    %v331 = vmul.f32 %v311, %v321
    %v332 = vmul.f32 %v312, %v321
    %v333 = vmul.f32 %v313, %v321
    %v334 = vmul.f32 %v314, %v321
    %v335 = vmul.f32 %v315, %v321
    %v336 = vmul.f32 %v316, %v321
    %v337 = vmul.f32 %v317, %v321
    %v338 = vmul.f32 %v318, %v321
    %v339 = vld [vmem:[%s5] sm:$0x1]
    %v341 = vperm.slane %v339, 0
    %v343 = vadd.f32 %v323, %v341
    %v344 = vadd.f32 %v324, %v341
    %v345 = vadd.f32 %v325, %v341
    %v346 = vadd.f32 %v326, %v341
    %v347 = vadd.f32 %v327, %v341
    %v348 = vadd.f32 %v328, %v341
    %v349 = vadd.f32 %v329, %v341
    %v350 = vadd.f32 %v330, %v341
    %v351 = vadd.f32 %v331, %v341
    %v352 = vadd.f32 %v332, %v341
    %v353 = vadd.f32 %v333, %v341
    %v354 = vadd.f32 %v334, %v341
    %v355 = vadd.f32 %v335, %v341
    %v356 = vadd.f32 %v336, %v341
    %v357 = vadd.f32 %v337, %v341
    %v358 = vadd.f32 %v338, %v341
    %v359 = vmax.f32 %v343, 0.0
    %v360 = vmax.f32 %v344, 0.0
    %v361 = vmax.f32 %v345, 0.0
    %v362 = vmax.f32 %v346, 0.0
    %v363 = vmax.f32 %v347, 0.0
    %v364 = vmax.f32 %v348, 0.0
    %v365 = vmax.f32 %v349, 0.0
    %v366 = vmax.f32 %v350, 0.0
    %v367 = vmax.f32 %v351, 0.0
    %v368 = vmax.f32 %v352, 0.0
    %v369 = vmax.f32 %v353, 0.0
    %v370 = vmax.f32 %v354, 0.0
    %v371 = vmax.f32 %v355, 0.0
    %v372 = vmax.f32 %v356, 0.0
    %v373 = vmax.f32 %v357, 0.0
    %v374 = vmax.f32 %v358, 0.0
    %v375 = vpack.c.bf16 %v359, %v359
    %v376 = vpack.c.bf16 %v360, %v360
    %v377 = vpack.c.bf16 %v361, %v361
    %v378 = vpack.c.bf16 %v362, %v362
    %v379 = vpack.c.bf16 %v363, %v363
    %v380 = vpack.c.bf16 %v364, %v364
    %v381 = vpack.c.bf16 %v365, %v365
    %v382 = vpack.c.bf16 %v366, %v366
    %v383 = vpack.c.bf16 %v367, %v367
    %v384 = vpack.c.bf16 %v368, %v368
    %v385 = vpack.c.bf16 %v369, %v369
    %v386 = vpack.c.bf16 %v370, %v370
    %v387 = vpack.c.bf16 %v371, %v371
    %v388 = vpack.c.bf16 %v372, %v372
    %v389 = vpack.c.bf16 %v373, %v373
    %v390 = vpack.c.bf16 %v374, %v374
    %391 = vst [vmem:[%s6] sm:$0xf] %v375
    %392 = vst [vmem:[%s6 + $0x4] sm:$0xf] %v376
    %393 = vst [vmem:[%s6 + $0x8] sm:$0xf] %v377
    %394 = vst [vmem:[%s6 + $0xc] sm:$0xf] %v378
    %395 = vst [vmem:[%s6 + $0x10] sm:$0xf] %v379
    %396 = vst [vmem:[%s6 + $0x14] sm:$0xf] %v380
    %397 = vst [vmem:[%s6 + $0x18] sm:$0xf] %v381
    %398 = vst [vmem:[%s6 + $0x1c] sm:$0xf] %v382
    %399 = vst [vmem:[%s6 + $0x20] sm:$0xf] %v383
    %400 = vst [vmem:[%s6 + $0x24] sm:$0xf] %v384
    %401 = vst [vmem:[%s6 + $0x28] sm:$0xf] %v385
    %402 = vst [vmem:[%s6 + $0x2c] sm:$0xf] %v386
    %403 = vst [vmem:[%s6 + $0x30] sm:$0xf] %v387
    %404 = vst [vmem:[%s6 + $0x34] sm:$0xf] %v388
    %405 = vst [vmem:[%s6 + $0x38] sm:$0xf] %v389
    %406 = vst [vmem:[%s6 + $0x3c] sm:$0xf] %v390
  $region33: #{densenet121_combine_forward.27} parent=0 // pred_fallthru
    _
  // Predicated region
  $region34: #{densenet121_combine_forward.27} parent=0 // pred_check
    _
  $region35: #{densenet121_combine_forward.27} parent=0 // pred_check_branch
    %408 = sbr.rel (0) target = $region37
  $region36: #{densenet121_combine_forward.27} parent=0 // pred_region
    _
  $region37: #{densenet121_combine_forward.27} parent=0 // pred_fallthru
    _
  // Predicated region
  $region38: #{densenet121_combine_forward.27} parent=0 // pred_check
    _
  $region39: #{densenet121_combine_forward.27} parent=0 // pred_check_branch
    %410 = sbr.rel (0) target = $region41
  $region40: #{densenet121_combine_forward.27} parent=0 // pred_region
    _
  $region41: #{densenet121_combine_forward.27} parent=0 // pred_fallthru
    _

// kernel: densenet121_combine_forward.25
$region0: #{densenet121_combine_forward.25}
  #allocation0 [shape = 'u32[]', space=smem, size = 0x4, offset = 0x4, fixed_abs, tag = 'smem constant byte address 0x4 - core index']
  #allocation1 [shape = 'u32[72,128]{1,0:T(1,128)}', space=vmem, size = 0x9000, scoped, tag = 'internal scratch']
  #allocation2 [shape = 'f32[512,128]{1,0:T(8,128)}', space=vmem, size = 0x40000, scoped, tag = 'scratch operand']
  %s0 = inlined_call_operand.vmem [shape: bf16[512,256], index: 0, kind: input, shape index: {}]
  %s1 = inlined_call_operand.vmem [shape: bf16[256,128], index: 1, kind: input, shape index: {}]
  %s2 = inlined_call_operand.vmem [shape: f32[1,256], index: 2, kind: input, shape index: {}]
  %s3 = inlined_call_operand.vmem [shape: f32[1,256], index: 3, kind: input, shape index: {}]
  %s4 = inlined_call_operand.vmem [shape: f32[1,128], index: 4, kind: input, shape index: {}]
  %s5 = inlined_call_operand.vmem [shape: f32[1,128], index: 5, kind: input, shape index: {}]
  %s6 = inlined_call_operand.vmem [shape: bf16[512,128], index: 6, kind: output, shape index: {}]
  %s7 = sld [smem:[#allocation0]]
  $region42: #{densenet121_combine_forward.25} parent=0
    _
  %s9 = ssub.s32 1, %s7
  %s10 = scalar_select 0, %s9, %s7
  // Predicated region
  $region2: #{densenet121_combine_forward.25} parent=0 // pred_check
    _
  $region3: #{densenet121_combine_forward.25} parent=0 // pred_check_branch
    %12 = sbr.rel (0) target = $region5
  $region4: #{densenet121_combine_forward.25} parent=0 // pred_region
    _
  $region5: #{densenet121_combine_forward.25} parent=0 // pred_fallthru
    _
  // Predicated region
  $region6: #{densenet121_combine_forward.25} parent=0 // pred_check
    _
  $region7: #{densenet121_combine_forward.25} parent=0 // pred_check_branch
    %14 = sbr.rel (0) target = $region9
  $region8: #{densenet121_combine_forward.25} parent=0 // pred_region
    _
  $region9: #{densenet121_combine_forward.25} parent=0 // pred_fallthru
    _
  // Predicated region
  $region10: #{densenet121_combine_forward.25} parent=0 // pred_check
    _
  $region11: #{densenet121_combine_forward.25} parent=0 // pred_check_branch
    %16 = sbr.rel (0) target = $region13
  $region12: #{densenet121_combine_forward.25} parent=0 // pred_region
    _
  $region13: #{densenet121_combine_forward.25} parent=0 // pred_fallthru
    _
  // Predicated region
  $region14: #{densenet121_combine_forward.25} parent=0 // pred_check
    _
  $region15: #{densenet121_combine_forward.25} parent=0 // pred_check_branch
    %18 = sbr.rel (0) target = $region17
  $region16: #{densenet121_combine_forward.25} parent=0 // pred_region
    _
  $region17: #{densenet121_combine_forward.25} parent=0 // pred_fallthru
    _
  // Predicated region
  $region18: #{densenet121_combine_forward.25} parent=0 // pred_check
    _
  $region19: #{densenet121_combine_forward.25} parent=0 // pred_check_branch
    %20 = sbr.rel (0) target = $region21
  $region20: #{densenet121_combine_forward.25} parent=0 // pred_region
    _
  $region21: #{densenet121_combine_forward.25} parent=0 // pred_fallthru
    _
  // Predicated region
  $region22: #{densenet121_combine_forward.25} parent=0 // pred_check
    _
  $region23: #{densenet121_combine_forward.25} parent=0 // pred_check_branch
    %22 = sbr.rel (0) target = $region25
  $region24: #{densenet121_combine_forward.25} parent=0 // pred_region
    _
  $region25: #{densenet121_combine_forward.25} parent=0 // pred_fallthru
    _
  %p23 = scmp.eq.s32.totalorder 0, 0
  // Predicated region
  $region26: #{densenet121_combine_forward.25} parent=0 // pred_check
    %p24 = pneg %p23
  $region27: #{densenet121_combine_forward.25} parent=0 // pred_check_branch
    %26 = sbr.rel (%p24) target = $region29
  $region28: #{densenet121_combine_forward.25} parent=0 // pred_region
    %27 = vst [vmem:[#allocation2] sm:$0xff] 0.0
    %28 = vst [vmem:[#allocation2 + $0x8] sm:$0xff] 0.0
    %29 = vst [vmem:[#allocation2 + $0x10] sm:$0xff] 0.0
    %30 = vst [vmem:[#allocation2 + $0x18] sm:$0xff] 0.0
    %31 = vst [vmem:[#allocation2 + $0x20] sm:$0xff] 0.0
    %32 = vst [vmem:[#allocation2 + $0x28] sm:$0xff] 0.0
    %33 = vst [vmem:[#allocation2 + $0x30] sm:$0xff] 0.0
    %34 = vst [vmem:[#allocation2 + $0x38] sm:$0xff] 0.0
    %35 = vst [vmem:[#allocation2 + $0x40] sm:$0xff] 0.0
    %36 = vst [vmem:[#allocation2 + $0x48] sm:$0xff] 0.0
    %37 = vst [vmem:[#allocation2 + $0x50] sm:$0xff] 0.0
    %38 = vst [vmem:[#allocation2 + $0x58] sm:$0xff] 0.0
    %39 = vst [vmem:[#allocation2 + $0x60] sm:$0xff] 0.0
    %40 = vst [vmem:[#allocation2 + $0x68] sm:$0xff] 0.0
    %41 = vst [vmem:[#allocation2 + $0x70] sm:$0xff] 0.0
    %42 = vst [vmem:[#allocation2 + $0x78] sm:$0xff] 0.0
    %43 = vst [vmem:[#allocation2 + $0x80] sm:$0xff] 0.0
    %44 = vst [vmem:[#allocation2 + $0x88] sm:$0xff] 0.0
    %45 = vst [vmem:[#allocation2 + $0x90] sm:$0xff] 0.0
    %46 = vst [vmem:[#allocation2 + $0x98] sm:$0xff] 0.0
    %47 = vst [vmem:[#allocation2 + $0xa0] sm:$0xff] 0.0
    %48 = vst [vmem:[#allocation2 + $0xa8] sm:$0xff] 0.0
    %49 = vst [vmem:[#allocation2 + $0xb0] sm:$0xff] 0.0
    %50 = vst [vmem:[#allocation2 + $0xb8] sm:$0xff] 0.0
    %51 = vst [vmem:[#allocation2 + $0xc0] sm:$0xff] 0.0
    %52 = vst [vmem:[#allocation2 + $0xc8] sm:$0xff] 0.0
    %53 = vst [vmem:[#allocation2 + $0xd0] sm:$0xff] 0.0
    %54 = vst [vmem:[#allocation2 + $0xd8] sm:$0xff] 0.0
    %55 = vst [vmem:[#allocation2 + $0xe0] sm:$0xff] 0.0
    %56 = vst [vmem:[#allocation2 + $0xe8] sm:$0xff] 0.0
    %57 = vst [vmem:[#allocation2 + $0xf0] sm:$0xff] 0.0
    %58 = vst [vmem:[#allocation2 + $0xf8] sm:$0xff] 0.0
    %59 = vst [vmem:[#allocation2 + $0x100] sm:$0xff] 0.0
    %60 = vst [vmem:[#allocation2 + $0x108] sm:$0xff] 0.0
    %61 = vst [vmem:[#allocation2 + $0x110] sm:$0xff] 0.0
    %62 = vst [vmem:[#allocation2 + $0x118] sm:$0xff] 0.0
    %63 = vst [vmem:[#allocation2 + $0x120] sm:$0xff] 0.0
    %64 = vst [vmem:[#allocation2 + $0x128] sm:$0xff] 0.0
    %65 = vst [vmem:[#allocation2 + $0x130] sm:$0xff] 0.0
    %66 = vst [vmem:[#allocation2 + $0x138] sm:$0xff] 0.0
    %67 = vst [vmem:[#allocation2 + $0x140] sm:$0xff] 0.0
    %68 = vst [vmem:[#allocation2 + $0x148] sm:$0xff] 0.0
    %69 = vst [vmem:[#allocation2 + $0x150] sm:$0xff] 0.0
    %70 = vst [vmem:[#allocation2 + $0x158] sm:$0xff] 0.0
    %71 = vst [vmem:[#allocation2 + $0x160] sm:$0xff] 0.0
    %72 = vst [vmem:[#allocation2 + $0x168] sm:$0xff] 0.0
    %73 = vst [vmem:[#allocation2 + $0x170] sm:$0xff] 0.0
    %74 = vst [vmem:[#allocation2 + $0x178] sm:$0xff] 0.0
    %75 = vst [vmem:[#allocation2 + $0x180] sm:$0xff] 0.0
    %76 = vst [vmem:[#allocation2 + $0x188] sm:$0xff] 0.0
    %77 = vst [vmem:[#allocation2 + $0x190] sm:$0xff] 0.0
    %78 = vst [vmem:[#allocation2 + $0x198] sm:$0xff] 0.0
    %79 = vst [vmem:[#allocation2 + $0x1a0] sm:$0xff] 0.0
    %80 = vst [vmem:[#allocation2 + $0x1a8] sm:$0xff] 0.0
    %81 = vst [vmem:[#allocation2 + $0x1b0] sm:$0xff] 0.0
    %82 = vst [vmem:[#allocation2 + $0x1b8] sm:$0xff] 0.0
    %83 = vst [vmem:[#allocation2 + $0x1c0] sm:$0xff] 0.0
    %84 = vst [vmem:[#allocation2 + $0x1c8] sm:$0xff] 0.0
    %85 = vst [vmem:[#allocation2 + $0x1d0] sm:$0xff] 0.0
    %86 = vst [vmem:[#allocation2 + $0x1d8] sm:$0xff] 0.0
    %87 = vst [vmem:[#allocation2 + $0x1e0] sm:$0xff] 0.0
    %88 = vst [vmem:[#allocation2 + $0x1e8] sm:$0xff] 0.0
    %89 = vst [vmem:[#allocation2 + $0x1f0] sm:$0xff] 0.0
    %90 = vst [vmem:[#allocation2 + $0x1f8] sm:$0xff] 0.0
  $region29: #{densenet121_combine_forward.25} parent=0 // pred_fallthru
    _
  %v91 = vld [vmem:[%s0] sm:$0xff]
  %v92 = vld [vmem:[%s0 + $0x8] sm:$0xff]
  %v93 = vld [vmem:[%s0 + $0x10] sm:$0xff]
  %v94 = vld [vmem:[%s0 + $0x18] sm:$0xff]
  %v95 = vld [vmem:[%s0 + $0x20] sm:$0xff]
  %v96 = vld [vmem:[%s0 + $0x28] sm:$0xff]
  %v97 = vld [vmem:[%s0 + $0x30] sm:$0xff]
  %v98 = vld [vmem:[%s0 + $0x38] sm:$0xff]
  %v99 = vld [vmem:[%s0 + $0x40] sm:$0xff]
  %v100 = vld [vmem:[%s0 + $0x48] sm:$0xff]
  %v101 = vld [vmem:[%s0 + $0x50] sm:$0xff]
  %v102 = vld [vmem:[%s0 + $0x58] sm:$0xff]
  %v103 = vld [vmem:[%s0 + $0x60] sm:$0xff]
  %v104 = vld [vmem:[%s0 + $0x68] sm:$0xff]
  %v105 = vld [vmem:[%s0 + $0x70] sm:$0xff]
  %v106 = vld [vmem:[%s0 + $0x78] sm:$0xff]
  %v107 = vld [vmem:[%s0 + $0x80] sm:$0xff]
  %v108 = vld [vmem:[%s0 + $0x88] sm:$0xff]
  %v109 = vld [vmem:[%s0 + $0x90] sm:$0xff]
  %v110 = vld [vmem:[%s0 + $0x98] sm:$0xff]
  %v111 = vld [vmem:[%s0 + $0xa0] sm:$0xff]
  %v112 = vld [vmem:[%s0 + $0xa8] sm:$0xff]
  %v113 = vld [vmem:[%s0 + $0xb0] sm:$0xff]
  %v114 = vld [vmem:[%s0 + $0xb8] sm:$0xff]
  %v115 = vld [vmem:[%s0 + $0xc0] sm:$0xff]
  %v116 = vld [vmem:[%s0 + $0xc8] sm:$0xff]
  %v117 = vld [vmem:[%s0 + $0xd0] sm:$0xff]
  %v118 = vld [vmem:[%s0 + $0xd8] sm:$0xff]
  %v119 = vld [vmem:[%s0 + $0xe0] sm:$0xff]
  %v120 = vld [vmem:[%s0 + $0xe8] sm:$0xff]
  %v121 = vld [vmem:[%s0 + $0xf0] sm:$0xff]
  %v122 = vld [vmem:[%s0 + $0xf8] sm:$0xff]
  %v123 = vld [vmem:[%s0 + $0x100] sm:$0xff]
  %v124 = vld [vmem:[%s0 + $0x108] sm:$0xff]
  %v125 = vld [vmem:[%s0 + $0x110] sm:$0xff]
  %v126 = vld [vmem:[%s0 + $0x118] sm:$0xff]
  %v127 = vld [vmem:[%s0 + $0x120] sm:$0xff]
  %v128 = vld [vmem:[%s0 + $0x128] sm:$0xff]
  %v129 = vld [vmem:[%s0 + $0x130] sm:$0xff]
  %v130 = vld [vmem:[%s0 + $0x138] sm:$0xff]
  %v131 = vld [vmem:[%s0 + $0x140] sm:$0xff]
  %v132 = vld [vmem:[%s0 + $0x148] sm:$0xff]
  %v133 = vld [vmem:[%s0 + $0x150] sm:$0xff]
  %v134 = vld [vmem:[%s0 + $0x158] sm:$0xff]
  %v135 = vld [vmem:[%s0 + $0x160] sm:$0xff]
  %v136 = vld [vmem:[%s0 + $0x168] sm:$0xff]
  %v137 = vld [vmem:[%s0 + $0x170] sm:$0xff]
  %v138 = vld [vmem:[%s0 + $0x178] sm:$0xff]
  %v139 = vld [vmem:[%s0 + $0x180] sm:$0xff]
  %v140 = vld [vmem:[%s0 + $0x188] sm:$0xff]
  %v141 = vld [vmem:[%s0 + $0x190] sm:$0xff]
  %v142 = vld [vmem:[%s0 + $0x198] sm:$0xff]
  %v143 = vld [vmem:[%s0 + $0x1a0] sm:$0xff]
  %v144 = vld [vmem:[%s0 + $0x1a8] sm:$0xff]
  %v145 = vld [vmem:[%s0 + $0x1b0] sm:$0xff]
  %v146 = vld [vmem:[%s0 + $0x1b8] sm:$0xff]
  %v147 = vld [vmem:[%s0 + $0x1c0] sm:$0xff]
  %v148 = vld [vmem:[%s0 + $0x1c8] sm:$0xff]
  %v149 = vld [vmem:[%s0 + $0x1d0] sm:$0xff]
  %v150 = vld [vmem:[%s0 + $0x1d8] sm:$0xff]
  %v151 = vld [vmem:[%s0 + $0x1e0] sm:$0xff]
  %v152 = vld [vmem:[%s0 + $0x1e8] sm:$0xff]
  %v153 = vld [vmem:[%s0 + $0x1f0] sm:$0xff]
  %v154 = vld [vmem:[%s0 + $0x1f8] sm:$0xff]
  %v155 = vld [vmem:[#allocation2] sm:$0xff]
  %v156 = vld [vmem:[#allocation2 + $0x8] sm:$0xff]
  %v157 = vld [vmem:[#allocation2 + $0x10] sm:$0xff]
  %v158 = vld [vmem:[#allocation2 + $0x18] sm:$0xff]
  %v159 = vld [vmem:[#allocation2 + $0x20] sm:$0xff]
  %v160 = vld [vmem:[#allocation2 + $0x28] sm:$0xff]
  %v161 = vld [vmem:[#allocation2 + $0x30] sm:$0xff]
  %v162 = vld [vmem:[#allocation2 + $0x38] sm:$0xff]
  %v163 = vld [vmem:[#allocation2 + $0x40] sm:$0xff]
  %v164 = vld [vmem:[#allocation2 + $0x48] sm:$0xff]
  %v165 = vld [vmem:[#allocation2 + $0x50] sm:$0xff]
  %v166 = vld [vmem:[#allocation2 + $0x58] sm:$0xff]
  %v167 = vld [vmem:[#allocation2 + $0x60] sm:$0xff]
  %v168 = vld [vmem:[#allocation2 + $0x68] sm:$0xff]
  %v169 = vld [vmem:[#allocation2 + $0x70] sm:$0xff]
  %v170 = vld [vmem:[#allocation2 + $0x78] sm:$0xff]
  %v171 = vld [vmem:[#allocation2 + $0x80] sm:$0xff]
  %v172 = vld [vmem:[#allocation2 + $0x88] sm:$0xff]
  %v173 = vld [vmem:[#allocation2 + $0x90] sm:$0xff]
  %v174 = vld [vmem:[#allocation2 + $0x98] sm:$0xff]
  %v175 = vld [vmem:[#allocation2 + $0xa0] sm:$0xff]
  %v176 = vld [vmem:[#allocation2 + $0xa8] sm:$0xff]
  %v177 = vld [vmem:[#allocation2 + $0xb0] sm:$0xff]
  %v178 = vld [vmem:[#allocation2 + $0xb8] sm:$0xff]
  %v179 = vld [vmem:[#allocation2 + $0xc0] sm:$0xff]
  %v180 = vld [vmem:[#allocation2 + $0xc8] sm:$0xff]
  %v181 = vld [vmem:[#allocation2 + $0xd0] sm:$0xff]
  %v182 = vld [vmem:[#allocation2 + $0xd8] sm:$0xff]
  %v183 = vld [vmem:[#allocation2 + $0xe0] sm:$0xff]
  %v184 = vld [vmem:[#allocation2 + $0xe8] sm:$0xff]
  %v185 = vld [vmem:[#allocation2 + $0xf0] sm:$0xff]
  %v186 = vld [vmem:[#allocation2 + $0xf8] sm:$0xff]
  %v187 = vld [vmem:[#allocation2 + $0x100] sm:$0xff]
  %v188 = vld [vmem:[#allocation2 + $0x108] sm:$0xff]
  %v189 = vld [vmem:[#allocation2 + $0x110] sm:$0xff]
  %v190 = vld [vmem:[#allocation2 + $0x118] sm:$0xff]
  %v191 = vld [vmem:[#allocation2 + $0x120] sm:$0xff]
  %v192 = vld [vmem:[#allocation2 + $0x128] sm:$0xff]
  %v193 = vld [vmem:[#allocation2 + $0x130] sm:$0xff]
  %v194 = vld [vmem:[#allocation2 + $0x138] sm:$0xff]
  %v195 = vld [vmem:[#allocation2 + $0x140] sm:$0xff]
  %v196 = vld [vmem:[#allocation2 + $0x148] sm:$0xff]
  %v197 = vld [vmem:[#allocation2 + $0x150] sm:$0xff]
  %v198 = vld [vmem:[#allocation2 + $0x158] sm:$0xff]
  %v199 = vld [vmem:[#allocation2 + $0x160] sm:$0xff]
  %v200 = vld [vmem:[#allocation2 + $0x168] sm:$0xff]
  %v201 = vld [vmem:[#allocation2 + $0x170] sm:$0xff]
  %v202 = vld [vmem:[#allocation2 + $0x178] sm:$0xff]
  %v203 = vld [vmem:[#allocation2 + $0x180] sm:$0xff]
  %v204 = vld [vmem:[#allocation2 + $0x188] sm:$0xff]
  %v205 = vld [vmem:[#allocation2 + $0x190] sm:$0xff]
  %v206 = vld [vmem:[#allocation2 + $0x198] sm:$0xff]
  %v207 = vld [vmem:[#allocation2 + $0x1a0] sm:$0xff]
  %v208 = vld [vmem:[#allocation2 + $0x1a8] sm:$0xff]
  %v209 = vld [vmem:[#allocation2 + $0x1b0] sm:$0xff]
  %v210 = vld [vmem:[#allocation2 + $0x1b8] sm:$0xff]
  %v211 = vld [vmem:[#allocation2 + $0x1c0] sm:$0xff]
  %v212 = vld [vmem:[#allocation2 + $0x1c8] sm:$0xff]
  %v213 = vld [vmem:[#allocation2 + $0x1d0] sm:$0xff]
  %v214 = vld [vmem:[#allocation2 + $0x1d8] sm:$0xff]
  %v215 = vld [vmem:[#allocation2 + $0x1e0] sm:$0xff]
  %v216 = vld [vmem:[#allocation2 + $0x1e8] sm:$0xff]
  %v217 = vld [vmem:[#allocation2 + $0x1f0] sm:$0xff]
  %v218 = vld [vmem:[#allocation2 + $0x1f8] sm:$0xff]
  %v219 = vld [vmem:[%s1] sm:$0xf]
  %v220 = vld [vmem:[%s1 + $0x4] sm:$0xf]
  %v221 = vld [vmem:[%s1 + $0x8] sm:$0xf]
  %v222 = vld [vmem:[%s1 + $0xc] sm:$0xf]
  %v223 = vld [vmem:[%s1 + $0x10] sm:$0xf]
  %v224 = vld [vmem:[%s1 + $0x14] sm:$0xf]
  %v225 = vld [vmem:[%s1 + $0x18] sm:$0xf]
  %v226 = vld [vmem:[%s1 + $0x1c] sm:$0xf]
  %v227 = vld [vmem:[%s1 + $0x20] sm:$0xf]
  %v228 = vld [vmem:[%s1 + $0x24] sm:$0xf]
  %v229 = vld [vmem:[%s1 + $0x28] sm:$0xf]
  %v230 = vld [vmem:[%s1 + $0x2c] sm:$0xf]
  %v231 = vld [vmem:[%s1 + $0x30] sm:$0xf]
  %v232 = vld [vmem:[%s1 + $0x34] sm:$0xf]
  %v233 = vld [vmem:[%s1 + $0x38] sm:$0xf]
  %v234 = vld [vmem:[%s1 + $0x3c] sm:$0xf]
  %v235 = vld [vmem:[%s1 + $0x40] sm:$0xf]
  %v236 = vld [vmem:[%s1 + $0x44] sm:$0xf]
  %v237 = vld [vmem:[%s1 + $0x48] sm:$0xf]
  %v238 = vld [vmem:[%s1 + $0x4c] sm:$0xf]
  %v239 = vld [vmem:[%s1 + $0x50] sm:$0xf]
  %v240 = vld [vmem:[%s1 + $0x54] sm:$0xf]
  %v241 = vld [vmem:[%s1 + $0x58] sm:$0xf]
  %v242 = vld [vmem:[%s1 + $0x5c] sm:$0xf]
  %v243 = vld [vmem:[%s1 + $0x60] sm:$0xf]
  %v244 = vld [vmem:[%s1 + $0x64] sm:$0xf]
  %v245 = vld [vmem:[%s1 + $0x68] sm:$0xf]
  %v246 = vld [vmem:[%s1 + $0x6c] sm:$0xf]
  %v247 = vld [vmem:[%s1 + $0x70] sm:$0xf]
  %v248 = vld [vmem:[%s1 + $0x74] sm:$0xf]
  %v249 = vld [vmem:[%s1 + $0x78] sm:$0xf]
  %v250 = vld [vmem:[%s1 + $0x7c] sm:$0xf]
  %v315 = vunpack.c.l.b16 %v91
  %v316 = vunpack.c.h.b16 %v91
  %v317 = vunpack.c.l.b16 %v92
  %v318 = vunpack.c.h.b16 %v92
  %v319 = vunpack.c.l.b16 %v93
  %v320 = vunpack.c.h.b16 %v93
  %v321 = vunpack.c.l.b16 %v94
  %v322 = vunpack.c.h.b16 %v94
  %v323 = vunpack.c.l.b16 %v95
  %v324 = vunpack.c.h.b16 %v95
  %v325 = vunpack.c.l.b16 %v96
  %v326 = vunpack.c.h.b16 %v96
  %v327 = vunpack.c.l.b16 %v97
  %v328 = vunpack.c.h.b16 %v97
  %v329 = vunpack.c.l.b16 %v98
  %v330 = vunpack.c.h.b16 %v98
  %v331 = vunpack.c.l.b16 %v99
  %v332 = vunpack.c.h.b16 %v99
  %v333 = vunpack.c.l.b16 %v100
  %v334 = vunpack.c.h.b16 %v100
  %v335 = vunpack.c.l.b16 %v101
  %v336 = vunpack.c.h.b16 %v101
  %v337 = vunpack.c.l.b16 %v102
  %v338 = vunpack.c.h.b16 %v102
  %v339 = vunpack.c.l.b16 %v103
  %v340 = vunpack.c.h.b16 %v103
  %v341 = vunpack.c.l.b16 %v104
  %v342 = vunpack.c.h.b16 %v104
  %v343 = vunpack.c.l.b16 %v105
  %v344 = vunpack.c.h.b16 %v105
  %v345 = vunpack.c.l.b16 %v106
  %v346 = vunpack.c.h.b16 %v106
  %v347 = vunpack.c.l.b16 %v107
  %v348 = vunpack.c.h.b16 %v107
  %v349 = vunpack.c.l.b16 %v108
  %v350 = vunpack.c.h.b16 %v108
  %v351 = vunpack.c.l.b16 %v109
  %v352 = vunpack.c.h.b16 %v109
  %v353 = vunpack.c.l.b16 %v110
  %v354 = vunpack.c.h.b16 %v110
  %v355 = vunpack.c.l.b16 %v111
  %v356 = vunpack.c.h.b16 %v111
  %v357 = vunpack.c.l.b16 %v112
  %v358 = vunpack.c.h.b16 %v112
  %v359 = vunpack.c.l.b16 %v113
  %v360 = vunpack.c.h.b16 %v113
  %v361 = vunpack.c.l.b16 %v114
  %v362 = vunpack.c.h.b16 %v114
  %v363 = vunpack.c.l.b16 %v115
  %v364 = vunpack.c.h.b16 %v115
  %v365 = vunpack.c.l.b16 %v116
  %v366 = vunpack.c.h.b16 %v116
  %v367 = vunpack.c.l.b16 %v117
  %v368 = vunpack.c.h.b16 %v117
  %v369 = vunpack.c.l.b16 %v118
  %v370 = vunpack.c.h.b16 %v118
  %v371 = vunpack.c.l.b16 %v119
  %v372 = vunpack.c.h.b16 %v119
  %v373 = vunpack.c.l.b16 %v120
  %v374 = vunpack.c.h.b16 %v120
  %v375 = vunpack.c.l.b16 %v121
  %v376 = vunpack.c.h.b16 %v121
  %v377 = vunpack.c.l.b16 %v122
  %v378 = vunpack.c.h.b16 %v122
  %v379 = vunpack.c.l.b16 %v123
  %v380 = vunpack.c.h.b16 %v123
  %v381 = vunpack.c.l.b16 %v124
  %v382 = vunpack.c.h.b16 %v124
  %v383 = vunpack.c.l.b16 %v125
  %v384 = vunpack.c.h.b16 %v125
  %v385 = vunpack.c.l.b16 %v126
  %v386 = vunpack.c.h.b16 %v126
  %v387 = vunpack.c.l.b16 %v127
  %v388 = vunpack.c.h.b16 %v127
  %v389 = vunpack.c.l.b16 %v128
  %v390 = vunpack.c.h.b16 %v128
  %v391 = vunpack.c.l.b16 %v129
  %v392 = vunpack.c.h.b16 %v129
  %v393 = vunpack.c.l.b16 %v130
  %v394 = vunpack.c.h.b16 %v130
  %v395 = vunpack.c.l.b16 %v131
  %v396 = vunpack.c.h.b16 %v131
  %v397 = vunpack.c.l.b16 %v132
  %v398 = vunpack.c.h.b16 %v132
  %v399 = vunpack.c.l.b16 %v133
  %v400 = vunpack.c.h.b16 %v133
  %v401 = vunpack.c.l.b16 %v134
  %v402 = vunpack.c.h.b16 %v134
  %v403 = vunpack.c.l.b16 %v135
  %v404 = vunpack.c.h.b16 %v135
  %v405 = vunpack.c.l.b16 %v136
  %v406 = vunpack.c.h.b16 %v136
  %v407 = vunpack.c.l.b16 %v137
  %v408 = vunpack.c.h.b16 %v137
  %v409 = vunpack.c.l.b16 %v138
  %v410 = vunpack.c.h.b16 %v138
  %v411 = vunpack.c.l.b16 %v139
  %v412 = vunpack.c.h.b16 %v139
  %v413 = vunpack.c.l.b16 %v140
  %v414 = vunpack.c.h.b16 %v140
  %v415 = vunpack.c.l.b16 %v141
  %v416 = vunpack.c.h.b16 %v141
  %v417 = vunpack.c.l.b16 %v142
  %v418 = vunpack.c.h.b16 %v142
  %v419 = vunpack.c.l.b16 %v143
  %v420 = vunpack.c.h.b16 %v143
  %v421 = vunpack.c.l.b16 %v144
  %v422 = vunpack.c.h.b16 %v144
  %v423 = vunpack.c.l.b16 %v145
  %v424 = vunpack.c.h.b16 %v145
  %v425 = vunpack.c.l.b16 %v146
  %v426 = vunpack.c.h.b16 %v146
  %v427 = vunpack.c.l.b16 %v147
  %v428 = vunpack.c.h.b16 %v147
  %v429 = vunpack.c.l.b16 %v148
  %v430 = vunpack.c.h.b16 %v148
  %v431 = vunpack.c.l.b16 %v149
  %v432 = vunpack.c.h.b16 %v149
  %v433 = vunpack.c.l.b16 %v150
  %v434 = vunpack.c.h.b16 %v150
  %v435 = vunpack.c.l.b16 %v151
  %v436 = vunpack.c.h.b16 %v151
  %v437 = vunpack.c.l.b16 %v152
  %v438 = vunpack.c.h.b16 %v152
  %v439 = vunpack.c.l.b16 %v153
  %v440 = vunpack.c.h.b16 %v153
  %v441 = vunpack.c.l.b16 %v154
  %v442 = vunpack.c.h.b16 %v154
  %v443 = vpack.c.b16 %v317, %v315
  %v444 = vpack.c.b16 %v318, %v316
  %v445 = vpack.c.b16 %v321, %v319
  %v446 = vpack.c.b16 %v322, %v320
  %v447 = vpack.c.b16 %v325, %v323
  %v448 = vpack.c.b16 %v326, %v324
  %v449 = vpack.c.b16 %v329, %v327
  %v450 = vpack.c.b16 %v330, %v328
  %v451 = vpack.c.b16 %v333, %v331
  %v452 = vpack.c.b16 %v334, %v332
  %v453 = vpack.c.b16 %v337, %v335
  %v454 = vpack.c.b16 %v338, %v336
  %v455 = vpack.c.b16 %v341, %v339
  %v456 = vpack.c.b16 %v342, %v340
  %v457 = vpack.c.b16 %v345, %v343
  %v458 = vpack.c.b16 %v346, %v344
  %v459 = vpack.c.b16 %v349, %v347
  %v460 = vpack.c.b16 %v350, %v348
  %v461 = vpack.c.b16 %v353, %v351
  %v462 = vpack.c.b16 %v354, %v352
  %v463 = vpack.c.b16 %v357, %v355
  %v464 = vpack.c.b16 %v358, %v356
  %v465 = vpack.c.b16 %v361, %v359
  %v466 = vpack.c.b16 %v362, %v360
  %v467 = vpack.c.b16 %v365, %v363
  %v468 = vpack.c.b16 %v366, %v364
  %v469 = vpack.c.b16 %v369, %v367
  %v470 = vpack.c.b16 %v370, %v368
  %v471 = vpack.c.b16 %v373, %v371
  %v472 = vpack.c.b16 %v374, %v372
  %v473 = vpack.c.b16 %v377, %v375
  %v474 = vpack.c.b16 %v378, %v376
  %v475 = vpack.c.b16 %v381, %v379
  %v476 = vpack.c.b16 %v382, %v380
  %v477 = vpack.c.b16 %v385, %v383
  %v478 = vpack.c.b16 %v386, %v384
  %v479 = vpack.c.b16 %v389, %v387
  %v480 = vpack.c.b16 %v390, %v388
  %v481 = vpack.c.b16 %v393, %v391
  %v482 = vpack.c.b16 %v394, %v392
  %v483 = vpack.c.b16 %v397, %v395
  %v484 = vpack.c.b16 %v398, %v396
  %v485 = vpack.c.b16 %v401, %v399
  %v486 = vpack.c.b16 %v402, %v400
  %v487 = vpack.c.b16 %v405, %v403
  %v488 = vpack.c.b16 %v406, %v404
  %v489 = vpack.c.b16 %v409, %v407
  %v490 = vpack.c.b16 %v410, %v408
  %v491 = vpack.c.b16 %v413, %v411
  %v492 = vpack.c.b16 %v414, %v412
  %v493 = vpack.c.b16 %v417, %v415
  %v494 = vpack.c.b16 %v418, %v416
  %v495 = vpack.c.b16 %v421, %v419
  %v496 = vpack.c.b16 %v422, %v420
  %v497 = vpack.c.b16 %v425, %v423
  %v498 = vpack.c.b16 %v426, %v424
  %v499 = vpack.c.b16 %v429, %v427
  %v500 = vpack.c.b16 %v430, %v428
  %v501 = vpack.c.b16 %v433, %v431
  %v502 = vpack.c.b16 %v434, %v432
  %v503 = vpack.c.b16 %v437, %v435
  %v504 = vpack.c.b16 %v438, %v436
  %v505 = vpack.c.b16 %v441, %v439
  %v506 = vpack.c.b16 %v442, %v440
  %v603 = vunpack.c.l.b16 %v219
  %v604 = vunpack.c.l.b16 %v220
  %v605 = vunpack.c.l.b16 %v221
  %v606 = vunpack.c.l.b16 %v222
  %v607 = vunpack.c.l.b16 %v223
  %v608 = vunpack.c.l.b16 %v224
  %v609 = vunpack.c.l.b16 %v225
  %v610 = vunpack.c.l.b16 %v226
  %v611 = vunpack.c.l.b16 %v227
  %v612 = vunpack.c.l.b16 %v228
  %v613 = vunpack.c.l.b16 %v229
  %v614 = vunpack.c.l.b16 %v230
  %v615 = vunpack.c.l.b16 %v231
  %v616 = vunpack.c.l.b16 %v232
  %v617 = vunpack.c.l.b16 %v233
  %v618 = vunpack.c.l.b16 %v234
  %v619 = vunpack.c.l.b16 %v235
  %v620 = vunpack.c.l.b16 %v236
  %v621 = vunpack.c.l.b16 %v237
  %v622 = vunpack.c.l.b16 %v238
  %v623 = vunpack.c.l.b16 %v239
  %v624 = vunpack.c.l.b16 %v240
  %v625 = vunpack.c.l.b16 %v241
  %v626 = vunpack.c.l.b16 %v242
  %v627 = vunpack.c.l.b16 %v243
  %v628 = vunpack.c.l.b16 %v244
  %v629 = vunpack.c.l.b16 %v245
  %v630 = vunpack.c.l.b16 %v246
  %v631 = vunpack.c.l.b16 %v247
  %v632 = vunpack.c.l.b16 %v248
  %v633 = vunpack.c.l.b16 %v249
  %v634 = vunpack.c.l.b16 %v250
  %v635 = vpack.c.b16 %v604, %v603
  %v636 = vpack.c.b16 %v606, %v605
  %v637 = vpack.c.b16 %v608, %v607
  %v638 = vpack.c.b16 %v610, %v609
  %v639 = vpack.c.b16 %v612, %v611
  %v640 = vpack.c.b16 %v614, %v613
  %v641 = vpack.c.b16 %v616, %v615
  %v642 = vpack.c.b16 %v618, %v617
  %v643 = vpack.c.b16 %v620, %v619
  %v644 = vpack.c.b16 %v622, %v621
  %v645 = vpack.c.b16 %v624, %v623
  %v646 = vpack.c.b16 %v626, %v625
  %v647 = vpack.c.b16 %v628, %v627
  %v648 = vpack.c.b16 %v630, %v629
  %v649 = vpack.c.b16 %v632, %v631
  %v650 = vpack.c.b16 %v634, %v633
  %667 = vmatpush.bf16.msra.mxu0 %v642
  %668 = vmatpush.bf16.msra.mxu0 %v641
  %669 = vmatpush.bf16.msra.mxu0 %v640
  %670 = vmatpush.bf16.msra.mxu0 %v639
  %671 = vmatpush.bf16.msra.mxu0 %v638
  %672 = vmatpush.bf16.msra.mxu0 %v637
  %673 = vmatpush.bf16.msra.mxu0 %v636
  %674 = vmatpush.bf16.msra.mxu0 %v635
  %675 = vmatmul.bf16.gmra.mxu0 %v443
  %v676 = vpop.f32.mrf.mxu0
  %v677 = vadd.f32 0.0, %v676
  %v678 = vpop.f32.mrf.mxu0
  %v679 = vadd.f32 0.0, %v678
  %680 = vmatmul.bf16.gmra.mxu0 %v445
  %v681 = vpop.f32.mrf.mxu0
  %v682 = vadd.f32 0.0, %v681
  %v683 = vpop.f32.mrf.mxu0
  %v684 = vadd.f32 0.0, %v683
  %685 = vmatmul.bf16.gmra.mxu0 %v447
  %v686 = vpop.f32.mrf.mxu0
  %v687 = vadd.f32 0.0, %v686
  %v688 = vpop.f32.mrf.mxu0
  %v689 = vadd.f32 0.0, %v688
  %690 = vmatmul.bf16.gmra.mxu0 %v449
  %v691 = vpop.f32.mrf.mxu0
  %v692 = vadd.f32 0.0, %v691
  %v693 = vpop.f32.mrf.mxu0
  %v694 = vadd.f32 0.0, %v693
  %695 = vmatmul.bf16.gmra.mxu0 %v451
  %v696 = vpop.f32.mrf.mxu0
  %v697 = vadd.f32 0.0, %v696
  %v698 = vpop.f32.mrf.mxu0
  %v699 = vadd.f32 0.0, %v698
  %700 = vmatmul.bf16.gmra.mxu0 %v453
  %v701 = vpop.f32.mrf.mxu0
  %v702 = vadd.f32 0.0, %v701
  %v703 = vpop.f32.mrf.mxu0
  %v704 = vadd.f32 0.0, %v703
  %705 = vmatmul.bf16.gmra.mxu0 %v455
  %v706 = vpop.f32.mrf.mxu0
  %v707 = vadd.f32 0.0, %v706
  %v708 = vpop.f32.mrf.mxu0
  %v709 = vadd.f32 0.0, %v708
  %710 = vmatmul.bf16.gmra.mxu0 %v457
  %v711 = vpop.f32.mrf.mxu0
  %v712 = vadd.f32 0.0, %v711
  %v713 = vpop.f32.mrf.mxu0
  %v714 = vadd.f32 0.0, %v713
  %715 = vmatmul.bf16.gmra.mxu0 %v459
  %v716 = vpop.f32.mrf.mxu0
  %v717 = vadd.f32 0.0, %v716
  %v718 = vpop.f32.mrf.mxu0
  %v719 = vadd.f32 0.0, %v718
  %720 = vmatmul.bf16.gmra.mxu0 %v461
  %v721 = vpop.f32.mrf.mxu0
  %v722 = vadd.f32 0.0, %v721
  %v723 = vpop.f32.mrf.mxu0
  %v724 = vadd.f32 0.0, %v723
  %725 = vmatmul.bf16.gmra.mxu0 %v463
  %v726 = vpop.f32.mrf.mxu0
  %v727 = vadd.f32 0.0, %v726
  %v728 = vpop.f32.mrf.mxu0
  %v729 = vadd.f32 0.0, %v728
  %730 = vmatmul.bf16.gmra.mxu0 %v465
  %v731 = vpop.f32.mrf.mxu0
  %v732 = vadd.f32 0.0, %v731
  %v733 = vpop.f32.mrf.mxu0
  %v734 = vadd.f32 0.0, %v733
  %735 = vmatmul.bf16.gmra.mxu0 %v467
  %v736 = vpop.f32.mrf.mxu0
  %v737 = vadd.f32 0.0, %v736
  %v738 = vpop.f32.mrf.mxu0
  %v739 = vadd.f32 0.0, %v738
  %740 = vmatmul.bf16.gmra.mxu0 %v469
  %v741 = vpop.f32.mrf.mxu0
  %v742 = vadd.f32 0.0, %v741
  %v743 = vpop.f32.mrf.mxu0
  %v744 = vadd.f32 0.0, %v743
  %745 = vmatmul.bf16.gmra.mxu0 %v471
  %v746 = vpop.f32.mrf.mxu0
  %v747 = vadd.f32 0.0, %v746
  %v748 = vpop.f32.mrf.mxu0
  %v749 = vadd.f32 0.0, %v748
  %750 = vmatmul.bf16.gmra.mxu0 %v473
  %v751 = vpop.f32.mrf.mxu0
  %v752 = vadd.f32 0.0, %v751
  %v753 = vpop.f32.mrf.mxu0
  %v754 = vadd.f32 0.0, %v753
  %755 = vmatmul.bf16.gmra.mxu0 %v475
  %v756 = vpop.f32.mrf.mxu0
  %v757 = vadd.f32 0.0, %v756
  %v758 = vpop.f32.mrf.mxu0
  %v759 = vadd.f32 0.0, %v758
  %760 = vmatmul.bf16.gmra.mxu0 %v477
  %v761 = vpop.f32.mrf.mxu0
  %v762 = vadd.f32 0.0, %v761
  %v763 = vpop.f32.mrf.mxu0
  %v764 = vadd.f32 0.0, %v763
  %765 = vmatmul.bf16.gmra.mxu0 %v479
  %v766 = vpop.f32.mrf.mxu0
  %v767 = vadd.f32 0.0, %v766
  %v768 = vpop.f32.mrf.mxu0
  %v769 = vadd.f32 0.0, %v768
  %770 = vmatmul.bf16.gmra.mxu0 %v481
  %v771 = vpop.f32.mrf.mxu0
  %v772 = vadd.f32 0.0, %v771
  %v773 = vpop.f32.mrf.mxu0
  %v774 = vadd.f32 0.0, %v773
  %775 = vmatmul.bf16.gmra.mxu0 %v483
  %v776 = vpop.f32.mrf.mxu0
  %v777 = vadd.f32 0.0, %v776
  %v778 = vpop.f32.mrf.mxu0
  %v779 = vadd.f32 0.0, %v778
  %780 = vmatmul.bf16.gmra.mxu0 %v485
  %v781 = vpop.f32.mrf.mxu0
  %v782 = vadd.f32 0.0, %v781
  %v783 = vpop.f32.mrf.mxu0
  %v784 = vadd.f32 0.0, %v783
  %785 = vmatmul.bf16.gmra.mxu0 %v487
  %v786 = vpop.f32.mrf.mxu0
  %v787 = vadd.f32 0.0, %v786
  %v788 = vpop.f32.mrf.mxu0
  %v789 = vadd.f32 0.0, %v788
  %790 = vmatmul.bf16.gmra.mxu0 %v489
  %v791 = vpop.f32.mrf.mxu0
  %v792 = vadd.f32 0.0, %v791
  %v793 = vpop.f32.mrf.mxu0
  %v794 = vadd.f32 0.0, %v793
  %795 = vmatmul.bf16.gmra.mxu0 %v491
  %v796 = vpop.f32.mrf.mxu0
  %v797 = vadd.f32 0.0, %v796
  %v798 = vpop.f32.mrf.mxu0
  %v799 = vadd.f32 0.0, %v798
  %800 = vmatmul.bf16.gmra.mxu0 %v493
  %v801 = vpop.f32.mrf.mxu0
  %v802 = vadd.f32 0.0, %v801
  %v803 = vpop.f32.mrf.mxu0
  %v804 = vadd.f32 0.0, %v803
  %805 = vmatmul.bf16.gmra.mxu0 %v495
  %v806 = vpop.f32.mrf.mxu0
  %v807 = vadd.f32 0.0, %v806
  %v808 = vpop.f32.mrf.mxu0
  %v809 = vadd.f32 0.0, %v808
  %810 = vmatmul.bf16.gmra.mxu0 %v497
  %v811 = vpop.f32.mrf.mxu0
  %v812 = vadd.f32 0.0, %v811
  %v813 = vpop.f32.mrf.mxu0
  %v814 = vadd.f32 0.0, %v813
  %815 = vmatmul.bf16.gmra.mxu0 %v499
  %v816 = vpop.f32.mrf.mxu0
  %v817 = vadd.f32 0.0, %v816
  %v818 = vpop.f32.mrf.mxu0
  %v819 = vadd.f32 0.0, %v818
  %820 = vmatmul.bf16.gmra.mxu0 %v501
  %v821 = vpop.f32.mrf.mxu0
  %v822 = vadd.f32 0.0, %v821
  %v823 = vpop.f32.mrf.mxu0
  %v824 = vadd.f32 0.0, %v823
  %825 = vmatmul.bf16.gmra.mxu0 %v503
  %v826 = vpop.f32.mrf.mxu0
  %v827 = vadd.f32 0.0, %v826
  %v828 = vpop.f32.mrf.mxu0
  %v829 = vadd.f32 0.0, %v828
  %830 = vmatmul.bf16.gmra.mxu0 %v505
  %v831 = vpop.f32.mrf.mxu0
  %v832 = vadd.f32 0.0, %v831
  %v833 = vpop.f32.mrf.mxu0
  %v834 = vadd.f32 0.0, %v833
  %835 = vdwg.mxu0
  %836 = vmatpush.bf16.msra.mxu0 %v650
  %837 = vmatpush.bf16.msra.mxu0 %v649
  %838 = vmatpush.bf16.msra.mxu0 %v648
  %839 = vmatpush.bf16.msra.mxu0 %v647
  %840 = vmatpush.bf16.msra.mxu0 %v646
  %841 = vmatpush.bf16.msra.mxu0 %v645
  %842 = vmatpush.bf16.msra.mxu0 %v644
  %843 = vmatpush.bf16.msra.mxu0 %v643
  %844 = vmatmul.bf16.gmra.mxu0 %v444
  %v845 = vpop.f32.mrf.mxu0
  %v846 = vadd.f32 %v677, %v845
  %v847 = vpop.f32.mrf.mxu0
  %v848 = vadd.f32 %v679, %v847
  %849 = vmatmul.bf16.gmra.mxu0 %v446
  %v850 = vpop.f32.mrf.mxu0
  %v851 = vadd.f32 %v682, %v850
  %v852 = vpop.f32.mrf.mxu0
  %v853 = vadd.f32 %v684, %v852
  %854 = vmatmul.bf16.gmra.mxu0 %v448
  %v855 = vpop.f32.mrf.mxu0
  %v856 = vadd.f32 %v687, %v855
  %v857 = vpop.f32.mrf.mxu0
  %v858 = vadd.f32 %v689, %v857
  %859 = vmatmul.bf16.gmra.mxu0 %v450
  %v860 = vpop.f32.mrf.mxu0
  %v861 = vadd.f32 %v692, %v860
  %v862 = vpop.f32.mrf.mxu0
  %v863 = vadd.f32 %v694, %v862
  %864 = vmatmul.bf16.gmra.mxu0 %v452
  %v865 = vpop.f32.mrf.mxu0
  %v866 = vadd.f32 %v697, %v865
  %v867 = vpop.f32.mrf.mxu0
  %v868 = vadd.f32 %v699, %v867
  %869 = vmatmul.bf16.gmra.mxu0 %v454
  %v870 = vpop.f32.mrf.mxu0
  %v871 = vadd.f32 %v702, %v870
  %v872 = vpop.f32.mrf.mxu0
  %v873 = vadd.f32 %v704, %v872
  %874 = vmatmul.bf16.gmra.mxu0 %v456
  %v875 = vpop.f32.mrf.mxu0
  %v876 = vadd.f32 %v707, %v875
  %v877 = vpop.f32.mrf.mxu0
  %v878 = vadd.f32 %v709, %v877
  %879 = vmatmul.bf16.gmra.mxu0 %v458
  %v880 = vpop.f32.mrf.mxu0
  %v881 = vadd.f32 %v712, %v880
  %v882 = vpop.f32.mrf.mxu0
  %v883 = vadd.f32 %v714, %v882
  %884 = vmatmul.bf16.gmra.mxu0 %v460
  %v885 = vpop.f32.mrf.mxu0
  %v886 = vadd.f32 %v717, %v885
  %v887 = vpop.f32.mrf.mxu0
  %v888 = vadd.f32 %v719, %v887
  %889 = vmatmul.bf16.gmra.mxu0 %v462
  %v890 = vpop.f32.mrf.mxu0
  %v891 = vadd.f32 %v722, %v890
  %v892 = vpop.f32.mrf.mxu0
  %v893 = vadd.f32 %v724, %v892
  %894 = vmatmul.bf16.gmra.mxu0 %v464
  %v895 = vpop.f32.mrf.mxu0
  %v896 = vadd.f32 %v727, %v895
  %v897 = vpop.f32.mrf.mxu0
  %v898 = vadd.f32 %v729, %v897
  %899 = vmatmul.bf16.gmra.mxu0 %v466
  %v900 = vpop.f32.mrf.mxu0
  %v901 = vadd.f32 %v732, %v900
  %v902 = vpop.f32.mrf.mxu0
  %v903 = vadd.f32 %v734, %v902
  %904 = vmatmul.bf16.gmra.mxu0 %v468
  %v905 = vpop.f32.mrf.mxu0
  %v906 = vadd.f32 %v737, %v905
  %v907 = vpop.f32.mrf.mxu0
  %v908 = vadd.f32 %v739, %v907
  %909 = vmatmul.bf16.gmra.mxu0 %v470
  %v910 = vpop.f32.mrf.mxu0
  %v911 = vadd.f32 %v742, %v910
  %v912 = vpop.f32.mrf.mxu0
  %v913 = vadd.f32 %v744, %v912
  %914 = vmatmul.bf16.gmra.mxu0 %v472
  %v915 = vpop.f32.mrf.mxu0
  %v916 = vadd.f32 %v747, %v915
  %v917 = vpop.f32.mrf.mxu0
  %v918 = vadd.f32 %v749, %v917
  %919 = vmatmul.bf16.gmra.mxu0 %v474
  %v920 = vpop.f32.mrf.mxu0
  %v921 = vadd.f32 %v752, %v920
  %v922 = vpop.f32.mrf.mxu0
  %v923 = vadd.f32 %v754, %v922
  %924 = vmatmul.bf16.gmra.mxu0 %v476
  %v925 = vpop.f32.mrf.mxu0
  %v926 = vadd.f32 %v757, %v925
  %v927 = vpop.f32.mrf.mxu0
  %v928 = vadd.f32 %v759, %v927
  %929 = vmatmul.bf16.gmra.mxu0 %v478
  %v930 = vpop.f32.mrf.mxu0
  %v931 = vadd.f32 %v762, %v930
  %v932 = vpop.f32.mrf.mxu0
  %v933 = vadd.f32 %v764, %v932
  %934 = vmatmul.bf16.gmra.mxu0 %v480
  %v935 = vpop.f32.mrf.mxu0
  %v936 = vadd.f32 %v767, %v935
  %v937 = vpop.f32.mrf.mxu0
  %v938 = vadd.f32 %v769, %v937
  %939 = vmatmul.bf16.gmra.mxu0 %v482
  %v940 = vpop.f32.mrf.mxu0
  %v941 = vadd.f32 %v772, %v940
  %v942 = vpop.f32.mrf.mxu0
  %v943 = vadd.f32 %v774, %v942
  %944 = vmatmul.bf16.gmra.mxu0 %v484
  %v945 = vpop.f32.mrf.mxu0
  %v946 = vadd.f32 %v777, %v945
  %v947 = vpop.f32.mrf.mxu0
  %v948 = vadd.f32 %v779, %v947
  %949 = vmatmul.bf16.gmra.mxu0 %v486
  %v950 = vpop.f32.mrf.mxu0
  %v951 = vadd.f32 %v782, %v950
  %v952 = vpop.f32.mrf.mxu0
  %v953 = vadd.f32 %v784, %v952
  %954 = vmatmul.bf16.gmra.mxu0 %v488
  %v955 = vpop.f32.mrf.mxu0
  %v956 = vadd.f32 %v787, %v955
  %v957 = vpop.f32.mrf.mxu0
  %v958 = vadd.f32 %v789, %v957
  %959 = vmatmul.bf16.gmra.mxu0 %v490
  %v960 = vpop.f32.mrf.mxu0
  %v961 = vadd.f32 %v792, %v960
  %v962 = vpop.f32.mrf.mxu0
  %v963 = vadd.f32 %v794, %v962
  %964 = vmatmul.bf16.gmra.mxu0 %v492
  %v965 = vpop.f32.mrf.mxu0
  %v966 = vadd.f32 %v797, %v965
  %v967 = vpop.f32.mrf.mxu0
  %v968 = vadd.f32 %v799, %v967
  %969 = vmatmul.bf16.gmra.mxu0 %v494
  %v970 = vpop.f32.mrf.mxu0
  %v971 = vadd.f32 %v802, %v970
  %v972 = vpop.f32.mrf.mxu0
  %v973 = vadd.f32 %v804, %v972
  %974 = vmatmul.bf16.gmra.mxu0 %v496
  %v975 = vpop.f32.mrf.mxu0
  %v976 = vadd.f32 %v807, %v975
  %v977 = vpop.f32.mrf.mxu0
  %v978 = vadd.f32 %v809, %v977
  %979 = vmatmul.bf16.gmra.mxu0 %v498
  %v980 = vpop.f32.mrf.mxu0
  %v981 = vadd.f32 %v812, %v980
  %v982 = vpop.f32.mrf.mxu0
  %v983 = vadd.f32 %v814, %v982
  %984 = vmatmul.bf16.gmra.mxu0 %v500
  %v985 = vpop.f32.mrf.mxu0
  %v986 = vadd.f32 %v817, %v985
  %v987 = vpop.f32.mrf.mxu0
  %v988 = vadd.f32 %v819, %v987
  %989 = vmatmul.bf16.gmra.mxu0 %v502
  %v990 = vpop.f32.mrf.mxu0
  %v991 = vadd.f32 %v822, %v990
  %v992 = vpop.f32.mrf.mxu0
  %v993 = vadd.f32 %v824, %v992
  %994 = vmatmul.bf16.gmra.mxu0 %v504
  %v995 = vpop.f32.mrf.mxu0
  %v996 = vadd.f32 %v827, %v995
  %v997 = vpop.f32.mrf.mxu0
  %v998 = vadd.f32 %v829, %v997
  %999 = vmatmul.bf16.gmra.mxu0 %v506
  %v1000 = vpop.f32.mrf.mxu0
  %v1001 = vadd.f32 %v832, %v1000
  %v1002 = vpop.f32.mrf.mxu0
  %v1003 = vadd.f32 %v834, %v1002
  %1004 = vdwg.mxu0
  %v1005 = vadd.f32 %v155, %v846
  %v1006 = vadd.f32 %v156, %v848
  %v1007 = vadd.f32 %v157, %v851
  %v1008 = vadd.f32 %v158, %v853
  %v1009 = vadd.f32 %v159, %v856
  %v1010 = vadd.f32 %v160, %v858
  %v1011 = vadd.f32 %v161, %v861
  %v1012 = vadd.f32 %v162, %v863
  %v1013 = vadd.f32 %v163, %v866
  %v1014 = vadd.f32 %v164, %v868
  %v1015 = vadd.f32 %v165, %v871
  %v1016 = vadd.f32 %v166, %v873
  %v1017 = vadd.f32 %v167, %v876
  %v1018 = vadd.f32 %v168, %v878
  %v1019 = vadd.f32 %v169, %v881
  %v1020 = vadd.f32 %v170, %v883
  %v1021 = vadd.f32 %v171, %v886
  %v1022 = vadd.f32 %v172, %v888
  %v1023 = vadd.f32 %v173, %v891
  %v1024 = vadd.f32 %v174, %v893
  %v1025 = vadd.f32 %v175, %v896
  %v1026 = vadd.f32 %v176, %v898
  %v1027 = vadd.f32 %v177, %v901
  %v1028 = vadd.f32 %v178, %v903
  %v1029 = vadd.f32 %v179, %v906
  %v1030 = vadd.f32 %v180, %v908
  %v1031 = vadd.f32 %v181, %v911
  %v1032 = vadd.f32 %v182, %v913
  %v1033 = vadd.f32 %v183, %v916
  %v1034 = vadd.f32 %v184, %v918
  %v1035 = vadd.f32 %v185, %v921
  %v1036 = vadd.f32 %v186, %v923
  %v1037 = vadd.f32 %v187, %v926
  %v1038 = vadd.f32 %v188, %v928
  %v1039 = vadd.f32 %v189, %v931
  %v1040 = vadd.f32 %v190, %v933
  %v1041 = vadd.f32 %v191, %v936
  %v1042 = vadd.f32 %v192, %v938
  %v1043 = vadd.f32 %v193, %v941
  %v1044 = vadd.f32 %v194, %v943
  %v1045 = vadd.f32 %v195, %v946
  %v1046 = vadd.f32 %v196, %v948
  %v1047 = vadd.f32 %v197, %v951
  %v1048 = vadd.f32 %v198, %v953
  %v1049 = vadd.f32 %v199, %v956
  %v1050 = vadd.f32 %v200, %v958
  %v1051 = vadd.f32 %v201, %v961
  %v1052 = vadd.f32 %v202, %v963
  %v1053 = vadd.f32 %v203, %v966
  %v1054 = vadd.f32 %v204, %v968
  %v1055 = vadd.f32 %v205, %v971
  %v1056 = vadd.f32 %v206, %v973
  %v1057 = vadd.f32 %v207, %v976
  %v1058 = vadd.f32 %v208, %v978
  %v1059 = vadd.f32 %v209, %v981
  %v1060 = vadd.f32 %v210, %v983
  %v1061 = vadd.f32 %v211, %v986
  %v1062 = vadd.f32 %v212, %v988
  %v1063 = vadd.f32 %v213, %v991
  %v1064 = vadd.f32 %v214, %v993
  %v1065 = vadd.f32 %v215, %v996
  %v1066 = vadd.f32 %v216, %v998
  %v1067 = vadd.f32 %v217, %v1001
  %v1068 = vadd.f32 %v218, %v1003
  %1069 = vst [vmem:[#allocation2] sm:$0xff] %v1005
  %1070 = vst [vmem:[#allocation2 + $0x8] sm:$0xff] %v1006
  %1071 = vst [vmem:[#allocation2 + $0x10] sm:$0xff] %v1007
  %1072 = vst [vmem:[#allocation2 + $0x18] sm:$0xff] %v1008
  %1073 = vst [vmem:[#allocation2 + $0x20] sm:$0xff] %v1009
  %1074 = vst [vmem:[#allocation2 + $0x28] sm:$0xff] %v1010
  %1075 = vst [vmem:[#allocation2 + $0x30] sm:$0xff] %v1011
  %1076 = vst [vmem:[#allocation2 + $0x38] sm:$0xff] %v1012
  %1077 = vst [vmem:[#allocation2 + $0x40] sm:$0xff] %v1013
  %1078 = vst [vmem:[#allocation2 + $0x48] sm:$0xff] %v1014
  %1079 = vst [vmem:[#allocation2 + $0x50] sm:$0xff] %v1015
  %1080 = vst [vmem:[#allocation2 + $0x58] sm:$0xff] %v1016
  %1081 = vst [vmem:[#allocation2 + $0x60] sm:$0xff] %v1017
  %1082 = vst [vmem:[#allocation2 + $0x68] sm:$0xff] %v1018
  %1083 = vst [vmem:[#allocation2 + $0x70] sm:$0xff] %v1019
  %1084 = vst [vmem:[#allocation2 + $0x78] sm:$0xff] %v1020
  %1085 = vst [vmem:[#allocation2 + $0x80] sm:$0xff] %v1021
  %1086 = vst [vmem:[#allocation2 + $0x88] sm:$0xff] %v1022
  %1087 = vst [vmem:[#allocation2 + $0x90] sm:$0xff] %v1023
  %1088 = vst [vmem:[#allocation2 + $0x98] sm:$0xff] %v1024
  %1089 = vst [vmem:[#allocation2 + $0xa0] sm:$0xff] %v1025
  %1090 = vst [vmem:[#allocation2 + $0xa8] sm:$0xff] %v1026
  %1091 = vst [vmem:[#allocation2 + $0xb0] sm:$0xff] %v1027
  %1092 = vst [vmem:[#allocation2 + $0xb8] sm:$0xff] %v1028
  %1093 = vst [vmem:[#allocation2 + $0xc0] sm:$0xff] %v1029
  %1094 = vst [vmem:[#allocation2 + $0xc8] sm:$0xff] %v1030
  %1095 = vst [vmem:[#allocation2 + $0xd0] sm:$0xff] %v1031
  %1096 = vst [vmem:[#allocation2 + $0xd8] sm:$0xff] %v1032
  %1097 = vst [vmem:[#allocation2 + $0xe0] sm:$0xff] %v1033
  %1098 = vst [vmem:[#allocation2 + $0xe8] sm:$0xff] %v1034
  %1099 = vst [vmem:[#allocation2 + $0xf0] sm:$0xff] %v1035
  %1100 = vst [vmem:[#allocation2 + $0xf8] sm:$0xff] %v1036
  %1101 = vst [vmem:[#allocation2 + $0x100] sm:$0xff] %v1037
  %1102 = vst [vmem:[#allocation2 + $0x108] sm:$0xff] %v1038
  %1103 = vst [vmem:[#allocation2 + $0x110] sm:$0xff] %v1039
  %1104 = vst [vmem:[#allocation2 + $0x118] sm:$0xff] %v1040
  %1105 = vst [vmem:[#allocation2 + $0x120] sm:$0xff] %v1041
  %1106 = vst [vmem:[#allocation2 + $0x128] sm:$0xff] %v1042
  %1107 = vst [vmem:[#allocation2 + $0x130] sm:$0xff] %v1043
  %1108 = vst [vmem:[#allocation2 + $0x138] sm:$0xff] %v1044
  %1109 = vst [vmem:[#allocation2 + $0x140] sm:$0xff] %v1045
  %1110 = vst [vmem:[#allocation2 + $0x148] sm:$0xff] %v1046
  %1111 = vst [vmem:[#allocation2 + $0x150] sm:$0xff] %v1047
  %1112 = vst [vmem:[#allocation2 + $0x158] sm:$0xff] %v1048
  %1113 = vst [vmem:[#allocation2 + $0x160] sm:$0xff] %v1049
  %1114 = vst [vmem:[#allocation2 + $0x168] sm:$0xff] %v1050
  %1115 = vst [vmem:[#allocation2 + $0x170] sm:$0xff] %v1051
  %1116 = vst [vmem:[#allocation2 + $0x178] sm:$0xff] %v1052
  %1117 = vst [vmem:[#allocation2 + $0x180] sm:$0xff] %v1053
  %1118 = vst [vmem:[#allocation2 + $0x188] sm:$0xff] %v1054
  %1119 = vst [vmem:[#allocation2 + $0x190] sm:$0xff] %v1055
  %1120 = vst [vmem:[#allocation2 + $0x198] sm:$0xff] %v1056
  %1121 = vst [vmem:[#allocation2 + $0x1a0] sm:$0xff] %v1057
  %1122 = vst [vmem:[#allocation2 + $0x1a8] sm:$0xff] %v1058
  %1123 = vst [vmem:[#allocation2 + $0x1b0] sm:$0xff] %v1059
  %1124 = vst [vmem:[#allocation2 + $0x1b8] sm:$0xff] %v1060
  %1125 = vst [vmem:[#allocation2 + $0x1c0] sm:$0xff] %v1061
  %1126 = vst [vmem:[#allocation2 + $0x1c8] sm:$0xff] %v1062
  %1127 = vst [vmem:[#allocation2 + $0x1d0] sm:$0xff] %v1063
  %1128 = vst [vmem:[#allocation2 + $0x1d8] sm:$0xff] %v1064
  %1129 = vst [vmem:[#allocation2 + $0x1e0] sm:$0xff] %v1065
  %1130 = vst [vmem:[#allocation2 + $0x1e8] sm:$0xff] %v1066
  %1131 = vst [vmem:[#allocation2 + $0x1f0] sm:$0xff] %v1067
  %1132 = vst [vmem:[#allocation2 + $0x1f8] sm:$0xff] %v1068
  // Predicated region
  $region30: #{densenet121_combine_forward.25} parent=0 // pred_check
    %p1133 = pneg %p23
  $region31: #{densenet121_combine_forward.25} parent=0 // pred_check_branch
    %1135 = sbr.rel (%p1133) target = $region33
  $region32: #{densenet121_combine_forward.25} parent=0 // pred_region
    %v1136 = vld [vmem:[#allocation2] sm:$0xff]
    %v1137 = vld [vmem:[#allocation2 + $0x8] sm:$0xff]
    %v1138 = vld [vmem:[#allocation2 + $0x10] sm:$0xff]
    %v1139 = vld [vmem:[#allocation2 + $0x18] sm:$0xff]
    %v1140 = vld [vmem:[#allocation2 + $0x20] sm:$0xff]
    %v1141 = vld [vmem:[#allocation2 + $0x28] sm:$0xff]
    %v1142 = vld [vmem:[#allocation2 + $0x30] sm:$0xff]
    %v1143 = vld [vmem:[#allocation2 + $0x38] sm:$0xff]
    %v1144 = vld [vmem:[#allocation2 + $0x40] sm:$0xff]
    %v1145 = vld [vmem:[#allocation2 + $0x48] sm:$0xff]
    %v1146 = vld [vmem:[#allocation2 + $0x50] sm:$0xff]
    %v1147 = vld [vmem:[#allocation2 + $0x58] sm:$0xff]
    %v1148 = vld [vmem:[#allocation2 + $0x60] sm:$0xff]
    %v1149 = vld [vmem:[#allocation2 + $0x68] sm:$0xff]
    %v1150 = vld [vmem:[#allocation2 + $0x70] sm:$0xff]
    %v1151 = vld [vmem:[#allocation2 + $0x78] sm:$0xff]
    %v1152 = vld [vmem:[#allocation2 + $0x80] sm:$0xff]
    %v1153 = vld [vmem:[#allocation2 + $0x88] sm:$0xff]
    %v1154 = vld [vmem:[#allocation2 + $0x90] sm:$0xff]
    %v1155 = vld [vmem:[#allocation2 + $0x98] sm:$0xff]
    %v1156 = vld [vmem:[#allocation2 + $0xa0] sm:$0xff]
    %v1157 = vld [vmem:[#allocation2 + $0xa8] sm:$0xff]
    %v1158 = vld [vmem:[#allocation2 + $0xb0] sm:$0xff]
    %v1159 = vld [vmem:[#allocation2 + $0xb8] sm:$0xff]
    %v1160 = vld [vmem:[#allocation2 + $0xc0] sm:$0xff]
    %v1161 = vld [vmem:[#allocation2 + $0xc8] sm:$0xff]
    %v1162 = vld [vmem:[#allocation2 + $0xd0] sm:$0xff]
    %v1163 = vld [vmem:[#allocation2 + $0xd8] sm:$0xff]
    %v1164 = vld [vmem:[#allocation2 + $0xe0] sm:$0xff]
    %v1165 = vld [vmem:[#allocation2 + $0xe8] sm:$0xff]
    %v1166 = vld [vmem:[#allocation2 + $0xf0] sm:$0xff]
    %v1167 = vld [vmem:[#allocation2 + $0xf8] sm:$0xff]
    %v1168 = vld [vmem:[#allocation2 + $0x100] sm:$0xff]
    %v1169 = vld [vmem:[#allocation2 + $0x108] sm:$0xff]
    %v1170 = vld [vmem:[#allocation2 + $0x110] sm:$0xff]
    %v1171 = vld [vmem:[#allocation2 + $0x118] sm:$0xff]
    %v1172 = vld [vmem:[#allocation2 + $0x120] sm:$0xff]
    %v1173 = vld [vmem:[#allocation2 + $0x128] sm:$0xff]
    %v1174 = vld [vmem:[#allocation2 + $0x130] sm:$0xff]
    %v1175 = vld [vmem:[#allocation2 + $0x138] sm:$0xff]
    %v1176 = vld [vmem:[#allocation2 + $0x140] sm:$0xff]
    %v1177 = vld [vmem:[#allocation2 + $0x148] sm:$0xff]
    %v1178 = vld [vmem:[#allocation2 + $0x150] sm:$0xff]
    %v1179 = vld [vmem:[#allocation2 + $0x158] sm:$0xff]
    %v1180 = vld [vmem:[#allocation2 + $0x160] sm:$0xff]
    %v1181 = vld [vmem:[#allocation2 + $0x168] sm:$0xff]
    %v1182 = vld [vmem:[#allocation2 + $0x170] sm:$0xff]
    %v1183 = vld [vmem:[#allocation2 + $0x178] sm:$0xff]
    %v1184 = vld [vmem:[#allocation2 + $0x180] sm:$0xff]
    %v1185 = vld [vmem:[#allocation2 + $0x188] sm:$0xff]
    %v1186 = vld [vmem:[#allocation2 + $0x190] sm:$0xff]
    %v1187 = vld [vmem:[#allocation2 + $0x198] sm:$0xff]
    %v1188 = vld [vmem:[#allocation2 + $0x1a0] sm:$0xff]
    %v1189 = vld [vmem:[#allocation2 + $0x1a8] sm:$0xff]
    %v1190 = vld [vmem:[#allocation2 + $0x1b0] sm:$0xff]
    %v1191 = vld [vmem:[#allocation2 + $0x1b8] sm:$0xff]
    %v1192 = vld [vmem:[#allocation2 + $0x1c0] sm:$0xff]
    %v1193 = vld [vmem:[#allocation2 + $0x1c8] sm:$0xff]
    %v1194 = vld [vmem:[#allocation2 + $0x1d0] sm:$0xff]
    %v1195 = vld [vmem:[#allocation2 + $0x1d8] sm:$0xff]
    %v1196 = vld [vmem:[#allocation2 + $0x1e0] sm:$0xff]
    %v1197 = vld [vmem:[#allocation2 + $0x1e8] sm:$0xff]
    %v1198 = vld [vmem:[#allocation2 + $0x1f0] sm:$0xff]
    %v1199 = vld [vmem:[#allocation2 + $0x1f8] sm:$0xff]
    %v1200 = vld [vmem:[%s4] sm:$0x1]
    %v1202 = vperm.slane %v1200, 0
    %v1204 = vmul.f32 %v1136, %v1202
    %v1205 = vmul.f32 %v1137, %v1202
    %v1206 = vmul.f32 %v1138, %v1202
    %v1207 = vmul.f32 %v1139, %v1202
    %v1208 = vmul.f32 %v1140, %v1202
    %v1209 = vmul.f32 %v1141, %v1202
    %v1210 = vmul.f32 %v1142, %v1202
    %v1211 = vmul.f32 %v1143, %v1202
    %v1212 = vmul.f32 %v1144, %v1202
    %v1213 = vmul.f32 %v1145, %v1202
    %v1214 = vmul.f32 %v1146, %v1202
    %v1215 = vmul.f32 %v1147, %v1202
    %v1216 = vmul.f32 %v1148, %v1202
    %v1217 = vmul.f32 %v1149, %v1202
    %v1218 = vmul.f32 %v1150, %v1202
    %v1219 = vmul.f32 %v1151, %v1202
    %v1220 = vmul.f32 %v1152, %v1202
    %v1221 = vmul.f32 %v1153, %v1202
    %v1222 = vmul.f32 %v1154, %v1202
    %v1223 = vmul.f32 %v1155, %v1202
    %v1224 = vmul.f32 %v1156, %v1202
    %v1225 = vmul.f32 %v1157, %v1202
    %v1226 = vmul.f32 %v1158, %v1202
    %v1227 = vmul.f32 %v1159, %v1202
    %v1228 = vmul.f32 %v1160, %v1202
    %v1229 = vmul.f32 %v1161, %v1202
    %v1230 = vmul.f32 %v1162, %v1202
    %v1231 = vmul.f32 %v1163, %v1202
    %v1232 = vmul.f32 %v1164, %v1202
    %v1233 = vmul.f32 %v1165, %v1202
    %v1234 = vmul.f32 %v1166, %v1202
    %v1235 = vmul.f32 %v1167, %v1202
    %v1236 = vmul.f32 %v1168, %v1202
    %v1237 = vmul.f32 %v1169, %v1202
    %v1238 = vmul.f32 %v1170, %v1202
    %v1239 = vmul.f32 %v1171, %v1202
    %v1240 = vmul.f32 %v1172, %v1202
    %v1241 = vmul.f32 %v1173, %v1202
    %v1242 = vmul.f32 %v1174, %v1202
    %v1243 = vmul.f32 %v1175, %v1202
    %v1244 = vmul.f32 %v1176, %v1202
    %v1245 = vmul.f32 %v1177, %v1202
    %v1246 = vmul.f32 %v1178, %v1202
    %v1247 = vmul.f32 %v1179, %v1202
    %v1248 = vmul.f32 %v1180, %v1202
    %v1249 = vmul.f32 %v1181, %v1202
    %v1250 = vmul.f32 %v1182, %v1202
    %v1251 = vmul.f32 %v1183, %v1202
    %v1252 = vmul.f32 %v1184, %v1202
    %v1253 = vmul.f32 %v1185, %v1202
    %v1254 = vmul.f32 %v1186, %v1202
    %v1255 = vmul.f32 %v1187, %v1202
    %v1256 = vmul.f32 %v1188, %v1202
    %v1257 = vmul.f32 %v1189, %v1202
    %v1258 = vmul.f32 %v1190, %v1202
    %v1259 = vmul.f32 %v1191, %v1202
    %v1260 = vmul.f32 %v1192, %v1202
    %v1261 = vmul.f32 %v1193, %v1202
    %v1262 = vmul.f32 %v1194, %v1202
    %v1263 = vmul.f32 %v1195, %v1202
    %v1264 = vmul.f32 %v1196, %v1202
    %v1265 = vmul.f32 %v1197, %v1202
    %v1266 = vmul.f32 %v1198, %v1202
    %v1267 = vmul.f32 %v1199, %v1202
    %v1268 = vld [vmem:[%s5] sm:$0x1]
    %v1270 = vperm.slane %v1268, 0
    %v1272 = vadd.f32 %v1204, %v1270
    %v1273 = vadd.f32 %v1205, %v1270
    %v1274 = vadd.f32 %v1206, %v1270
    %v1275 = vadd.f32 %v1207, %v1270
    %v1276 = vadd.f32 %v1208, %v1270
    %v1277 = vadd.f32 %v1209, %v1270
    %v1278 = vadd.f32 %v1210, %v1270
    %v1279 = vadd.f32 %v1211, %v1270
    %v1280 = vadd.f32 %v1212, %v1270
    %v1281 = vadd.f32 %v1213, %v1270
    %v1282 = vadd.f32 %v1214, %v1270
    %v1283 = vadd.f32 %v1215, %v1270
    %v1284 = vadd.f32 %v1216, %v1270
    %v1285 = vadd.f32 %v1217, %v1270
    %v1286 = vadd.f32 %v1218, %v1270
    %v1287 = vadd.f32 %v1219, %v1270
    %v1288 = vadd.f32 %v1220, %v1270
    %v1289 = vadd.f32 %v1221, %v1270
    %v1290 = vadd.f32 %v1222, %v1270
    %v1291 = vadd.f32 %v1223, %v1270
    %v1292 = vadd.f32 %v1224, %v1270
    %v1293 = vadd.f32 %v1225, %v1270
    %v1294 = vadd.f32 %v1226, %v1270
    %v1295 = vadd.f32 %v1227, %v1270
    %v1296 = vadd.f32 %v1228, %v1270
    %v1297 = vadd.f32 %v1229, %v1270
    %v1298 = vadd.f32 %v1230, %v1270
    %v1299 = vadd.f32 %v1231, %v1270
    %v1300 = vadd.f32 %v1232, %v1270
    %v1301 = vadd.f32 %v1233, %v1270
    %v1302 = vadd.f32 %v1234, %v1270
    %v1303 = vadd.f32 %v1235, %v1270
    %v1304 = vadd.f32 %v1236, %v1270
    %v1305 = vadd.f32 %v1237, %v1270
    %v1306 = vadd.f32 %v1238, %v1270
    %v1307 = vadd.f32 %v1239, %v1270
    %v1308 = vadd.f32 %v1240, %v1270
    %v1309 = vadd.f32 %v1241, %v1270
    %v1310 = vadd.f32 %v1242, %v1270
    %v1311 = vadd.f32 %v1243, %v1270
    %v1312 = vadd.f32 %v1244, %v1270
    %v1313 = vadd.f32 %v1245, %v1270
    %v1314 = vadd.f32 %v1246, %v1270
    %v1315 = vadd.f32 %v1247, %v1270
    %v1316 = vadd.f32 %v1248, %v1270
    %v1317 = vadd.f32 %v1249, %v1270
    %v1318 = vadd.f32 %v1250, %v1270
    %v1319 = vadd.f32 %v1251, %v1270
    %v1320 = vadd.f32 %v1252, %v1270
    %v1321 = vadd.f32 %v1253, %v1270
    %v1322 = vadd.f32 %v1254, %v1270
    %v1323 = vadd.f32 %v1255, %v1270
    %v1324 = vadd.f32 %v1256, %v1270
    %v1325 = vadd.f32 %v1257, %v1270
    %v1326 = vadd.f32 %v1258, %v1270
    %v1327 = vadd.f32 %v1259, %v1270
    %v1328 = vadd.f32 %v1260, %v1270
    %v1329 = vadd.f32 %v1261, %v1270
    %v1330 = vadd.f32 %v1262, %v1270
    %v1331 = vadd.f32 %v1263, %v1270
    %v1332 = vadd.f32 %v1264, %v1270
    %v1333 = vadd.f32 %v1265, %v1270
    %v1334 = vadd.f32 %v1266, %v1270
    %v1335 = vadd.f32 %v1267, %v1270
    %v1336 = vmax.f32 %v1272, 0.0
    %v1337 = vmax.f32 %v1273, 0.0
    %v1338 = vmax.f32 %v1274, 0.0
    %v1339 = vmax.f32 %v1275, 0.0
    %v1340 = vmax.f32 %v1276, 0.0
    %v1341 = vmax.f32 %v1277, 0.0
    %v1342 = vmax.f32 %v1278, 0.0
    %v1343 = vmax.f32 %v1279, 0.0
    %v1344 = vmax.f32 %v1280, 0.0
    %v1345 = vmax.f32 %v1281, 0.0
    %v1346 = vmax.f32 %v1282, 0.0
    %v1347 = vmax.f32 %v1283, 0.0
    %v1348 = vmax.f32 %v1284, 0.0
    %v1349 = vmax.f32 %v1285, 0.0
    %v1350 = vmax.f32 %v1286, 0.0
    %v1351 = vmax.f32 %v1287, 0.0
    %v1352 = vmax.f32 %v1288, 0.0
    %v1353 = vmax.f32 %v1289, 0.0
    %v1354 = vmax.f32 %v1290, 0.0
    %v1355 = vmax.f32 %v1291, 0.0
    %v1356 = vmax.f32 %v1292, 0.0
    %v1357 = vmax.f32 %v1293, 0.0
    %v1358 = vmax.f32 %v1294, 0.0
    %v1359 = vmax.f32 %v1295, 0.0
    %v1360 = vmax.f32 %v1296, 0.0
    %v1361 = vmax.f32 %v1297, 0.0
    %v1362 = vmax.f32 %v1298, 0.0
    %v1363 = vmax.f32 %v1299, 0.0
    %v1364 = vmax.f32 %v1300, 0.0
    %v1365 = vmax.f32 %v1301, 0.0
    %v1366 = vmax.f32 %v1302, 0.0
    %v1367 = vmax.f32 %v1303, 0.0
    %v1368 = vmax.f32 %v1304, 0.0
    %v1369 = vmax.f32 %v1305, 0.0
    %v1370 = vmax.f32 %v1306, 0.0
    %v1371 = vmax.f32 %v1307, 0.0
    %v1372 = vmax.f32 %v1308, 0.0
    %v1373 = vmax.f32 %v1309, 0.0
    %v1374 = vmax.f32 %v1310, 0.0
    %v1375 = vmax.f32 %v1311, 0.0
    %v1376 = vmax.f32 %v1312, 0.0
    %v1377 = vmax.f32 %v1313, 0.0
    %v1378 = vmax.f32 %v1314, 0.0
    %v1379 = vmax.f32 %v1315, 0.0
    %v1380 = vmax.f32 %v1316, 0.0
    %v1381 = vmax.f32 %v1317, 0.0
    %v1382 = vmax.f32 %v1318, 0.0
    %v1383 = vmax.f32 %v1319, 0.0
    %v1384 = vmax.f32 %v1320, 0.0
    %v1385 = vmax.f32 %v1321, 0.0
    %v1386 = vmax.f32 %v1322, 0.0
    %v1387 = vmax.f32 %v1323, 0.0
    %v1388 = vmax.f32 %v1324, 0.0
    %v1389 = vmax.f32 %v1325, 0.0
    %v1390 = vmax.f32 %v1326, 0.0
    %v1391 = vmax.f32 %v1327, 0.0
    %v1392 = vmax.f32 %v1328, 0.0
    %v1393 = vmax.f32 %v1329, 0.0
    %v1394 = vmax.f32 %v1330, 0.0
    %v1395 = vmax.f32 %v1331, 0.0
    %v1396 = vmax.f32 %v1332, 0.0
    %v1397 = vmax.f32 %v1333, 0.0
    %v1398 = vmax.f32 %v1334, 0.0
    %v1399 = vmax.f32 %v1335, 0.0
    %v1400 = vpack.c.bf16 %v1336, %v1336
    %v1401 = vpack.c.bf16 %v1337, %v1337
    %v1402 = vpack.c.bf16 %v1338, %v1338
    %v1403 = vpack.c.bf16 %v1339, %v1339
    %v1404 = vpack.c.bf16 %v1340, %v1340
    %v1405 = vpack.c.bf16 %v1341, %v1341
    %v1406 = vpack.c.bf16 %v1342, %v1342
    %v1407 = vpack.c.bf16 %v1343, %v1343
    %v1408 = vpack.c.bf16 %v1344, %v1344
    %v1409 = vpack.c.bf16 %v1345, %v1345
    %v1410 = vpack.c.bf16 %v1346, %v1346
    %v1411 = vpack.c.bf16 %v1347, %v1347
    %v1412 = vpack.c.bf16 %v1348, %v1348
    %v1413 = vpack.c.bf16 %v1349, %v1349
    %v1414 = vpack.c.bf16 %v1350, %v1350
    %v1415 = vpack.c.bf16 %v1351, %v1351
    %v1416 = vpack.c.bf16 %v1352, %v1352
    %v1417 = vpack.c.bf16 %v1353, %v1353
    %v1418 = vpack.c.bf16 %v1354, %v1354
    %v1419 = vpack.c.bf16 %v1355, %v1355
    %v1420 = vpack.c.bf16 %v1356, %v1356
    %v1421 = vpack.c.bf16 %v1357, %v1357
    %v1422 = vpack.c.bf16 %v1358, %v1358
    %v1423 = vpack.c.bf16 %v1359, %v1359
    %v1424 = vpack.c.bf16 %v1360, %v1360
    %v1425 = vpack.c.bf16 %v1361, %v1361
    %v1426 = vpack.c.bf16 %v1362, %v1362
    %v1427 = vpack.c.bf16 %v1363, %v1363
    %v1428 = vpack.c.bf16 %v1364, %v1364
    %v1429 = vpack.c.bf16 %v1365, %v1365
    %v1430 = vpack.c.bf16 %v1366, %v1366
    %v1431 = vpack.c.bf16 %v1367, %v1367
    %v1432 = vpack.c.bf16 %v1368, %v1368
    %v1433 = vpack.c.bf16 %v1369, %v1369
    %v1434 = vpack.c.bf16 %v1370, %v1370
    %v1435 = vpack.c.bf16 %v1371, %v1371
    %v1436 = vpack.c.bf16 %v1372, %v1372
    %v1437 = vpack.c.bf16 %v1373, %v1373
    %v1438 = vpack.c.bf16 %v1374, %v1374
    %v1439 = vpack.c.bf16 %v1375, %v1375
    %v1440 = vpack.c.bf16 %v1376, %v1376
    %v1441 = vpack.c.bf16 %v1377, %v1377
    %v1442 = vpack.c.bf16 %v1378, %v1378
    %v1443 = vpack.c.bf16 %v1379, %v1379
    %v1444 = vpack.c.bf16 %v1380, %v1380
    %v1445 = vpack.c.bf16 %v1381, %v1381
    %v1446 = vpack.c.bf16 %v1382, %v1382
    %v1447 = vpack.c.bf16 %v1383, %v1383
    %v1448 = vpack.c.bf16 %v1384, %v1384
    %v1449 = vpack.c.bf16 %v1385, %v1385
    %v1450 = vpack.c.bf16 %v1386, %v1386
    %v1451 = vpack.c.bf16 %v1387, %v1387
    %v1452 = vpack.c.bf16 %v1388, %v1388
    %v1453 = vpack.c.bf16 %v1389, %v1389
    %v1454 = vpack.c.bf16 %v1390, %v1390
    %v1455 = vpack.c.bf16 %v1391, %v1391
    %v1456 = vpack.c.bf16 %v1392, %v1392
    %v1457 = vpack.c.bf16 %v1393, %v1393
    %v1458 = vpack.c.bf16 %v1394, %v1394
    %v1459 = vpack.c.bf16 %v1395, %v1395
    %v1460 = vpack.c.bf16 %v1396, %v1396
    %v1461 = vpack.c.bf16 %v1397, %v1397
    %v1462 = vpack.c.bf16 %v1398, %v1398
    %v1463 = vpack.c.bf16 %v1399, %v1399
    %1464 = vst [vmem:[%s6] sm:$0xf] %v1400
    %1465 = vst [vmem:[%s6 + $0x4] sm:$0xf] %v1401
    %1466 = vst [vmem:[%s6 + $0x8] sm:$0xf] %v1402
    %1467 = vst [vmem:[%s6 + $0xc] sm:$0xf] %v1403
    %1468 = vst [vmem:[%s6 + $0x10] sm:$0xf] %v1404
    %1469 = vst [vmem:[%s6 + $0x14] sm:$0xf] %v1405
    %1470 = vst [vmem:[%s6 + $0x18] sm:$0xf] %v1406
    %1471 = vst [vmem:[%s6 + $0x1c] sm:$0xf] %v1407
    %1472 = vst [vmem:[%s6 + $0x20] sm:$0xf] %v1408
    %1473 = vst [vmem:[%s6 + $0x24] sm:$0xf] %v1409
    %1474 = vst [vmem:[%s6 + $0x28] sm:$0xf] %v1410
    %1475 = vst [vmem:[%s6 + $0x2c] sm:$0xf] %v1411
    %1476 = vst [vmem:[%s6 + $0x30] sm:$0xf] %v1412
    %1477 = vst [vmem:[%s6 + $0x34] sm:$0xf] %v1413
    %1478 = vst [vmem:[%s6 + $0x38] sm:$0xf] %v1414
    %1479 = vst [vmem:[%s6 + $0x3c] sm:$0xf] %v1415
    %1480 = vst [vmem:[%s6 + $0x40] sm:$0xf] %v1416
    %1481 = vst [vmem:[%s6 + $0x44] sm:$0xf] %v1417
    %1482 = vst [vmem:[%s6 + $0x48] sm:$0xf] %v1418
    %1483 = vst [vmem:[%s6 + $0x4c] sm:$0xf] %v1419
    %1484 = vst [vmem:[%s6 + $0x50] sm:$0xf] %v1420
    %1485 = vst [vmem:[%s6 + $0x54] sm:$0xf] %v1421
    %1486 = vst [vmem:[%s6 + $0x58] sm:$0xf] %v1422
    %1487 = vst [vmem:[%s6 + $0x5c] sm:$0xf] %v1423
    %1488 = vst [vmem:[%s6 + $0x60] sm:$0xf] %v1424
    %1489 = vst [vmem:[%s6 + $0x64] sm:$0xf] %v1425
    %1490 = vst [vmem:[%s6 + $0x68] sm:$0xf] %v1426
    %1491 = vst [vmem:[%s6 + $0x6c] sm:$0xf] %v1427
    %1492 = vst [vmem:[%s6 + $0x70] sm:$0xf] %v1428
    %1493 = vst [vmem:[%s6 + $0x74] sm:$0xf] %v1429
    %1494 = vst [vmem:[%s6 + $0x78] sm:$0xf] %v1430
    %1495 = vst [vmem:[%s6 + $0x7c] sm:$0xf] %v1431
    %1496 = vst [vmem:[%s6 + $0x80] sm:$0xf] %v1432
    %1497 = vst [vmem:[%s6 + $0x84] sm:$0xf] %v1433
    %1498 = vst [vmem:[%s6 + $0x88] sm:$0xf] %v1434
    %1499 = vst [vmem:[%s6 + $0x8c] sm:$0xf] %v1435
    %1500 = vst [vmem:[%s6 + $0x90] sm:$0xf] %v1436
    %1501 = vst [vmem:[%s6 + $0x94] sm:$0xf] %v1437
    %1502 = vst [vmem:[%s6 + $0x98] sm:$0xf] %v1438
    %1503 = vst [vmem:[%s6 + $0x9c] sm:$0xf] %v1439
    %1504 = vst [vmem:[%s6 + $0xa0] sm:$0xf] %v1440
    %1505 = vst [vmem:[%s6 + $0xa4] sm:$0xf] %v1441
    %1506 = vst [vmem:[%s6 + $0xa8] sm:$0xf] %v1442
    %1507 = vst [vmem:[%s6 + $0xac] sm:$0xf] %v1443
    %1508 = vst [vmem:[%s6 + $0xb0] sm:$0xf] %v1444
    %1509 = vst [vmem:[%s6 + $0xb4] sm:$0xf] %v1445
    %1510 = vst [vmem:[%s6 + $0xb8] sm:$0xf] %v1446
    %1511 = vst [vmem:[%s6 + $0xbc] sm:$0xf] %v1447
    %1512 = vst [vmem:[%s6 + $0xc0] sm:$0xf] %v1448
    %1513 = vst [vmem:[%s6 + $0xc4] sm:$0xf] %v1449
    %1514 = vst [vmem:[%s6 + $0xc8] sm:$0xf] %v1450
    %1515 = vst [vmem:[%s6 + $0xcc] sm:$0xf] %v1451
    %1516 = vst [vmem:[%s6 + $0xd0] sm:$0xf] %v1452
    %1517 = vst [vmem:[%s6 + $0xd4] sm:$0xf] %v1453
    %1518 = vst [vmem:[%s6 + $0xd8] sm:$0xf] %v1454
    %1519 = vst [vmem:[%s6 + $0xdc] sm:$0xf] %v1455
    %1520 = vst [vmem:[%s6 + $0xe0] sm:$0xf] %v1456
    %1521 = vst [vmem:[%s6 + $0xe4] sm:$0xf] %v1457
    %1522 = vst [vmem:[%s6 + $0xe8] sm:$0xf] %v1458
    %1523 = vst [vmem:[%s6 + $0xec] sm:$0xf] %v1459
    %1524 = vst [vmem:[%s6 + $0xf0] sm:$0xf] %v1460
    %1525 = vst [vmem:[%s6 + $0xf4] sm:$0xf] %v1461
    %1526 = vst [vmem:[%s6 + $0xf8] sm:$0xf] %v1462
    %1527 = vst [vmem:[%s6 + $0xfc] sm:$0xf] %v1463
  $region33: #{densenet121_combine_forward.25} parent=0 // pred_fallthru
    _
  // Predicated region
  $region34: #{densenet121_combine_forward.25} parent=0 // pred_check
    _
  $region35: #{densenet121_combine_forward.25} parent=0 // pred_check_branch
    %1529 = sbr.rel (0) target = $region37
  $region36: #{densenet121_combine_forward.25} parent=0 // pred_region
    _
  $region37: #{densenet121_combine_forward.25} parent=0 // pred_fallthru
    _
  // Predicated region
  $region38: #{densenet121_combine_forward.25} parent=0 // pred_check
    _
  $region39: #{densenet121_combine_forward.25} parent=0 // pred_check_branch
    %1531 = sbr.rel (0) target = $region41
  $region40: #{densenet121_combine_forward.25} parent=0 // pred_region
    _
  $region41: #{densenet121_combine_forward.25} parent=0 // pred_fallthru
    _

// kernel: densenet121_combine_forward.28
$region0: #{densenet121_combine_forward.28}
  #allocation0 [shape = 'u32[]', space=smem, size = 0x4, offset = 0x4, fixed_abs, tag = 'smem constant byte address 0x4 - core index']
  #allocation1 [shape = 'u32[72,128]{1,0:T(1,128)}', space=vmem, size = 0x9000, scoped, tag = 'internal scratch']
  #allocation2 [shape = 'f32[128,128]{1,0:T(8,128)}', space=vmem, size = 0x10000, scoped, tag = 'scratch operand']
  %s0 = inlined_call_operand.vmem [shape: bf16[128,384], index: 0, kind: input, shape index: {}]
  %s1 = inlined_call_operand.vmem [shape: bf16[384,128], index: 1, kind: input, shape index: {}]
  %s2 = inlined_call_operand.vmem [shape: f32[1,384], index: 2, kind: input, shape index: {}]
  %s3 = inlined_call_operand.vmem [shape: f32[1,384], index: 3, kind: input, shape index: {}]
  %s4 = inlined_call_operand.vmem [shape: f32[1,128], index: 4, kind: input, shape index: {}]
  %s5 = inlined_call_operand.vmem [shape: f32[1,128], index: 5, kind: input, shape index: {}]
  %s6 = inlined_call_operand.vmem [shape: bf16[128,128], index: 6, kind: output, shape index: {}]
  %s7 = sld [smem:[#allocation0]]
  $region42: #{densenet121_combine_forward.28} parent=0
    _
  %s9 = ssub.s32 1, %s7
  %s10 = scalar_select 0, %s9, %s7
  // Predicated region
  $region2: #{densenet121_combine_forward.28} parent=0 // pred_check
    _
  $region3: #{densenet121_combine_forward.28} parent=0 // pred_check_branch
    %12 = sbr.rel (0) target = $region5
  $region4: #{densenet121_combine_forward.28} parent=0 // pred_region
    _
  $region5: #{densenet121_combine_forward.28} parent=0 // pred_fallthru
    _
  // Predicated region
  $region6: #{densenet121_combine_forward.28} parent=0 // pred_check
    _
  $region7: #{densenet121_combine_forward.28} parent=0 // pred_check_branch
    %14 = sbr.rel (0) target = $region9
  $region8: #{densenet121_combine_forward.28} parent=0 // pred_region
    _
  $region9: #{densenet121_combine_forward.28} parent=0 // pred_fallthru
    _
  // Predicated region
  $region10: #{densenet121_combine_forward.28} parent=0 // pred_check
    _
  $region11: #{densenet121_combine_forward.28} parent=0 // pred_check_branch
    %16 = sbr.rel (0) target = $region13
  $region12: #{densenet121_combine_forward.28} parent=0 // pred_region
    _
  $region13: #{densenet121_combine_forward.28} parent=0 // pred_fallthru
    _
  // Predicated region
  $region14: #{densenet121_combine_forward.28} parent=0 // pred_check
    _
  $region15: #{densenet121_combine_forward.28} parent=0 // pred_check_branch
    %18 = sbr.rel (0) target = $region17
  $region16: #{densenet121_combine_forward.28} parent=0 // pred_region
    _
  $region17: #{densenet121_combine_forward.28} parent=0 // pred_fallthru
    _
  // Predicated region
  $region18: #{densenet121_combine_forward.28} parent=0 // pred_check
    _
  $region19: #{densenet121_combine_forward.28} parent=0 // pred_check_branch
    %20 = sbr.rel (0) target = $region21
  $region20: #{densenet121_combine_forward.28} parent=0 // pred_region
    _
  $region21: #{densenet121_combine_forward.28} parent=0 // pred_fallthru
    _
  // Predicated region
  $region22: #{densenet121_combine_forward.28} parent=0 // pred_check
    _
  $region23: #{densenet121_combine_forward.28} parent=0 // pred_check_branch
    %22 = sbr.rel (0) target = $region25
  $region24: #{densenet121_combine_forward.28} parent=0 // pred_region
    _
  $region25: #{densenet121_combine_forward.28} parent=0 // pred_fallthru
    _
  %p23 = scmp.eq.s32.totalorder 0, 0
  // Predicated region
  $region26: #{densenet121_combine_forward.28} parent=0 // pred_check
    %p24 = pneg %p23
  $region27: #{densenet121_combine_forward.28} parent=0 // pred_check_branch
    %26 = sbr.rel (%p24) target = $region29
  $region28: #{densenet121_combine_forward.28} parent=0 // pred_region
    %27 = vst [vmem:[#allocation2] sm:$0xff] 0.0
    %28 = vst [vmem:[#allocation2 + $0x8] sm:$0xff] 0.0
    %29 = vst [vmem:[#allocation2 + $0x10] sm:$0xff] 0.0
    %30 = vst [vmem:[#allocation2 + $0x18] sm:$0xff] 0.0
    %31 = vst [vmem:[#allocation2 + $0x20] sm:$0xff] 0.0
    %32 = vst [vmem:[#allocation2 + $0x28] sm:$0xff] 0.0
    %33 = vst [vmem:[#allocation2 + $0x30] sm:$0xff] 0.0
    %34 = vst [vmem:[#allocation2 + $0x38] sm:$0xff] 0.0
    %35 = vst [vmem:[#allocation2 + $0x40] sm:$0xff] 0.0
    %36 = vst [vmem:[#allocation2 + $0x48] sm:$0xff] 0.0
    %37 = vst [vmem:[#allocation2 + $0x50] sm:$0xff] 0.0
    %38 = vst [vmem:[#allocation2 + $0x58] sm:$0xff] 0.0
    %39 = vst [vmem:[#allocation2 + $0x60] sm:$0xff] 0.0
    %40 = vst [vmem:[#allocation2 + $0x68] sm:$0xff] 0.0
    %41 = vst [vmem:[#allocation2 + $0x70] sm:$0xff] 0.0
    %42 = vst [vmem:[#allocation2 + $0x78] sm:$0xff] 0.0
  $region29: #{densenet121_combine_forward.28} parent=0 // pred_fallthru
    _
  %v43 = vld [vmem:[%s0] sm:$0xff]
  %v44 = vld [vmem:[%s0 + $0x8] sm:$0xf]
  %v45 = vld [vmem:[%s0 + $0xc] sm:$0xff]
  %v46 = vld [vmem:[%s0 + $0x14] sm:$0xf]
  %v47 = vld [vmem:[%s0 + $0x18] sm:$0xff]
  %v48 = vld [vmem:[%s0 + $0x20] sm:$0xf]
  %v49 = vld [vmem:[%s0 + $0x24] sm:$0xff]
  %v50 = vld [vmem:[%s0 + $0x2c] sm:$0xf]
  %v51 = vld [vmem:[%s0 + $0x30] sm:$0xff]
  %v52 = vld [vmem:[%s0 + $0x38] sm:$0xf]
  %v53 = vld [vmem:[%s0 + $0x3c] sm:$0xff]
  %v54 = vld [vmem:[%s0 + $0x44] sm:$0xf]
  %v55 = vld [vmem:[%s0 + $0x48] sm:$0xff]
  %v56 = vld [vmem:[%s0 + $0x50] sm:$0xf]
  %v57 = vld [vmem:[%s0 + $0x54] sm:$0xff]
  %v58 = vld [vmem:[%s0 + $0x5c] sm:$0xf]
  %v59 = vld [vmem:[%s0 + $0x60] sm:$0xff]
  %v60 = vld [vmem:[%s0 + $0x68] sm:$0xf]
  %v61 = vld [vmem:[%s0 + $0x6c] sm:$0xff]
  %v62 = vld [vmem:[%s0 + $0x74] sm:$0xf]
  %v63 = vld [vmem:[%s0 + $0x78] sm:$0xff]
  %v64 = vld [vmem:[%s0 + $0x80] sm:$0xf]
  %v65 = vld [vmem:[%s0 + $0x84] sm:$0xff]
  %v66 = vld [vmem:[%s0 + $0x8c] sm:$0xf]
  %v67 = vld [vmem:[%s0 + $0x90] sm:$0xff]
  %v68 = vld [vmem:[%s0 + $0x98] sm:$0xf]
  %v69 = vld [vmem:[%s0 + $0x9c] sm:$0xff]
  %v70 = vld [vmem:[%s0 + $0xa4] sm:$0xf]
  %v71 = vld [vmem:[%s0 + $0xa8] sm:$0xff]
  %v72 = vld [vmem:[%s0 + $0xb0] sm:$0xf]
  %v73 = vld [vmem:[%s0 + $0xb4] sm:$0xff]
  %v74 = vld [vmem:[%s0 + $0xbc] sm:$0xf]
  %v75 = vld [vmem:[#allocation2] sm:$0xff]
  %v76 = vld [vmem:[#allocation2 + $0x8] sm:$0xff]
  %v77 = vld [vmem:[#allocation2 + $0x10] sm:$0xff]
  %v78 = vld [vmem:[#allocation2 + $0x18] sm:$0xff]
  %v79 = vld [vmem:[#allocation2 + $0x20] sm:$0xff]
  %v80 = vld [vmem:[#allocation2 + $0x28] sm:$0xff]
  %v81 = vld [vmem:[#allocation2 + $0x30] sm:$0xff]
  %v82 = vld [vmem:[#allocation2 + $0x38] sm:$0xff]
  %v83 = vld [vmem:[#allocation2 + $0x40] sm:$0xff]
  %v84 = vld [vmem:[#allocation2 + $0x48] sm:$0xff]
  %v85 = vld [vmem:[#allocation2 + $0x50] sm:$0xff]
  %v86 = vld [vmem:[#allocation2 + $0x58] sm:$0xff]
  %v87 = vld [vmem:[#allocation2 + $0x60] sm:$0xff]
  %v88 = vld [vmem:[#allocation2 + $0x68] sm:$0xff]
  %v89 = vld [vmem:[#allocation2 + $0x70] sm:$0xff]
  %v90 = vld [vmem:[#allocation2 + $0x78] sm:$0xff]
  %v91 = vld [vmem:[%s1] sm:$0xf]
  %v92 = vld [vmem:[%s1 + $0x4] sm:$0xf]
  %v93 = vld [vmem:[%s1 + $0x8] sm:$0xf]
  %v94 = vld [vmem:[%s1 + $0xc] sm:$0xf]
  %v95 = vld [vmem:[%s1 + $0x10] sm:$0xf]
  %v96 = vld [vmem:[%s1 + $0x14] sm:$0xf]
  %v97 = vld [vmem:[%s1 + $0x18] sm:$0xf]
  %v98 = vld [vmem:[%s1 + $0x1c] sm:$0xf]
  %v99 = vld [vmem:[%s1 + $0x20] sm:$0xf]
  %v100 = vld [vmem:[%s1 + $0x24] sm:$0xf]
  %v101 = vld [vmem:[%s1 + $0x28] sm:$0xf]
  %v102 = vld [vmem:[%s1 + $0x2c] sm:$0xf]
  %v103 = vld [vmem:[%s1 + $0x30] sm:$0xf]
  %v104 = vld [vmem:[%s1 + $0x34] sm:$0xf]
  %v105 = vld [vmem:[%s1 + $0x38] sm:$0xf]
  %v106 = vld [vmem:[%s1 + $0x3c] sm:$0xf]
  %v107 = vld [vmem:[%s1 + $0x40] sm:$0xf]
  %v108 = vld [vmem:[%s1 + $0x44] sm:$0xf]
  %v109 = vld [vmem:[%s1 + $0x48] sm:$0xf]
  %v110 = vld [vmem:[%s1 + $0x4c] sm:$0xf]
  %v111 = vld [vmem:[%s1 + $0x50] sm:$0xf]
  %v112 = vld [vmem:[%s1 + $0x54] sm:$0xf]
  %v113 = vld [vmem:[%s1 + $0x58] sm:$0xf]
  %v114 = vld [vmem:[%s1 + $0x5c] sm:$0xf]
  %v115 = vld [vmem:[%s1 + $0x60] sm:$0xf]
  %v116 = vld [vmem:[%s1 + $0x64] sm:$0xf]
  %v117 = vld [vmem:[%s1 + $0x68] sm:$0xf]
  %v118 = vld [vmem:[%s1 + $0x6c] sm:$0xf]
  %v119 = vld [vmem:[%s1 + $0x70] sm:$0xf]
  %v120 = vld [vmem:[%s1 + $0x74] sm:$0xf]
  %v121 = vld [vmem:[%s1 + $0x78] sm:$0xf]
  %v122 = vld [vmem:[%s1 + $0x7c] sm:$0xf]
  %v123 = vld [vmem:[%s1 + $0x80] sm:$0xf]
  %v124 = vld [vmem:[%s1 + $0x84] sm:$0xf]
  %v125 = vld [vmem:[%s1 + $0x88] sm:$0xf]
  %v126 = vld [vmem:[%s1 + $0x8c] sm:$0xf]
  %v127 = vld [vmem:[%s1 + $0x90] sm:$0xf]
  %v128 = vld [vmem:[%s1 + $0x94] sm:$0xf]
  %v129 = vld [vmem:[%s1 + $0x98] sm:$0xf]
  %v130 = vld [vmem:[%s1 + $0x9c] sm:$0xf]
  %v131 = vld [vmem:[%s1 + $0xa0] sm:$0xf]
  %v132 = vld [vmem:[%s1 + $0xa4] sm:$0xf]
  %v133 = vld [vmem:[%s1 + $0xa8] sm:$0xf]
  %v134 = vld [vmem:[%s1 + $0xac] sm:$0xf]
  %v135 = vld [vmem:[%s1 + $0xb0] sm:$0xf]
  %v136 = vld [vmem:[%s1 + $0xb4] sm:$0xf]
  %v137 = vld [vmem:[%s1 + $0xb8] sm:$0xf]
  %v138 = vld [vmem:[%s1 + $0xbc] sm:$0xf]
  %v171 = vunpack.c.l.b16 %v43
  %v172 = vunpack.c.h.b16 %v43
  %v173 = vunpack.c.l.b16 %v44
  %v174 = vunpack.c.l.b16 %v45
  %v175 = vunpack.c.h.b16 %v45
  %v176 = vunpack.c.l.b16 %v46
  %v177 = vunpack.c.l.b16 %v47
  %v178 = vunpack.c.h.b16 %v47
  %v179 = vunpack.c.l.b16 %v48
  %v180 = vunpack.c.l.b16 %v49
  %v181 = vunpack.c.h.b16 %v49
  %v182 = vunpack.c.l.b16 %v50
  %v183 = vunpack.c.l.b16 %v51
  %v184 = vunpack.c.h.b16 %v51
  %v185 = vunpack.c.l.b16 %v52
  %v186 = vunpack.c.l.b16 %v53
  %v187 = vunpack.c.h.b16 %v53
  %v188 = vunpack.c.l.b16 %v54
  %v189 = vunpack.c.l.b16 %v55
  %v190 = vunpack.c.h.b16 %v55
  %v191 = vunpack.c.l.b16 %v56
  %v192 = vunpack.c.l.b16 %v57
  %v193 = vunpack.c.h.b16 %v57
  %v194 = vunpack.c.l.b16 %v58
  %v195 = vunpack.c.l.b16 %v59
  %v196 = vunpack.c.h.b16 %v59
  %v197 = vunpack.c.l.b16 %v60
  %v198 = vunpack.c.l.b16 %v61
  %v199 = vunpack.c.h.b16 %v61
  %v200 = vunpack.c.l.b16 %v62
  %v201 = vunpack.c.l.b16 %v63
  %v202 = vunpack.c.h.b16 %v63
  %v203 = vunpack.c.l.b16 %v64
  %v204 = vunpack.c.l.b16 %v65
  %v205 = vunpack.c.h.b16 %v65
  %v206 = vunpack.c.l.b16 %v66
  %v207 = vunpack.c.l.b16 %v67
  %v208 = vunpack.c.h.b16 %v67
  %v209 = vunpack.c.l.b16 %v68
  %v210 = vunpack.c.l.b16 %v69
  %v211 = vunpack.c.h.b16 %v69
  %v212 = vunpack.c.l.b16 %v70
  %v213 = vunpack.c.l.b16 %v71
  %v214 = vunpack.c.h.b16 %v71
  %v215 = vunpack.c.l.b16 %v72
  %v216 = vunpack.c.l.b16 %v73
  %v217 = vunpack.c.h.b16 %v73
  %v218 = vunpack.c.l.b16 %v74
  %v219 = vpack.c.b16 %v174, %v171
  %v220 = vpack.c.b16 %v175, %v172
  %v221 = vpack.c.b16 %v176, %v173
  %v222 = vpack.c.b16 %v180, %v177
  %v223 = vpack.c.b16 %v181, %v178
  %v224 = vpack.c.b16 %v182, %v179
  %v225 = vpack.c.b16 %v186, %v183
  %v226 = vpack.c.b16 %v187, %v184
  %v227 = vpack.c.b16 %v188, %v185
  %v228 = vpack.c.b16 %v192, %v189
  %v229 = vpack.c.b16 %v193, %v190
  %v230 = vpack.c.b16 %v194, %v191
  %v231 = vpack.c.b16 %v198, %v195
  %v232 = vpack.c.b16 %v199, %v196
  %v233 = vpack.c.b16 %v200, %v197
  %v234 = vpack.c.b16 %v204, %v201
  %v235 = vpack.c.b16 %v205, %v202
  %v236 = vpack.c.b16 %v206, %v203
  %v237 = vpack.c.b16 %v210, %v207
  %v238 = vpack.c.b16 %v211, %v208
  %v239 = vpack.c.b16 %v212, %v209
  %v240 = vpack.c.b16 %v216, %v213
  %v241 = vpack.c.b16 %v217, %v214
  %v242 = vpack.c.b16 %v218, %v215
  %v315 = vunpack.c.l.b16 %v91
  %v316 = vunpack.c.l.b16 %v92
  %v317 = vunpack.c.l.b16 %v93
  %v318 = vunpack.c.l.b16 %v94
  %v319 = vunpack.c.l.b16 %v95
  %v320 = vunpack.c.l.b16 %v96
  %v321 = vunpack.c.l.b16 %v97
  %v322 = vunpack.c.l.b16 %v98
  %v323 = vunpack.c.l.b16 %v99
  %v324 = vunpack.c.l.b16 %v100
  %v325 = vunpack.c.l.b16 %v101
  %v326 = vunpack.c.l.b16 %v102
  %v327 = vunpack.c.l.b16 %v103
  %v328 = vunpack.c.l.b16 %v104
  %v329 = vunpack.c.l.b16 %v105
  %v330 = vunpack.c.l.b16 %v106
  %v331 = vunpack.c.l.b16 %v107
  %v332 = vunpack.c.l.b16 %v108
  %v333 = vunpack.c.l.b16 %v109
  %v334 = vunpack.c.l.b16 %v110
  %v335 = vunpack.c.l.b16 %v111
  %v336 = vunpack.c.l.b16 %v112
  %v337 = vunpack.c.l.b16 %v113
  %v338 = vunpack.c.l.b16 %v114
  %v339 = vunpack.c.l.b16 %v115
  %v340 = vunpack.c.l.b16 %v116
  %v341 = vunpack.c.l.b16 %v117
  %v342 = vunpack.c.l.b16 %v118
  %v343 = vunpack.c.l.b16 %v119
  %v344 = vunpack.c.l.b16 %v120
  %v345 = vunpack.c.l.b16 %v121
  %v346 = vunpack.c.l.b16 %v122
  %v347 = vunpack.c.l.b16 %v123
  %v348 = vunpack.c.l.b16 %v124
  %v349 = vunpack.c.l.b16 %v125
  %v350 = vunpack.c.l.b16 %v126
  %v351 = vunpack.c.l.b16 %v127
  %v352 = vunpack.c.l.b16 %v128
  %v353 = vunpack.c.l.b16 %v129
  %v354 = vunpack.c.l.b16 %v130
  %v355 = vunpack.c.l.b16 %v131
  %v356 = vunpack.c.l.b16 %v132
  %v357 = vunpack.c.l.b16 %v133
  %v358 = vunpack.c.l.b16 %v134
  %v359 = vunpack.c.l.b16 %v135
  %v360 = vunpack.c.l.b16 %v136
  %v361 = vunpack.c.l.b16 %v137
  %v362 = vunpack.c.l.b16 %v138
  %v363 = vpack.c.b16 %v316, %v315
  %v364 = vpack.c.b16 %v318, %v317
  %v365 = vpack.c.b16 %v320, %v319
  %v366 = vpack.c.b16 %v322, %v321
  %v367 = vpack.c.b16 %v324, %v323
  %v368 = vpack.c.b16 %v326, %v325
  %v369 = vpack.c.b16 %v328, %v327
  %v370 = vpack.c.b16 %v330, %v329
  %v371 = vpack.c.b16 %v332, %v331
  %v372 = vpack.c.b16 %v334, %v333
  %v373 = vpack.c.b16 %v336, %v335
  %v374 = vpack.c.b16 %v338, %v337
  %v375 = vpack.c.b16 %v340, %v339
  %v376 = vpack.c.b16 %v342, %v341
  %v377 = vpack.c.b16 %v344, %v343
  %v378 = vpack.c.b16 %v346, %v345
  %v379 = vpack.c.b16 %v348, %v347
  %v380 = vpack.c.b16 %v350, %v349
  %v381 = vpack.c.b16 %v352, %v351
  %v382 = vpack.c.b16 %v354, %v353
  %v383 = vpack.c.b16 %v356, %v355
  %v384 = vpack.c.b16 %v358, %v357
  %v385 = vpack.c.b16 %v360, %v359
  %v386 = vpack.c.b16 %v362, %v361
  %411 = vmatpush.bf16.msra.mxu0 %v370
  %412 = vmatpush.bf16.msra.mxu0 %v369
  %413 = vmatpush.bf16.msra.mxu0 %v368
  %414 = vmatpush.bf16.msra.mxu0 %v367
  %415 = vmatpush.bf16.msra.mxu0 %v366
  %416 = vmatpush.bf16.msra.mxu0 %v365
  %417 = vmatpush.bf16.msra.mxu0 %v364
  %418 = vmatpush.bf16.msra.mxu0 %v363
  %419 = vmatmul.bf16.gmra.mxu0 %v219
  %v420 = vpop.f32.mrf.mxu0
  %v421 = vadd.f32 0.0, %v420
  %v422 = vpop.f32.mrf.mxu0
  %v423 = vadd.f32 0.0, %v422
  %424 = vmatmul.bf16.gmra.mxu0 %v222
  %v425 = vpop.f32.mrf.mxu0
  %v426 = vadd.f32 0.0, %v425
  %v427 = vpop.f32.mrf.mxu0
  %v428 = vadd.f32 0.0, %v427
  %429 = vmatmul.bf16.gmra.mxu0 %v225
  %v430 = vpop.f32.mrf.mxu0
  %v431 = vadd.f32 0.0, %v430
  %v432 = vpop.f32.mrf.mxu0
  %v433 = vadd.f32 0.0, %v432
  %434 = vmatmul.bf16.gmra.mxu0 %v228
  %v435 = vpop.f32.mrf.mxu0
  %v436 = vadd.f32 0.0, %v435
  %v437 = vpop.f32.mrf.mxu0
  %v438 = vadd.f32 0.0, %v437
  %439 = vmatmul.bf16.gmra.mxu0 %v231
  %v440 = vpop.f32.mrf.mxu0
  %v441 = vadd.f32 0.0, %v440
  %v442 = vpop.f32.mrf.mxu0
  %v443 = vadd.f32 0.0, %v442
  %444 = vmatmul.bf16.gmra.mxu0 %v234
  %v445 = vpop.f32.mrf.mxu0
  %v446 = vadd.f32 0.0, %v445
  %v447 = vpop.f32.mrf.mxu0
  %v448 = vadd.f32 0.0, %v447
  %449 = vmatmul.bf16.gmra.mxu0 %v237
  %v450 = vpop.f32.mrf.mxu0
  %v451 = vadd.f32 0.0, %v450
  %v452 = vpop.f32.mrf.mxu0
  %v453 = vadd.f32 0.0, %v452
  %454 = vmatmul.bf16.gmra.mxu0 %v240
  %v455 = vpop.f32.mrf.mxu0
  %v456 = vadd.f32 0.0, %v455
  %v457 = vpop.f32.mrf.mxu0
  %v458 = vadd.f32 0.0, %v457
  %459 = vdwg.mxu0
  %460 = vmatpush.bf16.msra.mxu0 %v378
  %461 = vmatpush.bf16.msra.mxu0 %v377
  %462 = vmatpush.bf16.msra.mxu0 %v376
  %463 = vmatpush.bf16.msra.mxu0 %v375
  %464 = vmatpush.bf16.msra.mxu0 %v374
  %465 = vmatpush.bf16.msra.mxu0 %v373
  %466 = vmatpush.bf16.msra.mxu0 %v372
  %467 = vmatpush.bf16.msra.mxu0 %v371
  %468 = vmatmul.bf16.gmra.mxu0 %v220
  %v469 = vpop.f32.mrf.mxu0
  %v470 = vadd.f32 %v421, %v469
  %v471 = vpop.f32.mrf.mxu0
  %v472 = vadd.f32 %v423, %v471
  %473 = vmatmul.bf16.gmra.mxu0 %v223
  %v474 = vpop.f32.mrf.mxu0
  %v475 = vadd.f32 %v426, %v474
  %v476 = vpop.f32.mrf.mxu0
  %v477 = vadd.f32 %v428, %v476
  %478 = vmatmul.bf16.gmra.mxu0 %v226
  %v479 = vpop.f32.mrf.mxu0
  %v480 = vadd.f32 %v431, %v479
  %v481 = vpop.f32.mrf.mxu0
  %v482 = vadd.f32 %v433, %v481
  %483 = vmatmul.bf16.gmra.mxu0 %v229
  %v484 = vpop.f32.mrf.mxu0
  %v485 = vadd.f32 %v436, %v484
  %v486 = vpop.f32.mrf.mxu0
  %v487 = vadd.f32 %v438, %v486
  %488 = vmatmul.bf16.gmra.mxu0 %v232
  %v489 = vpop.f32.mrf.mxu0
  %v490 = vadd.f32 %v441, %v489
  %v491 = vpop.f32.mrf.mxu0
  %v492 = vadd.f32 %v443, %v491
  %493 = vmatmul.bf16.gmra.mxu0 %v235
  %v494 = vpop.f32.mrf.mxu0
  %v495 = vadd.f32 %v446, %v494
  %v496 = vpop.f32.mrf.mxu0
  %v497 = vadd.f32 %v448, %v496
  %498 = vmatmul.bf16.gmra.mxu0 %v238
  %v499 = vpop.f32.mrf.mxu0
  %v500 = vadd.f32 %v451, %v499
  %v501 = vpop.f32.mrf.mxu0
  %v502 = vadd.f32 %v453, %v501
  %503 = vmatmul.bf16.gmra.mxu0 %v241
  %v504 = vpop.f32.mrf.mxu0
  %v505 = vadd.f32 %v456, %v504
  %v506 = vpop.f32.mrf.mxu0
  %v507 = vadd.f32 %v458, %v506
  %508 = vdwg.mxu0
  %509 = vmatpush.bf16.msra.mxu0 %v386
  %510 = vmatpush.bf16.msra.mxu0 %v385
  %511 = vmatpush.bf16.msra.mxu0 %v384
  %512 = vmatpush.bf16.msra.mxu0 %v383
  %513 = vmatpush.bf16.msra.mxu0 %v382
  %514 = vmatpush.bf16.msra.mxu0 %v381
  %515 = vmatpush.bf16.msra.mxu0 %v380
  %516 = vmatpush.bf16.msra.mxu0 %v379
  %517 = vmatmul.bf16.gmra.mxu0 %v221
  %v518 = vpop.f32.mrf.mxu0
  %v519 = vadd.f32 %v470, %v518
  %v520 = vpop.f32.mrf.mxu0
  %v521 = vadd.f32 %v472, %v520
  %522 = vmatmul.bf16.gmra.mxu0 %v224
  %v523 = vpop.f32.mrf.mxu0
  %v524 = vadd.f32 %v475, %v523
  %v525 = vpop.f32.mrf.mxu0
  %v526 = vadd.f32 %v477, %v525
  %527 = vmatmul.bf16.gmra.mxu0 %v227
  %v528 = vpop.f32.mrf.mxu0
  %v529 = vadd.f32 %v480, %v528
  %v530 = vpop.f32.mrf.mxu0
  %v531 = vadd.f32 %v482, %v530
  %532 = vmatmul.bf16.gmra.mxu0 %v230
  %v533 = vpop.f32.mrf.mxu0
  %v534 = vadd.f32 %v485, %v533
  %v535 = vpop.f32.mrf.mxu0
  %v536 = vadd.f32 %v487, %v535
  %537 = vmatmul.bf16.gmra.mxu0 %v233
  %v538 = vpop.f32.mrf.mxu0
  %v539 = vadd.f32 %v490, %v538
  %v540 = vpop.f32.mrf.mxu0
  %v541 = vadd.f32 %v492, %v540
  %542 = vmatmul.bf16.gmra.mxu0 %v236
  %v543 = vpop.f32.mrf.mxu0
  %v544 = vadd.f32 %v495, %v543
  %v545 = vpop.f32.mrf.mxu0
  %v546 = vadd.f32 %v497, %v545
  %547 = vmatmul.bf16.gmra.mxu0 %v239
  %v548 = vpop.f32.mrf.mxu0
  %v549 = vadd.f32 %v500, %v548
  %v550 = vpop.f32.mrf.mxu0
  %v551 = vadd.f32 %v502, %v550
  %552 = vmatmul.bf16.gmra.mxu0 %v242
  %v553 = vpop.f32.mrf.mxu0
  %v554 = vadd.f32 %v505, %v553
  %v555 = vpop.f32.mrf.mxu0
  %v556 = vadd.f32 %v507, %v555
  %557 = vdwg.mxu0
  %v558 = vadd.f32 %v75, %v519
  %v559 = vadd.f32 %v76, %v521
  %v560 = vadd.f32 %v77, %v524
  %v561 = vadd.f32 %v78, %v526
  %v562 = vadd.f32 %v79, %v529
  %v563 = vadd.f32 %v80, %v531
  %v564 = vadd.f32 %v81, %v534
  %v565 = vadd.f32 %v82, %v536
  %v566 = vadd.f32 %v83, %v539
  %v567 = vadd.f32 %v84, %v541
  %v568 = vadd.f32 %v85, %v544
  %v569 = vadd.f32 %v86, %v546
  %v570 = vadd.f32 %v87, %v549
  %v571 = vadd.f32 %v88, %v551
  %v572 = vadd.f32 %v89, %v554
  %v573 = vadd.f32 %v90, %v556
  %574 = vst [vmem:[#allocation2] sm:$0xff] %v558
  %575 = vst [vmem:[#allocation2 + $0x8] sm:$0xff] %v559
  %576 = vst [vmem:[#allocation2 + $0x10] sm:$0xff] %v560
  %577 = vst [vmem:[#allocation2 + $0x18] sm:$0xff] %v561
  %578 = vst [vmem:[#allocation2 + $0x20] sm:$0xff] %v562
  %579 = vst [vmem:[#allocation2 + $0x28] sm:$0xff] %v563
  %580 = vst [vmem:[#allocation2 + $0x30] sm:$0xff] %v564
  %581 = vst [vmem:[#allocation2 + $0x38] sm:$0xff] %v565
  %582 = vst [vmem:[#allocation2 + $0x40] sm:$0xff] %v566
  %583 = vst [vmem:[#allocation2 + $0x48] sm:$0xff] %v567
  %584 = vst [vmem:[#allocation2 + $0x50] sm:$0xff] %v568
  %585 = vst [vmem:[#allocation2 + $0x58] sm:$0xff] %v569
  %586 = vst [vmem:[#allocation2 + $0x60] sm:$0xff] %v570
  %587 = vst [vmem:[#allocation2 + $0x68] sm:$0xff] %v571
  %588 = vst [vmem:[#allocation2 + $0x70] sm:$0xff] %v572
  %589 = vst [vmem:[#allocation2 + $0x78] sm:$0xff] %v573
  // Predicated region
  $region30: #{densenet121_combine_forward.28} parent=0 // pred_check
    %p590 = pneg %p23
  $region31: #{densenet121_combine_forward.28} parent=0 // pred_check_branch
    %592 = sbr.rel (%p590) target = $region33
  $region32: #{densenet121_combine_forward.28} parent=0 // pred_region
    %v593 = vld [vmem:[#allocation2] sm:$0xff]
    %v594 = vld [vmem:[#allocation2 + $0x8] sm:$0xff]
    %v595 = vld [vmem:[#allocation2 + $0x10] sm:$0xff]
    %v596 = vld [vmem:[#allocation2 + $0x18] sm:$0xff]
    %v597 = vld [vmem:[#allocation2 + $0x20] sm:$0xff]
    %v598 = vld [vmem:[#allocation2 + $0x28] sm:$0xff]
    %v599 = vld [vmem:[#allocation2 + $0x30] sm:$0xff]
    %v600 = vld [vmem:[#allocation2 + $0x38] sm:$0xff]
    %v601 = vld [vmem:[#allocation2 + $0x40] sm:$0xff]
    %v602 = vld [vmem:[#allocation2 + $0x48] sm:$0xff]
    %v603 = vld [vmem:[#allocation2 + $0x50] sm:$0xff]
    %v604 = vld [vmem:[#allocation2 + $0x58] sm:$0xff]
    %v605 = vld [vmem:[#allocation2 + $0x60] sm:$0xff]
    %v606 = vld [vmem:[#allocation2 + $0x68] sm:$0xff]
    %v607 = vld [vmem:[#allocation2 + $0x70] sm:$0xff]
    %v608 = vld [vmem:[#allocation2 + $0x78] sm:$0xff]
    %v609 = vld [vmem:[%s4] sm:$0x1]
    %v611 = vperm.slane %v609, 0
    %v613 = vmul.f32 %v593, %v611
    %v614 = vmul.f32 %v594, %v611
    %v615 = vmul.f32 %v595, %v611
    %v616 = vmul.f32 %v596, %v611
    %v617 = vmul.f32 %v597, %v611
    %v618 = vmul.f32 %v598, %v611
    %v619 = vmul.f32 %v599, %v611
    %v620 = vmul.f32 %v600, %v611
    %v621 = vmul.f32 %v601, %v611
    %v622 = vmul.f32 %v602, %v611
    %v623 = vmul.f32 %v603, %v611
    %v624 = vmul.f32 %v604, %v611
    %v625 = vmul.f32 %v605, %v611
    %v626 = vmul.f32 %v606, %v611
    %v627 = vmul.f32 %v607, %v611
    %v628 = vmul.f32 %v608, %v611
    %v629 = vld [vmem:[%s5] sm:$0x1]
    %v631 = vperm.slane %v629, 0
    %v633 = vadd.f32 %v613, %v631
    %v634 = vadd.f32 %v614, %v631
    %v635 = vadd.f32 %v615, %v631
    %v636 = vadd.f32 %v616, %v631
    %v637 = vadd.f32 %v617, %v631
    %v638 = vadd.f32 %v618, %v631
    %v639 = vadd.f32 %v619, %v631
    %v640 = vadd.f32 %v620, %v631
    %v641 = vadd.f32 %v621, %v631
    %v642 = vadd.f32 %v622, %v631
    %v643 = vadd.f32 %v623, %v631
    %v644 = vadd.f32 %v624, %v631
    %v645 = vadd.f32 %v625, %v631
    %v646 = vadd.f32 %v626, %v631
    %v647 = vadd.f32 %v627, %v631
    %v648 = vadd.f32 %v628, %v631
    %v649 = vpack.c.bf16 %v633, %v633
    %v650 = vpack.c.bf16 %v634, %v634
    %v651 = vpack.c.bf16 %v635, %v635
    %v652 = vpack.c.bf16 %v636, %v636
    %v653 = vpack.c.bf16 %v637, %v637
    %v654 = vpack.c.bf16 %v638, %v638
    %v655 = vpack.c.bf16 %v639, %v639
    %v656 = vpack.c.bf16 %v640, %v640
    %v657 = vpack.c.bf16 %v641, %v641
    %v658 = vpack.c.bf16 %v642, %v642
    %v659 = vpack.c.bf16 %v643, %v643
    %v660 = vpack.c.bf16 %v644, %v644
    %v661 = vpack.c.bf16 %v645, %v645
    %v662 = vpack.c.bf16 %v646, %v646
    %v663 = vpack.c.bf16 %v647, %v647
    %v664 = vpack.c.bf16 %v648, %v648
    %665 = vst [vmem:[%s6] sm:$0xf] %v649
    %666 = vst [vmem:[%s6 + $0x4] sm:$0xf] %v650
    %667 = vst [vmem:[%s6 + $0x8] sm:$0xf] %v651
    %668 = vst [vmem:[%s6 + $0xc] sm:$0xf] %v652
    %669 = vst [vmem:[%s6 + $0x10] sm:$0xf] %v653
    %670 = vst [vmem:[%s6 + $0x14] sm:$0xf] %v654
    %671 = vst [vmem:[%s6 + $0x18] sm:$0xf] %v655
    %672 = vst [vmem:[%s6 + $0x1c] sm:$0xf] %v656
    %673 = vst [vmem:[%s6 + $0x20] sm:$0xf] %v657
    %674 = vst [vmem:[%s6 + $0x24] sm:$0xf] %v658
    %675 = vst [vmem:[%s6 + $0x28] sm:$0xf] %v659
    %676 = vst [vmem:[%s6 + $0x2c] sm:$0xf] %v660
    %677 = vst [vmem:[%s6 + $0x30] sm:$0xf] %v661
    %678 = vst [vmem:[%s6 + $0x34] sm:$0xf] %v662
    %679 = vst [vmem:[%s6 + $0x38] sm:$0xf] %v663
    %680 = vst [vmem:[%s6 + $0x3c] sm:$0xf] %v664
  $region33: #{densenet121_combine_forward.28} parent=0 // pred_fallthru
    _
  // Predicated region
  $region34: #{densenet121_combine_forward.28} parent=0 // pred_check
    _
  $region35: #{densenet121_combine_forward.28} parent=0 // pred_check_branch
    %682 = sbr.rel (0) target = $region37
  $region36: #{densenet121_combine_forward.28} parent=0 // pred_region
    _
  $region37: #{densenet121_combine_forward.28} parent=0 // pred_fallthru
    _
  // Predicated region
  $region38: #{densenet121_combine_forward.28} parent=0 // pred_check
    _
  $region39: #{densenet121_combine_forward.28} parent=0 // pred_check_branch
    %684 = sbr.rel (0) target = $region41
  $region40: #{densenet121_combine_forward.28} parent=0 // pred_region
    _
  $region41: #{densenet121_combine_forward.28} parent=0 // pred_fallthru
    _

// kernel: densenet121_combine_forward.31
$region0: #{densenet121_combine_forward.31}
  #allocation0 [shape = 'u32[]', space=smem, size = 0x4, offset = 0x4, fixed_abs, tag = 'smem constant byte address 0x4 - core index']
  #allocation1 [shape = 'u32[72,128]{1,0:T(1,128)}', space=vmem, size = 0x9000, scoped, tag = 'internal scratch']
  #allocation2 [shape = 'f32[128,128]{1,0:T(8,128)}', space=vmem, size = 0x10000, scoped, tag = 'scratch operand']
  %s0 = inlined_call_operand.vmem [shape: bf16[128,128], index: 0, kind: input, shape index: {}]
  %s1 = inlined_call_operand.vmem [shape: bf16[128,128], index: 1, kind: input, shape index: {}]
  %s2 = inlined_call_operand.vmem [shape: f32[1,128], index: 2, kind: input, shape index: {}]
  %s3 = inlined_call_operand.vmem [shape: f32[1,128], index: 3, kind: input, shape index: {}]
  %s4 = inlined_call_operand.vmem [shape: f32[1,128], index: 4, kind: input, shape index: {}]
  %s5 = inlined_call_operand.vmem [shape: f32[1,128], index: 5, kind: input, shape index: {}]
  %s6 = inlined_call_operand.vmem [shape: bf16[128,128], index: 6, kind: output, shape index: {}]
  %s7 = sld [smem:[#allocation0]]
  $region42: #{densenet121_combine_forward.31} parent=0
    _
  %s9 = ssub.s32 1, %s7
  %s10 = scalar_select 0, %s9, %s7
  // Predicated region
  $region2: #{densenet121_combine_forward.31} parent=0 // pred_check
    _
  $region3: #{densenet121_combine_forward.31} parent=0 // pred_check_branch
    %12 = sbr.rel (0) target = $region5
  $region4: #{densenet121_combine_forward.31} parent=0 // pred_region
    _
  $region5: #{densenet121_combine_forward.31} parent=0 // pred_fallthru
    _
  // Predicated region
  $region6: #{densenet121_combine_forward.31} parent=0 // pred_check
    _
  $region7: #{densenet121_combine_forward.31} parent=0 // pred_check_branch
    %14 = sbr.rel (0) target = $region9
  $region8: #{densenet121_combine_forward.31} parent=0 // pred_region
    _
  $region9: #{densenet121_combine_forward.31} parent=0 // pred_fallthru
    _
  // Predicated region
  $region10: #{densenet121_combine_forward.31} parent=0 // pred_check
    _
  $region11: #{densenet121_combine_forward.31} parent=0 // pred_check_branch
    %16 = sbr.rel (0) target = $region13
  $region12: #{densenet121_combine_forward.31} parent=0 // pred_region
    _
  $region13: #{densenet121_combine_forward.31} parent=0 // pred_fallthru
    _
  // Predicated region
  $region14: #{densenet121_combine_forward.31} parent=0 // pred_check
    _
  $region15: #{densenet121_combine_forward.31} parent=0 // pred_check_branch
    %18 = sbr.rel (0) target = $region17
  $region16: #{densenet121_combine_forward.31} parent=0 // pred_region
    _
  $region17: #{densenet121_combine_forward.31} parent=0 // pred_fallthru
    _
  // Predicated region
  $region18: #{densenet121_combine_forward.31} parent=0 // pred_check
    _
  $region19: #{densenet121_combine_forward.31} parent=0 // pred_check_branch
    %20 = sbr.rel (0) target = $region21
  $region20: #{densenet121_combine_forward.31} parent=0 // pred_region
    _
  $region21: #{densenet121_combine_forward.31} parent=0 // pred_fallthru
    _
  // Predicated region
  $region22: #{densenet121_combine_forward.31} parent=0 // pred_check
    _
  $region23: #{densenet121_combine_forward.31} parent=0 // pred_check_branch
    %22 = sbr.rel (0) target = $region25
  $region24: #{densenet121_combine_forward.31} parent=0 // pred_region
    _
  $region25: #{densenet121_combine_forward.31} parent=0 // pred_fallthru
    _
  %p23 = scmp.eq.s32.totalorder 0, 0
  // Predicated region
  $region26: #{densenet121_combine_forward.31} parent=0 // pred_check
    %p24 = pneg %p23
  $region27: #{densenet121_combine_forward.31} parent=0 // pred_check_branch
    %26 = sbr.rel (%p24) target = $region29
  $region28: #{densenet121_combine_forward.31} parent=0 // pred_region
    %27 = vst [vmem:[#allocation2] sm:$0xff] 0.0
    %28 = vst [vmem:[#allocation2 + $0x8] sm:$0xff] 0.0
    %29 = vst [vmem:[#allocation2 + $0x10] sm:$0xff] 0.0
    %30 = vst [vmem:[#allocation2 + $0x18] sm:$0xff] 0.0
    %31 = vst [vmem:[#allocation2 + $0x20] sm:$0xff] 0.0
    %32 = vst [vmem:[#allocation2 + $0x28] sm:$0xff] 0.0
    %33 = vst [vmem:[#allocation2 + $0x30] sm:$0xff] 0.0
    %34 = vst [vmem:[#allocation2 + $0x38] sm:$0xff] 0.0
    %35 = vst [vmem:[#allocation2 + $0x40] sm:$0xff] 0.0
    %36 = vst [vmem:[#allocation2 + $0x48] sm:$0xff] 0.0
    %37 = vst [vmem:[#allocation2 + $0x50] sm:$0xff] 0.0
    %38 = vst [vmem:[#allocation2 + $0x58] sm:$0xff] 0.0
    %39 = vst [vmem:[#allocation2 + $0x60] sm:$0xff] 0.0
    %40 = vst [vmem:[#allocation2 + $0x68] sm:$0xff] 0.0
    %41 = vst [vmem:[#allocation2 + $0x70] sm:$0xff] 0.0
    %42 = vst [vmem:[#allocation2 + $0x78] sm:$0xff] 0.0
  $region29: #{densenet121_combine_forward.31} parent=0 // pred_fallthru
    _
  %v43 = vld [vmem:[%s0] sm:$0xf]
  %v44 = vld [vmem:[%s0 + $0x4] sm:$0xf]
  %v45 = vld [vmem:[%s0 + $0x8] sm:$0xf]
  %v46 = vld [vmem:[%s0 + $0xc] sm:$0xf]
  %v47 = vld [vmem:[%s0 + $0x10] sm:$0xf]
  %v48 = vld [vmem:[%s0 + $0x14] sm:$0xf]
  %v49 = vld [vmem:[%s0 + $0x18] sm:$0xf]
  %v50 = vld [vmem:[%s0 + $0x1c] sm:$0xf]
  %v51 = vld [vmem:[%s0 + $0x20] sm:$0xf]
  %v52 = vld [vmem:[%s0 + $0x24] sm:$0xf]
  %v53 = vld [vmem:[%s0 + $0x28] sm:$0xf]
  %v54 = vld [vmem:[%s0 + $0x2c] sm:$0xf]
  %v55 = vld [vmem:[%s0 + $0x30] sm:$0xf]
  %v56 = vld [vmem:[%s0 + $0x34] sm:$0xf]
  %v57 = vld [vmem:[%s0 + $0x38] sm:$0xf]
  %v58 = vld [vmem:[%s0 + $0x3c] sm:$0xf]
  %v59 = vunpack.c.l.bf16 %v43
  %v60 = vunpack.c.l.bf16 %v44
  %v61 = vunpack.c.l.bf16 %v45
  %v62 = vunpack.c.l.bf16 %v46
  %v63 = vunpack.c.l.bf16 %v47
  %v64 = vunpack.c.l.bf16 %v48
  %v65 = vunpack.c.l.bf16 %v49
  %v66 = vunpack.c.l.bf16 %v50
  %v67 = vunpack.c.l.bf16 %v51
  %v68 = vunpack.c.l.bf16 %v52
  %v69 = vunpack.c.l.bf16 %v53
  %v70 = vunpack.c.l.bf16 %v54
  %v71 = vunpack.c.l.bf16 %v55
  %v72 = vunpack.c.l.bf16 %v56
  %v73 = vunpack.c.l.bf16 %v57
  %v74 = vunpack.c.l.bf16 %v58
  %v75 = vld [vmem:[%s2] sm:$0x1]
  %v77 = vperm.slane %v75, 0
  %v79 = vmul.f32 %v59, %v77
  %v80 = vmul.f32 %v60, %v77
  %v81 = vmul.f32 %v61, %v77
  %v82 = vmul.f32 %v62, %v77
  %v83 = vmul.f32 %v63, %v77
  %v84 = vmul.f32 %v64, %v77
  %v85 = vmul.f32 %v65, %v77
  %v86 = vmul.f32 %v66, %v77
  %v87 = vmul.f32 %v67, %v77
  %v88 = vmul.f32 %v68, %v77
  %v89 = vmul.f32 %v69, %v77
  %v90 = vmul.f32 %v70, %v77
  %v91 = vmul.f32 %v71, %v77
  %v92 = vmul.f32 %v72, %v77
  %v93 = vmul.f32 %v73, %v77
  %v94 = vmul.f32 %v74, %v77
  %v95 = vld [vmem:[%s3] sm:$0x1]
  %v97 = vperm.slane %v95, 0
  %v99 = vadd.f32 %v79, %v97
  %v100 = vadd.f32 %v80, %v97
  %v101 = vadd.f32 %v81, %v97
  %v102 = vadd.f32 %v82, %v97
  %v103 = vadd.f32 %v83, %v97
  %v104 = vadd.f32 %v84, %v97
  %v105 = vadd.f32 %v85, %v97
  %v106 = vadd.f32 %v86, %v97
  %v107 = vadd.f32 %v87, %v97
  %v108 = vadd.f32 %v88, %v97
  %v109 = vadd.f32 %v89, %v97
  %v110 = vadd.f32 %v90, %v97
  %v111 = vadd.f32 %v91, %v97
  %v112 = vadd.f32 %v92, %v97
  %v113 = vadd.f32 %v93, %v97
  %v114 = vadd.f32 %v94, %v97
  %v115 = vmax.f32 %v99, 0.0
  %v116 = vmax.f32 %v100, 0.0
  %v117 = vmax.f32 %v101, 0.0
  %v118 = vmax.f32 %v102, 0.0
  %v119 = vmax.f32 %v103, 0.0
  %v120 = vmax.f32 %v104, 0.0
  %v121 = vmax.f32 %v105, 0.0
  %v122 = vmax.f32 %v106, 0.0
  %v123 = vmax.f32 %v107, 0.0
  %v124 = vmax.f32 %v108, 0.0
  %v125 = vmax.f32 %v109, 0.0
  %v126 = vmax.f32 %v110, 0.0
  %v127 = vmax.f32 %v111, 0.0
  %v128 = vmax.f32 %v112, 0.0
  %v129 = vmax.f32 %v113, 0.0
  %v130 = vmax.f32 %v114, 0.0
  %v131 = vpack.c.bf16 %v116, %v115
  %v132 = vpack.c.bf16 %v118, %v117
  %v133 = vpack.c.bf16 %v120, %v119
  %v134 = vpack.c.bf16 %v122, %v121
  %v135 = vpack.c.bf16 %v124, %v123
  %v136 = vpack.c.bf16 %v126, %v125
  %v137 = vpack.c.bf16 %v128, %v127
  %v138 = vpack.c.bf16 %v130, %v129
  %v139 = vld [vmem:[#allocation2] sm:$0xff]
  %v140 = vld [vmem:[#allocation2 + $0x8] sm:$0xff]
  %v141 = vld [vmem:[#allocation2 + $0x10] sm:$0xff]
  %v142 = vld [vmem:[#allocation2 + $0x18] sm:$0xff]
  %v143 = vld [vmem:[#allocation2 + $0x20] sm:$0xff]
  %v144 = vld [vmem:[#allocation2 + $0x28] sm:$0xff]
  %v145 = vld [vmem:[#allocation2 + $0x30] sm:$0xff]
  %v146 = vld [vmem:[#allocation2 + $0x38] sm:$0xff]
  %v147 = vld [vmem:[#allocation2 + $0x40] sm:$0xff]
  %v148 = vld [vmem:[#allocation2 + $0x48] sm:$0xff]
  %v149 = vld [vmem:[#allocation2 + $0x50] sm:$0xff]
  %v150 = vld [vmem:[#allocation2 + $0x58] sm:$0xff]
  %v151 = vld [vmem:[#allocation2 + $0x60] sm:$0xff]
  %v152 = vld [vmem:[#allocation2 + $0x68] sm:$0xff]
  %v153 = vld [vmem:[#allocation2 + $0x70] sm:$0xff]
  %v154 = vld [vmem:[#allocation2 + $0x78] sm:$0xff]
  %v155 = vld [vmem:[%s1] sm:$0xf]
  %v156 = vld [vmem:[%s1 + $0x4] sm:$0xf]
  %v157 = vld [vmem:[%s1 + $0x8] sm:$0xf]
  %v158 = vld [vmem:[%s1 + $0xc] sm:$0xf]
  %v159 = vld [vmem:[%s1 + $0x10] sm:$0xf]
  %v160 = vld [vmem:[%s1 + $0x14] sm:$0xf]
  %v161 = vld [vmem:[%s1 + $0x18] sm:$0xf]
  %v162 = vld [vmem:[%s1 + $0x1c] sm:$0xf]
  %v163 = vld [vmem:[%s1 + $0x20] sm:$0xf]
  %v164 = vld [vmem:[%s1 + $0x24] sm:$0xf]
  %v165 = vld [vmem:[%s1 + $0x28] sm:$0xf]
  %v166 = vld [vmem:[%s1 + $0x2c] sm:$0xf]
  %v167 = vld [vmem:[%s1 + $0x30] sm:$0xf]
  %v168 = vld [vmem:[%s1 + $0x34] sm:$0xf]
  %v169 = vld [vmem:[%s1 + $0x38] sm:$0xf]
  %v170 = vld [vmem:[%s1 + $0x3c] sm:$0xf]
  %v187 = vunpack.c.l.b16 %v155
  %v188 = vunpack.c.l.b16 %v156
  %v189 = vunpack.c.l.b16 %v157
  %v190 = vunpack.c.l.b16 %v158
  %v191 = vunpack.c.l.b16 %v159
  %v192 = vunpack.c.l.b16 %v160
  %v193 = vunpack.c.l.b16 %v161
  %v194 = vunpack.c.l.b16 %v162
  %v195 = vunpack.c.l.b16 %v163
  %v196 = vunpack.c.l.b16 %v164
  %v197 = vunpack.c.l.b16 %v165
  %v198 = vunpack.c.l.b16 %v166
  %v199 = vunpack.c.l.b16 %v167
  %v200 = vunpack.c.l.b16 %v168
  %v201 = vunpack.c.l.b16 %v169
  %v202 = vunpack.c.l.b16 %v170
  %v203 = vpack.c.b16 %v188, %v187
  %v204 = vpack.c.b16 %v190, %v189
  %v205 = vpack.c.b16 %v192, %v191
  %v206 = vpack.c.b16 %v194, %v193
  %v207 = vpack.c.b16 %v196, %v195
  %v208 = vpack.c.b16 %v198, %v197
  %v209 = vpack.c.b16 %v200, %v199
  %v210 = vpack.c.b16 %v202, %v201
  %219 = vmatpush.bf16.msra.mxu0 %v210
  %220 = vmatpush.bf16.msra.mxu0 %v209
  %221 = vmatpush.bf16.msra.mxu0 %v208
  %222 = vmatpush.bf16.msra.mxu0 %v207
  %223 = vmatpush.bf16.msra.mxu0 %v206
  %224 = vmatpush.bf16.msra.mxu0 %v205
  %225 = vmatpush.bf16.msra.mxu0 %v204
  %226 = vmatpush.bf16.msra.mxu0 %v203
  %227 = vmatmul.bf16.gmra.mxu0 %v131
  %v228 = vpop.f32.mrf.mxu0
  %v229 = vadd.f32 0.0, %v228
  %v230 = vpop.f32.mrf.mxu0
  %v231 = vadd.f32 0.0, %v230
  %232 = vmatmul.bf16.gmra.mxu0 %v132
  %v233 = vpop.f32.mrf.mxu0
  %v234 = vadd.f32 0.0, %v233
  %v235 = vpop.f32.mrf.mxu0
  %v236 = vadd.f32 0.0, %v235
  %237 = vmatmul.bf16.gmra.mxu0 %v133
  %v238 = vpop.f32.mrf.mxu0
  %v239 = vadd.f32 0.0, %v238
  %v240 = vpop.f32.mrf.mxu0
  %v241 = vadd.f32 0.0, %v240
  %242 = vmatmul.bf16.gmra.mxu0 %v134
  %v243 = vpop.f32.mrf.mxu0
  %v244 = vadd.f32 0.0, %v243
  %v245 = vpop.f32.mrf.mxu0
  %v246 = vadd.f32 0.0, %v245
  %247 = vmatmul.bf16.gmra.mxu0 %v135
  %v248 = vpop.f32.mrf.mxu0
  %v249 = vadd.f32 0.0, %v248
  %v250 = vpop.f32.mrf.mxu0
  %v251 = vadd.f32 0.0, %v250
  %252 = vmatmul.bf16.gmra.mxu0 %v136
  %v253 = vpop.f32.mrf.mxu0
  %v254 = vadd.f32 0.0, %v253
  %v255 = vpop.f32.mrf.mxu0
  %v256 = vadd.f32 0.0, %v255
  %257 = vmatmul.bf16.gmra.mxu0 %v137
  %v258 = vpop.f32.mrf.mxu0
  %v259 = vadd.f32 0.0, %v258
  %v260 = vpop.f32.mrf.mxu0
  %v261 = vadd.f32 0.0, %v260
  %262 = vmatmul.bf16.gmra.mxu0 %v138
  %v263 = vpop.f32.mrf.mxu0
  %v264 = vadd.f32 0.0, %v263
  %v265 = vpop.f32.mrf.mxu0
  %v266 = vadd.f32 0.0, %v265
  %267 = vdwg.mxu0
  %v268 = vadd.f32 %v139, %v229
  %v269 = vadd.f32 %v140, %v231
  %v270 = vadd.f32 %v141, %v234
  %v271 = vadd.f32 %v142, %v236
  %v272 = vadd.f32 %v143, %v239
  %v273 = vadd.f32 %v144, %v241
  %v274 = vadd.f32 %v145, %v244
  %v275 = vadd.f32 %v146, %v246
  %v276 = vadd.f32 %v147, %v249
  %v277 = vadd.f32 %v148, %v251
  %v278 = vadd.f32 %v149, %v254
  %v279 = vadd.f32 %v150, %v256
  %v280 = vadd.f32 %v151, %v259
  %v281 = vadd.f32 %v152, %v261
  %v282 = vadd.f32 %v153, %v264
  %v283 = vadd.f32 %v154, %v266
  %284 = vst [vmem:[#allocation2] sm:$0xff] %v268
  %285 = vst [vmem:[#allocation2 + $0x8] sm:$0xff] %v269
  %286 = vst [vmem:[#allocation2 + $0x10] sm:$0xff] %v270
  %287 = vst [vmem:[#allocation2 + $0x18] sm:$0xff] %v271
  %288 = vst [vmem:[#allocation2 + $0x20] sm:$0xff] %v272
  %289 = vst [vmem:[#allocation2 + $0x28] sm:$0xff] %v273
  %290 = vst [vmem:[#allocation2 + $0x30] sm:$0xff] %v274
  %291 = vst [vmem:[#allocation2 + $0x38] sm:$0xff] %v275
  %292 = vst [vmem:[#allocation2 + $0x40] sm:$0xff] %v276
  %293 = vst [vmem:[#allocation2 + $0x48] sm:$0xff] %v277
  %294 = vst [vmem:[#allocation2 + $0x50] sm:$0xff] %v278
  %295 = vst [vmem:[#allocation2 + $0x58] sm:$0xff] %v279
  %296 = vst [vmem:[#allocation2 + $0x60] sm:$0xff] %v280
  %297 = vst [vmem:[#allocation2 + $0x68] sm:$0xff] %v281
  %298 = vst [vmem:[#allocation2 + $0x70] sm:$0xff] %v282
  %299 = vst [vmem:[#allocation2 + $0x78] sm:$0xff] %v283
  // Predicated region
  $region30: #{densenet121_combine_forward.31} parent=0 // pred_check
    %p300 = pneg %p23
  $region31: #{densenet121_combine_forward.31} parent=0 // pred_check_branch
    %302 = sbr.rel (%p300) target = $region33
  $region32: #{densenet121_combine_forward.31} parent=0 // pred_region
    %v303 = vld [vmem:[#allocation2] sm:$0xff]
    %v304 = vld [vmem:[#allocation2 + $0x8] sm:$0xff]
    %v305 = vld [vmem:[#allocation2 + $0x10] sm:$0xff]
    %v306 = vld [vmem:[#allocation2 + $0x18] sm:$0xff]
    %v307 = vld [vmem:[#allocation2 + $0x20] sm:$0xff]
    %v308 = vld [vmem:[#allocation2 + $0x28] sm:$0xff]
    %v309 = vld [vmem:[#allocation2 + $0x30] sm:$0xff]
    %v310 = vld [vmem:[#allocation2 + $0x38] sm:$0xff]
    %v311 = vld [vmem:[#allocation2 + $0x40] sm:$0xff]
    %v312 = vld [vmem:[#allocation2 + $0x48] sm:$0xff]
    %v313 = vld [vmem:[#allocation2 + $0x50] sm:$0xff]
    %v314 = vld [vmem:[#allocation2 + $0x58] sm:$0xff]
    %v315 = vld [vmem:[#allocation2 + $0x60] sm:$0xff]
    %v316 = vld [vmem:[#allocation2 + $0x68] sm:$0xff]
    %v317 = vld [vmem:[#allocation2 + $0x70] sm:$0xff]
    %v318 = vld [vmem:[#allocation2 + $0x78] sm:$0xff]
    %v319 = vld [vmem:[%s4] sm:$0x1]
    %v321 = vperm.slane %v319, 0
    %v323 = vmul.f32 %v303, %v321
    %v324 = vmul.f32 %v304, %v321
    %v325 = vmul.f32 %v305, %v321
    %v326 = vmul.f32 %v306, %v321
    %v327 = vmul.f32 %v307, %v321
    %v328 = vmul.f32 %v308, %v321
    %v329 = vmul.f32 %v309, %v321
    %v330 = vmul.f32 %v310, %v321
    %v331 = vmul.f32 %v311, %v321
    %v332 = vmul.f32 %v312, %v321
    %v333 = vmul.f32 %v313, %v321
    %v334 = vmul.f32 %v314, %v321
    %v335 = vmul.f32 %v315, %v321
    %v336 = vmul.f32 %v316, %v321
    %v337 = vmul.f32 %v317, %v321
    %v338 = vmul.f32 %v318, %v321
    %v339 = vld [vmem:[%s5] sm:$0x1]
    %v341 = vperm.slane %v339, 0
    %v343 = vadd.f32 %v323, %v341
    %v344 = vadd.f32 %v324, %v341
    %v345 = vadd.f32 %v325, %v341
    %v346 = vadd.f32 %v326, %v341
    %v347 = vadd.f32 %v327, %v341
    %v348 = vadd.f32 %v328, %v341
    %v349 = vadd.f32 %v329, %v341
    %v350 = vadd.f32 %v330, %v341
    %v351 = vadd.f32 %v331, %v341
    %v352 = vadd.f32 %v332, %v341
    %v353 = vadd.f32 %v333, %v341
    %v354 = vadd.f32 %v334, %v341
    %v355 = vadd.f32 %v335, %v341
    %v356 = vadd.f32 %v336, %v341
    %v357 = vadd.f32 %v337, %v341
    %v358 = vadd.f32 %v338, %v341
    %v359 = vpack.c.bf16 %v343, %v343
    %v360 = vpack.c.bf16 %v344, %v344
    %v361 = vpack.c.bf16 %v345, %v345
    %v362 = vpack.c.bf16 %v346, %v346
    %v363 = vpack.c.bf16 %v347, %v347
    %v364 = vpack.c.bf16 %v348, %v348
    %v365 = vpack.c.bf16 %v349, %v349
    %v366 = vpack.c.bf16 %v350, %v350
    %v367 = vpack.c.bf16 %v351, %v351
    %v368 = vpack.c.bf16 %v352, %v352
    %v369 = vpack.c.bf16 %v353, %v353
    %v370 = vpack.c.bf16 %v354, %v354
    %v371 = vpack.c.bf16 %v355, %v355
    %v372 = vpack.c.bf16 %v356, %v356
    %v373 = vpack.c.bf16 %v357, %v357
    %v374 = vpack.c.bf16 %v358, %v358
    %375 = vst [vmem:[%s6] sm:$0xf] %v359
    %376 = vst [vmem:[%s6 + $0x4] sm:$0xf] %v360
    %377 = vst [vmem:[%s6 + $0x8] sm:$0xf] %v361
    %378 = vst [vmem:[%s6 + $0xc] sm:$0xf] %v362
    %379 = vst [vmem:[%s6 + $0x10] sm:$0xf] %v363
    %380 = vst [vmem:[%s6 + $0x14] sm:$0xf] %v364
    %381 = vst [vmem:[%s6 + $0x18] sm:$0xf] %v365
    %382 = vst [vmem:[%s6 + $0x1c] sm:$0xf] %v366
    %383 = vst [vmem:[%s6 + $0x20] sm:$0xf] %v367
    %384 = vst [vmem:[%s6 + $0x24] sm:$0xf] %v368
    %385 = vst [vmem:[%s6 + $0x28] sm:$0xf] %v369
    %386 = vst [vmem:[%s6 + $0x2c] sm:$0xf] %v370
    %387 = vst [vmem:[%s6 + $0x30] sm:$0xf] %v371
    %388 = vst [vmem:[%s6 + $0x34] sm:$0xf] %v372
    %389 = vst [vmem:[%s6 + $0x38] sm:$0xf] %v373
    %390 = vst [vmem:[%s6 + $0x3c] sm:$0xf] %v374
  $region33: #{densenet121_combine_forward.31} parent=0 // pred_fallthru
    _
  // Predicated region
  $region34: #{densenet121_combine_forward.31} parent=0 // pred_check
    _
  $region35: #{densenet121_combine_forward.31} parent=0 // pred_check_branch
    %392 = sbr.rel (0) target = $region37
  $region36: #{densenet121_combine_forward.31} parent=0 // pred_region
    _
  $region37: #{densenet121_combine_forward.31} parent=0 // pred_fallthru
    _
  // Predicated region
  $region38: #{densenet121_combine_forward.31} parent=0 // pred_check
    _
  $region39: #{densenet121_combine_forward.31} parent=0 // pred_check_branch
    %394 = sbr.rel (0) target = $region41
  $region40: #{densenet121_combine_forward.31} parent=0 // pred_region
    _
  $region41: #{densenet121_combine_forward.31} parent=0 // pred_fallthru
    _

// kernel: densenet121_combine_forward.32
$region0: #{densenet121_combine_forward.32}
  #allocation0 [shape = 'u32[]', space=smem, size = 0x4, offset = 0x4, fixed_abs, tag = 'smem constant byte address 0x4 - core index']
  #allocation1 [shape = 'u32[72,128]{1,0:T(1,128)}', space=vmem, size = 0x9000, scoped, tag = 'internal scratch']
  %s0 = inlined_call_operand.vmem [shape: bf16[4,32,16], index: 0, kind: input, shape index: {}]
  %s1 = inlined_call_operand.vmem [shape: bf16[32,16], index: 1, kind: output, shape index: {}]
  %s2 = sld [smem:[#allocation0]]
  $region14: #{densenet121_combine_forward.32} parent=0
    _
  %s4 = ssub.s32 1, %s2
  %s5 = scalar_select 0, %s4, %s2
  // Predicated region
  $region2: #{densenet121_combine_forward.32} parent=0 // pred_check
    _
  $region3: #{densenet121_combine_forward.32} parent=0 // pred_check_branch
    %7 = sbr.rel (0) target = $region5
  $region4: #{densenet121_combine_forward.32} parent=0 // pred_region
    _
  $region5: #{densenet121_combine_forward.32} parent=0 // pred_fallthru
    _
  %v8 = vld [vmem:[%s0] sm:$0xf]
  %v9 = vld [vmem:[%s0 + $0x4] sm:$0xf]
  %v10 = vld [vmem:[%s0 + $0x8] sm:$0xf]
  %v11 = vld [vmem:[%s0 + $0xc] sm:$0xf]
  %v12 = vunpack.c.l.bf16 %v8
  %v13 = vunpack.c.l.bf16 %v9
  %v14 = vunpack.c.l.bf16 %v10
  %v15 = vunpack.c.l.bf16 %v11
  %s16 = scalar_lea.vmem %s0, 16
  %v17 = vld [vmem:[%s16] sm:$0xf]
  %v18 = vld [vmem:[%s16 + $0x4] sm:$0xf]
  %v19 = vld [vmem:[%s16 + $0x8] sm:$0xf]
  %v20 = vld [vmem:[%s16 + $0xc] sm:$0xf]
  %v21 = vunpack.c.l.bf16 %v17
  %v22 = vunpack.c.l.bf16 %v18
  %v23 = vunpack.c.l.bf16 %v19
  %v24 = vunpack.c.l.bf16 %v20
  %v25 = vadd.f32 %v12, %v21
  %v26 = vadd.f32 %v13, %v22
  %v27 = vadd.f32 %v14, %v23
  %v28 = vadd.f32 %v15, %v24
  %s29 = scalar_lea.vmem %s0, 32
  %v30 = vld [vmem:[%s29] sm:$0xf]
  %v31 = vld [vmem:[%s29 + $0x4] sm:$0xf]
  %v32 = vld [vmem:[%s29 + $0x8] sm:$0xf]
  %v33 = vld [vmem:[%s29 + $0xc] sm:$0xf]
  %v34 = vunpack.c.l.bf16 %v30
  %v35 = vunpack.c.l.bf16 %v31
  %v36 = vunpack.c.l.bf16 %v32
  %v37 = vunpack.c.l.bf16 %v33
  %v38 = vadd.f32 %v25, %v34
  %v39 = vadd.f32 %v26, %v35
  %v40 = vadd.f32 %v27, %v36
  %v41 = vadd.f32 %v28, %v37
  %s42 = scalar_lea.vmem %s0, 48
  %v43 = vld [vmem:[%s42] sm:$0xf]
  %v44 = vld [vmem:[%s42 + $0x4] sm:$0xf]
  %v45 = vld [vmem:[%s42 + $0x8] sm:$0xf]
  %v46 = vld [vmem:[%s42 + $0xc] sm:$0xf]
  %v47 = vunpack.c.l.bf16 %v43
  %v48 = vunpack.c.l.bf16 %v44
  %v49 = vunpack.c.l.bf16 %v45
  %v50 = vunpack.c.l.bf16 %v46
  %v51 = vadd.f32 %v38, %v47
  %v52 = vadd.f32 %v39, %v48
  %v53 = vadd.f32 %v40, %v49
  %v54 = vadd.f32 %v41, %v50
  %v55 = vmul.f32 %v51, 0.25
  %v56 = vmul.f32 %v52, 0.25
  %v57 = vmul.f32 %v53, 0.25
  %v58 = vmul.f32 %v54, 0.25
  %v59 = vpack.c.bf16 %v55, %v55
  %v60 = vpack.c.bf16 %v56, %v56
  %v61 = vpack.c.bf16 %v57, %v57
  %v62 = vpack.c.bf16 %v58, %v58
  %vm63 = vcmask 125952
  %64 = vst.msk [vmem:[%s1] sm:$0xf] %vm63, %v59
  %65 = vst.msk [vmem:[%s1 + $0x4] sm:$0xf] %vm63, %v60
  %66 = vst.msk [vmem:[%s1 + $0x8] sm:$0xf] %vm63, %v61
  %67 = vst.msk [vmem:[%s1 + $0xc] sm:$0xf] %vm63, %v62
  // Predicated region
  $region6: #{densenet121_combine_forward.32} parent=0 // pred_check
    _
  $region7: #{densenet121_combine_forward.32} parent=0 // pred_check_branch
    %69 = sbr.rel (0) target = $region9
  $region8: #{densenet121_combine_forward.32} parent=0 // pred_region
    _
  $region9: #{densenet121_combine_forward.32} parent=0 // pred_fallthru
    _
  // Predicated region
  $region10: #{densenet121_combine_forward.32} parent=0 // pred_check
    _
  $region11: #{densenet121_combine_forward.32} parent=0 // pred_check_branch
    %71 = sbr.rel (0) target = $region13
  $region12: #{densenet121_combine_forward.32} parent=0 // pred_region
    _
  $region13: #{densenet121_combine_forward.32} parent=0 // pred_fallthru
    _

// kernel: densenet121_combine_forward.33
$region0: #{densenet121_combine_forward.33}
  #allocation0 [shape = 'u32[]', space=smem, size = 0x4, offset = 0x4, fixed_abs, tag = 'smem constant byte address 0x4 - core index']
  #allocation1 [shape = 'u32[72,128]{1,0:T(1,128)}', space=vmem, size = 0x9000, scoped, tag = 'internal scratch']
  #allocation2 [shape = 'f32[32,128]{1,0:T(8,128)}', space=vmem, size = 0x4000, scoped, tag = 'scratch operand']
  %s0 = inlined_call_operand.vmem [shape: bf16[32,128], index: 0, kind: input, shape index: {}]
  %s1 = inlined_call_operand.vmem [shape: bf16[128,128], index: 1, kind: input, shape index: {}]
  %s2 = inlined_call_operand.vmem [shape: f32[1,128], index: 2, kind: input, shape index: {}]
  %s3 = inlined_call_operand.vmem [shape: f32[1,128], index: 3, kind: input, shape index: {}]
  %s4 = inlined_call_operand.vmem [shape: f32[1,128], index: 4, kind: input, shape index: {}]
  %s5 = inlined_call_operand.vmem [shape: f32[1,128], index: 5, kind: input, shape index: {}]
  %s6 = inlined_call_operand.vmem [shape: bf16[32,128], index: 6, kind: output, shape index: {}]
  %s7 = sld [smem:[#allocation0]]
  $region42: #{densenet121_combine_forward.33} parent=0
    _
  %s9 = ssub.s32 1, %s7
  %s10 = scalar_select 0, %s9, %s7
  // Predicated region
  $region2: #{densenet121_combine_forward.33} parent=0 // pred_check
    _
  $region3: #{densenet121_combine_forward.33} parent=0 // pred_check_branch
    %12 = sbr.rel (0) target = $region5
  $region4: #{densenet121_combine_forward.33} parent=0 // pred_region
    _
  $region5: #{densenet121_combine_forward.33} parent=0 // pred_fallthru
    _
  // Predicated region
  $region6: #{densenet121_combine_forward.33} parent=0 // pred_check
    _
  $region7: #{densenet121_combine_forward.33} parent=0 // pred_check_branch
    %14 = sbr.rel (0) target = $region9
  $region8: #{densenet121_combine_forward.33} parent=0 // pred_region
    _
  $region9: #{densenet121_combine_forward.33} parent=0 // pred_fallthru
    _
  // Predicated region
  $region10: #{densenet121_combine_forward.33} parent=0 // pred_check
    _
  $region11: #{densenet121_combine_forward.33} parent=0 // pred_check_branch
    %16 = sbr.rel (0) target = $region13
  $region12: #{densenet121_combine_forward.33} parent=0 // pred_region
    _
  $region13: #{densenet121_combine_forward.33} parent=0 // pred_fallthru
    _
  // Predicated region
  $region14: #{densenet121_combine_forward.33} parent=0 // pred_check
    _
  $region15: #{densenet121_combine_forward.33} parent=0 // pred_check_branch
    %18 = sbr.rel (0) target = $region17
  $region16: #{densenet121_combine_forward.33} parent=0 // pred_region
    _
  $region17: #{densenet121_combine_forward.33} parent=0 // pred_fallthru
    _
  // Predicated region
  $region18: #{densenet121_combine_forward.33} parent=0 // pred_check
    _
  $region19: #{densenet121_combine_forward.33} parent=0 // pred_check_branch
    %20 = sbr.rel (0) target = $region21
  $region20: #{densenet121_combine_forward.33} parent=0 // pred_region
    _
  $region21: #{densenet121_combine_forward.33} parent=0 // pred_fallthru
    _
  // Predicated region
  $region22: #{densenet121_combine_forward.33} parent=0 // pred_check
    _
  $region23: #{densenet121_combine_forward.33} parent=0 // pred_check_branch
    %22 = sbr.rel (0) target = $region25
  $region24: #{densenet121_combine_forward.33} parent=0 // pred_region
    _
  $region25: #{densenet121_combine_forward.33} parent=0 // pred_fallthru
    _
  %p23 = scmp.eq.s32.totalorder 0, 0
  // Predicated region
  $region26: #{densenet121_combine_forward.33} parent=0 // pred_check
    %p24 = pneg %p23
  $region27: #{densenet121_combine_forward.33} parent=0 // pred_check_branch
    %26 = sbr.rel (%p24) target = $region29
  $region28: #{densenet121_combine_forward.33} parent=0 // pred_region
    %27 = vst [vmem:[#allocation2] sm:$0xff] 0.0
    %28 = vst [vmem:[#allocation2 + $0x8] sm:$0xff] 0.0
    %29 = vst [vmem:[#allocation2 + $0x10] sm:$0xff] 0.0
    %30 = vst [vmem:[#allocation2 + $0x18] sm:$0xff] 0.0
  $region29: #{densenet121_combine_forward.33} parent=0 // pred_fallthru
    _
  %v31 = vld [vmem:[%s0] sm:$0xf]
  %v32 = vld [vmem:[%s0 + $0x4] sm:$0xf]
  %v33 = vld [vmem:[%s0 + $0x8] sm:$0xf]
  %v34 = vld [vmem:[%s0 + $0xc] sm:$0xf]
  %v35 = vunpack.c.l.bf16 %v31
  %v36 = vunpack.c.l.bf16 %v32
  %v37 = vunpack.c.l.bf16 %v33
  %v38 = vunpack.c.l.bf16 %v34
  %v39 = vld [vmem:[%s2] sm:$0x1]
  %v41 = vperm.slane %v39, 0
  %v43 = vmul.f32 %v35, %v41
  %v44 = vmul.f32 %v36, %v41
  %v45 = vmul.f32 %v37, %v41
  %v46 = vmul.f32 %v38, %v41
  %v47 = vld [vmem:[%s3] sm:$0x1]
  %v49 = vperm.slane %v47, 0
  %v51 = vadd.f32 %v43, %v49
  %v52 = vadd.f32 %v44, %v49
  %v53 = vadd.f32 %v45, %v49
  %v54 = vadd.f32 %v46, %v49
  %v55 = vmax.f32 %v51, 0.0
  %v56 = vmax.f32 %v52, 0.0
  %v57 = vmax.f32 %v53, 0.0
  %v58 = vmax.f32 %v54, 0.0
  %v59 = vpack.c.bf16 %v56, %v55
  %v60 = vpack.c.bf16 %v58, %v57
  %v61 = vld [vmem:[#allocation2] sm:$0xff]
  %v62 = vld [vmem:[#allocation2 + $0x8] sm:$0xff]
  %v63 = vld [vmem:[#allocation2 + $0x10] sm:$0xff]
  %v64 = vld [vmem:[#allocation2 + $0x18] sm:$0xff]
  %v65 = vld [vmem:[%s1] sm:$0xf]
  %v66 = vld [vmem:[%s1 + $0x4] sm:$0xf]
  %v67 = vld [vmem:[%s1 + $0x8] sm:$0xf]
  %v68 = vld [vmem:[%s1 + $0xc] sm:$0xf]
  %v69 = vld [vmem:[%s1 + $0x10] sm:$0xf]
  %v70 = vld [vmem:[%s1 + $0x14] sm:$0xf]
  %v71 = vld [vmem:[%s1 + $0x18] sm:$0xf]
  %v72 = vld [vmem:[%s1 + $0x1c] sm:$0xf]
  %v73 = vld [vmem:[%s1 + $0x20] sm:$0xf]
  %v74 = vld [vmem:[%s1 + $0x24] sm:$0xf]
  %v75 = vld [vmem:[%s1 + $0x28] sm:$0xf]
  %v76 = vld [vmem:[%s1 + $0x2c] sm:$0xf]
  %v77 = vld [vmem:[%s1 + $0x30] sm:$0xf]
  %v78 = vld [vmem:[%s1 + $0x34] sm:$0xf]
  %v79 = vld [vmem:[%s1 + $0x38] sm:$0xf]
  %v80 = vld [vmem:[%s1 + $0x3c] sm:$0xf]
  %v97 = vunpack.c.l.b16 %v65
  %v98 = vunpack.c.l.b16 %v66
  %v99 = vunpack.c.l.b16 %v67
  %v100 = vunpack.c.l.b16 %v68
  %v101 = vunpack.c.l.b16 %v69
  %v102 = vunpack.c.l.b16 %v70
  %v103 = vunpack.c.l.b16 %v71
  %v104 = vunpack.c.l.b16 %v72
  %v105 = vunpack.c.l.b16 %v73
  %v106 = vunpack.c.l.b16 %v74
  %v107 = vunpack.c.l.b16 %v75
  %v108 = vunpack.c.l.b16 %v76
  %v109 = vunpack.c.l.b16 %v77
  %v110 = vunpack.c.l.b16 %v78
  %v111 = vunpack.c.l.b16 %v79
  %v112 = vunpack.c.l.b16 %v80
  %v113 = vpack.c.b16 %v98, %v97
  %v114 = vpack.c.b16 %v100, %v99
  %v115 = vpack.c.b16 %v102, %v101
  %v116 = vpack.c.b16 %v104, %v103
  %v117 = vpack.c.b16 %v106, %v105
  %v118 = vpack.c.b16 %v108, %v107
  %v119 = vpack.c.b16 %v110, %v109
  %v120 = vpack.c.b16 %v112, %v111
  %129 = vmatpush.bf16.msra.mxu0 %v120
  %130 = vmatpush.bf16.msra.mxu0 %v119
  %131 = vmatpush.bf16.msra.mxu0 %v118
  %132 = vmatpush.bf16.msra.mxu0 %v117
  %133 = vmatpush.bf16.msra.mxu0 %v116
  %134 = vmatpush.bf16.msra.mxu0 %v115
  %135 = vmatpush.bf16.msra.mxu0 %v114
  %136 = vmatpush.bf16.msra.mxu0 %v113
  %137 = vmatmul.bf16.gmra.mxu0 %v59
  %v138 = vpop.f32.mrf.mxu0
  %v139 = vadd.f32 0.0, %v138
  %v140 = vpop.f32.mrf.mxu0
  %v141 = vadd.f32 0.0, %v140
  %142 = vmatmul.bf16.gmra.mxu0 %v60
  %v143 = vpop.f32.mrf.mxu0
  %v144 = vadd.f32 0.0, %v143
  %v145 = vpop.f32.mrf.mxu0
  %v146 = vadd.f32 0.0, %v145
  %147 = vdwg.mxu0
  %v148 = vadd.f32 %v61, %v139
  %v149 = vadd.f32 %v62, %v141
  %v150 = vadd.f32 %v63, %v144
  %v151 = vadd.f32 %v64, %v146
  %152 = vst [vmem:[#allocation2] sm:$0xff] %v148
  %153 = vst [vmem:[#allocation2 + $0x8] sm:$0xff] %v149
  %154 = vst [vmem:[#allocation2 + $0x10] sm:$0xff] %v150
  %155 = vst [vmem:[#allocation2 + $0x18] sm:$0xff] %v151
  // Predicated region
  $region30: #{densenet121_combine_forward.33} parent=0 // pred_check
    %p156 = pneg %p23
  $region31: #{densenet121_combine_forward.33} parent=0 // pred_check_branch
    %158 = sbr.rel (%p156) target = $region33
  $region32: #{densenet121_combine_forward.33} parent=0 // pred_region
    %v159 = vld [vmem:[#allocation2] sm:$0xff]
    %v160 = vld [vmem:[#allocation2 + $0x8] sm:$0xff]
    %v161 = vld [vmem:[#allocation2 + $0x10] sm:$0xff]
    %v162 = vld [vmem:[#allocation2 + $0x18] sm:$0xff]
    %v163 = vld [vmem:[%s4] sm:$0x1]
    %v165 = vperm.slane %v163, 0
    %v167 = vmul.f32 %v159, %v165
    %v168 = vmul.f32 %v160, %v165
    %v169 = vmul.f32 %v161, %v165
    %v170 = vmul.f32 %v162, %v165
    %v171 = vld [vmem:[%s5] sm:$0x1]
    %v173 = vperm.slane %v171, 0
    %v175 = vadd.f32 %v167, %v173
    %v176 = vadd.f32 %v168, %v173
    %v177 = vadd.f32 %v169, %v173
    %v178 = vadd.f32 %v170, %v173
    %v179 = vmax.f32 %v175, 0.0
    %v180 = vmax.f32 %v176, 0.0
    %v181 = vmax.f32 %v177, 0.0
    %v182 = vmax.f32 %v178, 0.0
    %v183 = vpack.c.bf16 %v179, %v179
    %v184 = vpack.c.bf16 %v180, %v180
    %v185 = vpack.c.bf16 %v181, %v181
    %v186 = vpack.c.bf16 %v182, %v182
    %187 = vst [vmem:[%s6] sm:$0xf] %v183
    %188 = vst [vmem:[%s6 + $0x4] sm:$0xf] %v184
    %189 = vst [vmem:[%s6 + $0x8] sm:$0xf] %v185
    %190 = vst [vmem:[%s6 + $0xc] sm:$0xf] %v186
  $region33: #{densenet121_combine_forward.33} parent=0 // pred_fallthru
    _
  // Predicated region
  $region34: #{densenet121_combine_forward.33} parent=0 // pred_check
    _
  $region35: #{densenet121_combine_forward.33} parent=0 // pred_check_branch
    %192 = sbr.rel (0) target = $region37
  $region36: #{densenet121_combine_forward.33} parent=0 // pred_region
    _
  $region37: #{densenet121_combine_forward.33} parent=0 // pred_fallthru
    _
  // Predicated region
  $region38: #{densenet121_combine_forward.33} parent=0 // pred_check
    _
  $region39: #{densenet121_combine_forward.33} parent=0 // pred_check_branch
    %194 = sbr.rel (0) target = $region41
  $region40: #{densenet121_combine_forward.33} parent=0 // pred_region
    _
  $region41: #{densenet121_combine_forward.33} parent=0 // pred_fallthru
    _

// kernel: densenet121_combine_forward.34
$region0: #{densenet121_combine_forward.34}
  #allocation0 [shape = 'u32[]', space=smem, size = 0x4, offset = 0x4, fixed_abs, tag = 'smem constant byte address 0x4 - core index']
  #allocation1 [shape = 'u32[72,128]{1,0:T(1,128)}', space=vmem, size = 0x9000, scoped, tag = 'internal scratch']
  #allocation2 [shape = 'f32[32,128]{1,0:T(8,128)}', space=vmem, size = 0x4000, scoped, tag = 'scratch operand']
  %s0 = inlined_call_operand.vmem [shape: bf16[32,384], index: 0, kind: input, shape index: {}]
  %s1 = inlined_call_operand.vmem [shape: bf16[384,128], index: 1, kind: input, shape index: {}]
  %s2 = inlined_call_operand.vmem [shape: f32[1,384], index: 2, kind: input, shape index: {}]
  %s3 = inlined_call_operand.vmem [shape: f32[1,384], index: 3, kind: input, shape index: {}]
  %s4 = inlined_call_operand.vmem [shape: f32[1,128], index: 4, kind: input, shape index: {}]
  %s5 = inlined_call_operand.vmem [shape: f32[1,128], index: 5, kind: input, shape index: {}]
  %s6 = inlined_call_operand.vmem [shape: bf16[32,128], index: 6, kind: output, shape index: {}]
  %s7 = sld [smem:[#allocation0]]
  $region42: #{densenet121_combine_forward.34} parent=0
    _
  %s9 = ssub.s32 1, %s7
  %s10 = scalar_select 0, %s9, %s7
  // Predicated region
  $region2: #{densenet121_combine_forward.34} parent=0 // pred_check
    _
  $region3: #{densenet121_combine_forward.34} parent=0 // pred_check_branch
    %12 = sbr.rel (0) target = $region5
  $region4: #{densenet121_combine_forward.34} parent=0 // pred_region
    _
  $region5: #{densenet121_combine_forward.34} parent=0 // pred_fallthru
    _
  // Predicated region
  $region6: #{densenet121_combine_forward.34} parent=0 // pred_check
    _
  $region7: #{densenet121_combine_forward.34} parent=0 // pred_check_branch
    %14 = sbr.rel (0) target = $region9
  $region8: #{densenet121_combine_forward.34} parent=0 // pred_region
    _
  $region9: #{densenet121_combine_forward.34} parent=0 // pred_fallthru
    _
  // Predicated region
  $region10: #{densenet121_combine_forward.34} parent=0 // pred_check
    _
  $region11: #{densenet121_combine_forward.34} parent=0 // pred_check_branch
    %16 = sbr.rel (0) target = $region13
  $region12: #{densenet121_combine_forward.34} parent=0 // pred_region
    _
  $region13: #{densenet121_combine_forward.34} parent=0 // pred_fallthru
    _
  // Predicated region
  $region14: #{densenet121_combine_forward.34} parent=0 // pred_check
    _
  $region15: #{densenet121_combine_forward.34} parent=0 // pred_check_branch
    %18 = sbr.rel (0) target = $region17
  $region16: #{densenet121_combine_forward.34} parent=0 // pred_region
    _
  $region17: #{densenet121_combine_forward.34} parent=0 // pred_fallthru
    _
  // Predicated region
  $region18: #{densenet121_combine_forward.34} parent=0 // pred_check
    _
  $region19: #{densenet121_combine_forward.34} parent=0 // pred_check_branch
    %20 = sbr.rel (0) target = $region21
  $region20: #{densenet121_combine_forward.34} parent=0 // pred_region
    _
  $region21: #{densenet121_combine_forward.34} parent=0 // pred_fallthru
    _
  // Predicated region
  $region22: #{densenet121_combine_forward.34} parent=0 // pred_check
    _
  $region23: #{densenet121_combine_forward.34} parent=0 // pred_check_branch
    %22 = sbr.rel (0) target = $region25
  $region24: #{densenet121_combine_forward.34} parent=0 // pred_region
    _
  $region25: #{densenet121_combine_forward.34} parent=0 // pred_fallthru
    _
  %p23 = scmp.eq.s32.totalorder 0, 0
  // Predicated region
  $region26: #{densenet121_combine_forward.34} parent=0 // pred_check
    %p24 = pneg %p23
  $region27: #{densenet121_combine_forward.34} parent=0 // pred_check_branch
    %26 = sbr.rel (%p24) target = $region29
  $region28: #{densenet121_combine_forward.34} parent=0 // pred_region
    %27 = vst [vmem:[#allocation2] sm:$0xff] 0.0
    %28 = vst [vmem:[#allocation2 + $0x8] sm:$0xff] 0.0
    %29 = vst [vmem:[#allocation2 + $0x10] sm:$0xff] 0.0
    %30 = vst [vmem:[#allocation2 + $0x18] sm:$0xff] 0.0
  $region29: #{densenet121_combine_forward.34} parent=0 // pred_fallthru
    _
  %v31 = vld [vmem:[%s0] sm:$0xff]
  %v32 = vld [vmem:[%s0 + $0x8] sm:$0xf]
  %v33 = vld [vmem:[%s0 + $0xc] sm:$0xff]
  %v34 = vld [vmem:[%s0 + $0x14] sm:$0xf]
  %v35 = vld [vmem:[%s0 + $0x18] sm:$0xff]
  %v36 = vld [vmem:[%s0 + $0x20] sm:$0xf]
  %v37 = vld [vmem:[%s0 + $0x24] sm:$0xff]
  %v38 = vld [vmem:[%s0 + $0x2c] sm:$0xf]
  %v39 = vld [vmem:[#allocation2] sm:$0xff]
  %v40 = vld [vmem:[#allocation2 + $0x8] sm:$0xff]
  %v41 = vld [vmem:[#allocation2 + $0x10] sm:$0xff]
  %v42 = vld [vmem:[#allocation2 + $0x18] sm:$0xff]
  %v43 = vld [vmem:[%s1] sm:$0xf]
  %v44 = vld [vmem:[%s1 + $0x4] sm:$0xf]
  %v45 = vld [vmem:[%s1 + $0x8] sm:$0xf]
  %v46 = vld [vmem:[%s1 + $0xc] sm:$0xf]
  %v47 = vld [vmem:[%s1 + $0x10] sm:$0xf]
  %v48 = vld [vmem:[%s1 + $0x14] sm:$0xf]
  %v49 = vld [vmem:[%s1 + $0x18] sm:$0xf]
  %v50 = vld [vmem:[%s1 + $0x1c] sm:$0xf]
  %v51 = vld [vmem:[%s1 + $0x20] sm:$0xf]
  %v52 = vld [vmem:[%s1 + $0x24] sm:$0xf]
  %v53 = vld [vmem:[%s1 + $0x28] sm:$0xf]
  %v54 = vld [vmem:[%s1 + $0x2c] sm:$0xf]
  %v55 = vld [vmem:[%s1 + $0x30] sm:$0xf]
  %v56 = vld [vmem:[%s1 + $0x34] sm:$0xf]
  %v57 = vld [vmem:[%s1 + $0x38] sm:$0xf]
  %v58 = vld [vmem:[%s1 + $0x3c] sm:$0xf]
  %v59 = vld [vmem:[%s1 + $0x40] sm:$0xf]
  %v60 = vld [vmem:[%s1 + $0x44] sm:$0xf]
  %v61 = vld [vmem:[%s1 + $0x48] sm:$0xf]
  %v62 = vld [vmem:[%s1 + $0x4c] sm:$0xf]
  %v63 = vld [vmem:[%s1 + $0x50] sm:$0xf]
  %v64 = vld [vmem:[%s1 + $0x54] sm:$0xf]
  %v65 = vld [vmem:[%s1 + $0x58] sm:$0xf]
  %v66 = vld [vmem:[%s1 + $0x5c] sm:$0xf]
  %v67 = vld [vmem:[%s1 + $0x60] sm:$0xf]
  %v68 = vld [vmem:[%s1 + $0x64] sm:$0xf]
  %v69 = vld [vmem:[%s1 + $0x68] sm:$0xf]
  %v70 = vld [vmem:[%s1 + $0x6c] sm:$0xf]
  %v71 = vld [vmem:[%s1 + $0x70] sm:$0xf]
  %v72 = vld [vmem:[%s1 + $0x74] sm:$0xf]
  %v73 = vld [vmem:[%s1 + $0x78] sm:$0xf]
  %v74 = vld [vmem:[%s1 + $0x7c] sm:$0xf]
  %v75 = vld [vmem:[%s1 + $0x80] sm:$0xf]
  %v76 = vld [vmem:[%s1 + $0x84] sm:$0xf]
  %v77 = vld [vmem:[%s1 + $0x88] sm:$0xf]
  %v78 = vld [vmem:[%s1 + $0x8c] sm:$0xf]
  %v79 = vld [vmem:[%s1 + $0x90] sm:$0xf]
  %v80 = vld [vmem:[%s1 + $0x94] sm:$0xf]
  %v81 = vld [vmem:[%s1 + $0x98] sm:$0xf]
  %v82 = vld [vmem:[%s1 + $0x9c] sm:$0xf]
  %v83 = vld [vmem:[%s1 + $0xa0] sm:$0xf]
  %v84 = vld [vmem:[%s1 + $0xa4] sm:$0xf]
  %v85 = vld [vmem:[%s1 + $0xa8] sm:$0xf]
  %v86 = vld [vmem:[%s1 + $0xac] sm:$0xf]
  %v87 = vld [vmem:[%s1 + $0xb0] sm:$0xf]
  %v88 = vld [vmem:[%s1 + $0xb4] sm:$0xf]
  %v89 = vld [vmem:[%s1 + $0xb8] sm:$0xf]
  %v90 = vld [vmem:[%s1 + $0xbc] sm:$0xf]
  %v99 = vunpack.c.l.b16 %v31
  %v100 = vunpack.c.h.b16 %v31
  %v101 = vunpack.c.l.b16 %v32
  %v102 = vunpack.c.l.b16 %v33
  %v103 = vunpack.c.h.b16 %v33
  %v104 = vunpack.c.l.b16 %v34
  %v105 = vunpack.c.l.b16 %v35
  %v106 = vunpack.c.h.b16 %v35
  %v107 = vunpack.c.l.b16 %v36
  %v108 = vunpack.c.l.b16 %v37
  %v109 = vunpack.c.h.b16 %v37
  %v110 = vunpack.c.l.b16 %v38
  %v111 = vpack.c.b16 %v102, %v99
  %v112 = vpack.c.b16 %v103, %v100
  %v113 = vpack.c.b16 %v104, %v101
  %v114 = vpack.c.b16 %v108, %v105
  %v115 = vpack.c.b16 %v109, %v106
  %v116 = vpack.c.b16 %v110, %v107
  %v171 = vunpack.c.l.b16 %v43
  %v172 = vunpack.c.l.b16 %v44
  %v173 = vunpack.c.l.b16 %v45
  %v174 = vunpack.c.l.b16 %v46
  %v175 = vunpack.c.l.b16 %v47
  %v176 = vunpack.c.l.b16 %v48
  %v177 = vunpack.c.l.b16 %v49
  %v178 = vunpack.c.l.b16 %v50
  %v179 = vunpack.c.l.b16 %v51
  %v180 = vunpack.c.l.b16 %v52
  %v181 = vunpack.c.l.b16 %v53
  %v182 = vunpack.c.l.b16 %v54
  %v183 = vunpack.c.l.b16 %v55
  %v184 = vunpack.c.l.b16 %v56
  %v185 = vunpack.c.l.b16 %v57
  %v186 = vunpack.c.l.b16 %v58
  %v187 = vunpack.c.l.b16 %v59
  %v188 = vunpack.c.l.b16 %v60
  %v189 = vunpack.c.l.b16 %v61
  %v190 = vunpack.c.l.b16 %v62
  %v191 = vunpack.c.l.b16 %v63
  %v192 = vunpack.c.l.b16 %v64
  %v193 = vunpack.c.l.b16 %v65
  %v194 = vunpack.c.l.b16 %v66
  %v195 = vunpack.c.l.b16 %v67
  %v196 = vunpack.c.l.b16 %v68
  %v197 = vunpack.c.l.b16 %v69
  %v198 = vunpack.c.l.b16 %v70
  %v199 = vunpack.c.l.b16 %v71
  %v200 = vunpack.c.l.b16 %v72
  %v201 = vunpack.c.l.b16 %v73
  %v202 = vunpack.c.l.b16 %v74
  %v203 = vunpack.c.l.b16 %v75
  %v204 = vunpack.c.l.b16 %v76
  %v205 = vunpack.c.l.b16 %v77
  %v206 = vunpack.c.l.b16 %v78
  %v207 = vunpack.c.l.b16 %v79
  %v208 = vunpack.c.l.b16 %v80
  %v209 = vunpack.c.l.b16 %v81
  %v210 = vunpack.c.l.b16 %v82
  %v211 = vunpack.c.l.b16 %v83
  %v212 = vunpack.c.l.b16 %v84
  %v213 = vunpack.c.l.b16 %v85
  %v214 = vunpack.c.l.b16 %v86
  %v215 = vunpack.c.l.b16 %v87
  %v216 = vunpack.c.l.b16 %v88
  %v217 = vunpack.c.l.b16 %v89
  %v218 = vunpack.c.l.b16 %v90
  %v219 = vpack.c.b16 %v172, %v171
  %v220 = vpack.c.b16 %v174, %v173
  %v221 = vpack.c.b16 %v176, %v175
  %v222 = vpack.c.b16 %v178, %v177
  %v223 = vpack.c.b16 %v180, %v179
  %v224 = vpack.c.b16 %v182, %v181
  %v225 = vpack.c.b16 %v184, %v183
  %v226 = vpack.c.b16 %v186, %v185
  %v227 = vpack.c.b16 %v188, %v187
  %v228 = vpack.c.b16 %v190, %v189
  %v229 = vpack.c.b16 %v192, %v191
  %v230 = vpack.c.b16 %v194, %v193
  %v231 = vpack.c.b16 %v196, %v195
  %v232 = vpack.c.b16 %v198, %v197
  %v233 = vpack.c.b16 %v200, %v199
  %v234 = vpack.c.b16 %v202, %v201
  %v235 = vpack.c.b16 %v204, %v203
  %v236 = vpack.c.b16 %v206, %v205
  %v237 = vpack.c.b16 %v208, %v207
  %v238 = vpack.c.b16 %v210, %v209
  %v239 = vpack.c.b16 %v212, %v211
  %v240 = vpack.c.b16 %v214, %v213
  %v241 = vpack.c.b16 %v216, %v215
  %v242 = vpack.c.b16 %v218, %v217
  %267 = vmatpush.bf16.msra.mxu0 %v226
  %268 = vmatpush.bf16.msra.mxu0 %v225
  %269 = vmatpush.bf16.msra.mxu0 %v224
  %270 = vmatpush.bf16.msra.mxu0 %v223
  %271 = vmatpush.bf16.msra.mxu0 %v222
  %272 = vmatpush.bf16.msra.mxu0 %v221
  %273 = vmatpush.bf16.msra.mxu0 %v220
  %274 = vmatpush.bf16.msra.mxu0 %v219
  %275 = vmatmul.bf16.gmra.mxu0 %v111
  %v276 = vpop.f32.mrf.mxu0
  %v277 = vadd.f32 0.0, %v276
  %v278 = vpop.f32.mrf.mxu0
  %v279 = vadd.f32 0.0, %v278
  %280 = vmatmul.bf16.gmra.mxu0 %v114
  %v281 = vpop.f32.mrf.mxu0
  %v282 = vadd.f32 0.0, %v281
  %v283 = vpop.f32.mrf.mxu0
  %v284 = vadd.f32 0.0, %v283
  %285 = vdwg.mxu0
  %286 = vmatpush.bf16.msra.mxu0 %v234
  %287 = vmatpush.bf16.msra.mxu0 %v233
  %288 = vmatpush.bf16.msra.mxu0 %v232
  %289 = vmatpush.bf16.msra.mxu0 %v231
  %290 = vmatpush.bf16.msra.mxu0 %v230
  %291 = vmatpush.bf16.msra.mxu0 %v229
  %292 = vmatpush.bf16.msra.mxu0 %v228
  %293 = vmatpush.bf16.msra.mxu0 %v227
  %294 = vmatmul.bf16.gmra.mxu0 %v112
  %v295 = vpop.f32.mrf.mxu0
  %v296 = vadd.f32 %v277, %v295
  %v297 = vpop.f32.mrf.mxu0
  %v298 = vadd.f32 %v279, %v297
  %299 = vmatmul.bf16.gmra.mxu0 %v115
  %v300 = vpop.f32.mrf.mxu0
  %v301 = vadd.f32 %v282, %v300
  %v302 = vpop.f32.mrf.mxu0
  %v303 = vadd.f32 %v284, %v302
  %304 = vdwg.mxu0
  %305 = vmatpush.bf16.msra.mxu0 %v242
  %306 = vmatpush.bf16.msra.mxu0 %v241
  %307 = vmatpush.bf16.msra.mxu0 %v240
  %308 = vmatpush.bf16.msra.mxu0 %v239
  %309 = vmatpush.bf16.msra.mxu0 %v238
  %310 = vmatpush.bf16.msra.mxu0 %v237
  %311 = vmatpush.bf16.msra.mxu0 %v236
  %312 = vmatpush.bf16.msra.mxu0 %v235
  %313 = vmatmul.bf16.gmra.mxu0 %v113
  %v314 = vpop.f32.mrf.mxu0
  %v315 = vadd.f32 %v296, %v314
  %v316 = vpop.f32.mrf.mxu0
  %v317 = vadd.f32 %v298, %v316
  %318 = vmatmul.bf16.gmra.mxu0 %v116
  %v319 = vpop.f32.mrf.mxu0
  %v320 = vadd.f32 %v301, %v319
  %v321 = vpop.f32.mrf.mxu0
  %v322 = vadd.f32 %v303, %v321
  %323 = vdwg.mxu0
  %v324 = vadd.f32 %v39, %v315
  %v325 = vadd.f32 %v40, %v317
  %v326 = vadd.f32 %v41, %v320
  %v327 = vadd.f32 %v42, %v322
  %328 = vst [vmem:[#allocation2] sm:$0xff] %v324
  %329 = vst [vmem:[#allocation2 + $0x8] sm:$0xff] %v325
  %330 = vst [vmem:[#allocation2 + $0x10] sm:$0xff] %v326
  %331 = vst [vmem:[#allocation2 + $0x18] sm:$0xff] %v327
  // Predicated region
  $region30: #{densenet121_combine_forward.34} parent=0 // pred_check
    %p332 = pneg %p23
  $region31: #{densenet121_combine_forward.34} parent=0 // pred_check_branch
    %334 = sbr.rel (%p332) target = $region33
  $region32: #{densenet121_combine_forward.34} parent=0 // pred_region
    %v335 = vld [vmem:[#allocation2] sm:$0xff]
    %v336 = vld [vmem:[#allocation2 + $0x8] sm:$0xff]
    %v337 = vld [vmem:[#allocation2 + $0x10] sm:$0xff]
    %v338 = vld [vmem:[#allocation2 + $0x18] sm:$0xff]
    %v339 = vld [vmem:[%s4] sm:$0x1]
    %v341 = vperm.slane %v339, 0
    %v343 = vmul.f32 %v335, %v341
    %v344 = vmul.f32 %v336, %v341
    %v345 = vmul.f32 %v337, %v341
    %v346 = vmul.f32 %v338, %v341
    %v347 = vld [vmem:[%s5] sm:$0x1]
    %v349 = vperm.slane %v347, 0
    %v351 = vadd.f32 %v343, %v349
    %v352 = vadd.f32 %v344, %v349
    %v353 = vadd.f32 %v345, %v349
    %v354 = vadd.f32 %v346, %v349
    %v355 = vpack.c.bf16 %v351, %v351
    %v356 = vpack.c.bf16 %v352, %v352
    %v357 = vpack.c.bf16 %v353, %v353
    %v358 = vpack.c.bf16 %v354, %v354
    %359 = vst [vmem:[%s6] sm:$0xf] %v355
    %360 = vst [vmem:[%s6 + $0x4] sm:$0xf] %v356
    %361 = vst [vmem:[%s6 + $0x8] sm:$0xf] %v357
    %362 = vst [vmem:[%s6 + $0xc] sm:$0xf] %v358
  $region33: #{densenet121_combine_forward.34} parent=0 // pred_fallthru
    _
  // Predicated region
  $region34: #{densenet121_combine_forward.34} parent=0 // pred_check
    _
  $region35: #{densenet121_combine_forward.34} parent=0 // pred_check_branch
    %364 = sbr.rel (0) target = $region37
  $region36: #{densenet121_combine_forward.34} parent=0 // pred_region
    _
  $region37: #{densenet121_combine_forward.34} parent=0 // pred_fallthru
    _
  // Predicated region
  $region38: #{densenet121_combine_forward.34} parent=0 // pred_check
    _
  $region39: #{densenet121_combine_forward.34} parent=0 // pred_check_branch
    %366 = sbr.rel (0) target = $region41
  $region40: #{densenet121_combine_forward.34} parent=0 // pred_region
    _
  $region41: #{densenet121_combine_forward.34} parent=0 // pred_fallthru
    _

// kernel: densenet121_combine_forward.37
$region0: #{densenet121_combine_forward.37}
  #allocation0 [shape = 'u32[]', space=smem, size = 0x4, offset = 0x4, fixed_abs, tag = 'smem constant byte address 0x4 - core index']
  #allocation1 [shape = 'u32[72,128]{1,0:T(1,128)}', space=vmem, size = 0x9000, scoped, tag = 'internal scratch']
  #allocation2 [shape = 'f32[32,128]{1,0:T(8,128)}', space=vmem, size = 0x4000, scoped, tag = 'scratch operand']
  %s0 = inlined_call_operand.vmem [shape: bf16[32,128], index: 0, kind: input, shape index: {}]
  %s1 = inlined_call_operand.vmem [shape: bf16[128,128], index: 1, kind: input, shape index: {}]
  %s2 = inlined_call_operand.vmem [shape: f32[1,128], index: 2, kind: input, shape index: {}]
  %s3 = inlined_call_operand.vmem [shape: f32[1,128], index: 3, kind: input, shape index: {}]
  %s4 = inlined_call_operand.vmem [shape: f32[1,128], index: 4, kind: input, shape index: {}]
  %s5 = inlined_call_operand.vmem [shape: f32[1,128], index: 5, kind: input, shape index: {}]
  %s6 = inlined_call_operand.vmem [shape: bf16[32,128], index: 6, kind: output, shape index: {}]
  %s7 = sld [smem:[#allocation0]]
  $region42: #{densenet121_combine_forward.37} parent=0
    _
  %s9 = ssub.s32 1, %s7
  %s10 = scalar_select 0, %s9, %s7
  // Predicated region
  $region2: #{densenet121_combine_forward.37} parent=0 // pred_check
    _
  $region3: #{densenet121_combine_forward.37} parent=0 // pred_check_branch
    %12 = sbr.rel (0) target = $region5
  $region4: #{densenet121_combine_forward.37} parent=0 // pred_region
    _
  $region5: #{densenet121_combine_forward.37} parent=0 // pred_fallthru
    _
  // Predicated region
  $region6: #{densenet121_combine_forward.37} parent=0 // pred_check
    _
  $region7: #{densenet121_combine_forward.37} parent=0 // pred_check_branch
    %14 = sbr.rel (0) target = $region9
  $region8: #{densenet121_combine_forward.37} parent=0 // pred_region
    _
  $region9: #{densenet121_combine_forward.37} parent=0 // pred_fallthru
    _
  // Predicated region
  $region10: #{densenet121_combine_forward.37} parent=0 // pred_check
    _
  $region11: #{densenet121_combine_forward.37} parent=0 // pred_check_branch
    %16 = sbr.rel (0) target = $region13
  $region12: #{densenet121_combine_forward.37} parent=0 // pred_region
    _
  $region13: #{densenet121_combine_forward.37} parent=0 // pred_fallthru
    _
  // Predicated region
  $region14: #{densenet121_combine_forward.37} parent=0 // pred_check
    _
  $region15: #{densenet121_combine_forward.37} parent=0 // pred_check_branch
    %18 = sbr.rel (0) target = $region17
  $region16: #{densenet121_combine_forward.37} parent=0 // pred_region
    _
  $region17: #{densenet121_combine_forward.37} parent=0 // pred_fallthru
    _
  // Predicated region
  $region18: #{densenet121_combine_forward.37} parent=0 // pred_check
    _
  $region19: #{densenet121_combine_forward.37} parent=0 // pred_check_branch
    %20 = sbr.rel (0) target = $region21
  $region20: #{densenet121_combine_forward.37} parent=0 // pred_region
    _
  $region21: #{densenet121_combine_forward.37} parent=0 // pred_fallthru
    _
  // Predicated region
  $region22: #{densenet121_combine_forward.37} parent=0 // pred_check
    _
  $region23: #{densenet121_combine_forward.37} parent=0 // pred_check_branch
    %22 = sbr.rel (0) target = $region25
  $region24: #{densenet121_combine_forward.37} parent=0 // pred_region
    _
  $region25: #{densenet121_combine_forward.37} parent=0 // pred_fallthru
    _
  %p23 = scmp.eq.s32.totalorder 0, 0
  // Predicated region
  $region26: #{densenet121_combine_forward.37} parent=0 // pred_check
    %p24 = pneg %p23
  $region27: #{densenet121_combine_forward.37} parent=0 // pred_check_branch
    %26 = sbr.rel (%p24) target = $region29
  $region28: #{densenet121_combine_forward.37} parent=0 // pred_region
    %27 = vst [vmem:[#allocation2] sm:$0xff] 0.0
    %28 = vst [vmem:[#allocation2 + $0x8] sm:$0xff] 0.0
    %29 = vst [vmem:[#allocation2 + $0x10] sm:$0xff] 0.0
    %30 = vst [vmem:[#allocation2 + $0x18] sm:$0xff] 0.0
  $region29: #{densenet121_combine_forward.37} parent=0 // pred_fallthru
    _
  %v31 = vld [vmem:[%s0] sm:$0xf]
  %v32 = vld [vmem:[%s0 + $0x4] sm:$0xf]
  %v33 = vld [vmem:[%s0 + $0x8] sm:$0xf]
  %v34 = vld [vmem:[%s0 + $0xc] sm:$0xf]
  %v35 = vunpack.c.l.bf16 %v31
  %v36 = vunpack.c.l.bf16 %v32
  %v37 = vunpack.c.l.bf16 %v33
  %v38 = vunpack.c.l.bf16 %v34
  %v39 = vld [vmem:[%s2] sm:$0x1]
  %v41 = vperm.slane %v39, 0
  %v43 = vmul.f32 %v35, %v41
  %v44 = vmul.f32 %v36, %v41
  %v45 = vmul.f32 %v37, %v41
  %v46 = vmul.f32 %v38, %v41
  %v47 = vld [vmem:[%s3] sm:$0x1]
  %v49 = vperm.slane %v47, 0
  %v51 = vadd.f32 %v43, %v49
  %v52 = vadd.f32 %v44, %v49
  %v53 = vadd.f32 %v45, %v49
  %v54 = vadd.f32 %v46, %v49
  %v55 = vmax.f32 %v51, 0.0
  %v56 = vmax.f32 %v52, 0.0
  %v57 = vmax.f32 %v53, 0.0
  %v58 = vmax.f32 %v54, 0.0
  %v59 = vpack.c.bf16 %v56, %v55
  %v60 = vpack.c.bf16 %v58, %v57
  %v61 = vld [vmem:[#allocation2] sm:$0xff]
  %v62 = vld [vmem:[#allocation2 + $0x8] sm:$0xff]
  %v63 = vld [vmem:[#allocation2 + $0x10] sm:$0xff]
  %v64 = vld [vmem:[#allocation2 + $0x18] sm:$0xff]
  %v65 = vld [vmem:[%s1] sm:$0xf]
  %v66 = vld [vmem:[%s1 + $0x4] sm:$0xf]
  %v67 = vld [vmem:[%s1 + $0x8] sm:$0xf]
  %v68 = vld [vmem:[%s1 + $0xc] sm:$0xf]
  %v69 = vld [vmem:[%s1 + $0x10] sm:$0xf]
  %v70 = vld [vmem:[%s1 + $0x14] sm:$0xf]
  %v71 = vld [vmem:[%s1 + $0x18] sm:$0xf]
  %v72 = vld [vmem:[%s1 + $0x1c] sm:$0xf]
  %v73 = vld [vmem:[%s1 + $0x20] sm:$0xf]
  %v74 = vld [vmem:[%s1 + $0x24] sm:$0xf]
  %v75 = vld [vmem:[%s1 + $0x28] sm:$0xf]
  %v76 = vld [vmem:[%s1 + $0x2c] sm:$0xf]
  %v77 = vld [vmem:[%s1 + $0x30] sm:$0xf]
  %v78 = vld [vmem:[%s1 + $0x34] sm:$0xf]
  %v79 = vld [vmem:[%s1 + $0x38] sm:$0xf]
  %v80 = vld [vmem:[%s1 + $0x3c] sm:$0xf]
  %v97 = vunpack.c.l.b16 %v65
  %v98 = vunpack.c.l.b16 %v66
  %v99 = vunpack.c.l.b16 %v67
  %v100 = vunpack.c.l.b16 %v68
  %v101 = vunpack.c.l.b16 %v69
  %v102 = vunpack.c.l.b16 %v70
  %v103 = vunpack.c.l.b16 %v71
  %v104 = vunpack.c.l.b16 %v72
  %v105 = vunpack.c.l.b16 %v73
  %v106 = vunpack.c.l.b16 %v74
  %v107 = vunpack.c.l.b16 %v75
  %v108 = vunpack.c.l.b16 %v76
  %v109 = vunpack.c.l.b16 %v77
  %v110 = vunpack.c.l.b16 %v78
  %v111 = vunpack.c.l.b16 %v79
  %v112 = vunpack.c.l.b16 %v80
  %v113 = vpack.c.b16 %v98, %v97
  %v114 = vpack.c.b16 %v100, %v99
  %v115 = vpack.c.b16 %v102, %v101
  %v116 = vpack.c.b16 %v104, %v103
  %v117 = vpack.c.b16 %v106, %v105
  %v118 = vpack.c.b16 %v108, %v107
  %v119 = vpack.c.b16 %v110, %v109
  %v120 = vpack.c.b16 %v112, %v111
  %129 = vmatpush.bf16.msra.mxu0 %v120
  %130 = vmatpush.bf16.msra.mxu0 %v119
  %131 = vmatpush.bf16.msra.mxu0 %v118
  %132 = vmatpush.bf16.msra.mxu0 %v117
  %133 = vmatpush.bf16.msra.mxu0 %v116
  %134 = vmatpush.bf16.msra.mxu0 %v115
  %135 = vmatpush.bf16.msra.mxu0 %v114
  %136 = vmatpush.bf16.msra.mxu0 %v113
  %137 = vmatmul.bf16.gmra.mxu0 %v59
  %v138 = vpop.f32.mrf.mxu0
  %v139 = vadd.f32 0.0, %v138
  %v140 = vpop.f32.mrf.mxu0
  %v141 = vadd.f32 0.0, %v140
  %142 = vmatmul.bf16.gmra.mxu0 %v60
  %v143 = vpop.f32.mrf.mxu0
  %v144 = vadd.f32 0.0, %v143
  %v145 = vpop.f32.mrf.mxu0
  %v146 = vadd.f32 0.0, %v145
  %147 = vdwg.mxu0
  %v148 = vadd.f32 %v61, %v139
  %v149 = vadd.f32 %v62, %v141
  %v150 = vadd.f32 %v63, %v144
  %v151 = vadd.f32 %v64, %v146
  %152 = vst [vmem:[#allocation2] sm:$0xff] %v148
  %153 = vst [vmem:[#allocation2 + $0x8] sm:$0xff] %v149
  %154 = vst [vmem:[#allocation2 + $0x10] sm:$0xff] %v150
  %155 = vst [vmem:[#allocation2 + $0x18] sm:$0xff] %v151
  // Predicated region
  $region30: #{densenet121_combine_forward.37} parent=0 // pred_check
    %p156 = pneg %p23
  $region31: #{densenet121_combine_forward.37} parent=0 // pred_check_branch
    %158 = sbr.rel (%p156) target = $region33
  $region32: #{densenet121_combine_forward.37} parent=0 // pred_region
    %v159 = vld [vmem:[#allocation2] sm:$0xff]
    %v160 = vld [vmem:[#allocation2 + $0x8] sm:$0xff]
    %v161 = vld [vmem:[#allocation2 + $0x10] sm:$0xff]
    %v162 = vld [vmem:[#allocation2 + $0x18] sm:$0xff]
    %v163 = vld [vmem:[%s4] sm:$0x1]
    %v165 = vperm.slane %v163, 0
    %v167 = vmul.f32 %v159, %v165
    %v168 = vmul.f32 %v160, %v165
    %v169 = vmul.f32 %v161, %v165
    %v170 = vmul.f32 %v162, %v165
    %v171 = vld [vmem:[%s5] sm:$0x1]
    %v173 = vperm.slane %v171, 0
    %v175 = vadd.f32 %v167, %v173
    %v176 = vadd.f32 %v168, %v173
    %v177 = vadd.f32 %v169, %v173
    %v178 = vadd.f32 %v170, %v173
    %v179 = vpack.c.bf16 %v175, %v175
    %v180 = vpack.c.bf16 %v176, %v176
    %v181 = vpack.c.bf16 %v177, %v177
    %v182 = vpack.c.bf16 %v178, %v178
    %183 = vst [vmem:[%s6] sm:$0xf] %v179
    %184 = vst [vmem:[%s6 + $0x4] sm:$0xf] %v180
    %185 = vst [vmem:[%s6 + $0x8] sm:$0xf] %v181
    %186 = vst [vmem:[%s6 + $0xc] sm:$0xf] %v182
  $region33: #{densenet121_combine_forward.37} parent=0 // pred_fallthru
    _
  // Predicated region
  $region34: #{densenet121_combine_forward.37} parent=0 // pred_check
    _
  $region35: #{densenet121_combine_forward.37} parent=0 // pred_check_branch
    %188 = sbr.rel (0) target = $region37
  $region36: #{densenet121_combine_forward.37} parent=0 // pred_region
    _
  $region37: #{densenet121_combine_forward.37} parent=0 // pred_fallthru
    _
  // Predicated region
  $region38: #{densenet121_combine_forward.37} parent=0 // pred_check
    _
  $region39: #{densenet121_combine_forward.37} parent=0 // pred_check_branch
    %190 = sbr.rel (0) target = $region41
  $region40: #{densenet121_combine_forward.37} parent=0 // pred_region
    _
  $region41: #{densenet121_combine_forward.37} parent=0 // pred_fallthru
    _

// kernel: densenet121_combine_forward.38
$region0: #{densenet121_combine_forward.38}
  #allocation0 [shape = 'u32[]', space=smem, size = 0x4, offset = 0x4, fixed_abs, tag = 'smem constant byte address 0x4 - core index']
  #allocation1 [shape = 'u32[72,128]{1,0:T(1,128)}', space=vmem, size = 0x9000, scoped, tag = 'internal scratch']
  %s0 = inlined_call_operand.vmem [shape: bf16[4,8,16], index: 0, kind: input, shape index: {}]
  %s1 = inlined_call_operand.vmem [shape: bf16[8,16], index: 1, kind: output, shape index: {}]
  %s2 = sld [smem:[#allocation0]]
  $region14: #{densenet121_combine_forward.38} parent=0
    _
  %s4 = ssub.s32 1, %s2
  %s5 = scalar_select 0, %s4, %s2
  // Predicated region
  $region2: #{densenet121_combine_forward.38} parent=0 // pred_check
    _
  $region3: #{densenet121_combine_forward.38} parent=0 // pred_check_branch
    %7 = sbr.rel (0) target = $region5
  $region4: #{densenet121_combine_forward.38} parent=0 // pred_region
    _
  $region5: #{densenet121_combine_forward.38} parent=0 // pred_fallthru
    _
  %v8 = vld [vmem:[%s0] sm:$0xf]
  %v9 = vunpack.c.l.bf16 %v8
  %s10 = scalar_lea.vmem %s0, 4
  %v11 = vld [vmem:[%s10] sm:$0xf]
  %v12 = vunpack.c.l.bf16 %v11
  %v13 = vadd.f32 %v9, %v12
  %s14 = scalar_lea.vmem %s0, 8
  %v15 = vld [vmem:[%s14] sm:$0xf]
  %v16 = vunpack.c.l.bf16 %v15
  %v17 = vadd.f32 %v13, %v16
  %s18 = scalar_lea.vmem %s0, 12
  %v19 = vld [vmem:[%s18] sm:$0xf]
  %v20 = vunpack.c.l.bf16 %v19
  %v21 = vadd.f32 %v17, %v20
  %v22 = vmul.f32 %v21, 0.25
  %v23 = vpack.c.bf16 %v22, %v22
  %vm24 = vcmask 125952
  %25 = vst.msk [vmem:[%s1] sm:$0xf] %vm24, %v23
  // Predicated region
  $region6: #{densenet121_combine_forward.38} parent=0 // pred_check
    _
  $region7: #{densenet121_combine_forward.38} parent=0 // pred_check_branch
    %27 = sbr.rel (0) target = $region9
  $region8: #{densenet121_combine_forward.38} parent=0 // pred_region
    _
  $region9: #{densenet121_combine_forward.38} parent=0 // pred_fallthru
    _
  // Predicated region
  $region10: #{densenet121_combine_forward.38} parent=0 // pred_check
    _
  $region11: #{densenet121_combine_forward.38} parent=0 // pred_check_branch
    %29 = sbr.rel (0) target = $region13
  $region12: #{densenet121_combine_forward.38} parent=0 // pred_region
    _
  $region13: #{densenet121_combine_forward.38} parent=0 // pred_fallthru
    _

// kernel: densenet121_combine_forward.39
$region0: #{densenet121_combine_forward.39}
  #allocation0 [shape = 'u32[]', space=smem, size = 0x4, offset = 0x4, fixed_abs, tag = 'smem constant byte address 0x4 - core index']
  #allocation1 [shape = 'u32[72,128]{1,0:T(1,128)}', space=vmem, size = 0x9000, scoped, tag = 'internal scratch']
  #allocation2 [shape = 'f32[8,128]{1,0:T(8,128)}', space=vmem, size = 0x1000, scoped, tag = 'scratch operand']
  %s0 = inlined_call_operand.vmem [shape: bf16[8,128], index: 0, kind: input, shape index: {}]
  %s1 = inlined_call_operand.vmem [shape: bf16[128,128], index: 1, kind: input, shape index: {}]
  %s2 = inlined_call_operand.vmem [shape: f32[1,128], index: 2, kind: input, shape index: {}]
  %s3 = inlined_call_operand.vmem [shape: f32[1,128], index: 3, kind: input, shape index: {}]
  %s4 = inlined_call_operand.vmem [shape: f32[1,128], index: 4, kind: input, shape index: {}]
  %s5 = inlined_call_operand.vmem [shape: f32[1,128], index: 5, kind: input, shape index: {}]
  %s6 = inlined_call_operand.vmem [shape: bf16[8,128], index: 6, kind: output, shape index: {}]
  %s7 = sld [smem:[#allocation0]]
  $region42: #{densenet121_combine_forward.39} parent=0
    _
  %s9 = ssub.s32 1, %s7
  %s10 = scalar_select 0, %s9, %s7
  // Predicated region
  $region2: #{densenet121_combine_forward.39} parent=0 // pred_check
    _
  $region3: #{densenet121_combine_forward.39} parent=0 // pred_check_branch
    %12 = sbr.rel (0) target = $region5
  $region4: #{densenet121_combine_forward.39} parent=0 // pred_region
    _
  $region5: #{densenet121_combine_forward.39} parent=0 // pred_fallthru
    _
  // Predicated region
  $region6: #{densenet121_combine_forward.39} parent=0 // pred_check
    _
  $region7: #{densenet121_combine_forward.39} parent=0 // pred_check_branch
    %14 = sbr.rel (0) target = $region9
  $region8: #{densenet121_combine_forward.39} parent=0 // pred_region
    _
  $region9: #{densenet121_combine_forward.39} parent=0 // pred_fallthru
    _
  // Predicated region
  $region10: #{densenet121_combine_forward.39} parent=0 // pred_check
    _
  $region11: #{densenet121_combine_forward.39} parent=0 // pred_check_branch
    %16 = sbr.rel (0) target = $region13
  $region12: #{densenet121_combine_forward.39} parent=0 // pred_region
    _
  $region13: #{densenet121_combine_forward.39} parent=0 // pred_fallthru
    _
  // Predicated region
  $region14: #{densenet121_combine_forward.39} parent=0 // pred_check
    _
  $region15: #{densenet121_combine_forward.39} parent=0 // pred_check_branch
    %18 = sbr.rel (0) target = $region17
  $region16: #{densenet121_combine_forward.39} parent=0 // pred_region
    _
  $region17: #{densenet121_combine_forward.39} parent=0 // pred_fallthru
    _
  // Predicated region
  $region18: #{densenet121_combine_forward.39} parent=0 // pred_check
    _
  $region19: #{densenet121_combine_forward.39} parent=0 // pred_check_branch
    %20 = sbr.rel (0) target = $region21
  $region20: #{densenet121_combine_forward.39} parent=0 // pred_region
    _
  $region21: #{densenet121_combine_forward.39} parent=0 // pred_fallthru
    _
  // Predicated region
  $region22: #{densenet121_combine_forward.39} parent=0 // pred_check
    _
  $region23: #{densenet121_combine_forward.39} parent=0 // pred_check_branch
    %22 = sbr.rel (0) target = $region25
  $region24: #{densenet121_combine_forward.39} parent=0 // pred_region
    _
  $region25: #{densenet121_combine_forward.39} parent=0 // pred_fallthru
    _
  %p23 = scmp.eq.s32.totalorder 0, 0
  // Predicated region
  $region26: #{densenet121_combine_forward.39} parent=0 // pred_check
    %p24 = pneg %p23
  $region27: #{densenet121_combine_forward.39} parent=0 // pred_check_branch
    %26 = sbr.rel (%p24) target = $region29
  $region28: #{densenet121_combine_forward.39} parent=0 // pred_region
    %27 = vst [vmem:[#allocation2] sm:$0xff] 0.0
  $region29: #{densenet121_combine_forward.39} parent=0 // pred_fallthru
    _
  %v28 = vld [vmem:[%s0] sm:$0xf]
  %v29 = vunpack.c.l.bf16 %v28
  %v30 = vld [vmem:[%s2] sm:$0x1]
  %v32 = vperm.slane %v30, 0
  %v34 = vmul.f32 %v29, %v32
  %v35 = vld [vmem:[%s3] sm:$0x1]
  %v37 = vperm.slane %v35, 0
  %v39 = vadd.f32 %v34, %v37
  %v40 = vmax.f32 %v39, 0.0
  %v41 = vpack.c.bf16 %v40, %v40
  %v42 = vld [vmem:[#allocation2] sm:$0xff]
  %v43 = vld [vmem:[%s1] sm:$0xf]
  %v44 = vld [vmem:[%s1 + $0x4] sm:$0xf]
  %v45 = vld [vmem:[%s1 + $0x8] sm:$0xf]
  %v46 = vld [vmem:[%s1 + $0xc] sm:$0xf]
  %v47 = vld [vmem:[%s1 + $0x10] sm:$0xf]
  %v48 = vld [vmem:[%s1 + $0x14] sm:$0xf]
  %v49 = vld [vmem:[%s1 + $0x18] sm:$0xf]
  %v50 = vld [vmem:[%s1 + $0x1c] sm:$0xf]
  %v51 = vld [vmem:[%s1 + $0x20] sm:$0xf]
  %v52 = vld [vmem:[%s1 + $0x24] sm:$0xf]
  %v53 = vld [vmem:[%s1 + $0x28] sm:$0xf]
  %v54 = vld [vmem:[%s1 + $0x2c] sm:$0xf]
  %v55 = vld [vmem:[%s1 + $0x30] sm:$0xf]
  %v56 = vld [vmem:[%s1 + $0x34] sm:$0xf]
  %v57 = vld [vmem:[%s1 + $0x38] sm:$0xf]
  %v58 = vld [vmem:[%s1 + $0x3c] sm:$0xf]
  %v75 = vunpack.c.l.b16 %v43
  %v76 = vunpack.c.l.b16 %v44
  %v77 = vunpack.c.l.b16 %v45
  %v78 = vunpack.c.l.b16 %v46
  %v79 = vunpack.c.l.b16 %v47
  %v80 = vunpack.c.l.b16 %v48
  %v81 = vunpack.c.l.b16 %v49
  %v82 = vunpack.c.l.b16 %v50
  %v83 = vunpack.c.l.b16 %v51
  %v84 = vunpack.c.l.b16 %v52
  %v85 = vunpack.c.l.b16 %v53
  %v86 = vunpack.c.l.b16 %v54
  %v87 = vunpack.c.l.b16 %v55
  %v88 = vunpack.c.l.b16 %v56
  %v89 = vunpack.c.l.b16 %v57
  %v90 = vunpack.c.l.b16 %v58
  %v91 = vpack.c.b16 %v76, %v75
  %v92 = vpack.c.b16 %v78, %v77
  %v93 = vpack.c.b16 %v80, %v79
  %v94 = vpack.c.b16 %v82, %v81
  %v95 = vpack.c.b16 %v84, %v83
  %v96 = vpack.c.b16 %v86, %v85
  %v97 = vpack.c.b16 %v88, %v87
  %v98 = vpack.c.b16 %v90, %v89
  %107 = vmatpush.bf16.msra.mxu0 %v98
  %108 = vmatpush.bf16.msra.mxu0 %v97
  %109 = vmatpush.bf16.msra.mxu0 %v96
  %110 = vmatpush.bf16.msra.mxu0 %v95
  %111 = vmatpush.bf16.msra.mxu0 %v94
  %112 = vmatpush.bf16.msra.mxu0 %v93
  %113 = vmatpush.bf16.msra.mxu0 %v92
  %114 = vmatpush.bf16.msra.mxu0 %v91
  %115 = vmatmul.bf16.gmra.mxu0 %v41
  %v116 = vpop.f32.mrf.mxu0
  %v117 = vadd.f32 0.0, %v116
  %v118 = vpop.f32.mrf.mxu0
  %119 = vdwg.mxu0
  %v120 = vadd.f32 %v42, %v117
  %121 = vst [vmem:[#allocation2] sm:$0xff] %v120
  // Predicated region
  $region30: #{densenet121_combine_forward.39} parent=0 // pred_check
    %p122 = pneg %p23
  $region31: #{densenet121_combine_forward.39} parent=0 // pred_check_branch
    %124 = sbr.rel (%p122) target = $region33
  $region32: #{densenet121_combine_forward.39} parent=0 // pred_region
    %v125 = vld [vmem:[#allocation2] sm:$0xff]
    %v126 = vld [vmem:[%s4] sm:$0x1]
    %v128 = vperm.slane %v126, 0
    %v130 = vmul.f32 %v125, %v128
    %v131 = vld [vmem:[%s5] sm:$0x1]
    %v133 = vperm.slane %v131, 0
    %v135 = vadd.f32 %v130, %v133
    %v136 = vmax.f32 %v135, 0.0
    %v137 = vpack.c.bf16 %v136, %v136
    %138 = vst [vmem:[%s6] sm:$0xf] %v137
  $region33: #{densenet121_combine_forward.39} parent=0 // pred_fallthru
    _
  // Predicated region
  $region34: #{densenet121_combine_forward.39} parent=0 // pred_check
    _
  $region35: #{densenet121_combine_forward.39} parent=0 // pred_check_branch
    %140 = sbr.rel (0) target = $region37
  $region36: #{densenet121_combine_forward.39} parent=0 // pred_region
    _
  $region37: #{densenet121_combine_forward.39} parent=0 // pred_fallthru
    _
  // Predicated region
  $region38: #{densenet121_combine_forward.39} parent=0 // pred_check
    _
  $region39: #{densenet121_combine_forward.39} parent=0 // pred_check_branch
    %142 = sbr.rel (0) target = $region41
  $region40: #{densenet121_combine_forward.39} parent=0 // pred_region
    _
  $region41: #{densenet121_combine_forward.39} parent=0 // pred_fallthru
    _

// kernel: densenet121_combine_forward.40
$region0: #{densenet121_combine_forward.40}
  #allocation0 [shape = 'u32[]', space=smem, size = 0x4, offset = 0x4, fixed_abs, tag = 'smem constant byte address 0x4 - core index']
  #allocation1 [shape = 'u32[72,128]{1,0:T(1,128)}', space=vmem, size = 0x9000, scoped, tag = 'internal scratch']
  #allocation2 [shape = 'f32[8,128]{1,0:T(8,128)}', space=vmem, size = 0x1000, scoped, tag = 'scratch operand']
  %s0 = inlined_call_operand.vmem [shape: bf16[8,384], index: 0, kind: input, shape index: {}]
  %s1 = inlined_call_operand.vmem [shape: bf16[384,128], index: 1, kind: input, shape index: {}]
  %s2 = inlined_call_operand.vmem [shape: f32[1,384], index: 2, kind: input, shape index: {}]
  %s3 = inlined_call_operand.vmem [shape: f32[1,384], index: 3, kind: input, shape index: {}]
  %s4 = inlined_call_operand.vmem [shape: f32[1,128], index: 4, kind: input, shape index: {}]
  %s5 = inlined_call_operand.vmem [shape: f32[1,128], index: 5, kind: input, shape index: {}]
  %s6 = inlined_call_operand.vmem [shape: bf16[8,128], index: 6, kind: output, shape index: {}]
  %s7 = sld [smem:[#allocation0]]
  $region42: #{densenet121_combine_forward.40} parent=0
    _
  %s9 = ssub.s32 1, %s7
  %s10 = scalar_select 0, %s9, %s7
  // Predicated region
  $region2: #{densenet121_combine_forward.40} parent=0 // pred_check
    _
  $region3: #{densenet121_combine_forward.40} parent=0 // pred_check_branch
    %12 = sbr.rel (0) target = $region5
  $region4: #{densenet121_combine_forward.40} parent=0 // pred_region
    _
  $region5: #{densenet121_combine_forward.40} parent=0 // pred_fallthru
    _
  // Predicated region
  $region6: #{densenet121_combine_forward.40} parent=0 // pred_check
    _
  $region7: #{densenet121_combine_forward.40} parent=0 // pred_check_branch
    %14 = sbr.rel (0) target = $region9
  $region8: #{densenet121_combine_forward.40} parent=0 // pred_region
    _
  $region9: #{densenet121_combine_forward.40} parent=0 // pred_fallthru
    _
  // Predicated region
  $region10: #{densenet121_combine_forward.40} parent=0 // pred_check
    _
  $region11: #{densenet121_combine_forward.40} parent=0 // pred_check_branch
    %16 = sbr.rel (0) target = $region13
  $region12: #{densenet121_combine_forward.40} parent=0 // pred_region
    _
  $region13: #{densenet121_combine_forward.40} parent=0 // pred_fallthru
    _
  // Predicated region
  $region14: #{densenet121_combine_forward.40} parent=0 // pred_check
    _
  $region15: #{densenet121_combine_forward.40} parent=0 // pred_check_branch
    %18 = sbr.rel (0) target = $region17
  $region16: #{densenet121_combine_forward.40} parent=0 // pred_region
    _
  $region17: #{densenet121_combine_forward.40} parent=0 // pred_fallthru
    _
  // Predicated region
  $region18: #{densenet121_combine_forward.40} parent=0 // pred_check
    _
  $region19: #{densenet121_combine_forward.40} parent=0 // pred_check_branch
    %20 = sbr.rel (0) target = $region21
  $region20: #{densenet121_combine_forward.40} parent=0 // pred_region
    _
  $region21: #{densenet121_combine_forward.40} parent=0 // pred_fallthru
    _
  // Predicated region
  $region22: #{densenet121_combine_forward.40} parent=0 // pred_check
    _
  $region23: #{densenet121_combine_forward.40} parent=0 // pred_check_branch
    %22 = sbr.rel (0) target = $region25
  $region24: #{densenet121_combine_forward.40} parent=0 // pred_region
    _
  $region25: #{densenet121_combine_forward.40} parent=0 // pred_fallthru
    _
  %p23 = scmp.eq.s32.totalorder 0, 0
  // Predicated region
  $region26: #{densenet121_combine_forward.40} parent=0 // pred_check
    %p24 = pneg %p23
  $region27: #{densenet121_combine_forward.40} parent=0 // pred_check_branch
    %26 = sbr.rel (%p24) target = $region29
  $region28: #{densenet121_combine_forward.40} parent=0 // pred_region
    %27 = vst [vmem:[#allocation2] sm:$0xff] 0.0
  $region29: #{densenet121_combine_forward.40} parent=0 // pred_fallthru
    _
  %v28 = vld [vmem:[%s0] sm:$0xff]
  %v29 = vld [vmem:[%s0 + $0x8] sm:$0xf]
  %v30 = vld [vmem:[#allocation2] sm:$0xff]
  %v31 = vld [vmem:[%s1] sm:$0xf]
  %v32 = vld [vmem:[%s1 + $0x4] sm:$0xf]
  %v33 = vld [vmem:[%s1 + $0x8] sm:$0xf]
  %v34 = vld [vmem:[%s1 + $0xc] sm:$0xf]
  %v35 = vld [vmem:[%s1 + $0x10] sm:$0xf]
  %v36 = vld [vmem:[%s1 + $0x14] sm:$0xf]
  %v37 = vld [vmem:[%s1 + $0x18] sm:$0xf]
  %v38 = vld [vmem:[%s1 + $0x1c] sm:$0xf]
  %v39 = vld [vmem:[%s1 + $0x20] sm:$0xf]
  %v40 = vld [vmem:[%s1 + $0x24] sm:$0xf]
  %v41 = vld [vmem:[%s1 + $0x28] sm:$0xf]
  %v42 = vld [vmem:[%s1 + $0x2c] sm:$0xf]
  %v43 = vld [vmem:[%s1 + $0x30] sm:$0xf]
  %v44 = vld [vmem:[%s1 + $0x34] sm:$0xf]
  %v45 = vld [vmem:[%s1 + $0x38] sm:$0xf]
  %v46 = vld [vmem:[%s1 + $0x3c] sm:$0xf]
  %v47 = vld [vmem:[%s1 + $0x40] sm:$0xf]
  %v48 = vld [vmem:[%s1 + $0x44] sm:$0xf]
  %v49 = vld [vmem:[%s1 + $0x48] sm:$0xf]
  %v50 = vld [vmem:[%s1 + $0x4c] sm:$0xf]
  %v51 = vld [vmem:[%s1 + $0x50] sm:$0xf]
  %v52 = vld [vmem:[%s1 + $0x54] sm:$0xf]
  %v53 = vld [vmem:[%s1 + $0x58] sm:$0xf]
  %v54 = vld [vmem:[%s1 + $0x5c] sm:$0xf]
  %v55 = vld [vmem:[%s1 + $0x60] sm:$0xf]
  %v56 = vld [vmem:[%s1 + $0x64] sm:$0xf]
  %v57 = vld [vmem:[%s1 + $0x68] sm:$0xf]
  %v58 = vld [vmem:[%s1 + $0x6c] sm:$0xf]
  %v59 = vld [vmem:[%s1 + $0x70] sm:$0xf]
  %v60 = vld [vmem:[%s1 + $0x74] sm:$0xf]
  %v61 = vld [vmem:[%s1 + $0x78] sm:$0xf]
  %v62 = vld [vmem:[%s1 + $0x7c] sm:$0xf]
  %v63 = vld [vmem:[%s1 + $0x80] sm:$0xf]
  %v64 = vld [vmem:[%s1 + $0x84] sm:$0xf]
  %v65 = vld [vmem:[%s1 + $0x88] sm:$0xf]
  %v66 = vld [vmem:[%s1 + $0x8c] sm:$0xf]
  %v67 = vld [vmem:[%s1 + $0x90] sm:$0xf]
  %v68 = vld [vmem:[%s1 + $0x94] sm:$0xf]
  %v69 = vld [vmem:[%s1 + $0x98] sm:$0xf]
  %v70 = vld [vmem:[%s1 + $0x9c] sm:$0xf]
  %v71 = vld [vmem:[%s1 + $0xa0] sm:$0xf]
  %v72 = vld [vmem:[%s1 + $0xa4] sm:$0xf]
  %v73 = vld [vmem:[%s1 + $0xa8] sm:$0xf]
  %v74 = vld [vmem:[%s1 + $0xac] sm:$0xf]
  %v75 = vld [vmem:[%s1 + $0xb0] sm:$0xf]
  %v76 = vld [vmem:[%s1 + $0xb4] sm:$0xf]
  %v77 = vld [vmem:[%s1 + $0xb8] sm:$0xf]
  %v78 = vld [vmem:[%s1 + $0xbc] sm:$0xf]
  %v81 = vunpack.c.l.b16 %v28
  %v82 = vunpack.c.h.b16 %v28
  %v83 = vunpack.c.l.b16 %v29
  %v84 = vpack.c.b16 %v81, %v81
  %v85 = vpack.c.b16 %v82, %v82
  %v86 = vpack.c.b16 %v83, %v83
  %v138 = vunpack.c.l.b16 %v31
  %v139 = vunpack.c.l.b16 %v32
  %v140 = vunpack.c.l.b16 %v33
  %v141 = vunpack.c.l.b16 %v34
  %v142 = vunpack.c.l.b16 %v35
  %v143 = vunpack.c.l.b16 %v36
  %v144 = vunpack.c.l.b16 %v37
  %v145 = vunpack.c.l.b16 %v38
  %v146 = vunpack.c.l.b16 %v39
  %v147 = vunpack.c.l.b16 %v40
  %v148 = vunpack.c.l.b16 %v41
  %v149 = vunpack.c.l.b16 %v42
  %v150 = vunpack.c.l.b16 %v43
  %v151 = vunpack.c.l.b16 %v44
  %v152 = vunpack.c.l.b16 %v45
  %v153 = vunpack.c.l.b16 %v46
  %v154 = vunpack.c.l.b16 %v47
  %v155 = vunpack.c.l.b16 %v48
  %v156 = vunpack.c.l.b16 %v49
  %v157 = vunpack.c.l.b16 %v50
  %v158 = vunpack.c.l.b16 %v51
  %v159 = vunpack.c.l.b16 %v52
  %v160 = vunpack.c.l.b16 %v53
  %v161 = vunpack.c.l.b16 %v54
  %v162 = vunpack.c.l.b16 %v55
  %v163 = vunpack.c.l.b16 %v56
  %v164 = vunpack.c.l.b16 %v57
  %v165 = vunpack.c.l.b16 %v58
  %v166 = vunpack.c.l.b16 %v59
  %v167 = vunpack.c.l.b16 %v60
  %v168 = vunpack.c.l.b16 %v61
  %v169 = vunpack.c.l.b16 %v62
  %v170 = vunpack.c.l.b16 %v63
  %v171 = vunpack.c.l.b16 %v64
  %v172 = vunpack.c.l.b16 %v65
  %v173 = vunpack.c.l.b16 %v66
  %v174 = vunpack.c.l.b16 %v67
  %v175 = vunpack.c.l.b16 %v68
  %v176 = vunpack.c.l.b16 %v69
  %v177 = vunpack.c.l.b16 %v70
  %v178 = vunpack.c.l.b16 %v71
  %v179 = vunpack.c.l.b16 %v72
  %v180 = vunpack.c.l.b16 %v73
  %v181 = vunpack.c.l.b16 %v74
  %v182 = vunpack.c.l.b16 %v75
  %v183 = vunpack.c.l.b16 %v76
  %v184 = vunpack.c.l.b16 %v77
  %v185 = vunpack.c.l.b16 %v78
  %v186 = vpack.c.b16 %v139, %v138
  %v187 = vpack.c.b16 %v141, %v140
  %v188 = vpack.c.b16 %v143, %v142
  %v189 = vpack.c.b16 %v145, %v144
  %v190 = vpack.c.b16 %v147, %v146
  %v191 = vpack.c.b16 %v149, %v148
  %v192 = vpack.c.b16 %v151, %v150
  %v193 = vpack.c.b16 %v153, %v152
  %v194 = vpack.c.b16 %v155, %v154
  %v195 = vpack.c.b16 %v157, %v156
  %v196 = vpack.c.b16 %v159, %v158
  %v197 = vpack.c.b16 %v161, %v160
  %v198 = vpack.c.b16 %v163, %v162
  %v199 = vpack.c.b16 %v165, %v164
  %v200 = vpack.c.b16 %v167, %v166
  %v201 = vpack.c.b16 %v169, %v168
  %v202 = vpack.c.b16 %v171, %v170
  %v203 = vpack.c.b16 %v173, %v172
  %v204 = vpack.c.b16 %v175, %v174
  %v205 = vpack.c.b16 %v177, %v176
  %v206 = vpack.c.b16 %v179, %v178
  %v207 = vpack.c.b16 %v181, %v180
  %v208 = vpack.c.b16 %v183, %v182
  %v209 = vpack.c.b16 %v185, %v184
  %234 = vmatpush.bf16.msra.mxu0 %v193
  %235 = vmatpush.bf16.msra.mxu0 %v192
  %236 = vmatpush.bf16.msra.mxu0 %v191
  %237 = vmatpush.bf16.msra.mxu0 %v190
  %238 = vmatpush.bf16.msra.mxu0 %v189
  %239 = vmatpush.bf16.msra.mxu0 %v188
  %240 = vmatpush.bf16.msra.mxu0 %v187
  %241 = vmatpush.bf16.msra.mxu0 %v186
  %242 = vmatmul.bf16.gmra.mxu0 %v84
  %v243 = vpop.f32.mrf.mxu0
  %v244 = vadd.f32 0.0, %v243
  %v245 = vpop.f32.mrf.mxu0
  %246 = vdwg.mxu0
  %247 = vmatpush.bf16.msra.mxu0 %v201
  %248 = vmatpush.bf16.msra.mxu0 %v200
  %249 = vmatpush.bf16.msra.mxu0 %v199
  %250 = vmatpush.bf16.msra.mxu0 %v198
  %251 = vmatpush.bf16.msra.mxu0 %v197
  %252 = vmatpush.bf16.msra.mxu0 %v196
  %253 = vmatpush.bf16.msra.mxu0 %v195
  %254 = vmatpush.bf16.msra.mxu0 %v194
  %255 = vmatmul.bf16.gmra.mxu0 %v85
  %v256 = vpop.f32.mrf.mxu0
  %v257 = vadd.f32 %v244, %v256
  %v258 = vpop.f32.mrf.mxu0
  %259 = vdwg.mxu0
  %260 = vmatpush.bf16.msra.mxu0 %v209
  %261 = vmatpush.bf16.msra.mxu0 %v208
  %262 = vmatpush.bf16.msra.mxu0 %v207
  %263 = vmatpush.bf16.msra.mxu0 %v206
  %264 = vmatpush.bf16.msra.mxu0 %v205
  %265 = vmatpush.bf16.msra.mxu0 %v204
  %266 = vmatpush.bf16.msra.mxu0 %v203
  %267 = vmatpush.bf16.msra.mxu0 %v202
  %268 = vmatmul.bf16.gmra.mxu0 %v86
  %v269 = vpop.f32.mrf.mxu0
  %v270 = vadd.f32 %v257, %v269
  %v271 = vpop.f32.mrf.mxu0
  %272 = vdwg.mxu0
  %v273 = vadd.f32 %v30, %v270
  %274 = vst [vmem:[#allocation2] sm:$0xff] %v273
  // Predicated region
  $region30: #{densenet121_combine_forward.40} parent=0 // pred_check
    %p275 = pneg %p23
  $region31: #{densenet121_combine_forward.40} parent=0 // pred_check_branch
    %277 = sbr.rel (%p275) target = $region33
  $region32: #{densenet121_combine_forward.40} parent=0 // pred_region
    %v278 = vld [vmem:[#allocation2] sm:$0xff]
    %v279 = vld [vmem:[%s4] sm:$0x1]
    %v281 = vperm.slane %v279, 0
    %v283 = vmul.f32 %v278, %v281
    %v284 = vld [vmem:[%s5] sm:$0x1]
    %v286 = vperm.slane %v284, 0
    %v288 = vadd.f32 %v283, %v286
    %v289 = vpack.c.bf16 %v288, %v288
    %290 = vst [vmem:[%s6] sm:$0xf] %v289
  $region33: #{densenet121_combine_forward.40} parent=0 // pred_fallthru
    _
  // Predicated region
  $region34: #{densenet121_combine_forward.40} parent=0 // pred_check
    _
  $region35: #{densenet121_combine_forward.40} parent=0 // pred_check_branch
    %292 = sbr.rel (0) target = $region37
  $region36: #{densenet121_combine_forward.40} parent=0 // pred_region
    _
  $region37: #{densenet121_combine_forward.40} parent=0 // pred_fallthru
    _
  // Predicated region
  $region38: #{densenet121_combine_forward.40} parent=0 // pred_check
    _
  $region39: #{densenet121_combine_forward.40} parent=0 // pred_check_branch
    %294 = sbr.rel (0) target = $region41
  $region40: #{densenet121_combine_forward.40} parent=0 // pred_region
    _
  $region41: #{densenet121_combine_forward.40} parent=0 // pred_fallthru
    _

// kernel: densenet121_combine_forward.44
$region0: #{densenet121_combine_forward.44}
  #allocation0 [shape = 'u32[]', space=smem, size = 0x4, offset = 0x4, fixed_abs, tag = 'smem constant byte address 0x4 - core index']
  #allocation1 [shape = 'u32[72,128]{1,0:T(1,128)}', space=vmem, size = 0x9000, scoped, tag = 'internal scratch']
  %s0 = inlined_call_operand.vmem [shape: bf16[4,2,16], index: 0, kind: input, shape index: {}]
  %s1 = inlined_call_operand.vmem [shape: bf16[2,16], index: 1, kind: output, shape index: {}]
  %s2 = sld [smem:[#allocation0]]
  $region14: #{densenet121_combine_forward.44} parent=0
    _
  %s4 = ssub.s32 1, %s2
  %s5 = scalar_select 0, %s4, %s2
  // Predicated region
  $region2: #{densenet121_combine_forward.44} parent=0 // pred_check
    _
  $region3: #{densenet121_combine_forward.44} parent=0 // pred_check_branch
    %7 = sbr.rel (0) target = $region5
  $region4: #{densenet121_combine_forward.44} parent=0 // pred_region
    _
  $region5: #{densenet121_combine_forward.44} parent=0 // pred_fallthru
    _
  %v8 = vld [vmem:[%s0] sm:$0x1]
  %v9 = vunpack.c.l.bf16 %v8
  %s10 = scalar_lea.vmem %s0, 1
  %v11 = vld [vmem:[%s10] sm:$0x1]
  %v12 = vunpack.c.l.bf16 %v11
  %v13 = vadd.f32 %v9, %v12
  %s14 = scalar_lea.vmem %s0, 2
  %v15 = vld [vmem:[%s14] sm:$0x1]
  %v16 = vunpack.c.l.bf16 %v15
  %v17 = vadd.f32 %v13, %v16
  %s18 = scalar_lea.vmem %s0, 3
  %v19 = vld [vmem:[%s18] sm:$0x1]
  %v20 = vunpack.c.l.bf16 %v19
  %v21 = vadd.f32 %v17, %v20
  %v22 = vmul.f32 %v21, 0.25
  %v23 = vpack.c.bf16 %v22, %v22
  %vm24 = vcmask 122880
  %25 = vst.msk [vmem:[%s1] sm:$0x1] %vm24, %v23
  // Predicated region
  $region6: #{densenet121_combine_forward.44} parent=0 // pred_check
    _
  $region7: #{densenet121_combine_forward.44} parent=0 // pred_check_branch
    %27 = sbr.rel (0) target = $region9
  $region8: #{densenet121_combine_forward.44} parent=0 // pred_region
    _
  $region9: #{densenet121_combine_forward.44} parent=0 // pred_fallthru
    _
  // Predicated region
  $region10: #{densenet121_combine_forward.44} parent=0 // pred_check
    _
  $region11: #{densenet121_combine_forward.44} parent=0 // pred_check_branch
    %29 = sbr.rel (0) target = $region13
  $region12: #{densenet121_combine_forward.44} parent=0 // pred_region
    _
  $region13: #{densenet121_combine_forward.44} parent=0 // pred_fallthru
    _

// kernel: densenet121_combine_forward.43
$region0: #{densenet121_combine_forward.43}
  #allocation0 [shape = 'u32[]', space=smem, size = 0x4, offset = 0x4, fixed_abs, tag = 'smem constant byte address 0x4 - core index']
  #allocation1 [shape = 'u32[72,128]{1,0:T(1,128)}', space=vmem, size = 0x9000, scoped, tag = 'internal scratch']
  #allocation2 [shape = 'f32[8,128]{1,0:T(8,128)}', space=vmem, size = 0x1000, scoped, tag = 'scratch operand']
  %s0 = inlined_call_operand.vmem [shape: bf16[8,128], index: 0, kind: input, shape index: {}]
  %s1 = inlined_call_operand.vmem [shape: bf16[128,128], index: 1, kind: input, shape index: {}]
  %s2 = inlined_call_operand.vmem [shape: f32[1,128], index: 2, kind: input, shape index: {}]
  %s3 = inlined_call_operand.vmem [shape: f32[1,128], index: 3, kind: input, shape index: {}]
  %s4 = inlined_call_operand.vmem [shape: f32[1,128], index: 4, kind: input, shape index: {}]
  %s5 = inlined_call_operand.vmem [shape: f32[1,128], index: 5, kind: input, shape index: {}]
  %s6 = inlined_call_operand.vmem [shape: bf16[8,128], index: 6, kind: output, shape index: {}]
  %s7 = sld [smem:[#allocation0]]
  $region42: #{densenet121_combine_forward.43} parent=0
    _
  %s9 = ssub.s32 1, %s7
  %s10 = scalar_select 0, %s9, %s7
  // Predicated region
  $region2: #{densenet121_combine_forward.43} parent=0 // pred_check
    _
  $region3: #{densenet121_combine_forward.43} parent=0 // pred_check_branch
    %12 = sbr.rel (0) target = $region5
  $region4: #{densenet121_combine_forward.43} parent=0 // pred_region
    _
  $region5: #{densenet121_combine_forward.43} parent=0 // pred_fallthru
    _
  // Predicated region
  $region6: #{densenet121_combine_forward.43} parent=0 // pred_check
    _
  $region7: #{densenet121_combine_forward.43} parent=0 // pred_check_branch
    %14 = sbr.rel (0) target = $region9
  $region8: #{densenet121_combine_forward.43} parent=0 // pred_region
    _
  $region9: #{densenet121_combine_forward.43} parent=0 // pred_fallthru
    _
  // Predicated region
  $region10: #{densenet121_combine_forward.43} parent=0 // pred_check
    _
  $region11: #{densenet121_combine_forward.43} parent=0 // pred_check_branch
    %16 = sbr.rel (0) target = $region13
  $region12: #{densenet121_combine_forward.43} parent=0 // pred_region
    _
  $region13: #{densenet121_combine_forward.43} parent=0 // pred_fallthru
    _
  // Predicated region
  $region14: #{densenet121_combine_forward.43} parent=0 // pred_check
    _
  $region15: #{densenet121_combine_forward.43} parent=0 // pred_check_branch
    %18 = sbr.rel (0) target = $region17
  $region16: #{densenet121_combine_forward.43} parent=0 // pred_region
    _
  $region17: #{densenet121_combine_forward.43} parent=0 // pred_fallthru
    _
  // Predicated region
  $region18: #{densenet121_combine_forward.43} parent=0 // pred_check
    _
  $region19: #{densenet121_combine_forward.43} parent=0 // pred_check_branch
    %20 = sbr.rel (0) target = $region21
  $region20: #{densenet121_combine_forward.43} parent=0 // pred_region
    _
  $region21: #{densenet121_combine_forward.43} parent=0 // pred_fallthru
    _
  // Predicated region
  $region22: #{densenet121_combine_forward.43} parent=0 // pred_check
    _
  $region23: #{densenet121_combine_forward.43} parent=0 // pred_check_branch
    %22 = sbr.rel (0) target = $region25
  $region24: #{densenet121_combine_forward.43} parent=0 // pred_region
    _
  $region25: #{densenet121_combine_forward.43} parent=0 // pred_fallthru
    _
  %p23 = scmp.eq.s32.totalorder 0, 0
  // Predicated region
  $region26: #{densenet121_combine_forward.43} parent=0 // pred_check
    %p24 = pneg %p23
  $region27: #{densenet121_combine_forward.43} parent=0 // pred_check_branch
    %26 = sbr.rel (%p24) target = $region29
  $region28: #{densenet121_combine_forward.43} parent=0 // pred_region
    %27 = vst [vmem:[#allocation2] sm:$0xff] 0.0
  $region29: #{densenet121_combine_forward.43} parent=0 // pred_fallthru
    _
  %v28 = vld [vmem:[%s0] sm:$0xf]
  %v29 = vunpack.c.l.bf16 %v28
  %v30 = vld [vmem:[%s2] sm:$0x1]
  %v32 = vperm.slane %v30, 0
  %v34 = vmul.f32 %v29, %v32
  %v35 = vld [vmem:[%s3] sm:$0x1]
  %v37 = vperm.slane %v35, 0
  %v39 = vadd.f32 %v34, %v37
  %v40 = vmax.f32 %v39, 0.0
  %v41 = vpack.c.bf16 %v40, %v40
  %v42 = vld [vmem:[#allocation2] sm:$0xff]
  %v43 = vld [vmem:[%s1] sm:$0xf]
  %v44 = vld [vmem:[%s1 + $0x4] sm:$0xf]
  %v45 = vld [vmem:[%s1 + $0x8] sm:$0xf]
  %v46 = vld [vmem:[%s1 + $0xc] sm:$0xf]
  %v47 = vld [vmem:[%s1 + $0x10] sm:$0xf]
  %v48 = vld [vmem:[%s1 + $0x14] sm:$0xf]
  %v49 = vld [vmem:[%s1 + $0x18] sm:$0xf]
  %v50 = vld [vmem:[%s1 + $0x1c] sm:$0xf]
  %v51 = vld [vmem:[%s1 + $0x20] sm:$0xf]
  %v52 = vld [vmem:[%s1 + $0x24] sm:$0xf]
  %v53 = vld [vmem:[%s1 + $0x28] sm:$0xf]
  %v54 = vld [vmem:[%s1 + $0x2c] sm:$0xf]
  %v55 = vld [vmem:[%s1 + $0x30] sm:$0xf]
  %v56 = vld [vmem:[%s1 + $0x34] sm:$0xf]
  %v57 = vld [vmem:[%s1 + $0x38] sm:$0xf]
  %v58 = vld [vmem:[%s1 + $0x3c] sm:$0xf]
  %v75 = vunpack.c.l.b16 %v43
  %v76 = vunpack.c.l.b16 %v44
  %v77 = vunpack.c.l.b16 %v45
  %v78 = vunpack.c.l.b16 %v46
  %v79 = vunpack.c.l.b16 %v47
  %v80 = vunpack.c.l.b16 %v48
  %v81 = vunpack.c.l.b16 %v49
  %v82 = vunpack.c.l.b16 %v50
  %v83 = vunpack.c.l.b16 %v51
  %v84 = vunpack.c.l.b16 %v52
  %v85 = vunpack.c.l.b16 %v53
  %v86 = vunpack.c.l.b16 %v54
  %v87 = vunpack.c.l.b16 %v55
  %v88 = vunpack.c.l.b16 %v56
  %v89 = vunpack.c.l.b16 %v57
  %v90 = vunpack.c.l.b16 %v58
  %v91 = vpack.c.b16 %v76, %v75
  %v92 = vpack.c.b16 %v78, %v77
  %v93 = vpack.c.b16 %v80, %v79
  %v94 = vpack.c.b16 %v82, %v81
  %v95 = vpack.c.b16 %v84, %v83
  %v96 = vpack.c.b16 %v86, %v85
  %v97 = vpack.c.b16 %v88, %v87
  %v98 = vpack.c.b16 %v90, %v89
  %107 = vmatpush.bf16.msra.mxu0 %v98
  %108 = vmatpush.bf16.msra.mxu0 %v97
  %109 = vmatpush.bf16.msra.mxu0 %v96
  %110 = vmatpush.bf16.msra.mxu0 %v95
  %111 = vmatpush.bf16.msra.mxu0 %v94
  %112 = vmatpush.bf16.msra.mxu0 %v93
  %113 = vmatpush.bf16.msra.mxu0 %v92
  %114 = vmatpush.bf16.msra.mxu0 %v91
  %115 = vmatmul.bf16.gmra.mxu0 %v41
  %v116 = vpop.f32.mrf.mxu0
  %v117 = vadd.f32 0.0, %v116
  %v118 = vpop.f32.mrf.mxu0
  %119 = vdwg.mxu0
  %v120 = vadd.f32 %v42, %v117
  %121 = vst [vmem:[#allocation2] sm:$0xff] %v120
  // Predicated region
  $region30: #{densenet121_combine_forward.43} parent=0 // pred_check
    %p122 = pneg %p23
  $region31: #{densenet121_combine_forward.43} parent=0 // pred_check_branch
    %124 = sbr.rel (%p122) target = $region33
  $region32: #{densenet121_combine_forward.43} parent=0 // pred_region
    %v125 = vld [vmem:[#allocation2] sm:$0xff]
    %v126 = vld [vmem:[%s4] sm:$0x1]
    %v128 = vperm.slane %v126, 0
    %v130 = vmul.f32 %v125, %v128
    %v131 = vld [vmem:[%s5] sm:$0x1]
    %v133 = vperm.slane %v131, 0
    %v135 = vadd.f32 %v130, %v133
    %v136 = vpack.c.bf16 %v135, %v135
    %137 = vst [vmem:[%s6] sm:$0xf] %v136
  $region33: #{densenet121_combine_forward.43} parent=0 // pred_fallthru
    _
  // Predicated region
  $region34: #{densenet121_combine_forward.43} parent=0 // pred_check
    _
  $region35: #{densenet121_combine_forward.43} parent=0 // pred_check_branch
    %139 = sbr.rel (0) target = $region37
  $region36: #{densenet121_combine_forward.43} parent=0 // pred_region
    _
  $region37: #{densenet121_combine_forward.43} parent=0 // pred_fallthru
    _
  // Predicated region
  $region38: #{densenet121_combine_forward.43} parent=0 // pred_check
    _
  $region39: #{densenet121_combine_forward.43} parent=0 // pred_check_branch
    %141 = sbr.rel (0) target = $region41
  $region40: #{densenet121_combine_forward.43} parent=0 // pred_region
    _
  $region41: #{densenet121_combine_forward.43} parent=0 // pred_fallthru
    _

// kernel: densenet121_combine_forward.49
$region0: #{densenet121_combine_forward.49}
  #allocation0 [shape = 'u32[]', space=smem, size = 0x4, offset = 0x4, fixed_abs, tag = 'smem constant byte address 0x4 - core index']
  #allocation1 [shape = 'u32[72,128]{1,0:T(1,128)}', space=vmem, size = 0x9000, scoped, tag = 'internal scratch']
  #allocation2 [shape = 'f32[8,128]{1,0:T(8,128)}', space=vmem, size = 0x1000, scoped, tag = 'scratch operand']
  %s0 = inlined_call_operand.vmem [shape: bf16[8,128], index: 0, kind: input, shape index: {}]
  %s1 = inlined_call_operand.vmem [shape: bf16[128,128], index: 1, kind: input, shape index: {}]
  %s2 = inlined_call_operand.vmem [shape: f32[1,128], index: 2, kind: input, shape index: {}]
  %s3 = inlined_call_operand.vmem [shape: f32[1,128], index: 3, kind: input, shape index: {}]
  %s4 = inlined_call_operand.vmem [shape: f32[1,128], index: 4, kind: input, shape index: {}]
  %s5 = inlined_call_operand.vmem [shape: f32[1,128], index: 5, kind: input, shape index: {}]
  %s6 = inlined_call_operand.vmem [shape: f32[8,128], index: 6, kind: output, shape index: {}]
  %s7 = sld [smem:[#allocation0]]
  $region42: #{densenet121_combine_forward.49} parent=0
    _
  %s9 = ssub.s32 1, %s7
  %s10 = scalar_select 0, %s9, %s7
  // Predicated region
  $region2: #{densenet121_combine_forward.49} parent=0 // pred_check
    _
  $region3: #{densenet121_combine_forward.49} parent=0 // pred_check_branch
    %12 = sbr.rel (0) target = $region5
  $region4: #{densenet121_combine_forward.49} parent=0 // pred_region
    _
  $region5: #{densenet121_combine_forward.49} parent=0 // pred_fallthru
    _
  // Predicated region
  $region6: #{densenet121_combine_forward.49} parent=0 // pred_check
    _
  $region7: #{densenet121_combine_forward.49} parent=0 // pred_check_branch
    %14 = sbr.rel (0) target = $region9
  $region8: #{densenet121_combine_forward.49} parent=0 // pred_region
    _
  $region9: #{densenet121_combine_forward.49} parent=0 // pred_fallthru
    _
  // Predicated region
  $region10: #{densenet121_combine_forward.49} parent=0 // pred_check
    _
  $region11: #{densenet121_combine_forward.49} parent=0 // pred_check_branch
    %16 = sbr.rel (0) target = $region13
  $region12: #{densenet121_combine_forward.49} parent=0 // pred_region
    _
  $region13: #{densenet121_combine_forward.49} parent=0 // pred_fallthru
    _
  // Predicated region
  $region14: #{densenet121_combine_forward.49} parent=0 // pred_check
    _
  $region15: #{densenet121_combine_forward.49} parent=0 // pred_check_branch
    %18 = sbr.rel (0) target = $region17
  $region16: #{densenet121_combine_forward.49} parent=0 // pred_region
    _
  $region17: #{densenet121_combine_forward.49} parent=0 // pred_fallthru
    _
  // Predicated region
  $region18: #{densenet121_combine_forward.49} parent=0 // pred_check
    _
  $region19: #{densenet121_combine_forward.49} parent=0 // pred_check_branch
    %20 = sbr.rel (0) target = $region21
  $region20: #{densenet121_combine_forward.49} parent=0 // pred_region
    _
  $region21: #{densenet121_combine_forward.49} parent=0 // pred_fallthru
    _
  // Predicated region
  $region22: #{densenet121_combine_forward.49} parent=0 // pred_check
    _
  $region23: #{densenet121_combine_forward.49} parent=0 // pred_check_branch
    %22 = sbr.rel (0) target = $region25
  $region24: #{densenet121_combine_forward.49} parent=0 // pred_region
    _
  $region25: #{densenet121_combine_forward.49} parent=0 // pred_fallthru
    _
  %p23 = scmp.eq.s32.totalorder 0, 0
  // Predicated region
  $region26: #{densenet121_combine_forward.49} parent=0 // pred_check
    %p24 = pneg %p23
  $region27: #{densenet121_combine_forward.49} parent=0 // pred_check_branch
    %26 = sbr.rel (%p24) target = $region29
  $region28: #{densenet121_combine_forward.49} parent=0 // pred_region
    %27 = vst [vmem:[#allocation2] sm:$0xff] 0.0
  $region29: #{densenet121_combine_forward.49} parent=0 // pred_fallthru
    _
  %v28 = vld [vmem:[%s0] sm:$0xf]
  %v29 = vld [vmem:[#allocation2] sm:$0xff]
  %v30 = vld [vmem:[%s1] sm:$0xf]
  %v31 = vld [vmem:[%s1 + $0x4] sm:$0xf]
  %v32 = vld [vmem:[%s1 + $0x8] sm:$0xf]
  %v33 = vld [vmem:[%s1 + $0xc] sm:$0xf]
  %v34 = vld [vmem:[%s1 + $0x10] sm:$0xf]
  %v35 = vld [vmem:[%s1 + $0x14] sm:$0xf]
  %v36 = vld [vmem:[%s1 + $0x18] sm:$0xf]
  %v37 = vld [vmem:[%s1 + $0x1c] sm:$0xf]
  %v38 = vld [vmem:[%s1 + $0x20] sm:$0xf]
  %v39 = vld [vmem:[%s1 + $0x24] sm:$0xf]
  %v40 = vld [vmem:[%s1 + $0x28] sm:$0xf]
  %v41 = vld [vmem:[%s1 + $0x2c] sm:$0xf]
  %v42 = vld [vmem:[%s1 + $0x30] sm:$0xf]
  %v43 = vld [vmem:[%s1 + $0x34] sm:$0xf]
  %v44 = vld [vmem:[%s1 + $0x38] sm:$0xf]
  %v45 = vld [vmem:[%s1 + $0x3c] sm:$0xf]
  %v62 = vunpack.c.l.b16 %v30
  %v63 = vunpack.c.l.b16 %v31
  %v64 = vunpack.c.l.b16 %v32
  %v65 = vunpack.c.l.b16 %v33
  %v66 = vunpack.c.l.b16 %v34
  %v67 = vunpack.c.l.b16 %v35
  %v68 = vunpack.c.l.b16 %v36
  %v69 = vunpack.c.l.b16 %v37
  %v70 = vunpack.c.l.b16 %v38
  %v71 = vunpack.c.l.b16 %v39
  %v72 = vunpack.c.l.b16 %v40
  %v73 = vunpack.c.l.b16 %v41
  %v74 = vunpack.c.l.b16 %v42
  %v75 = vunpack.c.l.b16 %v43
  %v76 = vunpack.c.l.b16 %v44
  %v77 = vunpack.c.l.b16 %v45
  %v78 = vpack.c.b16 %v63, %v62
  %v79 = vpack.c.b16 %v65, %v64
  %v80 = vpack.c.b16 %v67, %v66
  %v81 = vpack.c.b16 %v69, %v68
  %v82 = vpack.c.b16 %v71, %v70
  %v83 = vpack.c.b16 %v73, %v72
  %v84 = vpack.c.b16 %v75, %v74
  %v85 = vpack.c.b16 %v77, %v76
  %94 = vmatpush.bf16.msra.mxu0 %v85
  %95 = vmatpush.bf16.msra.mxu0 %v84
  %96 = vmatpush.bf16.msra.mxu0 %v83
  %97 = vmatpush.bf16.msra.mxu0 %v82
  %98 = vmatpush.bf16.msra.mxu0 %v81
  %99 = vmatpush.bf16.msra.mxu0 %v80
  %100 = vmatpush.bf16.msra.mxu0 %v79
  %101 = vmatpush.bf16.msra.mxu0 %v78
  %102 = vmatmul.bf16.gmra.mxu0 %v28
  %v103 = vpop.f32.mrf.mxu0
  %v104 = vadd.f32 0.0, %v103
  %v105 = vpop.f32.mrf.mxu0
  %106 = vdwg.mxu0
  %v107 = vadd.f32 %v29, %v104
  %108 = vst [vmem:[#allocation2] sm:$0xff] %v107
  // Predicated region
  $region30: #{densenet121_combine_forward.49} parent=0 // pred_check
    %p109 = pneg %p23
  $region31: #{densenet121_combine_forward.49} parent=0 // pred_check_branch
    %111 = sbr.rel (%p109) target = $region33
  $region32: #{densenet121_combine_forward.49} parent=0 // pred_region
    %v112 = vld [vmem:[#allocation2] sm:$0xff]
    %v113 = vld [vmem:[%s4] sm:$0x1]
    %v115 = vperm.slane %v113, 0
    %v117 = vmul.f32 %v112, %v115
    %v118 = vld [vmem:[%s5] sm:$0x1]
    %v120 = vperm.slane %v118, 0
    %v122 = vadd.f32 %v117, %v120
    %123 = vst [vmem:[%s6] sm:$0xff] %v122
  $region33: #{densenet121_combine_forward.49} parent=0 // pred_fallthru
    _
  // Predicated region
  $region34: #{densenet121_combine_forward.49} parent=0 // pred_check
    _
  $region35: #{densenet121_combine_forward.49} parent=0 // pred_check_branch
    %125 = sbr.rel (0) target = $region37
  $region36: #{densenet121_combine_forward.49} parent=0 // pred_region
    _
  $region37: #{densenet121_combine_forward.49} parent=0 // pred_fallthru
    _
  // Predicated region
  $region38: #{densenet121_combine_forward.49} parent=0 // pred_check
    _
  $region39: #{densenet121_combine_forward.49} parent=0 // pred_check_branch
    %127 = sbr.rel (0) target = $region41
  $region40: #{densenet121_combine_forward.49} parent=0 // pred_region
    _
  $region41: #{densenet121_combine_forward.49} parent=0 // pred_fallthru
    _

</llo_original>
